<compile_context>
chip_gen: v7x
topology: tpu7x:2x2x1
jax: 0.10.0
libtpu: 0.0.40
codegen_flags: <defaults>
</compile_context>

<pallas_src>
import functools

import jax
import jax.numpy as jnp
from jax import lax
from jax.experimental import pallas as pl
from jax.experimental.pallas import tpu as pltpu


CP = 128  # lane width used for in-VMEM compute (channels on lanes)


# ----------------------------------------------------------------------------
# Pallas kernel
# ----------------------------------------------------------------------------
def _make_kernel(H, W, NB, cin, planes, has_shortcut_conv):
    HW = H * W
    TAPS = tuple((ky, kx) for ky in range(3) for kx in range(3))

    def kernel(x_ref, w1_ref, b1_ref, w2_ref, b2_ref, a_ref, o_ref, pad_ref):
        # Zero only the 1-pixel halo border of the shared padded scratch (the
        # interior is always fully overwritten).  Done per grid step so it
        # stays correct when the batch axis is sharded "parallel" across
        # TensorCores.  Column zeroing restricted to rows 1..H.
        zr = jnp.zeros((1, W + 2, CP), jnp.float32)
        zc = jnp.zeros((H, 1, CP), jnp.float32)
        pad_ref[0:1, :, :] = zr
        pad_ref[H + 1:H + 2, :, :] = zr
        pad_ref[1:H + 1, 0:1, :] = zc
        pad_ref[1:H + 1, W + 1:W + 2, :] = zc

        lane = lax.broadcasted_iota(jnp.int32, (HW, CP), 1)

        def packed_patch(c_real):
            """im2col patch with K packed as lane = tap*c_real + channel.

            Each tap is read at full 128-lane width (stale lanes masked to 0),
            rotated to its K slot with pltpu.roll (XLU; no unaligned stores),
            and summed.  Lanes >= 9*c_real are exactly zero; the matching
            weight rows are zero too (belt & braces)."""
            keep = lane < c_real
            acc = None
            for t, (ky, kx) in enumerate(TAPS):
                tap = pad_ref[ky:ky + H, kx:kx + W, :].reshape(HW, CP)
                tap = jnp.where(keep, tap, 0.0)
                if t:
                    tap = pltpu.roll(tap, shift=t * c_real, axis=1)
                acc = tap if acc is None else acc + tap
            return acc.astype(jnp.bfloat16)   # single cast per stage

        for b in range(NB):                   # static unroll over this step's images
            x = x_ref[b]                      # (HW, cin) f32

            # stage 1: conv1 (+ fused 1x1 shortcut cols) -> gauss -> bn1 -> relu
            pad_ref[1:H + 1, 1:W + 1, :cin] = x.reshape(H, W, cin)
            y1 = jnp.dot(packed_patch(cin), w1_ref[...],
                         preferred_element_type=jnp.float32)   # (HW, CP[+CP])
            h1 = jnp.dot(a_ref[...], y1[:, :CP].astype(jnp.bfloat16),
                         preferred_element_type=jnp.float32)   # exact blur
            h1 = jnp.maximum(h1 + b1_ref[...], 0.0)            # (HW, CP), 0 beyond planes

            # stage 2: conv2 -> gauss -> (bn2 + bn_sc bias folded) -> +shortcut -> relu
            pad_ref[1:H + 1, 1:W + 1, :] = h1.reshape(H, W, CP)
            y2 = jnp.dot(packed_patch(planes), w2_ref[...],
                         preferred_element_type=jnp.float32)   # (HW, CP)
            out = jnp.dot(a_ref[...], y2.astype(jnp.bfloat16),
                          preferred_element_type=jnp.float32) + b2_ref[...]

            if has_shortcut_conv:
                out = out + y1[:, CP:]                         # fused linear shortcut
                res = out[:, :planes]
            else:
                res = out[:, :planes] + x                      # identity (cin == planes)

            o_ref[b] = jnp.maximum(res, 0.0)                   # (HW, planes)

    return kernel


# ----------------------------------------------------------------------------
# Wrapper: fold BN, pack weights, build gaussian operator, call pallas
# ----------------------------------------------------------------------------
def _build_gauss_operator(H, W, g):
    """(H*W, H*W) matrix applying a depthwise 3x3 conv with zero 'SAME' padding
    exactly (including borders).  Built once in the wrapper."""
    yy, xx = jnp.meshgrid(jnp.arange(H), jnp.arange(W), indexing="ij")
    p = (yy * W + xx).reshape(-1)
    A = jnp.zeros((H * W, H * W), jnp.float32)
    for dy in (-1, 0, 1):
        for dx in (-1, 0, 1):
            ny, nx = yy + dy, xx + dx
            valid = ((ny >= 0) & (ny < H) & (nx >= 0) & (nx < W)).reshape(-1)
            q = (jnp.clip(ny, 0, H - 1) * W + jnp.clip(nx, 0, W - 1)).reshape(-1)
            A = A.at[p, q].add(jnp.where(valid, g[dy + 1, dx + 1], 0.0))
    return A


@functools.partial(jax.jit, static_argnames=("has_shortcut_conv",))
def basic_block_pallas(x_nhwc, params, *, has_shortcut_conv=True):
    N, H, W, cin = x_nhwc.shape
    planes = params["w1"].shape[-1]
    HW = H * W
    assert 9 * max(cin, planes) <= CP, "TODO(synk): tile K for larger channels"
    if not has_shortcut_conv:
        assert cin == planes, "identity shortcut requires cin == planes"

    # 2 images per step amortizes per-step overhead; for larger (even) N the
    # grid stays >= 2 steps so v7x's two TensorCores both get work.
    NB = 2 if N % 2 == 0 else 1
    assert N % NB == 0

    x_flat = x_nhwc.reshape(N, HW, cin)          # true channel count on HBM

    def pack_conv(w, scale, ci, ncols):
        co = w.shape[-1]
        wk = jnp.zeros((CP, ncols), jnp.float32)
        return wk.at[:9 * ci, :co].set(
            (w * scale.reshape(1, 1, 1, co)).reshape(9 * ci, co))

    ncols1 = 2 * CP if has_shortcut_conv else CP
    w1k = pack_conv(params["w1"], params["s1"], cin, ncols1)
    if has_shortcut_conv:
        # 1x1 shortcut (bn_sc scale folded) rides the centre tap's K rows,
        # output columns CP:CP+planes -> fills the 256-wide MXU on v6e/v7x.
        w1k = w1k.at[4 * cin:5 * cin, CP:CP + planes].set(
            params["wsc"] * params["ssc"].reshape(1, planes))
    w1k = w1k.astype(jnp.bfloat16)
    w2k = pack_conv(params["w2"], params["s2"], planes, CP).astype(jnp.bfloat16)

    def pad_bias(b):
        return jnp.zeros((1, CP), jnp.float32).at[:, :planes].set(
            b.reshape(1, planes))

    b1 = pad_bias(params["b1"])
    b2 = pad_bias(params["b2"] + (params["bsc"] if has_shortcut_conv else 0.0))

    # kernel1 == kernel2 in the module -> one deduped bf16 operator.
    A = _build_gauss_operator(H, W, params["g"]).astype(jnp.bfloat16)

    kernel = _make_kernel(H, W, NB, cin, planes, has_shortcut_conv)
    full = lambda s: pl.BlockSpec(s, lambda n: (0,) * len(s))

    out = pl.pallas_call(
        kernel,
        out_shape=jax.ShapeDtypeStruct((N, HW, planes), jnp.float32),
        grid=(N // NB,),
        in_specs=[
            pl.BlockSpec((NB, HW, cin), lambda n: (n, 0, 0)),   # x (true channels)
            full((CP, ncols1)), full((1, CP)),                  # w1(+shortcut), b1
            full((CP, CP)), full((1, CP)),                      # w2, b2+bsc
            full((HW, HW)),                                     # gaussian operator
        ],
        out_specs=pl.BlockSpec((NB, HW, planes), lambda n: (n, 0, 0)),
        scratch_shapes=[pltpu.VMEM((H + 2, W + 2, CP), jnp.float32)],  # halo pad
        compiler_params=pltpu.CompilerParams(
            dimension_semantics=("parallel",),   # batch steps shard across TCs
            vmem_limit_bytes=32 * 1024 * 1024,   # ~1.5-2 MiB actually used
        ),
    )(x_flat, w1k, b1, w2k, b2, A)

    return out.reshape(N, H, W, planes)


# ----------------------------------------------------------------------------
# Deterministic parameter construction (synthetic, no checkpoint)
# ----------------------------------------------------------------------------
def _gaussian_kernel_2d(ksize, sigma):
    ax = jnp.arange(ksize, dtype=jnp.float32)
    mean = (ksize - 1) / 2.0
    g1d = jnp.exp(-((ax - mean) ** 2) / (2.0 * sigma ** 2))
    g2d = jnp.outer(g1d, g1d)
    return (g2d / jnp.sum(g2d)).astype(jnp.float32)


def _bn_fold(key, c, eps=1e-5):
    k1, k2, k3, k4 = jax.random.split(key, 4)
    gamma = 1.0 + 0.1 * jax.random.normal(k1, (c,), jnp.float32)
    beta = 0.1 * jax.random.normal(k2, (c,), jnp.float32)
    running_mean = 0.1 * jax.random.normal(k3, (c,), jnp.float32)
    running_var = jnp.abs(1.0 + 0.1 * jax.random.normal(k4, (c,), jnp.float32))
    scale = gamma / jnp.sqrt(running_var + eps)
    bias = beta - running_mean * scale
    return scale.reshape(1, c), bias.reshape(1, c)


def init_params(key, in_planes, planes, gauss_ksize=3, gauss_sigma=1.0):
    k1, k2, k3, kb1, kb2, kbsc = jax.random.split(key, 6)
    std1 = (2.0 / (in_planes * 9)) ** 0.5
    std2 = (2.0 / (planes * 9)) ** 0.5
    stdsc = (2.0 / in_planes) ** 0.5
    # conv weights stored HWIO for the NHWC kernel (PyTorch would be OIHW)
    w1 = std1 * jax.random.normal(k1, (3, 3, in_planes, planes), jnp.float32)
    w2 = std2 * jax.random.normal(k2, (3, 3, planes, planes), jnp.float32)
    wsc = stdsc * jax.random.normal(k3, (in_planes, planes), jnp.float32)  # 1x1
    s1, b1 = _bn_fold(kb1, planes)
    s2, b2 = _bn_fold(kb2, planes)
    ssc, bsc = _bn_fold(kbsc, planes)
    g = _gaussian_kernel_2d(gauss_ksize, gauss_sigma)   # kernel1 == kernel2
    return {
        "w1": w1, "s1": s1, "b1": b1,
        "w2": w2, "s2": s2, "b2": b2,
        "wsc": wsc, "ssc": ssc, "bsc": bsc,
        "g": g,
    }


# ----------------------------------------------------------------------------
# Pure-JAX reference (unfused, original module semantics) for correctness
# ----------------------------------------------------------------------------
def ref_forward(x_nhwc, params):
    planes = params["w1"].shape[-1]
    dn = ("NHWC", "HWIO", "NHWC")

    def conv(x, w, groups=1):
        return lax.conv_general_dilated(x, w, (1, 1), "SAME",
                                        dimension_numbers=dn,
                                        feature_group_count=groups)

    g_dw = jnp.broadcast_to(params["g"][:, :, None, None], (3, 3, 1, planes))

    out = conv(x_nhwc, params["w1"])
    out = conv(out, g_dw, groups=planes)
    out = jnp.maximum(out * params["s1"] + params["b1"], 0.0)
    out = conv(out, params["w2"])
    out = conv(out, g_dw, groups=planes)
    out = out * params["s2"] + params["b2"]
    sc = conv(x_nhwc, params["wsc"][None, None, :, :])
    sc = sc * params["ssc"] + params["bsc"]
    return jnp.maximum(out + sc, 0.0)


# ----------------------------------------------------------------------------
if __name__ == "__main__":
    key = jax.random.PRNGKey(0)
    N, Cin, H, W = 2, 4, 16, 16
    planes = 8                                 # in_planes != planes -> conv shortcut

    k_x, k_p = jax.random.split(key)
    x_nchw = jax.random.normal(k_x, (N, Cin, H, W), jnp.float32)   # PyTorch layout
    params = init_params(k_p, Cin, planes)

    x_nhwc = jnp.transpose(x_nchw, (0, 2, 3, 1))                   # -> kernel layout

    out_nhwc = basic_block_pallas(x_nhwc, params, has_shortcut_conv=True)
    out_nhwc = jax.block_until_ready(out_nhwc)

    ref_nhwc = ref_forward(x_nhwc, params)
    out_nchw = jnp.transpose(out_nhwc, (0, 3, 1, 2))               # back to NCHW
    assert out_nchw.shape == (N, planes, H, W)

    # bf16 MXU operands everywhere (conv weights, activations, gauss operator)
    # with f32 accumulation -> bf16-level tolerance (abs + rel).
    err = jnp.abs(out_nhwc - ref_nhwc)
    budget = 5e-2 + 5e-2 * jnp.abs(ref_nhwc)
    assert bool(jnp.all(err <= budget)), (
        f"mismatch vs reference: max abs err {float(jnp.max(err))}")

    print("KERNEL_OK")
</pallas_src>

<mosaic_0001>
module attributes {stable_mosaic.version = 11 : i64} {
  func.func private @main(%arg0: i32) attributes {dimension_semantics = [#tpu.dimension_semantics<core_parallel>], iteration_bounds = array<i64: 2>, tpu.core_type = #tpu.core_type<sc_scalar_subcore>, window_params = []} {
    return
  }
}

module attributes {stable_mosaic.version = 11 : i64} {
  func.func private @main(%arg0: i32) attributes {dimension_semantics = [#tpu.dimension_semantics<core_parallel>], iteration_bounds = array<i64: 2>, tpu.core_type = #tpu.core_type<sc_scalar_subcore>, window_params = []} {
    return
  }
}

module attributes {stable_mosaic.version = 11 : i64} {
  func.func @kernel(%arg0: i32, %arg1: memref<2x256x4xf32, #tpu.memory_space<vmem>>, %arg2: memref<128x256xbf16, #tpu.memory_space<vmem>>, %arg3: memref<1x128xf32, #tpu.memory_space<vmem>>, %arg4: memref<128x128xbf16, #tpu.memory_space<vmem>>, %arg5: memref<1x128xf32, #tpu.memory_space<vmem>>, %arg6: memref<256x256xbf16, #tpu.memory_space<vmem>>, %arg7: memref<2x256x8xf32, #tpu.memory_space<vmem>>, %arg8: memref<18x18x128xf32, #tpu.memory_space<vmem>>) attributes {dimension_semantics = [#tpu.dimension_semantics<parallel>], iteration_bounds = array<i64: 1>, scalar_prefetch = 0 : i64, scratch_operands = 1 : i64, tpu.core_type = #tpu.core_type<tc>, window_params = [{transform_indices = @transform_0, window_bounds = array<i64: 2, 256, 4>}, {pipeline_mode = #tpu.pipeline_mode<synchronous>, transform_indices = @transform_1, window_bounds = array<i64: 128, 256>}, {pipeline_mode = #tpu.pipeline_mode<synchronous>, transform_indices = @transform_2, window_bounds = array<i64: 1, 128>}, {pipeline_mode = #tpu.pipeline_mode<synchronous>, transform_indices = @transform_3, window_bounds = array<i64: 128, 128>}, {pipeline_mode = #tpu.pipeline_mode<synchronous>, transform_indices = @transform_4, window_bounds = array<i64: 1, 128>}, {pipeline_mode = #tpu.pipeline_mode<synchronous>, transform_indices = @transform_5, window_bounds = array<i64: 256, 256>}, {transform_indices = @transform_6, window_bounds = array<i64: 2, 256, 8>}]} {
    %cst = arith.constant 0.000000e+00 : f32
    %0 = vector.broadcast %cst : f32 to vector<1x18x128xf32>
    %cst_0 = arith.constant 0.000000e+00 : f32
    %1 = vector.broadcast %cst_0 : f32 to vector<16x1x128xf32>
    %c0 = arith.constant 0 : index
    %c0_1 = arith.constant 0 : index
    %c0_2 = arith.constant 0 : index
    %2 = vector.load %arg8[%c0, %c0_1, %c0_2] : memref<18x18x128xf32, #tpu.memory_space<vmem>>, vector<1x18x128xf32>
    tpu.vector_store %arg8[%c0, %c0_1, %c0_2], %0 {strides = array<i32>} : memref<18x18x128xf32, #tpu.memory_space<vmem>>, vector<1x18x128xf32>,
    %c17 = arith.constant 17 : index
    %c0_3 = arith.constant 0 : index
    %c0_4 = arith.constant 0 : index
    %3 = vector.load %arg8[%c17, %c0_3, %c0_4] : memref<18x18x128xf32, #tpu.memory_space<vmem>>, vector<1x18x128xf32>
    tpu.vector_store %arg8[%c17, %c0_3, %c0_4], %0 {strides = array<i32>} : memref<18x18x128xf32, #tpu.memory_space<vmem>>, vector<1x18x128xf32>,
    %c1 = arith.constant 1 : index
    %c0_5 = arith.constant 0 : index
    %c0_6 = arith.constant 0 : index
    %4 = vector.load %arg8[%c1, %c0_5, %c0_6] : memref<18x18x128xf32, #tpu.memory_space<vmem>>, vector<16x1x128xf32>
    tpu.vector_store %arg8[%c1, %c0_5, %c0_6], %1 {strides = array<i32>} : memref<18x18x128xf32, #tpu.memory_space<vmem>>, vector<16x1x128xf32>,
    %c1_7 = arith.constant 1 : index
    %c17_8 = arith.constant 17 : index
    %c0_9 = arith.constant 0 : index
    %5 = vector.load %arg8[%c1_7, %c17_8, %c0_9] : memref<18x18x128xf32, #tpu.memory_space<vmem>>, vector<16x1x128xf32>
    tpu.vector_store %arg8[%c1_7, %c17_8, %c0_9], %1 {strides = array<i32>} : memref<18x18x128xf32, #tpu.memory_space<vmem>>, vector<16x1x128xf32>,
    %6 = tpu.iota {dimensions = array<i32: 1>} : vector<256x128xi32>
    %c0_10 = arith.constant 0 : index
    %c0_11 = arith.constant 0 : index
    %c0_12 = arith.constant 0 : index
    %7 = vector.load %arg1[%c0_10, %c0_11, %c0_12] : memref<2x256x4xf32, #tpu.memory_space<vmem>>, vector<1x256x4xf32>
    %8 = vector.shape_cast %7 : vector<1x256x4xf32> to vector<256x4xf32>
    %9 = vector.shape_cast %8 : vector<256x4xf32> to vector<16x16x4xf32>
    %c1_13 = arith.constant 1 : index
    %c1_14 = arith.constant 1 : index
    %c0_15 = arith.constant 0 : index
    %10 = vector.load %arg8[%c1_13, %c1_14, %c0_15] : memref<18x18x128xf32, #tpu.memory_space<vmem>>, vector<16x16x4xf32>
    tpu.vector_store %arg8[%c1_13, %c1_14, %c0_15], %9 {strides = array<i32>} : memref<18x18x128xf32, #tpu.memory_space<vmem>>, vector<16x16x4xf32>,
    %c4_i32 = arith.constant 4 : i32
    %11 = vector.broadcast %c4_i32 : i32 to vector<256x128xi32>
    %12 = arith.cmpi slt, %6, %11 : vector<256x128xi32>
    %c0_16 = arith.constant 0 : index
    %c0_17 = arith.constant 0 : index
    %c0_18 = arith.constant 0 : index
    %13 = vector.load %arg8[%c0_16, %c0_17, %c0_18] : memref<18x18x128xf32, #tpu.memory_space<vmem>>, vector<16x16x128xf32>
    %14 = vector.shape_cast %13 : vector<16x16x128xf32> to vector<256x128xf32>
    %cst_19 = arith.constant 0.000000e+00 : f32
    %15 = vector.broadcast %cst_19 : f32 to vector<256x128xf32>
    %16 = arith.select %12, %14, %15 : vector<256x128xi1>, vector<256x128xf32>
    %c0_20 = arith.constant 0 : index
    %c1_21 = arith.constant 1 : index
    %c0_22 = arith.constant 0 : index
    %17 = vector.load %arg8[%c0_20, %c1_21, %c0_22] : memref<18x18x128xf32, #tpu.memory_space<vmem>>, vector<16x16x128xf32>
    %18 = vector.shape_cast %17 : vector<16x16x128xf32> to vector<256x128xf32>
    %cst_23 = arith.constant 0.000000e+00 : f32
    %19 = vector.broadcast %cst_23 : f32 to vector<256x128xf32>
    %20 = arith.select %12, %18, %19 : vector<256x128xi1>, vector<256x128xf32>
    %c4_i32_24 = arith.constant 4 : i32
    %21 = tpu.dynamic_rotate %20 by %c4_i32_24 dim 1 : vector<256x128xf32>, i32 -> vector<256x128xf32>
    %22 = arith.addf %16, %21 : vector<256x128xf32>
    %c0_25 = arith.constant 0 : index
    %c2 = arith.constant 2 : index
    %c0_26 = arith.constant 0 : index
    %23 = vector.load %arg8[%c0_25, %c2, %c0_26] : memref<18x18x128xf32, #tpu.memory_space<vmem>>, vector<16x16x128xf32>
    %24 = vector.shape_cast %23 : vector<16x16x128xf32> to vector<256x128xf32>
    %cst_27 = arith.constant 0.000000e+00 : f32
    %25 = vector.broadcast %cst_27 : f32 to vector<256x128xf32>
    %26 = arith.select %12, %24, %25 : vector<256x128xi1>, vector<256x128xf32>
    %c8_i32 = arith.constant 8 : i32
    %27 = tpu.dynamic_rotate %26 by %c8_i32 dim 1 : vector<256x128xf32>, i32 -> vector<256x128xf32>
    %28 = arith.addf %22, %27 : vector<256x128xf32>
    %c1_28 = arith.constant 1 : index
    %c0_29 = arith.constant 0 : index
    %c0_30 = arith.constant 0 : index
    %29 = vector.load %arg8[%c1_28, %c0_29, %c0_30] : memref<18x18x128xf32, #tpu.memory_space<vmem>>, vector<16x16x128xf32>
    %30 = vector.shape_cast %29 : vector<16x16x128xf32> to vector<256x128xf32>
    %cst_31 = arith.constant 0.000000e+00 : f32
    %31 = vector.broadcast %cst_31 : f32 to vector<256x128xf32>
    %32 = arith.select %12, %30, %31 : vector<256x128xi1>, vector<256x128xf32>
    %c12_i32 = arith.constant 12 : i32
    %33 = tpu.dynamic_rotate %32 by %c12_i32 dim 1 : vector<256x128xf32>, i32 -> vector<256x128xf32>
    %34 = arith.addf %28, %33 : vector<256x128xf32>
    %c1_32 = arith.constant 1 : index
    %c1_33 = arith.constant 1 : index
    %c0_34 = arith.constant 0 : index
    %35 = vector.load %arg8[%c1_32, %c1_33, %c0_34] : memref<18x18x128xf32, #tpu.memory_space<vmem>>, vector<16x16x128xf32>
    %36 = vector.shape_cast %35 : vector<16x16x128xf32> to vector<256x128xf32>
    %cst_35 = arith.constant 0.000000e+00 : f32
    %37 = vector.broadcast %cst_35 : f32 to vector<256x128xf32>
    %38 = arith.select %12, %36, %37 : vector<256x128xi1>, vector<256x128xf32>
    %c16_i32 = arith.constant 16 : i32
    %39 = tpu.dynamic_rotate %38 by %c16_i32 dim 1 : vector<256x128xf32>, i32 -> vector<256x128xf32>
    %40 = arith.addf %34, %39 : vector<256x128xf32>
    %c1_36 = arith.constant 1 : index
    %c2_37 = arith.constant 2 : index
    %c0_38 = arith.constant 0 : index
    %41 = vector.load %arg8[%c1_36, %c2_37, %c0_38] : memref<18x18x128xf32, #tpu.memory_space<vmem>>, vector<16x16x128xf32>
    %42 = vector.shape_cast %41 : vector<16x16x128xf32> to vector<256x128xf32>
    %cst_39 = arith.constant 0.000000e+00 : f32
    %43 = vector.broadcast %cst_39 : f32 to vector<256x128xf32>
    %44 = arith.select %12, %42, %43 : vector<256x128xi1>, vector<256x128xf32>
    %c20_i32 = arith.constant 20 : i32
    %45 = tpu.dynamic_rotate %44 by %c20_i32 dim 1 : vector<256x128xf32>, i32 -> vector<256x128xf32>
    %46 = arith.addf %40, %45 : vector<256x128xf32>
    %c2_40 = arith.constant 2 : index
    %c0_41 = arith.constant 0 : index
    %c0_42 = arith.constant 0 : index
    %47 = vector.load %arg8[%c2_40, %c0_41, %c0_42] : memref<18x18x128xf32, #tpu.memory_space<vmem>>, vector<16x16x128xf32>
    %48 = vector.shape_cast %47 : vector<16x16x128xf32> to vector<256x128xf32>
    %cst_43 = arith.constant 0.000000e+00 : f32
    %49 = vector.broadcast %cst_43 : f32 to vector<256x128xf32>
    %50 = arith.select %12, %48, %49 : vector<256x128xi1>, vector<256x128xf32>
    %c24_i32 = arith.constant 24 : i32
    %51 = tpu.dynamic_rotate %50 by %c24_i32 dim 1 : vector<256x128xf32>, i32 -> vector<256x128xf32>
    %52 = arith.addf %46, %51 : vector<256x128xf32>
    %c2_44 = arith.constant 2 : index
    %c1_45 = arith.constant 1 : index
    %c0_46 = arith.constant 0 : index
    %53 = vector.load %arg8[%c2_44, %c1_45, %c0_46] : memref<18x18x128xf32, #tpu.memory_space<vmem>>, vector<16x16x128xf32>
    %54 = vector.shape_cast %53 : vector<16x16x128xf32> to vector<256x128xf32>
    %cst_47 = arith.constant 0.000000e+00 : f32
    %55 = vector.broadcast %cst_47 : f32 to vector<256x128xf32>
    %56 = arith.select %12, %54, %55 : vector<256x128xi1>, vector<256x128xf32>
    %c28_i32 = arith.constant 28 : i32
    %57 = tpu.dynamic_rotate %56 by %c28_i32 dim 1 : vector<256x128xf32>, i32 -> vector<256x128xf32>
    %58 = arith.addf %52, %57 : vector<256x128xf32>
    %c2_48 = arith.constant 2 : index
    %c2_49 = arith.constant 2 : index
    %c0_50 = arith.constant 0 : index
    %59 = vector.load %arg8[%c2_48, %c2_49, %c0_50] : memref<18x18x128xf32, #tpu.memory_space<vmem>>, vector<16x16x128xf32>
    %60 = vector.shape_cast %59 : vector<16x16x128xf32> to vector<256x128xf32>
    %cst_51 = arith.constant 0.000000e+00 : f32
    %61 = vector.broadcast %cst_51 : f32 to vector<256x128xf32>
    %62 = arith.select %12, %60, %61 : vector<256x128xi1>, vector<256x128xf32>
    %c32_i32 = arith.constant 32 : i32
    %63 = tpu.dynamic_rotate %62 by %c32_i32 dim 1 : vector<256x128xf32>, i32 -> vector<256x128xf32>
    %64 = arith.addf %58, %63 : vector<256x128xf32>
    %65 = arith.truncf %64 : vector<256x128xf32> to vector<256x128xbf16>
    %c0_52 = arith.constant 0 : index
    %c0_53 = arith.constant 0 : index
    %66 = vector.load %arg2[%c0_52, %c0_53] : memref<128x256xbf16, #tpu.memory_space<vmem>>, vector<128x256xbf16>
    %cst_54 = arith.constant dense<0.000000e+00> : vector<256x256xf32>
    %67 = tpu.matmul %65, %66, %cst_54 {dimension_numbers = #tpu.dot_dimension_numbers<[1], [0], [0], [1], [0, 0, 1, 1], [], []>} : vector<256x128xbf16>, vector<128x256xbf16>, vector<256x256xf32> -> vector<256x256xf32>
    %c0_55 = arith.constant 0 : index
    %c0_56 = arith.constant 0 : index
    %68 = vector.load %arg6[%c0_55, %c0_56] : memref<256x256xbf16, #tpu.memory_space<vmem>>, vector<256x256xbf16>
    %69 = vector.extract_strided_slice %67 {offsets = [0, 0], sizes = [256, 128], strides = [1, 1]} : vector<256x256xf32> to vector<256x128xf32>
    %70 = arith.truncf %69 : vector<256x128xf32> to vector<256x128xbf16>
    %cst_57 = arith.constant dense<0.000000e+00> : vector<256x128xf32>
    %71 = tpu.matmul %68, %70, %cst_57 {dimension_numbers = #tpu.dot_dimension_numbers<[1], [0], [0], [1], [0, 0, 1, 1], [], []>} : vector<256x256xbf16>, vector<256x128xbf16>, vector<256x128xf32> -> vector<256x128xf32>
    %c0_58 = arith.constant 0 : index
    %c0_59 = arith.constant 0 : index
    %72 = vector.load %arg3[%c0_58, %c0_59] : memref<1x128xf32, #tpu.memory_space<vmem>>, vector<1x128xf32>
    %73 = vector.broadcast %72 : vector<1x128xf32> to vector<256x128xf32>
    %74 = arith.addf %71, %73 : vector<256x128xf32>
    %cst_60 = arith.constant 0.000000e+00 : f32
    %75 = vector.broadcast %cst_60 : f32 to vector<256x128xf32>
    %76 = arith.maximumf %74, %75 : vector<256x128xf32>
    %77 = vector.shape_cast %76 : vector<256x128xf32> to vector<16x16x128xf32>
    %c1_61 = arith.constant 1 : index
    %c1_62 = arith.constant 1 : index
    %c0_63 = arith.constant 0 : index
    %78 = vector.load %arg8[%c1_61, %c1_62, %c0_63] : memref<18x18x128xf32, #tpu.memory_space<vmem>>, vector<16x16x128xf32>
    tpu.vector_store %arg8[%c1_61, %c1_62, %c0_63], %77 {strides = array<i32>} : memref<18x18x128xf32, #tpu.memory_space<vmem>>, vector<16x16x128xf32>,
    %c8_i32_64 = arith.constant 8 : i32
    %79 = vector.broadcast %c8_i32_64 : i32 to vector<256x128xi32>
    %80 = arith.cmpi slt, %6, %79 : vector<256x128xi32>
    %c0_65 = arith.constant 0 : index
    %c0_66 = arith.constant 0 : index
    %c0_67 = arith.constant 0 : index
    %81 = vector.load %arg8[%c0_65, %c0_66, %c0_67] : memref<18x18x128xf32, #tpu.memory_space<vmem>>, vector<16x16x128xf32>
    %82 = vector.shape_cast %81 : vector<16x16x128xf32> to vector<256x128xf32>
    %cst_68 = arith.constant 0.000000e+00 : f32
    %83 = vector.broadcast %cst_68 : f32 to vector<256x128xf32>
    %84 = arith.select %80, %82, %83 : vector<256x128xi1>, vector<256x128xf32>
    %c0_69 = arith.constant 0 : index
    %c1_70 = arith.constant 1 : index
    %c0_71 = arith.constant 0 : index
    %85 = vector.load %arg8[%c0_69, %c1_70, %c0_71] : memref<18x18x128xf32, #tpu.memory_space<vmem>>, vector<16x16x128xf32>
    %86 = vector.shape_cast %85 : vector<16x16x128xf32> to vector<256x128xf32>
    %cst_72 = arith.constant 0.000000e+00 : f32
    %87 = vector.broadcast %cst_72 : f32 to vector<256x128xf32>
    %88 = arith.select %80, %86, %87 : vector<256x128xi1>, vector<256x128xf32>
    %c8_i32_73 = arith.constant 8 : i32
    %89 = tpu.dynamic_rotate %88 by %c8_i32_73 dim 1 : vector<256x128xf32>, i32 -> vector<256x128xf32>
    %90 = arith.addf %84, %89 : vector<256x128xf32>
    %c0_74 = arith.constant 0 : index
    %c2_75 = arith.constant 2 : index
    %c0_76 = arith.constant 0 : index
    %91 = vector.load %arg8[%c0_74, %c2_75, %c0_76] : memref<18x18x128xf32, #tpu.memory_space<vmem>>, vector<16x16x128xf32>
    %92 = vector.shape_cast %91 : vector<16x16x128xf32> to vector<256x128xf32>
    %cst_77 = arith.constant 0.000000e+00 : f32
    %93 = vector.broadcast %cst_77 : f32 to vector<256x128xf32>
    %94 = arith.select %80, %92, %93 : vector<256x128xi1>, vector<256x128xf32>
    %c16_i32_78 = arith.constant 16 : i32
    %95 = tpu.dynamic_rotate %94 by %c16_i32_78 dim 1 : vector<256x128xf32>, i32 -> vector<256x128xf32>
    %96 = arith.addf %90, %95 : vector<256x128xf32>
    %c1_79 = arith.constant 1 : index
    %c0_80 = arith.constant 0 : index
    %c0_81 = arith.constant 0 : index
    %97 = vector.load %arg8[%c1_79, %c0_80, %c0_81] : memref<18x18x128xf32, #tpu.memory_space<vmem>>, vector<16x16x128xf32>
    %98 = vector.shape_cast %97 : vector<16x16x128xf32> to vector<256x128xf32>
    %cst_82 = arith.constant 0.000000e+00 : f32
    %99 = vector.broadcast %cst_82 : f32 to vector<256x128xf32>
    %100 = arith.select %80, %98, %99 : vector<256x128xi1>, vector<256x128xf32>
    %c24_i32_83 = arith.constant 24 : i32
    %101 = tpu.dynamic_rotate %100 by %c24_i32_83 dim 1 : vector<256x128xf32>, i32 -> vector<256x128xf32>
    %102 = arith.addf %96, %101 : vector<256x128xf32>
    %c1_84 = arith.constant 1 : index
    %c1_85 = arith.constant 1 : index
    %c0_86 = arith.constant 0 : index
    %103 = vector.load %arg8[%c1_84, %c1_85, %c0_86] : memref<18x18x128xf32, #tpu.memory_space<vmem>>, vector<16x16x128xf32>
    %104 = vector.shape_cast %103 : vector<16x16x128xf32> to vector<256x128xf32>
    %cst_87 = arith.constant 0.000000e+00 : f32
    %105 = vector.broadcast %cst_87 : f32 to vector<256x128xf32>
    %106 = arith.select %80, %104, %105 : vector<256x128xi1>, vector<256x128xf32>
    %c32_i32_88 = arith.constant 32 : i32
    %107 = tpu.dynamic_rotate %106 by %c32_i32_88 dim 1 : vector<256x128xf32>, i32 -> vector<256x128xf32>
    %108 = arith.addf %102, %107 : vector<256x128xf32>
    %c1_89 = arith.constant 1 : index
    %c2_90 = arith.constant 2 : index
    %c0_91 = arith.constant 0 : index
    %109 = vector.load %arg8[%c1_89, %c2_90, %c0_91] : memref<18x18x128xf32, #tpu.memory_space<vmem>>, vector<16x16x128xf32>
    %110 = vector.shape_cast %109 : vector<16x16x128xf32> to vector<256x128xf32>
    %cst_92 = arith.constant 0.000000e+00 : f32
    %111 = vector.broadcast %cst_92 : f32 to vector<256x128xf32>
    %112 = arith.select %80, %110, %111 : vector<256x128xi1>, vector<256x128xf32>
    %c40_i32 = arith.constant 40 : i32
    %113 = tpu.dynamic_rotate %112 by %c40_i32 dim 1 : vector<256x128xf32>, i32 -> vector<256x128xf32>
    %114 = arith.addf %108, %113 : vector<256x128xf32>
    %c2_93 = arith.constant 2 : index
    %c0_94 = arith.constant 0 : index
    %c0_95 = arith.constant 0 : index
    %115 = vector.load %arg8[%c2_93, %c0_94, %c0_95] : memref<18x18x128xf32, #tpu.memory_space<vmem>>, vector<16x16x128xf32>
    %116 = vector.shape_cast %115 : vector<16x16x128xf32> to vector<256x128xf32>
    %cst_96 = arith.constant 0.000000e+00 : f32
    %117 = vector.broadcast %cst_96 : f32 to vector<256x128xf32>
    %118 = arith.select %80, %116, %117 : vector<256x128xi1>, vector<256x128xf32>
    %c48_i32 = arith.constant 48 : i32
    %119 = tpu.dynamic_rotate %118 by %c48_i32 dim 1 : vector<256x128xf32>, i32 -> vector<256x128xf32>
    %120 = arith.addf %114, %119 : vector<256x128xf32>
    %c2_97 = arith.constant 2 : index
    %c1_98 = arith.constant 1 : index
    %c0_99 = arith.constant 0 : index
    %121 = vector.load %arg8[%c2_97, %c1_98, %c0_99] : memref<18x18x128xf32, #tpu.memory_space<vmem>>, vector<16x16x128xf32>
    %122 = vector.shape_cast %121 : vector<16x16x128xf32> to vector<256x128xf32>
    %cst_100 = arith.constant 0.000000e+00 : f32
    %123 = vector.broadcast %cst_100 : f32 to vector<256x128xf32>
    %124 = arith.select %80, %122, %123 : vector<256x128xi1>, vector<256x128xf32>
    %c56_i32 = arith.constant 56 : i32
    %125 = tpu.dynamic_rotate %124 by %c56_i32 dim 1 : vector<256x128xf32>, i32 -> vector<256x128xf32>
    %126 = arith.addf %120, %125 : vector<256x128xf32>
    %c2_101 = arith.constant 2 : index
    %c2_102 = arith.constant 2 : index
    %c0_103 = arith.constant 0 : index
    %127 = vector.load %arg8[%c2_101, %c2_102, %c0_103] : memref<18x18x128xf32, #tpu.memory_space<vmem>>, vector<16x16x128xf32>
    %128 = vector.shape_cast %127 : vector<16x16x128xf32> to vector<256x128xf32>
    %cst_104 = arith.constant 0.000000e+00 : f32
    %129 = vector.broadcast %cst_104 : f32 to vector<256x128xf32>
    %130 = arith.select %80, %128, %129 : vector<256x128xi1>, vector<256x128xf32>
    %c64_i32 = arith.constant 64 : i32
    %131 = tpu.dynamic_rotate %130 by %c64_i32 dim 1 : vector<256x128xf32>, i32 -> vector<256x128xf32>
    %132 = arith.addf %126, %131 : vector<256x128xf32>
    %133 = arith.truncf %132 : vector<256x128xf32> to vector<256x128xbf16>
    %c0_105 = arith.constant 0 : index
    %c0_106 = arith.constant 0 : index
    %134 = vector.load %arg4[%c0_105, %c0_106] : memref<128x128xbf16, #tpu.memory_space<vmem>>, vector<128x128xbf16>
    %cst_107 = arith.constant dense<0.000000e+00> : vector<256x128xf32>
    %135 = tpu.matmul %133, %134, %cst_107 {dimension_numbers = #tpu.dot_dimension_numbers<[1], [0], [0], [1], [0, 0, 1, 1], [], []>} : vector<256x128xbf16>, vector<128x128xbf16>, vector<256x128xf32> -> vector<256x128xf32>
    %c0_108 = arith.constant 0 : index
    %c0_109 = arith.constant 0 : index
    %136 = vector.load %arg6[%c0_108, %c0_109] : memref<256x256xbf16, #tpu.memory_space<vmem>>, vector<256x256xbf16>
    %137 = arith.truncf %135 : vector<256x128xf32> to vector<256x128xbf16>
    %cst_110 = arith.constant dense<0.000000e+00> : vector<256x128xf32>
    %138 = tpu.matmul %136, %137, %cst_110 {dimension_numbers = #tpu.dot_dimension_numbers<[1], [0], [0], [1], [0, 0, 1, 1], [], []>} : vector<256x256xbf16>, vector<256x128xbf16>, vector<256x128xf32> -> vector<256x128xf32>
    %c0_111 = arith.constant 0 : index
    %c0_112 = arith.constant 0 : index
    %139 = vector.load %arg5[%c0_111, %c0_112] : memref<1x128xf32, #tpu.memory_space<vmem>>, vector<1x128xf32>
    %140 = vector.broadcast %139 : vector<1x128xf32> to vector<256x128xf32>
    %141 = arith.addf %138, %140 : vector<256x128xf32>
    %142 = vector.extract_strided_slice %67 {offsets = [0, 128], sizes = [256, 128], strides = [1, 1]} : vector<256x256xf32> to vector<256x128xf32>
    %143 = arith.addf %141, %142 : vector<256x128xf32>
    %144 = vector.extract_strided_slice %143 {offsets = [0, 0], sizes = [256, 8], strides = [1, 1]} : vector<256x128xf32> to vector<256x8xf32>
    %cst_113 = arith.constant 0.000000e+00 : f32
    %145 = vector.broadcast %cst_113 : f32 to vector<256x8xf32>
    %146 = arith.maximumf %144, %145 : vector<256x8xf32>
    %c0_114 = arith.constant 0 : index
    %c0_115 = arith.constant 0 : index
    %c0_116 = arith.constant 0 : index
    %147 = vector.load %arg7[%c0_114, %c0_115, %c0_116] : memref<2x256x8xf32, #tpu.memory_space<vmem>>, vector<1x256x8xf32>
    %148 = vector.shape_cast %147 : vector<1x256x8xf32> to vector<256x8xf32>
    %149 = vector.shape_cast %146 : vector<256x8xf32> to vector<1x256x8xf32>
    tpu.vector_store %arg7[%c0_114, %c0_115, %c0_116], %149 {strides = array<i32>} : memref<2x256x8xf32, #tpu.memory_space<vmem>>, vector<1x256x8xf32>,
    %c1_117 = arith.constant 1 : index
    %c0_118 = arith.constant 0 : index
    %c0_119 = arith.constant 0 : index
    %150 = vector.load %arg1[%c1_117, %c0_118, %c0_119] : memref<2x256x4xf32, #tpu.memory_space<vmem>>, vector<1x256x4xf32>
    %151 = vector.shape_cast %150 : vector<1x256x4xf32> to vector<256x4xf32>
    %152 = vector.shape_cast %151 : vector<256x4xf32> to vector<16x16x4xf32>
    %c1_120 = arith.constant 1 : index
    %c1_121 = arith.constant 1 : index
    %c0_122 = arith.constant 0 : index
    %153 = vector.load %arg8[%c1_120, %c1_121, %c0_122] : memref<18x18x128xf32, #tpu.memory_space<vmem>>, vector<16x16x4xf32>
    tpu.vector_store %arg8[%c1_120, %c1_121, %c0_122], %152 {strides = array<i32>} : memref<18x18x128xf32, #tpu.memory_space<vmem>>, vector<16x16x4xf32>,
    %c4_i32_123 = arith.constant 4 : i32
    %154 = vector.broadcast %c4_i32_123 : i32 to vector<256x128xi32>
    %155 = arith.cmpi slt, %6, %154 : vector<256x128xi32>
    %c0_124 = arith.constant 0 : index
    %c0_125 = arith.constant 0 : index
    %c0_126 = arith.constant 0 : index
    %156 = vector.load %arg8[%c0_124, %c0_125, %c0_126] : memref<18x18x128xf32, #tpu.memory_space<vmem>>, vector<16x16x128xf32>
    %157 = vector.shape_cast %156 : vector<16x16x128xf32> to vector<256x128xf32>
    %cst_127 = arith.constant 0.000000e+00 : f32
    %158 = vector.broadcast %cst_127 : f32 to vector<256x128xf32>
    %159 = arith.select %155, %157, %158 : vector<256x128xi1>, vector<256x128xf32>
    %c0_128 = arith.constant 0 : index
    %c1_129 = arith.constant 1 : index
    %c0_130 = arith.constant 0 : index
    %160 = vector.load %arg8[%c0_128, %c1_129, %c0_130] : memref<18x18x128xf32, #tpu.memory_space<vmem>>, vector<16x16x128xf32>
    %161 = vector.shape_cast %160 : vector<16x16x128xf32> to vector<256x128xf32>
    %cst_131 = arith.constant 0.000000e+00 : f32
    %162 = vector.broadcast %cst_131 : f32 to vector<256x128xf32>
    %163 = arith.select %155, %161, %162 : vector<256x128xi1>, vector<256x128xf32>
    %c4_i32_132 = arith.constant 4 : i32
    %164 = tpu.dynamic_rotate %163 by %c4_i32_132 dim 1 : vector<256x128xf32>, i32 -> vector<256x128xf32>
    %165 = arith.addf %159, %164 : vector<256x128xf32>
    %c0_133 = arith.constant 0 : index
    %c2_134 = arith.constant 2 : index
    %c0_135 = arith.constant 0 : index
    %166 = vector.load %arg8[%c0_133, %c2_134, %c0_135] : memref<18x18x128xf32, #tpu.memory_space<vmem>>, vector<16x16x128xf32>
    %167 = vector.shape_cast %166 : vector<16x16x128xf32> to vector<256x128xf32>
    %cst_136 = arith.constant 0.000000e+00 : f32
    %168 = vector.broadcast %cst_136 : f32 to vector<256x128xf32>
    %169 = arith.select %155, %167, %168 : vector<256x128xi1>, vector<256x128xf32>
    %c8_i32_137 = arith.constant 8 : i32
    %170 = tpu.dynamic_rotate %169 by %c8_i32_137 dim 1 : vector<256x128xf32>, i32 -> vector<256x128xf32>
    %171 = arith.addf %165, %170 : vector<256x128xf32>
    %c1_138 = arith.constant 1 : index
    %c0_139 = arith.constant 0 : index
    %c0_140 = arith.constant 0 : index
    %172 = vector.load %arg8[%c1_138, %c0_139, %c0_140] : memref<18x18x128xf32, #tpu.memory_space<vmem>>, vector<16x16x128xf32>
    %173 = vector.shape_cast %172 : vector<16x16x128xf32> to vector<256x128xf32>
    %cst_141 = arith.constant 0.000000e+00 : f32
    %174 = vector.broadcast %cst_141 : f32 to vector<256x128xf32>
    %175 = arith.select %155, %173, %174 : vector<256x128xi1>, vector<256x128xf32>
    %c12_i32_142 = arith.constant 12 : i32
    %176 = tpu.dynamic_rotate %175 by %c12_i32_142 dim 1 : vector<256x128xf32>, i32 -> vector<256x128xf32>
    %177 = arith.addf %171, %176 : vector<256x128xf32>
    %c1_143 = arith.constant 1 : index
    %c1_144 = arith.constant 1 : index
    %c0_145 = arith.constant 0 : index
    %178 = vector.load %arg8[%c1_143, %c1_144, %c0_145] : memref<18x18x128xf32, #tpu.memory_space<vmem>>, vector<16x16x128xf32>
    %179 = vector.shape_cast %178 : vector<16x16x128xf32> to vector<256x128xf32>
    %cst_146 = arith.constant 0.000000e+00 : f32
    %180 = vector.broadcast %cst_146 : f32 to vector<256x128xf32>
    %181 = arith.select %155, %179, %180 : vector<256x128xi1>, vector<256x128xf32>
    %c16_i32_147 = arith.constant 16 : i32
    %182 = tpu.dynamic_rotate %181 by %c16_i32_147 dim 1 : vector<256x128xf32>, i32 -> vector<256x128xf32>
    %183 = arith.addf %177, %182 : vector<256x128xf32>
    %c1_148 = arith.constant 1 : index
    %c2_149 = arith.constant 2 : index
    %c0_150 = arith.constant 0 : index
    %184 = vector.load %arg8[%c1_148, %c2_149, %c0_150] : memref<18x18x128xf32, #tpu.memory_space<vmem>>, vector<16x16x128xf32>
    %185 = vector.shape_cast %184 : vector<16x16x128xf32> to vector<256x128xf32>
    %cst_151 = arith.constant 0.000000e+00 : f32
    %186 = vector.broadcast %cst_151 : f32 to vector<256x128xf32>
    %187 = arith.select %155, %185, %186 : vector<256x128xi1>, vector<256x128xf32>
    %c20_i32_152 = arith.constant 20 : i32
    %188 = tpu.dynamic_rotate %187 by %c20_i32_152 dim 1 : vector<256x128xf32>, i32 -> vector<256x128xf32>
    %189 = arith.addf %183, %188 : vector<256x128xf32>
    %c2_153 = arith.constant 2 : index
    %c0_154 = arith.constant 0 : index
    %c0_155 = arith.constant 0 : index
    %190 = vector.load %arg8[%c2_153, %c0_154, %c0_155] : memref<18x18x128xf32, #tpu.memory_space<vmem>>, vector<16x16x128xf32>
    %191 = vector.shape_cast %190 : vector<16x16x128xf32> to vector<256x128xf32>
    %cst_156 = arith.constant 0.000000e+00 : f32
    %192 = vector.broadcast %cst_156 : f32 to vector<256x128xf32>
    %193 = arith.select %155, %191, %192 : vector<256x128xi1>, vector<256x128xf32>
    %c24_i32_157 = arith.constant 24 : i32
    %194 = tpu.dynamic_rotate %193 by %c24_i32_157 dim 1 : vector<256x128xf32>, i32 -> vector<256x128xf32>
    %195 = arith.addf %189, %194 : vector<256x128xf32>
    %c2_158 = arith.constant 2 : index
    %c1_159 = arith.constant 1 : index
    %c0_160 = arith.constant 0 : index
    %196 = vector.load %arg8[%c2_158, %c1_159, %c0_160] : memref<18x18x128xf32, #tpu.memory_space<vmem>>, vector<16x16x128xf32>
    %197 = vector.shape_cast %196 : vector<16x16x128xf32> to vector<256x128xf32>
    %cst_161 = arith.constant 0.000000e+00 : f32
    %198 = vector.broadcast %cst_161 : f32 to vector<256x128xf32>
    %199 = arith.select %155, %197, %198 : vector<256x128xi1>, vector<256x128xf32>
    %c28_i32_162 = arith.constant 28 : i32
    %200 = tpu.dynamic_rotate %199 by %c28_i32_162 dim 1 : vector<256x128xf32>, i32 -> vector<256x128xf32>
    %201 = arith.addf %195, %200 : vector<256x128xf32>
    %c2_163 = arith.constant 2 : index
    %c2_164 = arith.constant 2 : index
    %c0_165 = arith.constant 0 : index
    %202 = vector.load %arg8[%c2_163, %c2_164, %c0_165] : memref<18x18x128xf32, #tpu.memory_space<vmem>>, vector<16x16x128xf32>
    %203 = vector.shape_cast %202 : vector<16x16x128xf32> to vector<256x128xf32>
    %cst_166 = arith.constant 0.000000e+00 : f32
    %204 = vector.broadcast %cst_166 : f32 to vector<256x128xf32>
    %205 = arith.select %155, %203, %204 : vector<256x128xi1>, vector<256x128xf32>
    %c32_i32_167 = arith.constant 32 : i32
    %206 = tpu.dynamic_rotate %205 by %c32_i32_167 dim 1 : vector<256x128xf32>, i32 -> vector<256x128xf32>
    %207 = arith.addf %201, %206 : vector<256x128xf32>
    %208 = arith.truncf %207 : vector<256x128xf32> to vector<256x128xbf16>
    %c0_168 = arith.constant 0 : index
    %c0_169 = arith.constant 0 : index
    %209 = vector.load %arg2[%c0_168, %c0_169] : memref<128x256xbf16, #tpu.memory_space<vmem>>, vector<128x256xbf16>
    %cst_170 = arith.constant dense<0.000000e+00> : vector<256x256xf32>
    %210 = tpu.matmul %208, %209, %cst_170 {dimension_numbers = #tpu.dot_dimension_numbers<[1], [0], [0], [1], [0, 0, 1, 1], [], []>} : vector<256x128xbf16>, vector<128x256xbf16>, vector<256x256xf32> -> vector<256x256xf32>
    %c0_171 = arith.constant 0 : index
    %c0_172 = arith.constant 0 : index
    %211 = vector.load %arg6[%c0_171, %c0_172] : memref<256x256xbf16, #tpu.memory_space<vmem>>, vector<256x256xbf16>
    %212 = vector.extract_strided_slice %210 {offsets = [0, 0], sizes = [256, 128], strides = [1, 1]} : vector<256x256xf32> to vector<256x128xf32>
    %213 = arith.truncf %212 : vector<256x128xf32> to vector<256x128xbf16>
    %cst_173 = arith.constant dense<0.000000e+00> : vector<256x128xf32>
    %214 = tpu.matmul %211, %213, %cst_173 {dimension_numbers = #tpu.dot_dimension_numbers<[1], [0], [0], [1], [0, 0, 1, 1], [], []>} : vector<256x256xbf16>, vector<256x128xbf16>, vector<256x128xf32> -> vector<256x128xf32>
    %c0_174 = arith.constant 0 : index
    %c0_175 = arith.constant 0 : index
    %215 = vector.load %arg3[%c0_174, %c0_175] : memref<1x128xf32, #tpu.memory_space<vmem>>, vector<1x128xf32>
    %216 = vector.broadcast %215 : vector<1x128xf32> to vector<256x128xf32>
    %217 = arith.addf %214, %216 : vector<256x128xf32>
    %cst_176 = arith.constant 0.000000e+00 : f32
    %218 = vector.broadcast %cst_176 : f32 to vector<256x128xf32>
    %219 = arith.maximumf %217, %218 : vector<256x128xf32>
    %220 = vector.shape_cast %219 : vector<256x128xf32> to vector<16x16x128xf32>
    %c1_177 = arith.constant 1 : index
    %c1_178 = arith.constant 1 : index
    %c0_179 = arith.constant 0 : index
    %221 = vector.load %arg8[%c1_177, %c1_178, %c0_179] : memref<18x18x128xf32, #tpu.memory_space<vmem>>, vector<16x16x128xf32>
    tpu.vector_store %arg8[%c1_177, %c1_178, %c0_179], %220 {strides = array<i32>} : memref<18x18x128xf32, #tpu.memory_space<vmem>>, vector<16x16x128xf32>,
    %c8_i32_180 = arith.constant 8 : i32
    %222 = vector.broadcast %c8_i32_180 : i32 to vector<256x128xi32>
    %223 = arith.cmpi slt, %6, %222 : vector<256x128xi32>
    %c0_181 = arith.constant 0 : index
    %c0_182 = arith.constant 0 : index
    %c0_183 = arith.constant 0 : index
    %224 = vector.load %arg8[%c0_181, %c0_182, %c0_183] : memref<18x18x128xf32, #tpu.memory_space<vmem>>, vector<16x16x128xf32>
    %225 = vector.shape_cast %224 : vector<16x16x128xf32> to vector<256x128xf32>
    %cst_184 = arith.constant 0.000000e+00 : f32
    %226 = vector.broadcast %cst_184 : f32 to vector<256x128xf32>
    %227 = arith.select %223, %225, %226 : vector<256x128xi1>, vector<256x128xf32>
    %c0_185 = arith.constant 0 : index
    %c1_186 = arith.constant 1 : index
    %c0_187 = arith.constant 0 : index
    %228 = vector.load %arg8[%c0_185, %c1_186, %c0_187] : memref<18x18x128xf32, #tpu.memory_space<vmem>>, vector<16x16x128xf32>
    %229 = vector.shape_cast %228 : vector<16x16x128xf32> to vector<256x128xf32>
    %cst_188 = arith.constant 0.000000e+00 : f32
    %230 = vector.broadcast %cst_188 : f32 to vector<256x128xf32>
    %231 = arith.select %223, %229, %230 : vector<256x128xi1>, vector<256x128xf32>
    %c8_i32_189 = arith.constant 8 : i32
    %232 = tpu.dynamic_rotate %231 by %c8_i32_189 dim 1 : vector<256x128xf32>, i32 -> vector<256x128xf32>
    %233 = arith.addf %227, %232 : vector<256x128xf32>
    %c0_190 = arith.constant 0 : index
    %c2_191 = arith.constant 2 : index
    %c0_192 = arith.constant 0 : index
    %234 = vector.load %arg8[%c0_190, %c2_191, %c0_192] : memref<18x18x128xf32, #tpu.memory_space<vmem>>, vector<16x16x128xf32>
    %235 = vector.shape_cast %234 : vector<16x16x128xf32> to vector<256x128xf32>
    %cst_193 = arith.constant 0.000000e+00 : f32
    %236 = vector.broadcast %cst_193 : f32 to vector<256x128xf32>
    %237 = arith.select %223, %235, %236 : vector<256x128xi1>, vector<256x128xf32>
    %c16_i32_194 = arith.constant 16 : i32
    %238 = tpu.dynamic_rotate %237 by %c16_i32_194 dim 1 : vector<256x128xf32>, i32 -> vector<256x128xf32>
    %239 = arith.addf %233, %238 : vector<256x128xf32>
    %c1_195 = arith.constant 1 : index
    %c0_196 = arith.constant 0 : index
    %c0_197 = arith.constant 0 : index
    %240 = vector.load %arg8[%c1_195, %c0_196, %c0_197] : memref<18x18x128xf32, #tpu.memory_space<vmem>>, vector<16x16x128xf32>
    %241 = vector.shape_cast %240 : vector<16x16x128xf32> to vector<256x128xf32>
    %cst_198 = arith.constant 0.000000e+00 : f32
    %242 = vector.broadcast %cst_198 : f32 to vector<256x128xf32>
    %243 = arith.select %223, %241, %242 : vector<256x128xi1>, vector<256x128xf32>
    %c24_i32_199 = arith.constant 24 : i32
    %244 = tpu.dynamic_rotate %243 by %c24_i32_199 dim 1 : vector<256x128xf32>, i32 -> vector<256x128xf32>
    %245 = arith.addf %239, %244 : vector<256x128xf32>
    %c1_200 = arith.constant 1 : index
    %c1_201 = arith.constant 1 : index
    %c0_202 = arith.constant 0 : index
    %246 = vector.load %arg8[%c1_200, %c1_201, %c0_202] : memref<18x18x128xf32, #tpu.memory_space<vmem>>, vector<16x16x128xf32>
    %247 = vector.shape_cast %246 : vector<16x16x128xf32> to vector<256x128xf32>
    %cst_203 = arith.constant 0.000000e+00 : f32
    %248 = vector.broadcast %cst_203 : f32 to vector<256x128xf32>
    %249 = arith.select %223, %247, %248 : vector<256x128xi1>, vector<256x128xf32>
    %c32_i32_204 = arith.constant 32 : i32
    %250 = tpu.dynamic_rotate %249 by %c32_i32_204 dim 1 : vector<256x128xf32>, i32 -> vector<256x128xf32>
    %251 = arith.addf %245, %250 : vector<256x128xf32>
    %c1_205 = arith.constant 1 : index
    %c2_206 = arith.constant 2 : index
    %c0_207 = arith.constant 0 : index
    %252 = vector.load %arg8[%c1_205, %c2_206, %c0_207] : memref<18x18x128xf32, #tpu.memory_space<vmem>>, vector<16x16x128xf32>
    %253 = vector.shape_cast %252 : vector<16x16x128xf32> to vector<256x128xf32>
    %cst_208 = arith.constant 0.000000e+00 : f32
    %254 = vector.broadcast %cst_208 : f32 to vector<256x128xf32>
    %255 = arith.select %223, %253, %254 : vector<256x128xi1>, vector<256x128xf32>
    %c40_i32_209 = arith.constant 40 : i32
    %256 = tpu.dynamic_rotate %255 by %c40_i32_209 dim 1 : vector<256x128xf32>, i32 -> vector<256x128xf32>
    %257 = arith.addf %251, %256 : vector<256x128xf32>
    %c2_210 = arith.constant 2 : index
    %c0_211 = arith.constant 0 : index
    %c0_212 = arith.constant 0 : index
    %258 = vector.load %arg8[%c2_210, %c0_211, %c0_212] : memref<18x18x128xf32, #tpu.memory_space<vmem>>, vector<16x16x128xf32>
    %259 = vector.shape_cast %258 : vector<16x16x128xf32> to vector<256x128xf32>
    %cst_213 = arith.constant 0.000000e+00 : f32
    %260 = vector.broadcast %cst_213 : f32 to vector<256x128xf32>
    %261 = arith.select %223, %259, %260 : vector<256x128xi1>, vector<256x128xf32>
    %c48_i32_214 = arith.constant 48 : i32
    %262 = tpu.dynamic_rotate %261 by %c48_i32_214 dim 1 : vector<256x128xf32>, i32 -> vector<256x128xf32>
    %263 = arith.addf %257, %262 : vector<256x128xf32>
    %c2_215 = arith.constant 2 : index
    %c1_216 = arith.constant 1 : index
    %c0_217 = arith.constant 0 : index
    %264 = vector.load %arg8[%c2_215, %c1_216, %c0_217] : memref<18x18x128xf32, #tpu.memory_space<vmem>>, vector<16x16x128xf32>
    %265 = vector.shape_cast %264 : vector<16x16x128xf32> to vector<256x128xf32>
    %cst_218 = arith.constant 0.000000e+00 : f32
    %266 = vector.broadcast %cst_218 : f32 to vector<256x128xf32>
    %267 = arith.select %223, %265, %266 : vector<256x128xi1>, vector<256x128xf32>
    %c56_i32_219 = arith.constant 56 : i32
    %268 = tpu.dynamic_rotate %267 by %c56_i32_219 dim 1 : vector<256x128xf32>, i32 -> vector<256x128xf32>
    %269 = arith.addf %263, %268 : vector<256x128xf32>
    %c2_220 = arith.constant 2 : index
    %c2_221 = arith.constant 2 : index
    %c0_222 = arith.constant 0 : index
    %270 = vector.load %arg8[%c2_220, %c2_221, %c0_222] : memref<18x18x128xf32, #tpu.memory_space<vmem>>, vector<16x16x128xf32>
    %271 = vector.shape_cast %270 : vector<16x16x128xf32> to vector<256x128xf32>
    %cst_223 = arith.constant 0.000000e+00 : f32
    %272 = vector.broadcast %cst_223 : f32 to vector<256x128xf32>
    %273 = arith.select %223, %271, %272 : vector<256x128xi1>, vector<256x128xf32>
    %c64_i32_224 = arith.constant 64 : i32
    %274 = tpu.dynamic_rotate %273 by %c64_i32_224 dim 1 : vector<256x128xf32>, i32 -> vector<256x128xf32>
    %275 = arith.addf %269, %274 : vector<256x128xf32>
    %276 = arith.truncf %275 : vector<256x128xf32> to vector<256x128xbf16>
    %c0_225 = arith.constant 0 : index
    %c0_226 = arith.constant 0 : index
    %277 = vector.load %arg4[%c0_225, %c0_226] : memref<128x128xbf16, #tpu.memory_space<vmem>>, vector<128x128xbf16>
    %cst_227 = arith.constant dense<0.000000e+00> : vector<256x128xf32>
    %278 = tpu.matmul %276, %277, %cst_227 {dimension_numbers = #tpu.dot_dimension_numbers<[1], [0], [0], [1], [0, 0, 1, 1], [], []>} : vector<256x128xbf16>, vector<128x128xbf16>, vector<256x128xf32> -> vector<256x128xf32>
    %c0_228 = arith.constant 0 : index
    %c0_229 = arith.constant 0 : index
    %279 = vector.load %arg6[%c0_228, %c0_229] : memref<256x256xbf16, #tpu.memory_space<vmem>>, vector<256x256xbf16>
    %280 = arith.truncf %278 : vector<256x128xf32> to vector<256x128xbf16>
    %cst_230 = arith.constant dense<0.000000e+00> : vector<256x128xf32>
    %281 = tpu.matmul %279, %280, %cst_230 {dimension_numbers = #tpu.dot_dimension_numbers<[1], [0], [0], [1], [0, 0, 1, 1], [], []>} : vector<256x256xbf16>, vector<256x128xbf16>, vector<256x128xf32> -> vector<256x128xf32>
    %c0_231 = arith.constant 0 : index
    %c0_232 = arith.constant 0 : index
    %282 = vector.load %arg5[%c0_231, %c0_232] : memref<1x128xf32, #tpu.memory_space<vmem>>, vector<1x128xf32>
    %283 = vector.broadcast %282 : vector<1x128xf32> to vector<256x128xf32>
    %284 = arith.addf %281, %283 : vector<256x128xf32>
    %285 = vector.extract_strided_slice %210 {offsets = [0, 128], sizes = [256, 128], strides = [1, 1]} : vector<256x256xf32> to vector<256x128xf32>
    %286 = arith.addf %284, %285 : vector<256x128xf32>
    %287 = vector.extract_strided_slice %286 {offsets = [0, 0], sizes = [256, 8], strides = [1, 1]} : vector<256x128xf32> to vector<256x8xf32>
    %cst_233 = arith.constant 0.000000e+00 : f32
    %288 = vector.broadcast %cst_233 : f32 to vector<256x8xf32>
    %289 = arith.maximumf %287, %288 : vector<256x8xf32>
    %c1_234 = arith.constant 1 : index
    %c0_235 = arith.constant 0 : index
    %c0_236 = arith.constant 0 : index
    %290 = vector.load %arg7[%c1_234, %c0_235, %c0_236] : memref<2x256x8xf32, #tpu.memory_space<vmem>>, vector<1x256x8xf32>
    %291 = vector.shape_cast %290 : vector<1x256x8xf32> to vector<256x8xf32>
    %292 = vector.shape_cast %289 : vector<256x8xf32> to vector<1x256x8xf32>
    tpu.vector_store %arg7[%c1_234, %c0_235, %c0_236], %292 {strides = array<i32>} : memref<2x256x8xf32, #tpu.memory_space<vmem>>, vector<1x256x8xf32>,
    return
  }
  func.func @transform_0(%arg0: i32) -> (i32, i32, i32) {
    %c0_i32 = arith.constant 0 : i32
    %c0_i32_0 = arith.constant 0 : i32
    %c0_i32_1 = arith.constant 0 : i32
    return %arg0, %c0_i32, %c0_i32_0 : i32, i32, i32
  }
  func.func @transform_1(%arg0: i32) -> (i32, i32) {
    %c0_i32 = arith.constant 0 : i32
    %c0_i32_0 = arith.constant 0 : i32
    %c0_i32_1 = arith.constant 0 : i32
    return %c0_i32, %c0_i32_0 : i32, i32
  }
  func.func @transform_2(%arg0: i32) -> (i32, i32) {
    %c0_i32 = arith.constant 0 : i32
    %c0_i32_0 = arith.constant 0 : i32
    %c0_i32_1 = arith.constant 0 : i32
    return %c0_i32, %c0_i32_0 : i32, i32
  }
  func.func @transform_3(%arg0: i32) -> (i32, i32) {
    %c0_i32 = arith.constant 0 : i32
    %c0_i32_0 = arith.constant 0 : i32
    %c0_i32_1 = arith.constant 0 : i32
    return %c0_i32, %c0_i32_0 : i32, i32
  }
  func.func @transform_4(%arg0: i32) -> (i32, i32) {
    %c0_i32 = arith.constant 0 : i32
    %c0_i32_0 = arith.constant 0 : i32
    %c0_i32_1 = arith.constant 0 : i32
    return %c0_i32, %c0_i32_0 : i32, i32
  }
  func.func @transform_5(%arg0: i32) -> (i32, i32) {
    %c0_i32 = arith.constant 0 : i32
    %c0_i32_0 = arith.constant 0 : i32
    %c0_i32_1 = arith.constant 0 : i32
    return %c0_i32, %c0_i32_0 : i32, i32
  }
  func.func @transform_6(%arg0: i32) -> (i32, i32, i32) {
    %c0_i32 = arith.constant 0 : i32
    %c0_i32_0 = arith.constant 0 : i32
    %c0_i32_1 = arith.constant 0 : i32
    return %arg0, %c0_i32, %c0_i32_0 : i32, i32, i32
  }
}

</mosaic_0001>

<llo_original>
// kernel: basic_block_pallas.1
$region0: #{basic_block_pallas.1}
  #allocation0 [shape = 'u32[]', space=smem, size = 0x4, offset = 0x4, fixed_abs, tag = 'smem constant byte address 0x4 - core index']
  #allocation1 [shape = 'u32[144,128]{1,0:T(1,128)}', space=vmem, size = 0x12000, scoped, tag = 'internal scratch']
  #allocation2 [shape = 'f32[18,18,128]{2,1,0:T(8,128)}', space=vmem, size = 0x36000, scoped, tag = 'scratch operand']
  %s0 = inlined_call_operand.vmem [shape: f32[2,256,4], index: 0, kind: input, shape index: {}]
  %s1 = inlined_call_operand.vmem [shape: bf16[128,256], index: 1, kind: input, shape index: {}]
  %s2 = inlined_call_operand.vmem [shape: f32[1,128], index: 2, kind: input, shape index: {}]
  %s3 = inlined_call_operand.vmem [shape: bf16[128,128], index: 3, kind: input, shape index: {}]
  %s4 = inlined_call_operand.vmem [shape: f32[1,128], index: 4, kind: input, shape index: {}]
  %s5 = inlined_call_operand.vmem [shape: bf16[256,256], index: 5, kind: input, shape index: {}]
  %s6 = inlined_call_operand.vmem [shape: f32[2,256,8], index: 6, kind: output, shape index: {}]
  %s7 = sld [smem:[#allocation0]]
  $region34: #{basic_block_pallas.1} parent=0
    _
  %s9 = ssub.s32 1, %s7
  %s10 = scalar_select 0, %s9, %s7
  // Predicated region
  $region2: #{basic_block_pallas.1} parent=0 // pred_check
    _
  $region3: #{basic_block_pallas.1} parent=0 // pred_check_branch
    %12 = sbr.rel (0) target = $region5
  $region4: #{basic_block_pallas.1} parent=0 // pred_region
    _
  $region5: #{basic_block_pallas.1} parent=0 // pred_fallthru
    _
  // Predicated region
  $region6: #{basic_block_pallas.1} parent=0 // pred_check
    _
  $region7: #{basic_block_pallas.1} parent=0 // pred_check_branch
    %14 = sbr.rel (0) target = $region9
  $region8: #{basic_block_pallas.1} parent=0 // pred_region
    _
  $region9: #{basic_block_pallas.1} parent=0 // pred_fallthru
    _
  // Predicated region
  $region10: #{basic_block_pallas.1} parent=0 // pred_check
    _
  $region11: #{basic_block_pallas.1} parent=0 // pred_check_branch
    %16 = sbr.rel (0) target = $region13
  $region12: #{basic_block_pallas.1} parent=0 // pred_region
    _
  $region13: #{basic_block_pallas.1} parent=0 // pred_fallthru
    _
  // Predicated region
  $region14: #{basic_block_pallas.1} parent=0 // pred_check
    _
  $region15: #{basic_block_pallas.1} parent=0 // pred_check_branch
    %18 = sbr.rel (0) target = $region17
  $region16: #{basic_block_pallas.1} parent=0 // pred_region
    _
  $region17: #{basic_block_pallas.1} parent=0 // pred_fallthru
    _
  // Predicated region
  $region18: #{basic_block_pallas.1} parent=0 // pred_check
    _
  $region19: #{basic_block_pallas.1} parent=0 // pred_check_branch
    %20 = sbr.rel (0) target = $region21
  $region20: #{basic_block_pallas.1} parent=0 // pred_region
    _
  $region21: #{basic_block_pallas.1} parent=0 // pred_fallthru
    _
  // Predicated region
  $region22: #{basic_block_pallas.1} parent=0 // pred_check
    _
  $region23: #{basic_block_pallas.1} parent=0 // pred_check_branch
    %22 = sbr.rel (0) target = $region25
  $region24: #{basic_block_pallas.1} parent=0 // pred_region
    _
  $region25: #{basic_block_pallas.1} parent=0 // pred_fallthru
    _
  %24 = vst [vmem:[#allocation2] sm:$0xff] 0.0
  %25 = vst [vmem:[#allocation2 + $0x8] sm:$0xff] 0.0
  %26 = vst [vmem:[#allocation2 + $0x10] sm:$0x3] 0.0
  %s27 = scalar_lea.vmem [#allocation2], 408
  %28 = vst [vmem:[%s27] sm:$0xff] 0.0
  %29 = vst [vmem:[%s27 + $0x8] sm:$0xff] 0.0
  %30 = vst [vmem:[%s27 + $0x10] sm:$0x3] 0.0
  %s31 = scalar_lea.vmem [#allocation2], 24
  %32 = vst [vmem:[%s31] sm:$0x1] 0.0
  %33 = vst [vmem:[%s31 + $0x18] sm:$0x1] 0.0
  %34 = vst [vmem:[%s31 + $0x30] sm:$0x1] 0.0
  %35 = vst [vmem:[%s31 + $0x48] sm:$0x1] 0.0
  %36 = vst [vmem:[%s31 + $0x60] sm:$0x1] 0.0
  %37 = vst [vmem:[%s31 + $0x78] sm:$0x1] 0.0
  %38 = vst [vmem:[%s31 + $0x90] sm:$0x1] 0.0
  %39 = vst [vmem:[%s31 + $0xa8] sm:$0x1] 0.0
  %40 = vst [vmem:[%s31 + $0xc0] sm:$0x1] 0.0
  %41 = vst [vmem:[%s31 + $0xd8] sm:$0x1] 0.0
  %42 = vst [vmem:[%s31 + $0xf0] sm:$0x1] 0.0
  %43 = vst [vmem:[%s31 + $0x108] sm:$0x1] 0.0
  %44 = vst [vmem:[%s31 + $0x120] sm:$0x1] 0.0
  %45 = vst [vmem:[%s31 + $0x138] sm:$0x1] 0.0
  %46 = vst [vmem:[%s31 + $0x150] sm:$0x1] 0.0
  %47 = vst [vmem:[%s31 + $0x168] sm:$0x1] 0.0
  %48 = vst [vmem:[%s31 + $0x11] sm:$0x1] 0.0
  %49 = vst [vmem:[%s31 + $0x29] sm:$0x1] 0.0
  %50 = vst [vmem:[%s31 + $0x41] sm:$0x1] 0.0
  %51 = vst [vmem:[%s31 + $0x59] sm:$0x1] 0.0
  %52 = vst [vmem:[%s31 + $0x71] sm:$0x1] 0.0
  %53 = vst [vmem:[%s31 + $0x89] sm:$0x1] 0.0
  %54 = vst [vmem:[%s31 + $0xa1] sm:$0x1] 0.0
  %55 = vst [vmem:[%s31 + $0xb9] sm:$0x1] 0.0
  %56 = vst [vmem:[%s31 + $0xd1] sm:$0x1] 0.0
  %57 = vst [vmem:[%s31 + $0xe9] sm:$0x1] 0.0
  %58 = vst [vmem:[%s31 + $0x101] sm:$0x1] 0.0
  %59 = vst [vmem:[%s31 + $0x119] sm:$0x1] 0.0
  %60 = vst [vmem:[%s31 + $0x131] sm:$0x1] 0.0
  %61 = vst [vmem:[%s31 + $0x149] sm:$0x1] 0.0
  %62 = vst [vmem:[%s31 + $0x161] sm:$0x1] 0.0
  %63 = vst [vmem:[%s31 + $0x179] sm:$0x1] 0.0
  %v64 = vlaneseq
  %v65 = vand.u32 %v64, 127
  %v66 = vld [vmem:[%s0] sm:$0xff]
  %v67 = vld [vmem:[%s0 + $0x8] sm:$0xff]
  %v68 = vld [vmem:[%s0 + $0x10] sm:$0xff]
  %v69 = vld [vmem:[%s0 + $0x18] sm:$0xff]
  %v70 = vld [vmem:[%s0 + $0x20] sm:$0xff]
  %v71 = vld [vmem:[%s0 + $0x28] sm:$0xff]
  %v72 = vld [vmem:[%s0 + $0x30] sm:$0xff]
  %v73 = vld [vmem:[%s0 + $0x38] sm:$0xff]
  %v74 = vld [vmem:[%s0 + $0x40] sm:$0xff]
  %v75 = vld [vmem:[%s0 + $0x48] sm:$0xff]
  %v76 = vld [vmem:[%s0 + $0x50] sm:$0xff]
  %v77 = vld [vmem:[%s0 + $0x58] sm:$0xff]
  %v78 = vld [vmem:[%s0 + $0x60] sm:$0xff]
  %v79 = vld [vmem:[%s0 + $0x68] sm:$0xff]
  %v80 = vld [vmem:[%s0 + $0x70] sm:$0xff]
  %v81 = vld [vmem:[%s0 + $0x78] sm:$0xff]
  %v82 = vld [vmem:[%s0 + $0x80] sm:$0xff]
  %v83 = vld [vmem:[%s0 + $0x88] sm:$0xff]
  %v84 = vld [vmem:[%s0 + $0x90] sm:$0xff]
  %v85 = vld [vmem:[%s0 + $0x98] sm:$0xff]
  %v86 = vld [vmem:[%s0 + $0xa0] sm:$0xff]
  %v87 = vld [vmem:[%s0 + $0xa8] sm:$0xff]
  %v88 = vld [vmem:[%s0 + $0xb0] sm:$0xff]
  %v89 = vld [vmem:[%s0 + $0xb8] sm:$0xff]
  %v90 = vld [vmem:[%s0 + $0xc0] sm:$0xff]
  %v91 = vld [vmem:[%s0 + $0xc8] sm:$0xff]
  %v92 = vld [vmem:[%s0 + $0xd0] sm:$0xff]
  %v93 = vld [vmem:[%s0 + $0xd8] sm:$0xff]
  %v94 = vld [vmem:[%s0 + $0xe0] sm:$0xff]
  %v95 = vld [vmem:[%s0 + $0xe8] sm:$0xff]
  %v96 = vld [vmem:[%s0 + $0xf0] sm:$0xff]
  %v97 = vld [vmem:[%s0 + $0xf8] sm:$0xff]
  %vm98 = vcmask 31744
  %99 = vst.msk [vmem:[%s31 + $0x1] sm:$0xff] %vm98, %v66
  %100 = vst.msk [vmem:[%s31 + $0x9] sm:$0xff] %vm98, %v67
  %101 = vst.msk [vmem:[%s31 + $0x19] sm:$0xff] %vm98, %v68
  %102 = vst.msk [vmem:[%s31 + $0x21] sm:$0xff] %vm98, %v69
  %103 = vst.msk [vmem:[%s31 + $0x31] sm:$0xff] %vm98, %v70
  %104 = vst.msk [vmem:[%s31 + $0x39] sm:$0xff] %vm98, %v71
  %105 = vst.msk [vmem:[%s31 + $0x49] sm:$0xff] %vm98, %v72
  %106 = vst.msk [vmem:[%s31 + $0x51] sm:$0xff] %vm98, %v73
  %107 = vst.msk [vmem:[%s31 + $0x61] sm:$0xff] %vm98, %v74
  %108 = vst.msk [vmem:[%s31 + $0x69] sm:$0xff] %vm98, %v75
  %109 = vst.msk [vmem:[%s31 + $0x79] sm:$0xff] %vm98, %v76
  %110 = vst.msk [vmem:[%s31 + $0x81] sm:$0xff] %vm98, %v77
  %111 = vst.msk [vmem:[%s31 + $0x91] sm:$0xff] %vm98, %v78
  %112 = vst.msk [vmem:[%s31 + $0x99] sm:$0xff] %vm98, %v79
  %113 = vst.msk [vmem:[%s31 + $0xa9] sm:$0xff] %vm98, %v80
  %114 = vst.msk [vmem:[%s31 + $0xb1] sm:$0xff] %vm98, %v81
  %115 = vst.msk [vmem:[%s31 + $0xc1] sm:$0xff] %vm98, %v82
  %116 = vst.msk [vmem:[%s31 + $0xc9] sm:$0xff] %vm98, %v83
  %117 = vst.msk [vmem:[%s31 + $0xd9] sm:$0xff] %vm98, %v84
  %118 = vst.msk [vmem:[%s31 + $0xe1] sm:$0xff] %vm98, %v85
  %119 = vst.msk [vmem:[%s31 + $0xf1] sm:$0xff] %vm98, %v86
  %120 = vst.msk [vmem:[%s31 + $0xf9] sm:$0xff] %vm98, %v87
  %121 = vst.msk [vmem:[%s31 + $0x109] sm:$0xff] %vm98, %v88
  %122 = vst.msk [vmem:[%s31 + $0x111] sm:$0xff] %vm98, %v89
  %123 = vst.msk [vmem:[%s31 + $0x121] sm:$0xff] %vm98, %v90
  %124 = vst.msk [vmem:[%s31 + $0x129] sm:$0xff] %vm98, %v91
  %125 = vst.msk [vmem:[%s31 + $0x139] sm:$0xff] %vm98, %v92
  %126 = vst.msk [vmem:[%s31 + $0x141] sm:$0xff] %vm98, %v93
  %127 = vst.msk [vmem:[%s31 + $0x151] sm:$0xff] %vm98, %v94
  %128 = vst.msk [vmem:[%s31 + $0x159] sm:$0xff] %vm98, %v95
  %129 = vst.msk [vmem:[%s31 + $0x169] sm:$0xff] %vm98, %v96
  %130 = vst.msk [vmem:[%s31 + $0x171] sm:$0xff] %vm98, %v97
  %vm131 = vcmp.lt.s32.totalorder %v65, 4
  %v132 = vld [vmem:[#allocation2] sm:$0xff]
  %v133 = vld [vmem:[#allocation2 + $0x8] sm:$0xff]
  %v134 = vld [vmem:[#allocation2 + $0x18] sm:$0xff]
  %v135 = vld [vmem:[#allocation2 + $0x20] sm:$0xff]
  %v136 = vld [vmem:[#allocation2 + $0x30] sm:$0xff]
  %v137 = vld [vmem:[#allocation2 + $0x38] sm:$0xff]
  %v138 = vld [vmem:[#allocation2 + $0x48] sm:$0xff]
  %v139 = vld [vmem:[#allocation2 + $0x50] sm:$0xff]
  %v140 = vld [vmem:[#allocation2 + $0x60] sm:$0xff]
  %v141 = vld [vmem:[#allocation2 + $0x68] sm:$0xff]
  %v142 = vld [vmem:[#allocation2 + $0x78] sm:$0xff]
  %v143 = vld [vmem:[#allocation2 + $0x80] sm:$0xff]
  %v144 = vld [vmem:[#allocation2 + $0x90] sm:$0xff]
  %v145 = vld [vmem:[#allocation2 + $0x98] sm:$0xff]
  %v146 = vld [vmem:[#allocation2 + $0xa8] sm:$0xff]
  %v147 = vld [vmem:[#allocation2 + $0xb0] sm:$0xff]
  %v148 = vld [vmem:[#allocation2 + $0xc0] sm:$0xff]
  %v149 = vld [vmem:[#allocation2 + $0xc8] sm:$0xff]
  %v150 = vld [vmem:[#allocation2 + $0xd8] sm:$0xff]
  %v151 = vld [vmem:[#allocation2 + $0xe0] sm:$0xff]
  %v152 = vld [vmem:[#allocation2 + $0xf0] sm:$0xff]
  %v153 = vld [vmem:[#allocation2 + $0xf8] sm:$0xff]
  %v154 = vld [vmem:[#allocation2 + $0x108] sm:$0xff]
  %v155 = vld [vmem:[#allocation2 + $0x110] sm:$0xff]
  %v156 = vld [vmem:[#allocation2 + $0x120] sm:$0xff]
  %v157 = vld [vmem:[#allocation2 + $0x128] sm:$0xff]
  %v158 = vld [vmem:[#allocation2 + $0x138] sm:$0xff]
  %v159 = vld [vmem:[#allocation2 + $0x140] sm:$0xff]
  %v160 = vld [vmem:[#allocation2 + $0x150] sm:$0xff]
  %v161 = vld [vmem:[#allocation2 + $0x158] sm:$0xff]
  %v162 = vld [vmem:[#allocation2 + $0x168] sm:$0xff]
  %v163 = vld [vmem:[#allocation2 + $0x170] sm:$0xff]
  %v164 = vsel %vm131, %v132, 0.0
  %v165 = vsel %vm131, %v133, 0.0
  %v166 = vsel %vm131, %v134, 0.0
  %v167 = vsel %vm131, %v135, 0.0
  %v168 = vsel %vm131, %v136, 0.0
  %v169 = vsel %vm131, %v137, 0.0
  %v170 = vsel %vm131, %v138, 0.0
  %v171 = vsel %vm131, %v139, 0.0
  %v172 = vsel %vm131, %v140, 0.0
  %v173 = vsel %vm131, %v141, 0.0
  %v174 = vsel %vm131, %v142, 0.0
  %v175 = vsel %vm131, %v143, 0.0
  %v176 = vsel %vm131, %v144, 0.0
  %v177 = vsel %vm131, %v145, 0.0
  %v178 = vsel %vm131, %v146, 0.0
  %v179 = vsel %vm131, %v147, 0.0
  %v180 = vsel %vm131, %v148, 0.0
  %v181 = vsel %vm131, %v149, 0.0
  %v182 = vsel %vm131, %v150, 0.0
  %v183 = vsel %vm131, %v151, 0.0
  %v184 = vsel %vm131, %v152, 0.0
  %v185 = vsel %vm131, %v153, 0.0
  %v186 = vsel %vm131, %v154, 0.0
  %v187 = vsel %vm131, %v155, 0.0
  %v188 = vsel %vm131, %v156, 0.0
  %v189 = vsel %vm131, %v157, 0.0
  %v190 = vsel %vm131, %v158, 0.0
  %v191 = vsel %vm131, %v159, 0.0
  %v192 = vsel %vm131, %v160, 0.0
  %v193 = vsel %vm131, %v161, 0.0
  %v194 = vsel %vm131, %v162, 0.0
  %v195 = vsel %vm131, %v163, 0.0
  %v196 = vld [vmem:[#allocation2 + $0x1] sm:$0xff]
  %v197 = vld [vmem:[#allocation2 + $0x9] sm:$0xff]
  %v198 = vld [vmem:[#allocation2 + $0x19] sm:$0xff]
  %v199 = vld [vmem:[#allocation2 + $0x21] sm:$0xff]
  %v200 = vld [vmem:[#allocation2 + $0x31] sm:$0xff]
  %v201 = vld [vmem:[#allocation2 + $0x39] sm:$0xff]
  %v202 = vld [vmem:[#allocation2 + $0x49] sm:$0xff]
  %v203 = vld [vmem:[#allocation2 + $0x51] sm:$0xff]
  %v204 = vld [vmem:[#allocation2 + $0x61] sm:$0xff]
  %v205 = vld [vmem:[#allocation2 + $0x69] sm:$0xff]
  %v206 = vld [vmem:[#allocation2 + $0x79] sm:$0xff]
  %v207 = vld [vmem:[#allocation2 + $0x81] sm:$0xff]
  %v208 = vld [vmem:[#allocation2 + $0x91] sm:$0xff]
  %v209 = vld [vmem:[#allocation2 + $0x99] sm:$0xff]
  %v210 = vld [vmem:[#allocation2 + $0xa9] sm:$0xff]
  %v211 = vld [vmem:[#allocation2 + $0xb1] sm:$0xff]
  %v212 = vld [vmem:[#allocation2 + $0xc1] sm:$0xff]
  %v213 = vld [vmem:[#allocation2 + $0xc9] sm:$0xff]
  %v214 = vld [vmem:[#allocation2 + $0xd9] sm:$0xff]
  %v215 = vld [vmem:[#allocation2 + $0xe1] sm:$0xff]
  %v216 = vld [vmem:[#allocation2 + $0xf1] sm:$0xff]
  %v217 = vld [vmem:[#allocation2 + $0xf9] sm:$0xff]
  %v218 = vld [vmem:[#allocation2 + $0x109] sm:$0xff]
  %v219 = vld [vmem:[#allocation2 + $0x111] sm:$0xff]
  %v220 = vld [vmem:[#allocation2 + $0x121] sm:$0xff]
  %v221 = vld [vmem:[#allocation2 + $0x129] sm:$0xff]
  %v222 = vld [vmem:[#allocation2 + $0x139] sm:$0xff]
  %v223 = vld [vmem:[#allocation2 + $0x141] sm:$0xff]
  %v224 = vld [vmem:[#allocation2 + $0x151] sm:$0xff]
  %v225 = vld [vmem:[#allocation2 + $0x159] sm:$0xff]
  %v226 = vld [vmem:[#allocation2 + $0x169] sm:$0xff]
  %v227 = vld [vmem:[#allocation2 + $0x171] sm:$0xff]
  %v228 = vsel %vm131, %v196, 0.0
  %v229 = vsel %vm131, %v197, 0.0
  %v230 = vsel %vm131, %v198, 0.0
  %v231 = vsel %vm131, %v199, 0.0
  %v232 = vsel %vm131, %v200, 0.0
  %v233 = vsel %vm131, %v201, 0.0
  %v234 = vsel %vm131, %v202, 0.0
  %v235 = vsel %vm131, %v203, 0.0
  %v236 = vsel %vm131, %v204, 0.0
  %v237 = vsel %vm131, %v205, 0.0
  %v238 = vsel %vm131, %v206, 0.0
  %v239 = vsel %vm131, %v207, 0.0
  %v240 = vsel %vm131, %v208, 0.0
  %v241 = vsel %vm131, %v209, 0.0
  %v242 = vsel %vm131, %v210, 0.0
  %v243 = vsel %vm131, %v211, 0.0
  %v244 = vsel %vm131, %v212, 0.0
  %v245 = vsel %vm131, %v213, 0.0
  %v246 = vsel %vm131, %v214, 0.0
  %v247 = vsel %vm131, %v215, 0.0
  %v248 = vsel %vm131, %v216, 0.0
  %v249 = vsel %vm131, %v217, 0.0
  %v250 = vsel %vm131, %v218, 0.0
  %v251 = vsel %vm131, %v219, 0.0
  %v252 = vsel %vm131, %v220, 0.0
  %v253 = vsel %vm131, %v221, 0.0
  %v254 = vsel %vm131, %v222, 0.0
  %v255 = vsel %vm131, %v223, 0.0
  %v256 = vsel %vm131, %v224, 0.0
  %v257 = vsel %vm131, %v225, 0.0
  %v258 = vsel %vm131, %v226, 0.0
  %v259 = vsel %vm131, %v227, 0.0
  %260 = vrot.lane.b32.xlu0 %v228, 4
  %v261 = vpop.permute.xlu0 %260
  %262 = vrot.lane.b32.xlu0 %v229, 4
  %v263 = vpop.permute.xlu0 %262
  %264 = vrot.lane.b32.xlu0 %v230, 4
  %v265 = vpop.permute.xlu0 %264
  %266 = vrot.lane.b32.xlu0 %v231, 4
  %v267 = vpop.permute.xlu0 %266
  %268 = vrot.lane.b32.xlu0 %v232, 4
  %v269 = vpop.permute.xlu0 %268
  %270 = vrot.lane.b32.xlu0 %v233, 4
  %v271 = vpop.permute.xlu0 %270
  %272 = vrot.lane.b32.xlu0 %v234, 4
  %v273 = vpop.permute.xlu0 %272
  %274 = vrot.lane.b32.xlu0 %v235, 4
  %v275 = vpop.permute.xlu0 %274
  %276 = vrot.lane.b32.xlu0 %v236, 4
  %v277 = vpop.permute.xlu0 %276
  %278 = vrot.lane.b32.xlu0 %v237, 4
  %v279 = vpop.permute.xlu0 %278
  %280 = vrot.lane.b32.xlu0 %v238, 4
  %v281 = vpop.permute.xlu0 %280
  %282 = vrot.lane.b32.xlu0 %v239, 4
  %v283 = vpop.permute.xlu0 %282
  %284 = vrot.lane.b32.xlu0 %v240, 4
  %v285 = vpop.permute.xlu0 %284
  %286 = vrot.lane.b32.xlu0 %v241, 4
  %v287 = vpop.permute.xlu0 %286
  %288 = vrot.lane.b32.xlu0 %v242, 4
  %v289 = vpop.permute.xlu0 %288
  %290 = vrot.lane.b32.xlu0 %v243, 4
  %v291 = vpop.permute.xlu0 %290
  %292 = vrot.lane.b32.xlu0 %v244, 4
  %v293 = vpop.permute.xlu0 %292
  %294 = vrot.lane.b32.xlu0 %v245, 4
  %v295 = vpop.permute.xlu0 %294
  %296 = vrot.lane.b32.xlu0 %v246, 4
  %v297 = vpop.permute.xlu0 %296
  %298 = vrot.lane.b32.xlu0 %v247, 4
  %v299 = vpop.permute.xlu0 %298
  %300 = vrot.lane.b32.xlu0 %v248, 4
  %v301 = vpop.permute.xlu0 %300
  %302 = vrot.lane.b32.xlu0 %v249, 4
  %v303 = vpop.permute.xlu0 %302
  %304 = vrot.lane.b32.xlu0 %v250, 4
  %v305 = vpop.permute.xlu0 %304
  %306 = vrot.lane.b32.xlu0 %v251, 4
  %v307 = vpop.permute.xlu0 %306
  %308 = vrot.lane.b32.xlu0 %v252, 4
  %v309 = vpop.permute.xlu0 %308
  %310 = vrot.lane.b32.xlu0 %v253, 4
  %v311 = vpop.permute.xlu0 %310
  %312 = vrot.lane.b32.xlu0 %v254, 4
  %v313 = vpop.permute.xlu0 %312
  %314 = vrot.lane.b32.xlu0 %v255, 4
  %v315 = vpop.permute.xlu0 %314
  %316 = vrot.lane.b32.xlu0 %v256, 4
  %v317 = vpop.permute.xlu0 %316
  %318 = vrot.lane.b32.xlu0 %v257, 4
  %v319 = vpop.permute.xlu0 %318
  %320 = vrot.lane.b32.xlu0 %v258, 4
  %v321 = vpop.permute.xlu0 %320
  %322 = vrot.lane.b32.xlu0 %v259, 4
  %v323 = vpop.permute.xlu0 %322
  %v324 = vadd.f32 %v164, %v261
  %v325 = vadd.f32 %v165, %v263
  %v326 = vadd.f32 %v166, %v265
  %v327 = vadd.f32 %v167, %v267
  %v328 = vadd.f32 %v168, %v269
  %v329 = vadd.f32 %v169, %v271
  %v330 = vadd.f32 %v170, %v273
  %v331 = vadd.f32 %v171, %v275
  %v332 = vadd.f32 %v172, %v277
  %v333 = vadd.f32 %v173, %v279
  %v334 = vadd.f32 %v174, %v281
  %v335 = vadd.f32 %v175, %v283
  %v336 = vadd.f32 %v176, %v285
  %v337 = vadd.f32 %v177, %v287
  %v338 = vadd.f32 %v178, %v289
  %v339 = vadd.f32 %v179, %v291
  %v340 = vadd.f32 %v180, %v293
  %v341 = vadd.f32 %v181, %v295
  %v342 = vadd.f32 %v182, %v297
  %v343 = vadd.f32 %v183, %v299
  %v344 = vadd.f32 %v184, %v301
  %v345 = vadd.f32 %v185, %v303
  %v346 = vadd.f32 %v186, %v305
  %v347 = vadd.f32 %v187, %v307
  %v348 = vadd.f32 %v188, %v309
  %v349 = vadd.f32 %v189, %v311
  %v350 = vadd.f32 %v190, %v313
  %v351 = vadd.f32 %v191, %v315
  %v352 = vadd.f32 %v192, %v317
  %v353 = vadd.f32 %v193, %v319
  %v354 = vadd.f32 %v194, %v321
  %v355 = vadd.f32 %v195, %v323
  %v356 = vld [vmem:[#allocation2 + $0x2] sm:$0xff]
  %v357 = vld [vmem:[#allocation2 + $0xa] sm:$0xff]
  %v358 = vld [vmem:[#allocation2 + $0x1a] sm:$0xff]
  %v359 = vld [vmem:[#allocation2 + $0x22] sm:$0xff]
  %v360 = vld [vmem:[#allocation2 + $0x32] sm:$0xff]
  %v361 = vld [vmem:[#allocation2 + $0x3a] sm:$0xff]
  %v362 = vld [vmem:[#allocation2 + $0x4a] sm:$0xff]
  %v363 = vld [vmem:[#allocation2 + $0x52] sm:$0xff]
  %v364 = vld [vmem:[#allocation2 + $0x62] sm:$0xff]
  %v365 = vld [vmem:[#allocation2 + $0x6a] sm:$0xff]
  %v366 = vld [vmem:[#allocation2 + $0x7a] sm:$0xff]
  %v367 = vld [vmem:[#allocation2 + $0x82] sm:$0xff]
  %v368 = vld [vmem:[#allocation2 + $0x92] sm:$0xff]
  %v369 = vld [vmem:[#allocation2 + $0x9a] sm:$0xff]
  %v370 = vld [vmem:[#allocation2 + $0xaa] sm:$0xff]
  %v371 = vld [vmem:[#allocation2 + $0xb2] sm:$0xff]
  %v372 = vld [vmem:[#allocation2 + $0xc2] sm:$0xff]
  %v373 = vld [vmem:[#allocation2 + $0xca] sm:$0xff]
  %v374 = vld [vmem:[#allocation2 + $0xda] sm:$0xff]
  %v375 = vld [vmem:[#allocation2 + $0xe2] sm:$0xff]
  %v376 = vld [vmem:[#allocation2 + $0xf2] sm:$0xff]
  %v377 = vld [vmem:[#allocation2 + $0xfa] sm:$0xff]
  %v378 = vld [vmem:[#allocation2 + $0x10a] sm:$0xff]
  %v379 = vld [vmem:[#allocation2 + $0x112] sm:$0xff]
  %v380 = vld [vmem:[#allocation2 + $0x122] sm:$0xff]
  %v381 = vld [vmem:[#allocation2 + $0x12a] sm:$0xff]
  %v382 = vld [vmem:[#allocation2 + $0x13a] sm:$0xff]
  %v383 = vld [vmem:[#allocation2 + $0x142] sm:$0xff]
  %v384 = vld [vmem:[#allocation2 + $0x152] sm:$0xff]
  %v385 = vld [vmem:[#allocation2 + $0x15a] sm:$0xff]
  %v386 = vld [vmem:[#allocation2 + $0x16a] sm:$0xff]
  %v387 = vld [vmem:[#allocation2 + $0x172] sm:$0xff]
  %v388 = vsel %vm131, %v356, 0.0
  %v389 = vsel %vm131, %v357, 0.0
  %v390 = vsel %vm131, %v358, 0.0
  %v391 = vsel %vm131, %v359, 0.0
  %v392 = vsel %vm131, %v360, 0.0
  %v393 = vsel %vm131, %v361, 0.0
  %v394 = vsel %vm131, %v362, 0.0
  %v395 = vsel %vm131, %v363, 0.0
  %v396 = vsel %vm131, %v364, 0.0
  %v397 = vsel %vm131, %v365, 0.0
  %v398 = vsel %vm131, %v366, 0.0
  %v399 = vsel %vm131, %v367, 0.0
  %v400 = vsel %vm131, %v368, 0.0
  %v401 = vsel %vm131, %v369, 0.0
  %v402 = vsel %vm131, %v370, 0.0
  %v403 = vsel %vm131, %v371, 0.0
  %v404 = vsel %vm131, %v372, 0.0
  %v405 = vsel %vm131, %v373, 0.0
  %v406 = vsel %vm131, %v374, 0.0
  %v407 = vsel %vm131, %v375, 0.0
  %v408 = vsel %vm131, %v376, 0.0
  %v409 = vsel %vm131, %v377, 0.0
  %v410 = vsel %vm131, %v378, 0.0
  %v411 = vsel %vm131, %v379, 0.0
  %v412 = vsel %vm131, %v380, 0.0
  %v413 = vsel %vm131, %v381, 0.0
  %v414 = vsel %vm131, %v382, 0.0
  %v415 = vsel %vm131, %v383, 0.0
  %v416 = vsel %vm131, %v384, 0.0
  %v417 = vsel %vm131, %v385, 0.0
  %v418 = vsel %vm131, %v386, 0.0
  %v419 = vsel %vm131, %v387, 0.0
  %420 = vrot.lane.b32.xlu0 %v388, 8
  %v421 = vpop.permute.xlu0 %420
  %422 = vrot.lane.b32.xlu0 %v389, 8
  %v423 = vpop.permute.xlu0 %422
  %424 = vrot.lane.b32.xlu0 %v390, 8
  %v425 = vpop.permute.xlu0 %424
  %426 = vrot.lane.b32.xlu0 %v391, 8
  %v427 = vpop.permute.xlu0 %426
  %428 = vrot.lane.b32.xlu0 %v392, 8
  %v429 = vpop.permute.xlu0 %428
  %430 = vrot.lane.b32.xlu0 %v393, 8
  %v431 = vpop.permute.xlu0 %430
  %432 = vrot.lane.b32.xlu0 %v394, 8
  %v433 = vpop.permute.xlu0 %432
  %434 = vrot.lane.b32.xlu0 %v395, 8
  %v435 = vpop.permute.xlu0 %434
  %436 = vrot.lane.b32.xlu0 %v396, 8
  %v437 = vpop.permute.xlu0 %436
  %438 = vrot.lane.b32.xlu0 %v397, 8
  %v439 = vpop.permute.xlu0 %438
  %440 = vrot.lane.b32.xlu0 %v398, 8
  %v441 = vpop.permute.xlu0 %440
  %442 = vrot.lane.b32.xlu0 %v399, 8
  %v443 = vpop.permute.xlu0 %442
  %444 = vrot.lane.b32.xlu0 %v400, 8
  %v445 = vpop.permute.xlu0 %444
  %446 = vrot.lane.b32.xlu0 %v401, 8
  %v447 = vpop.permute.xlu0 %446
  %448 = vrot.lane.b32.xlu0 %v402, 8
  %v449 = vpop.permute.xlu0 %448
  %450 = vrot.lane.b32.xlu0 %v403, 8
  %v451 = vpop.permute.xlu0 %450
  %452 = vrot.lane.b32.xlu0 %v404, 8
  %v453 = vpop.permute.xlu0 %452
  %454 = vrot.lane.b32.xlu0 %v405, 8
  %v455 = vpop.permute.xlu0 %454
  %456 = vrot.lane.b32.xlu0 %v406, 8
  %v457 = vpop.permute.xlu0 %456
  %458 = vrot.lane.b32.xlu0 %v407, 8
  %v459 = vpop.permute.xlu0 %458
  %460 = vrot.lane.b32.xlu0 %v408, 8
  %v461 = vpop.permute.xlu0 %460
  %462 = vrot.lane.b32.xlu0 %v409, 8
  %v463 = vpop.permute.xlu0 %462
  %464 = vrot.lane.b32.xlu0 %v410, 8
  %v465 = vpop.permute.xlu0 %464
  %466 = vrot.lane.b32.xlu0 %v411, 8
  %v467 = vpop.permute.xlu0 %466
  %468 = vrot.lane.b32.xlu0 %v412, 8
  %v469 = vpop.permute.xlu0 %468
  %470 = vrot.lane.b32.xlu0 %v413, 8
  %v471 = vpop.permute.xlu0 %470
  %472 = vrot.lane.b32.xlu0 %v414, 8
  %v473 = vpop.permute.xlu0 %472
  %474 = vrot.lane.b32.xlu0 %v415, 8
  %v475 = vpop.permute.xlu0 %474
  %476 = vrot.lane.b32.xlu0 %v416, 8
  %v477 = vpop.permute.xlu0 %476
  %478 = vrot.lane.b32.xlu0 %v417, 8
  %v479 = vpop.permute.xlu0 %478
  %480 = vrot.lane.b32.xlu0 %v418, 8
  %v481 = vpop.permute.xlu0 %480
  %482 = vrot.lane.b32.xlu0 %v419, 8
  %v483 = vpop.permute.xlu0 %482
  %v484 = vadd.f32 %v324, %v421
  %v485 = vadd.f32 %v325, %v423
  %v486 = vadd.f32 %v326, %v425
  %v487 = vadd.f32 %v327, %v427
  %v488 = vadd.f32 %v328, %v429
  %v489 = vadd.f32 %v329, %v431
  %v490 = vadd.f32 %v330, %v433
  %v491 = vadd.f32 %v331, %v435
  %v492 = vadd.f32 %v332, %v437
  %v493 = vadd.f32 %v333, %v439
  %v494 = vadd.f32 %v334, %v441
  %v495 = vadd.f32 %v335, %v443
  %v496 = vadd.f32 %v336, %v445
  %v497 = vadd.f32 %v337, %v447
  %v498 = vadd.f32 %v338, %v449
  %v499 = vadd.f32 %v339, %v451
  %v500 = vadd.f32 %v340, %v453
  %v501 = vadd.f32 %v341, %v455
  %v502 = vadd.f32 %v342, %v457
  %v503 = vadd.f32 %v343, %v459
  %v504 = vadd.f32 %v344, %v461
  %v505 = vadd.f32 %v345, %v463
  %v506 = vadd.f32 %v346, %v465
  %v507 = vadd.f32 %v347, %v467
  %v508 = vadd.f32 %v348, %v469
  %v509 = vadd.f32 %v349, %v471
  %v510 = vadd.f32 %v350, %v473
  %v511 = vadd.f32 %v351, %v475
  %v512 = vadd.f32 %v352, %v477
  %v513 = vadd.f32 %v353, %v479
  %v514 = vadd.f32 %v354, %v481
  %v515 = vadd.f32 %v355, %v483
  %v516 = vld [vmem:[%s31] sm:$0xff]
  %v517 = vld [vmem:[%s31 + $0x8] sm:$0xff]
  %v518 = vld [vmem:[%s31 + $0x18] sm:$0xff]
  %v519 = vld [vmem:[%s31 + $0x20] sm:$0xff]
  %v520 = vld [vmem:[%s31 + $0x30] sm:$0xff]
  %v521 = vld [vmem:[%s31 + $0x38] sm:$0xff]
  %v522 = vld [vmem:[%s31 + $0x48] sm:$0xff]
  %v523 = vld [vmem:[%s31 + $0x50] sm:$0xff]
  %v524 = vld [vmem:[%s31 + $0x60] sm:$0xff]
  %v525 = vld [vmem:[%s31 + $0x68] sm:$0xff]
  %v526 = vld [vmem:[%s31 + $0x78] sm:$0xff]
  %v527 = vld [vmem:[%s31 + $0x80] sm:$0xff]
  %v528 = vld [vmem:[%s31 + $0x90] sm:$0xff]
  %v529 = vld [vmem:[%s31 + $0x98] sm:$0xff]
  %v530 = vld [vmem:[%s31 + $0xa8] sm:$0xff]
  %v531 = vld [vmem:[%s31 + $0xb0] sm:$0xff]
  %v532 = vld [vmem:[%s31 + $0xc0] sm:$0xff]
  %v533 = vld [vmem:[%s31 + $0xc8] sm:$0xff]
  %v534 = vld [vmem:[%s31 + $0xd8] sm:$0xff]
  %v535 = vld [vmem:[%s31 + $0xe0] sm:$0xff]
  %v536 = vld [vmem:[%s31 + $0xf0] sm:$0xff]
  %v537 = vld [vmem:[%s31 + $0xf8] sm:$0xff]
  %v538 = vld [vmem:[%s31 + $0x108] sm:$0xff]
  %v539 = vld [vmem:[%s31 + $0x110] sm:$0xff]
  %v540 = vld [vmem:[%s31 + $0x120] sm:$0xff]
  %v541 = vld [vmem:[%s31 + $0x128] sm:$0xff]
  %v542 = vld [vmem:[%s31 + $0x138] sm:$0xff]
  %v543 = vld [vmem:[%s31 + $0x140] sm:$0xff]
  %v544 = vld [vmem:[%s31 + $0x150] sm:$0xff]
  %v545 = vld [vmem:[%s31 + $0x158] sm:$0xff]
  %v546 = vld [vmem:[%s31 + $0x168] sm:$0xff]
  %v547 = vld [vmem:[%s31 + $0x170] sm:$0xff]
  %v548 = vsel %vm131, %v516, 0.0
  %v549 = vsel %vm131, %v517, 0.0
  %v550 = vsel %vm131, %v518, 0.0
  %v551 = vsel %vm131, %v519, 0.0
  %v552 = vsel %vm131, %v520, 0.0
  %v553 = vsel %vm131, %v521, 0.0
  %v554 = vsel %vm131, %v522, 0.0
  %v555 = vsel %vm131, %v523, 0.0
  %v556 = vsel %vm131, %v524, 0.0
  %v557 = vsel %vm131, %v525, 0.0
  %v558 = vsel %vm131, %v526, 0.0
  %v559 = vsel %vm131, %v527, 0.0
  %v560 = vsel %vm131, %v528, 0.0
  %v561 = vsel %vm131, %v529, 0.0
  %v562 = vsel %vm131, %v530, 0.0
  %v563 = vsel %vm131, %v531, 0.0
  %v564 = vsel %vm131, %v532, 0.0
  %v565 = vsel %vm131, %v533, 0.0
  %v566 = vsel %vm131, %v534, 0.0
  %v567 = vsel %vm131, %v535, 0.0
  %v568 = vsel %vm131, %v536, 0.0
  %v569 = vsel %vm131, %v537, 0.0
  %v570 = vsel %vm131, %v538, 0.0
  %v571 = vsel %vm131, %v539, 0.0
  %v572 = vsel %vm131, %v540, 0.0
  %v573 = vsel %vm131, %v541, 0.0
  %v574 = vsel %vm131, %v542, 0.0
  %v575 = vsel %vm131, %v543, 0.0
  %v576 = vsel %vm131, %v544, 0.0
  %v577 = vsel %vm131, %v545, 0.0
  %v578 = vsel %vm131, %v546, 0.0
  %v579 = vsel %vm131, %v547, 0.0
  %580 = vrot.lane.b32.xlu0 %v548, 12
  %v581 = vpop.permute.xlu0 %580
  %582 = vrot.lane.b32.xlu0 %v549, 12
  %v583 = vpop.permute.xlu0 %582
  %584 = vrot.lane.b32.xlu0 %v550, 12
  %v585 = vpop.permute.xlu0 %584
  %586 = vrot.lane.b32.xlu0 %v551, 12
  %v587 = vpop.permute.xlu0 %586
  %588 = vrot.lane.b32.xlu0 %v552, 12
  %v589 = vpop.permute.xlu0 %588
  %590 = vrot.lane.b32.xlu0 %v553, 12
  %v591 = vpop.permute.xlu0 %590
  %592 = vrot.lane.b32.xlu0 %v554, 12
  %v593 = vpop.permute.xlu0 %592
  %594 = vrot.lane.b32.xlu0 %v555, 12
  %v595 = vpop.permute.xlu0 %594
  %596 = vrot.lane.b32.xlu0 %v556, 12
  %v597 = vpop.permute.xlu0 %596
  %598 = vrot.lane.b32.xlu0 %v557, 12
  %v599 = vpop.permute.xlu0 %598
  %600 = vrot.lane.b32.xlu0 %v558, 12
  %v601 = vpop.permute.xlu0 %600
  %602 = vrot.lane.b32.xlu0 %v559, 12
  %v603 = vpop.permute.xlu0 %602
  %604 = vrot.lane.b32.xlu0 %v560, 12
  %v605 = vpop.permute.xlu0 %604
  %606 = vrot.lane.b32.xlu0 %v561, 12
  %v607 = vpop.permute.xlu0 %606
  %608 = vrot.lane.b32.xlu0 %v562, 12
  %v609 = vpop.permute.xlu0 %608
  %610 = vrot.lane.b32.xlu0 %v563, 12
  %v611 = vpop.permute.xlu0 %610
  %612 = vrot.lane.b32.xlu0 %v564, 12
  %v613 = vpop.permute.xlu0 %612
  %614 = vrot.lane.b32.xlu0 %v565, 12
  %v615 = vpop.permute.xlu0 %614
  %616 = vrot.lane.b32.xlu0 %v566, 12
  %v617 = vpop.permute.xlu0 %616
  %618 = vrot.lane.b32.xlu0 %v567, 12
  %v619 = vpop.permute.xlu0 %618
  %620 = vrot.lane.b32.xlu0 %v568, 12
  %v621 = vpop.permute.xlu0 %620
  %622 = vrot.lane.b32.xlu0 %v569, 12
  %v623 = vpop.permute.xlu0 %622
  %624 = vrot.lane.b32.xlu0 %v570, 12
  %v625 = vpop.permute.xlu0 %624
  %626 = vrot.lane.b32.xlu0 %v571, 12
  %v627 = vpop.permute.xlu0 %626
  %628 = vrot.lane.b32.xlu0 %v572, 12
  %v629 = vpop.permute.xlu0 %628
  %630 = vrot.lane.b32.xlu0 %v573, 12
  %v631 = vpop.permute.xlu0 %630
  %632 = vrot.lane.b32.xlu0 %v574, 12
  %v633 = vpop.permute.xlu0 %632
  %634 = vrot.lane.b32.xlu0 %v575, 12
  %v635 = vpop.permute.xlu0 %634
  %636 = vrot.lane.b32.xlu0 %v576, 12
  %v637 = vpop.permute.xlu0 %636
  %638 = vrot.lane.b32.xlu0 %v577, 12
  %v639 = vpop.permute.xlu0 %638
  %640 = vrot.lane.b32.xlu0 %v578, 12
  %v641 = vpop.permute.xlu0 %640
  %642 = vrot.lane.b32.xlu0 %v579, 12
  %v643 = vpop.permute.xlu0 %642
  %v644 = vadd.f32 %v484, %v581
  %v645 = vadd.f32 %v485, %v583
  %v646 = vadd.f32 %v486, %v585
  %v647 = vadd.f32 %v487, %v587
  %v648 = vadd.f32 %v488, %v589
  %v649 = vadd.f32 %v489, %v591
  %v650 = vadd.f32 %v490, %v593
  %v651 = vadd.f32 %v491, %v595
  %v652 = vadd.f32 %v492, %v597
  %v653 = vadd.f32 %v493, %v599
  %v654 = vadd.f32 %v494, %v601
  %v655 = vadd.f32 %v495, %v603
  %v656 = vadd.f32 %v496, %v605
  %v657 = vadd.f32 %v497, %v607
  %v658 = vadd.f32 %v498, %v609
  %v659 = vadd.f32 %v499, %v611
  %v660 = vadd.f32 %v500, %v613
  %v661 = vadd.f32 %v501, %v615
  %v662 = vadd.f32 %v502, %v617
  %v663 = vadd.f32 %v503, %v619
  %v664 = vadd.f32 %v504, %v621
  %v665 = vadd.f32 %v505, %v623
  %v666 = vadd.f32 %v506, %v625
  %v667 = vadd.f32 %v507, %v627
  %v668 = vadd.f32 %v508, %v629
  %v669 = vadd.f32 %v509, %v631
  %v670 = vadd.f32 %v510, %v633
  %v671 = vadd.f32 %v511, %v635
  %v672 = vadd.f32 %v512, %v637
  %v673 = vadd.f32 %v513, %v639
  %v674 = vadd.f32 %v514, %v641
  %v675 = vadd.f32 %v515, %v643
  %v676 = vld [vmem:[%s31 + $0x1] sm:$0xff]
  %v677 = vld [vmem:[%s31 + $0x9] sm:$0xff]
  %v678 = vld [vmem:[%s31 + $0x19] sm:$0xff]
  %v679 = vld [vmem:[%s31 + $0x21] sm:$0xff]
  %v680 = vld [vmem:[%s31 + $0x31] sm:$0xff]
  %v681 = vld [vmem:[%s31 + $0x39] sm:$0xff]
  %v682 = vld [vmem:[%s31 + $0x49] sm:$0xff]
  %v683 = vld [vmem:[%s31 + $0x51] sm:$0xff]
  %v684 = vld [vmem:[%s31 + $0x61] sm:$0xff]
  %v685 = vld [vmem:[%s31 + $0x69] sm:$0xff]
  %v686 = vld [vmem:[%s31 + $0x79] sm:$0xff]
  %v687 = vld [vmem:[%s31 + $0x81] sm:$0xff]
  %v688 = vld [vmem:[%s31 + $0x91] sm:$0xff]
  %v689 = vld [vmem:[%s31 + $0x99] sm:$0xff]
  %v690 = vld [vmem:[%s31 + $0xa9] sm:$0xff]
  %v691 = vld [vmem:[%s31 + $0xb1] sm:$0xff]
  %v692 = vld [vmem:[%s31 + $0xc1] sm:$0xff]
  %v693 = vld [vmem:[%s31 + $0xc9] sm:$0xff]
  %v694 = vld [vmem:[%s31 + $0xd9] sm:$0xff]
  %v695 = vld [vmem:[%s31 + $0xe1] sm:$0xff]
  %v696 = vld [vmem:[%s31 + $0xf1] sm:$0xff]
  %v697 = vld [vmem:[%s31 + $0xf9] sm:$0xff]
  %v698 = vld [vmem:[%s31 + $0x109] sm:$0xff]
  %v699 = vld [vmem:[%s31 + $0x111] sm:$0xff]
  %v700 = vld [vmem:[%s31 + $0x121] sm:$0xff]
  %v701 = vld [vmem:[%s31 + $0x129] sm:$0xff]
  %v702 = vld [vmem:[%s31 + $0x139] sm:$0xff]
  %v703 = vld [vmem:[%s31 + $0x141] sm:$0xff]
  %v704 = vld [vmem:[%s31 + $0x151] sm:$0xff]
  %v705 = vld [vmem:[%s31 + $0x159] sm:$0xff]
  %v706 = vld [vmem:[%s31 + $0x169] sm:$0xff]
  %v707 = vld [vmem:[%s31 + $0x171] sm:$0xff]
  %v708 = vsel %vm131, %v676, 0.0
  %v709 = vsel %vm131, %v677, 0.0
  %v710 = vsel %vm131, %v678, 0.0
  %v711 = vsel %vm131, %v679, 0.0
  %v712 = vsel %vm131, %v680, 0.0
  %v713 = vsel %vm131, %v681, 0.0
  %v714 = vsel %vm131, %v682, 0.0
  %v715 = vsel %vm131, %v683, 0.0
  %v716 = vsel %vm131, %v684, 0.0
  %v717 = vsel %vm131, %v685, 0.0
  %v718 = vsel %vm131, %v686, 0.0
  %v719 = vsel %vm131, %v687, 0.0
  %v720 = vsel %vm131, %v688, 0.0
  %v721 = vsel %vm131, %v689, 0.0
  %v722 = vsel %vm131, %v690, 0.0
  %v723 = vsel %vm131, %v691, 0.0
  %v724 = vsel %vm131, %v692, 0.0
  %v725 = vsel %vm131, %v693, 0.0
  %v726 = vsel %vm131, %v694, 0.0
  %v727 = vsel %vm131, %v695, 0.0
  %v728 = vsel %vm131, %v696, 0.0
  %v729 = vsel %vm131, %v697, 0.0
  %v730 = vsel %vm131, %v698, 0.0
  %v731 = vsel %vm131, %v699, 0.0
  %v732 = vsel %vm131, %v700, 0.0
  %v733 = vsel %vm131, %v701, 0.0
  %v734 = vsel %vm131, %v702, 0.0
  %v735 = vsel %vm131, %v703, 0.0
  %v736 = vsel %vm131, %v704, 0.0
  %v737 = vsel %vm131, %v705, 0.0
  %v738 = vsel %vm131, %v706, 0.0
  %v739 = vsel %vm131, %v707, 0.0
  %740 = vrot.lane.b32.xlu0 %v708, 16
  %v741 = vpop.permute.xlu0 %740
  %742 = vrot.lane.b32.xlu0 %v709, 16
  %v743 = vpop.permute.xlu0 %742
  %744 = vrot.lane.b32.xlu0 %v710, 16
  %v745 = vpop.permute.xlu0 %744
  %746 = vrot.lane.b32.xlu0 %v711, 16
  %v747 = vpop.permute.xlu0 %746
  %748 = vrot.lane.b32.xlu0 %v712, 16
  %v749 = vpop.permute.xlu0 %748
  %750 = vrot.lane.b32.xlu0 %v713, 16
  %v751 = vpop.permute.xlu0 %750
  %752 = vrot.lane.b32.xlu0 %v714, 16
  %v753 = vpop.permute.xlu0 %752
  %754 = vrot.lane.b32.xlu0 %v715, 16
  %v755 = vpop.permute.xlu0 %754
  %756 = vrot.lane.b32.xlu0 %v716, 16
  %v757 = vpop.permute.xlu0 %756
  %758 = vrot.lane.b32.xlu0 %v717, 16
  %v759 = vpop.permute.xlu0 %758
  %760 = vrot.lane.b32.xlu0 %v718, 16
  %v761 = vpop.permute.xlu0 %760
  %762 = vrot.lane.b32.xlu0 %v719, 16
  %v763 = vpop.permute.xlu0 %762
  %764 = vrot.lane.b32.xlu0 %v720, 16
  %v765 = vpop.permute.xlu0 %764
  %766 = vrot.lane.b32.xlu0 %v721, 16
  %v767 = vpop.permute.xlu0 %766
  %768 = vrot.lane.b32.xlu0 %v722, 16
  %v769 = vpop.permute.xlu0 %768
  %770 = vrot.lane.b32.xlu0 %v723, 16
  %v771 = vpop.permute.xlu0 %770
  %772 = vrot.lane.b32.xlu0 %v724, 16
  %v773 = vpop.permute.xlu0 %772
  %774 = vrot.lane.b32.xlu0 %v725, 16
  %v775 = vpop.permute.xlu0 %774
  %776 = vrot.lane.b32.xlu0 %v726, 16
  %v777 = vpop.permute.xlu0 %776
  %778 = vrot.lane.b32.xlu0 %v727, 16
  %v779 = vpop.permute.xlu0 %778
  %780 = vrot.lane.b32.xlu0 %v728, 16
  %v781 = vpop.permute.xlu0 %780
  %782 = vrot.lane.b32.xlu0 %v729, 16
  %v783 = vpop.permute.xlu0 %782
  %784 = vrot.lane.b32.xlu0 %v730, 16
  %v785 = vpop.permute.xlu0 %784
  %786 = vrot.lane.b32.xlu0 %v731, 16
  %v787 = vpop.permute.xlu0 %786
  %788 = vrot.lane.b32.xlu0 %v732, 16
  %v789 = vpop.permute.xlu0 %788
  %790 = vrot.lane.b32.xlu0 %v733, 16
  %v791 = vpop.permute.xlu0 %790
  %792 = vrot.lane.b32.xlu0 %v734, 16
  %v793 = vpop.permute.xlu0 %792
  %794 = vrot.lane.b32.xlu0 %v735, 16
  %v795 = vpop.permute.xlu0 %794
  %796 = vrot.lane.b32.xlu0 %v736, 16
  %v797 = vpop.permute.xlu0 %796
  %798 = vrot.lane.b32.xlu0 %v737, 16
  %v799 = vpop.permute.xlu0 %798
  %800 = vrot.lane.b32.xlu0 %v738, 16
  %v801 = vpop.permute.xlu0 %800
  %802 = vrot.lane.b32.xlu0 %v739, 16
  %v803 = vpop.permute.xlu0 %802
  %v804 = vadd.f32 %v644, %v741
  %v805 = vadd.f32 %v645, %v743
  %v806 = vadd.f32 %v646, %v745
  %v807 = vadd.f32 %v647, %v747
  %v808 = vadd.f32 %v648, %v749
  %v809 = vadd.f32 %v649, %v751
  %v810 = vadd.f32 %v650, %v753
  %v811 = vadd.f32 %v651, %v755
  %v812 = vadd.f32 %v652, %v757
  %v813 = vadd.f32 %v653, %v759
  %v814 = vadd.f32 %v654, %v761
  %v815 = vadd.f32 %v655, %v763
  %v816 = vadd.f32 %v656, %v765
  %v817 = vadd.f32 %v657, %v767
  %v818 = vadd.f32 %v658, %v769
  %v819 = vadd.f32 %v659, %v771
  %v820 = vadd.f32 %v660, %v773
  %v821 = vadd.f32 %v661, %v775
  %v822 = vadd.f32 %v662, %v777
  %v823 = vadd.f32 %v663, %v779
  %v824 = vadd.f32 %v664, %v781
  %v825 = vadd.f32 %v665, %v783
  %v826 = vadd.f32 %v666, %v785
  %v827 = vadd.f32 %v667, %v787
  %v828 = vadd.f32 %v668, %v789
  %v829 = vadd.f32 %v669, %v791
  %v830 = vadd.f32 %v670, %v793
  %v831 = vadd.f32 %v671, %v795
  %v832 = vadd.f32 %v672, %v797
  %v833 = vadd.f32 %v673, %v799
  %v834 = vadd.f32 %v674, %v801
  %v835 = vadd.f32 %v675, %v803
  %v836 = vld [vmem:[%s31 + $0x2] sm:$0xff]
  %v837 = vld [vmem:[%s31 + $0xa] sm:$0xff]
  %v838 = vld [vmem:[%s31 + $0x1a] sm:$0xff]
  %v839 = vld [vmem:[%s31 + $0x22] sm:$0xff]
  %v840 = vld [vmem:[%s31 + $0x32] sm:$0xff]
  %v841 = vld [vmem:[%s31 + $0x3a] sm:$0xff]
  %v842 = vld [vmem:[%s31 + $0x4a] sm:$0xff]
  %v843 = vld [vmem:[%s31 + $0x52] sm:$0xff]
  %v844 = vld [vmem:[%s31 + $0x62] sm:$0xff]
  %v845 = vld [vmem:[%s31 + $0x6a] sm:$0xff]
  %v846 = vld [vmem:[%s31 + $0x7a] sm:$0xff]
  %v847 = vld [vmem:[%s31 + $0x82] sm:$0xff]
  %v848 = vld [vmem:[%s31 + $0x92] sm:$0xff]
  %v849 = vld [vmem:[%s31 + $0x9a] sm:$0xff]
  %v850 = vld [vmem:[%s31 + $0xaa] sm:$0xff]
  %v851 = vld [vmem:[%s31 + $0xb2] sm:$0xff]
  %v852 = vld [vmem:[%s31 + $0xc2] sm:$0xff]
  %v853 = vld [vmem:[%s31 + $0xca] sm:$0xff]
  %v854 = vld [vmem:[%s31 + $0xda] sm:$0xff]
  %v855 = vld [vmem:[%s31 + $0xe2] sm:$0xff]
  %v856 = vld [vmem:[%s31 + $0xf2] sm:$0xff]
  %v857 = vld [vmem:[%s31 + $0xfa] sm:$0xff]
  %v858 = vld [vmem:[%s31 + $0x10a] sm:$0xff]
  %v859 = vld [vmem:[%s31 + $0x112] sm:$0xff]
  %v860 = vld [vmem:[%s31 + $0x122] sm:$0xff]
  %v861 = vld [vmem:[%s31 + $0x12a] sm:$0xff]
  %v862 = vld [vmem:[%s31 + $0x13a] sm:$0xff]
  %v863 = vld [vmem:[%s31 + $0x142] sm:$0xff]
  %v864 = vld [vmem:[%s31 + $0x152] sm:$0xff]
  %v865 = vld [vmem:[%s31 + $0x15a] sm:$0xff]
  %v866 = vld [vmem:[%s31 + $0x16a] sm:$0xff]
  %v867 = vld [vmem:[%s31 + $0x172] sm:$0xff]
  %v868 = vsel %vm131, %v836, 0.0
  %v869 = vsel %vm131, %v837, 0.0
  %v870 = vsel %vm131, %v838, 0.0
  %v871 = vsel %vm131, %v839, 0.0
  %v872 = vsel %vm131, %v840, 0.0
  %v873 = vsel %vm131, %v841, 0.0
  %v874 = vsel %vm131, %v842, 0.0
  %v875 = vsel %vm131, %v843, 0.0
  %v876 = vsel %vm131, %v844, 0.0
  %v877 = vsel %vm131, %v845, 0.0
  %v878 = vsel %vm131, %v846, 0.0
  %v879 = vsel %vm131, %v847, 0.0
  %v880 = vsel %vm131, %v848, 0.0
  %v881 = vsel %vm131, %v849, 0.0
  %v882 = vsel %vm131, %v850, 0.0
  %v883 = vsel %vm131, %v851, 0.0
  %v884 = vsel %vm131, %v852, 0.0
  %v885 = vsel %vm131, %v853, 0.0
  %v886 = vsel %vm131, %v854, 0.0
  %v887 = vsel %vm131, %v855, 0.0
  %v888 = vsel %vm131, %v856, 0.0
  %v889 = vsel %vm131, %v857, 0.0
  %v890 = vsel %vm131, %v858, 0.0
  %v891 = vsel %vm131, %v859, 0.0
  %v892 = vsel %vm131, %v860, 0.0
  %v893 = vsel %vm131, %v861, 0.0
  %v894 = vsel %vm131, %v862, 0.0
  %v895 = vsel %vm131, %v863, 0.0
  %v896 = vsel %vm131, %v864, 0.0
  %v897 = vsel %vm131, %v865, 0.0
  %v898 = vsel %vm131, %v866, 0.0
  %v899 = vsel %vm131, %v867, 0.0
  %900 = vrot.lane.b32.xlu0 %v868, 20
  %v901 = vpop.permute.xlu0 %900
  %902 = vrot.lane.b32.xlu0 %v869, 20
  %v903 = vpop.permute.xlu0 %902
  %904 = vrot.lane.b32.xlu0 %v870, 20
  %v905 = vpop.permute.xlu0 %904
  %906 = vrot.lane.b32.xlu0 %v871, 20
  %v907 = vpop.permute.xlu0 %906
  %908 = vrot.lane.b32.xlu0 %v872, 20
  %v909 = vpop.permute.xlu0 %908
  %910 = vrot.lane.b32.xlu0 %v873, 20
  %v911 = vpop.permute.xlu0 %910
  %912 = vrot.lane.b32.xlu0 %v874, 20
  %v913 = vpop.permute.xlu0 %912
  %914 = vrot.lane.b32.xlu0 %v875, 20
  %v915 = vpop.permute.xlu0 %914
  %916 = vrot.lane.b32.xlu0 %v876, 20
  %v917 = vpop.permute.xlu0 %916
  %918 = vrot.lane.b32.xlu0 %v877, 20
  %v919 = vpop.permute.xlu0 %918
  %920 = vrot.lane.b32.xlu0 %v878, 20
  %v921 = vpop.permute.xlu0 %920
  %922 = vrot.lane.b32.xlu0 %v879, 20
  %v923 = vpop.permute.xlu0 %922
  %924 = vrot.lane.b32.xlu0 %v880, 20
  %v925 = vpop.permute.xlu0 %924
  %926 = vrot.lane.b32.xlu0 %v881, 20
  %v927 = vpop.permute.xlu0 %926
  %928 = vrot.lane.b32.xlu0 %v882, 20
  %v929 = vpop.permute.xlu0 %928
  %930 = vrot.lane.b32.xlu0 %v883, 20
  %v931 = vpop.permute.xlu0 %930
  %932 = vrot.lane.b32.xlu0 %v884, 20
  %v933 = vpop.permute.xlu0 %932
  %934 = vrot.lane.b32.xlu0 %v885, 20
  %v935 = vpop.permute.xlu0 %934
  %936 = vrot.lane.b32.xlu0 %v886, 20
  %v937 = vpop.permute.xlu0 %936
  %938 = vrot.lane.b32.xlu0 %v887, 20
  %v939 = vpop.permute.xlu0 %938
  %940 = vrot.lane.b32.xlu0 %v888, 20
  %v941 = vpop.permute.xlu0 %940
  %942 = vrot.lane.b32.xlu0 %v889, 20
  %v943 = vpop.permute.xlu0 %942
  %944 = vrot.lane.b32.xlu0 %v890, 20
  %v945 = vpop.permute.xlu0 %944
  %946 = vrot.lane.b32.xlu0 %v891, 20
  %v947 = vpop.permute.xlu0 %946
  %948 = vrot.lane.b32.xlu0 %v892, 20
  %v949 = vpop.permute.xlu0 %948
  %950 = vrot.lane.b32.xlu0 %v893, 20
  %v951 = vpop.permute.xlu0 %950
  %952 = vrot.lane.b32.xlu0 %v894, 20
  %v953 = vpop.permute.xlu0 %952
  %954 = vrot.lane.b32.xlu0 %v895, 20
  %v955 = vpop.permute.xlu0 %954
  %956 = vrot.lane.b32.xlu0 %v896, 20
  %v957 = vpop.permute.xlu0 %956
  %958 = vrot.lane.b32.xlu0 %v897, 20
  %v959 = vpop.permute.xlu0 %958
  %960 = vrot.lane.b32.xlu0 %v898, 20
  %v961 = vpop.permute.xlu0 %960
  %962 = vrot.lane.b32.xlu0 %v899, 20
  %v963 = vpop.permute.xlu0 %962
  %v964 = vadd.f32 %v804, %v901
  %v965 = vadd.f32 %v805, %v903
  %v966 = vadd.f32 %v806, %v905
  %v967 = vadd.f32 %v807, %v907
  %v968 = vadd.f32 %v808, %v909
  %v969 = vadd.f32 %v809, %v911
  %v970 = vadd.f32 %v810, %v913
  %v971 = vadd.f32 %v811, %v915
  %v972 = vadd.f32 %v812, %v917
  %v973 = vadd.f32 %v813, %v919
  %v974 = vadd.f32 %v814, %v921
  %v975 = vadd.f32 %v815, %v923
  %v976 = vadd.f32 %v816, %v925
  %v977 = vadd.f32 %v817, %v927
  %v978 = vadd.f32 %v818, %v929
  %v979 = vadd.f32 %v819, %v931
  %v980 = vadd.f32 %v820, %v933
  %v981 = vadd.f32 %v821, %v935
  %v982 = vadd.f32 %v822, %v937
  %v983 = vadd.f32 %v823, %v939
  %v984 = vadd.f32 %v824, %v941
  %v985 = vadd.f32 %v825, %v943
  %v986 = vadd.f32 %v826, %v945
  %v987 = vadd.f32 %v827, %v947
  %v988 = vadd.f32 %v828, %v949
  %v989 = vadd.f32 %v829, %v951
  %v990 = vadd.f32 %v830, %v953
  %v991 = vadd.f32 %v831, %v955
  %v992 = vadd.f32 %v832, %v957
  %v993 = vadd.f32 %v833, %v959
  %v994 = vadd.f32 %v834, %v961
  %v995 = vadd.f32 %v835, %v963
  %s996 = scalar_lea.vmem [#allocation2], 48
  %v997 = vld [vmem:[%s996] sm:$0xff]
  %v998 = vld [vmem:[%s996 + $0x8] sm:$0xff]
  %v999 = vld [vmem:[%s996 + $0x18] sm:$0xff]
  %v1000 = vld [vmem:[%s996 + $0x20] sm:$0xff]
  %v1001 = vld [vmem:[%s996 + $0x30] sm:$0xff]
  %v1002 = vld [vmem:[%s996 + $0x38] sm:$0xff]
  %v1003 = vld [vmem:[%s996 + $0x48] sm:$0xff]
  %v1004 = vld [vmem:[%s996 + $0x50] sm:$0xff]
  %v1005 = vld [vmem:[%s996 + $0x60] sm:$0xff]
  %v1006 = vld [vmem:[%s996 + $0x68] sm:$0xff]
  %v1007 = vld [vmem:[%s996 + $0x78] sm:$0xff]
  %v1008 = vld [vmem:[%s996 + $0x80] sm:$0xff]
  %v1009 = vld [vmem:[%s996 + $0x90] sm:$0xff]
  %v1010 = vld [vmem:[%s996 + $0x98] sm:$0xff]
  %v1011 = vld [vmem:[%s996 + $0xa8] sm:$0xff]
  %v1012 = vld [vmem:[%s996 + $0xb0] sm:$0xff]
  %v1013 = vld [vmem:[%s996 + $0xc0] sm:$0xff]
  %v1014 = vld [vmem:[%s996 + $0xc8] sm:$0xff]
  %v1015 = vld [vmem:[%s996 + $0xd8] sm:$0xff]
  %v1016 = vld [vmem:[%s996 + $0xe0] sm:$0xff]
  %v1017 = vld [vmem:[%s996 + $0xf0] sm:$0xff]
  %v1018 = vld [vmem:[%s996 + $0xf8] sm:$0xff]
  %v1019 = vld [vmem:[%s996 + $0x108] sm:$0xff]
  %v1020 = vld [vmem:[%s996 + $0x110] sm:$0xff]
  %v1021 = vld [vmem:[%s996 + $0x120] sm:$0xff]
  %v1022 = vld [vmem:[%s996 + $0x128] sm:$0xff]
  %v1023 = vld [vmem:[%s996 + $0x138] sm:$0xff]
  %v1024 = vld [vmem:[%s996 + $0x140] sm:$0xff]
  %v1025 = vld [vmem:[%s996 + $0x150] sm:$0xff]
  %v1026 = vld [vmem:[%s996 + $0x158] sm:$0xff]
  %v1027 = vld [vmem:[%s996 + $0x168] sm:$0xff]
  %v1028 = vld [vmem:[%s996 + $0x170] sm:$0xff]
  %v1029 = vsel %vm131, %v997, 0.0
  %v1030 = vsel %vm131, %v998, 0.0
  %v1031 = vsel %vm131, %v999, 0.0
  %v1032 = vsel %vm131, %v1000, 0.0
  %v1033 = vsel %vm131, %v1001, 0.0
  %v1034 = vsel %vm131, %v1002, 0.0
  %v1035 = vsel %vm131, %v1003, 0.0
  %v1036 = vsel %vm131, %v1004, 0.0
  %v1037 = vsel %vm131, %v1005, 0.0
  %v1038 = vsel %vm131, %v1006, 0.0
  %v1039 = vsel %vm131, %v1007, 0.0
  %v1040 = vsel %vm131, %v1008, 0.0
  %v1041 = vsel %vm131, %v1009, 0.0
  %v1042 = vsel %vm131, %v1010, 0.0
  %v1043 = vsel %vm131, %v1011, 0.0
  %v1044 = vsel %vm131, %v1012, 0.0
  %v1045 = vsel %vm131, %v1013, 0.0
  %v1046 = vsel %vm131, %v1014, 0.0
  %v1047 = vsel %vm131, %v1015, 0.0
  %v1048 = vsel %vm131, %v1016, 0.0
  %v1049 = vsel %vm131, %v1017, 0.0
  %v1050 = vsel %vm131, %v1018, 0.0
  %v1051 = vsel %vm131, %v1019, 0.0
  %v1052 = vsel %vm131, %v1020, 0.0
  %v1053 = vsel %vm131, %v1021, 0.0
  %v1054 = vsel %vm131, %v1022, 0.0
  %v1055 = vsel %vm131, %v1023, 0.0
  %v1056 = vsel %vm131, %v1024, 0.0
  %v1057 = vsel %vm131, %v1025, 0.0
  %v1058 = vsel %vm131, %v1026, 0.0
  %v1059 = vsel %vm131, %v1027, 0.0
  %v1060 = vsel %vm131, %v1028, 0.0
  %1061 = vrot.lane.b32.xlu0 %v1029, 24
  %v1062 = vpop.permute.xlu0 %1061
  %1063 = vrot.lane.b32.xlu0 %v1030, 24
  %v1064 = vpop.permute.xlu0 %1063
  %1065 = vrot.lane.b32.xlu0 %v1031, 24
  %v1066 = vpop.permute.xlu0 %1065
  %1067 = vrot.lane.b32.xlu0 %v1032, 24
  %v1068 = vpop.permute.xlu0 %1067
  %1069 = vrot.lane.b32.xlu0 %v1033, 24
  %v1070 = vpop.permute.xlu0 %1069
  %1071 = vrot.lane.b32.xlu0 %v1034, 24
  %v1072 = vpop.permute.xlu0 %1071
  %1073 = vrot.lane.b32.xlu0 %v1035, 24
  %v1074 = vpop.permute.xlu0 %1073
  %1075 = vrot.lane.b32.xlu0 %v1036, 24
  %v1076 = vpop.permute.xlu0 %1075
  %1077 = vrot.lane.b32.xlu0 %v1037, 24
  %v1078 = vpop.permute.xlu0 %1077
  %1079 = vrot.lane.b32.xlu0 %v1038, 24
  %v1080 = vpop.permute.xlu0 %1079
  %1081 = vrot.lane.b32.xlu0 %v1039, 24
  %v1082 = vpop.permute.xlu0 %1081
  %1083 = vrot.lane.b32.xlu0 %v1040, 24
  %v1084 = vpop.permute.xlu0 %1083
  %1085 = vrot.lane.b32.xlu0 %v1041, 24
  %v1086 = vpop.permute.xlu0 %1085
  %1087 = vrot.lane.b32.xlu0 %v1042, 24
  %v1088 = vpop.permute.xlu0 %1087
  %1089 = vrot.lane.b32.xlu0 %v1043, 24
  %v1090 = vpop.permute.xlu0 %1089
  %1091 = vrot.lane.b32.xlu0 %v1044, 24
  %v1092 = vpop.permute.xlu0 %1091
  %1093 = vrot.lane.b32.xlu0 %v1045, 24
  %v1094 = vpop.permute.xlu0 %1093
  %1095 = vrot.lane.b32.xlu0 %v1046, 24
  %v1096 = vpop.permute.xlu0 %1095
  %1097 = vrot.lane.b32.xlu0 %v1047, 24
  %v1098 = vpop.permute.xlu0 %1097
  %1099 = vrot.lane.b32.xlu0 %v1048, 24
  %v1100 = vpop.permute.xlu0 %1099
  %1101 = vrot.lane.b32.xlu0 %v1049, 24
  %v1102 = vpop.permute.xlu0 %1101
  %1103 = vrot.lane.b32.xlu0 %v1050, 24
  %v1104 = vpop.permute.xlu0 %1103
  %1105 = vrot.lane.b32.xlu0 %v1051, 24
  %v1106 = vpop.permute.xlu0 %1105
  %1107 = vrot.lane.b32.xlu0 %v1052, 24
  %v1108 = vpop.permute.xlu0 %1107
  %1109 = vrot.lane.b32.xlu0 %v1053, 24
  %v1110 = vpop.permute.xlu0 %1109
  %1111 = vrot.lane.b32.xlu0 %v1054, 24
  %v1112 = vpop.permute.xlu0 %1111
  %1113 = vrot.lane.b32.xlu0 %v1055, 24
  %v1114 = vpop.permute.xlu0 %1113
  %1115 = vrot.lane.b32.xlu0 %v1056, 24
  %v1116 = vpop.permute.xlu0 %1115
  %1117 = vrot.lane.b32.xlu0 %v1057, 24
  %v1118 = vpop.permute.xlu0 %1117
  %1119 = vrot.lane.b32.xlu0 %v1058, 24
  %v1120 = vpop.permute.xlu0 %1119
  %1121 = vrot.lane.b32.xlu0 %v1059, 24
  %v1122 = vpop.permute.xlu0 %1121
  %1123 = vrot.lane.b32.xlu0 %v1060, 24
  %v1124 = vpop.permute.xlu0 %1123
  %v1125 = vadd.f32 %v964, %v1062
  %v1126 = vadd.f32 %v965, %v1064
  %v1127 = vadd.f32 %v966, %v1066
  %v1128 = vadd.f32 %v967, %v1068
  %v1129 = vadd.f32 %v968, %v1070
  %v1130 = vadd.f32 %v969, %v1072
  %v1131 = vadd.f32 %v970, %v1074
  %v1132 = vadd.f32 %v971, %v1076
  %v1133 = vadd.f32 %v972, %v1078
  %v1134 = vadd.f32 %v973, %v1080
  %v1135 = vadd.f32 %v974, %v1082
  %v1136 = vadd.f32 %v975, %v1084
  %v1137 = vadd.f32 %v976, %v1086
  %v1138 = vadd.f32 %v977, %v1088
  %v1139 = vadd.f32 %v978, %v1090
  %v1140 = vadd.f32 %v979, %v1092
  %v1141 = vadd.f32 %v980, %v1094
  %v1142 = vadd.f32 %v981, %v1096
  %v1143 = vadd.f32 %v982, %v1098
  %v1144 = vadd.f32 %v983, %v1100
  %v1145 = vadd.f32 %v984, %v1102
  %v1146 = vadd.f32 %v985, %v1104
  %v1147 = vadd.f32 %v986, %v1106
  %v1148 = vadd.f32 %v987, %v1108
  %v1149 = vadd.f32 %v988, %v1110
  %v1150 = vadd.f32 %v989, %v1112
  %v1151 = vadd.f32 %v990, %v1114
  %v1152 = vadd.f32 %v991, %v1116
  %v1153 = vadd.f32 %v992, %v1118
  %v1154 = vadd.f32 %v993, %v1120
  %v1155 = vadd.f32 %v994, %v1122
  %v1156 = vadd.f32 %v995, %v1124
  %v1157 = vld [vmem:[%s996 + $0x1] sm:$0xff]
  %v1158 = vld [vmem:[%s996 + $0x9] sm:$0xff]
  %v1159 = vld [vmem:[%s996 + $0x19] sm:$0xff]
  %v1160 = vld [vmem:[%s996 + $0x21] sm:$0xff]
  %v1161 = vld [vmem:[%s996 + $0x31] sm:$0xff]
  %v1162 = vld [vmem:[%s996 + $0x39] sm:$0xff]
  %v1163 = vld [vmem:[%s996 + $0x49] sm:$0xff]
  %v1164 = vld [vmem:[%s996 + $0x51] sm:$0xff]
  %v1165 = vld [vmem:[%s996 + $0x61] sm:$0xff]
  %v1166 = vld [vmem:[%s996 + $0x69] sm:$0xff]
  %v1167 = vld [vmem:[%s996 + $0x79] sm:$0xff]
  %v1168 = vld [vmem:[%s996 + $0x81] sm:$0xff]
  %v1169 = vld [vmem:[%s996 + $0x91] sm:$0xff]
  %v1170 = vld [vmem:[%s996 + $0x99] sm:$0xff]
  %v1171 = vld [vmem:[%s996 + $0xa9] sm:$0xff]
  %v1172 = vld [vmem:[%s996 + $0xb1] sm:$0xff]
  %v1173 = vld [vmem:[%s996 + $0xc1] sm:$0xff]
  %v1174 = vld [vmem:[%s996 + $0xc9] sm:$0xff]
  %v1175 = vld [vmem:[%s996 + $0xd9] sm:$0xff]
  %v1176 = vld [vmem:[%s996 + $0xe1] sm:$0xff]
  %v1177 = vld [vmem:[%s996 + $0xf1] sm:$0xff]
  %v1178 = vld [vmem:[%s996 + $0xf9] sm:$0xff]
  %v1179 = vld [vmem:[%s996 + $0x109] sm:$0xff]
  %v1180 = vld [vmem:[%s996 + $0x111] sm:$0xff]
  %v1181 = vld [vmem:[%s996 + $0x121] sm:$0xff]
  %v1182 = vld [vmem:[%s996 + $0x129] sm:$0xff]
  %v1183 = vld [vmem:[%s996 + $0x139] sm:$0xff]
  %v1184 = vld [vmem:[%s996 + $0x141] sm:$0xff]
  %v1185 = vld [vmem:[%s996 + $0x151] sm:$0xff]
  %v1186 = vld [vmem:[%s996 + $0x159] sm:$0xff]
  %v1187 = vld [vmem:[%s996 + $0x169] sm:$0xff]
  %v1188 = vld [vmem:[%s996 + $0x171] sm:$0xff]
  %v1189 = vsel %vm131, %v1157, 0.0
  %v1190 = vsel %vm131, %v1158, 0.0
  %v1191 = vsel %vm131, %v1159, 0.0
  %v1192 = vsel %vm131, %v1160, 0.0
  %v1193 = vsel %vm131, %v1161, 0.0
  %v1194 = vsel %vm131, %v1162, 0.0
  %v1195 = vsel %vm131, %v1163, 0.0
  %v1196 = vsel %vm131, %v1164, 0.0
  %v1197 = vsel %vm131, %v1165, 0.0
  %v1198 = vsel %vm131, %v1166, 0.0
  %v1199 = vsel %vm131, %v1167, 0.0
  %v1200 = vsel %vm131, %v1168, 0.0
  %v1201 = vsel %vm131, %v1169, 0.0
  %v1202 = vsel %vm131, %v1170, 0.0
  %v1203 = vsel %vm131, %v1171, 0.0
  %v1204 = vsel %vm131, %v1172, 0.0
  %v1205 = vsel %vm131, %v1173, 0.0
  %v1206 = vsel %vm131, %v1174, 0.0
  %v1207 = vsel %vm131, %v1175, 0.0
  %v1208 = vsel %vm131, %v1176, 0.0
  %v1209 = vsel %vm131, %v1177, 0.0
  %v1210 = vsel %vm131, %v1178, 0.0
  %v1211 = vsel %vm131, %v1179, 0.0
  %v1212 = vsel %vm131, %v1180, 0.0
  %v1213 = vsel %vm131, %v1181, 0.0
  %v1214 = vsel %vm131, %v1182, 0.0
  %v1215 = vsel %vm131, %v1183, 0.0
  %v1216 = vsel %vm131, %v1184, 0.0
  %v1217 = vsel %vm131, %v1185, 0.0
  %v1218 = vsel %vm131, %v1186, 0.0
  %v1219 = vsel %vm131, %v1187, 0.0
  %v1220 = vsel %vm131, %v1188, 0.0
  %1221 = vrot.lane.b32.xlu0 %v1189, 28
  %v1222 = vpop.permute.xlu0 %1221
  %1223 = vrot.lane.b32.xlu0 %v1190, 28
  %v1224 = vpop.permute.xlu0 %1223
  %1225 = vrot.lane.b32.xlu0 %v1191, 28
  %v1226 = vpop.permute.xlu0 %1225
  %1227 = vrot.lane.b32.xlu0 %v1192, 28
  %v1228 = vpop.permute.xlu0 %1227
  %1229 = vrot.lane.b32.xlu0 %v1193, 28
  %v1230 = vpop.permute.xlu0 %1229
  %1231 = vrot.lane.b32.xlu0 %v1194, 28
  %v1232 = vpop.permute.xlu0 %1231
  %1233 = vrot.lane.b32.xlu0 %v1195, 28
  %v1234 = vpop.permute.xlu0 %1233
  %1235 = vrot.lane.b32.xlu0 %v1196, 28
  %v1236 = vpop.permute.xlu0 %1235
  %1237 = vrot.lane.b32.xlu0 %v1197, 28
  %v1238 = vpop.permute.xlu0 %1237
  %1239 = vrot.lane.b32.xlu0 %v1198, 28
  %v1240 = vpop.permute.xlu0 %1239
  %1241 = vrot.lane.b32.xlu0 %v1199, 28
  %v1242 = vpop.permute.xlu0 %1241
  %1243 = vrot.lane.b32.xlu0 %v1200, 28
  %v1244 = vpop.permute.xlu0 %1243
  %1245 = vrot.lane.b32.xlu0 %v1201, 28
  %v1246 = vpop.permute.xlu0 %1245
  %1247 = vrot.lane.b32.xlu0 %v1202, 28
  %v1248 = vpop.permute.xlu0 %1247
  %1249 = vrot.lane.b32.xlu0 %v1203, 28
  %v1250 = vpop.permute.xlu0 %1249
  %1251 = vrot.lane.b32.xlu0 %v1204, 28
  %v1252 = vpop.permute.xlu0 %1251
  %1253 = vrot.lane.b32.xlu0 %v1205, 28
  %v1254 = vpop.permute.xlu0 %1253
  %1255 = vrot.lane.b32.xlu0 %v1206, 28
  %v1256 = vpop.permute.xlu0 %1255
  %1257 = vrot.lane.b32.xlu0 %v1207, 28
  %v1258 = vpop.permute.xlu0 %1257
  %1259 = vrot.lane.b32.xlu0 %v1208, 28
  %v1260 = vpop.permute.xlu0 %1259
  %1261 = vrot.lane.b32.xlu0 %v1209, 28
  %v1262 = vpop.permute.xlu0 %1261
  %1263 = vrot.lane.b32.xlu0 %v1210, 28
  %v1264 = vpop.permute.xlu0 %1263
  %1265 = vrot.lane.b32.xlu0 %v1211, 28
  %v1266 = vpop.permute.xlu0 %1265
  %1267 = vrot.lane.b32.xlu0 %v1212, 28
  %v1268 = vpop.permute.xlu0 %1267
  %1269 = vrot.lane.b32.xlu0 %v1213, 28
  %v1270 = vpop.permute.xlu0 %1269
  %1271 = vrot.lane.b32.xlu0 %v1214, 28
  %v1272 = vpop.permute.xlu0 %1271
  %1273 = vrot.lane.b32.xlu0 %v1215, 28
  %v1274 = vpop.permute.xlu0 %1273
  %1275 = vrot.lane.b32.xlu0 %v1216, 28
  %v1276 = vpop.permute.xlu0 %1275
  %1277 = vrot.lane.b32.xlu0 %v1217, 28
  %v1278 = vpop.permute.xlu0 %1277
  %1279 = vrot.lane.b32.xlu0 %v1218, 28
  %v1280 = vpop.permute.xlu0 %1279
  %1281 = vrot.lane.b32.xlu0 %v1219, 28
  %v1282 = vpop.permute.xlu0 %1281
  %1283 = vrot.lane.b32.xlu0 %v1220, 28
  %v1284 = vpop.permute.xlu0 %1283
  %v1285 = vadd.f32 %v1125, %v1222
  %v1286 = vadd.f32 %v1126, %v1224
  %v1287 = vadd.f32 %v1127, %v1226
  %v1288 = vadd.f32 %v1128, %v1228
  %v1289 = vadd.f32 %v1129, %v1230
  %v1290 = vadd.f32 %v1130, %v1232
  %v1291 = vadd.f32 %v1131, %v1234
  %v1292 = vadd.f32 %v1132, %v1236
  %v1293 = vadd.f32 %v1133, %v1238
  %v1294 = vadd.f32 %v1134, %v1240
  %v1295 = vadd.f32 %v1135, %v1242
  %v1296 = vadd.f32 %v1136, %v1244
  %v1297 = vadd.f32 %v1137, %v1246
  %v1298 = vadd.f32 %v1138, %v1248
  %v1299 = vadd.f32 %v1139, %v1250
  %v1300 = vadd.f32 %v1140, %v1252
  %v1301 = vadd.f32 %v1141, %v1254
  %v1302 = vadd.f32 %v1142, %v1256
  %v1303 = vadd.f32 %v1143, %v1258
  %v1304 = vadd.f32 %v1144, %v1260
  %v1305 = vadd.f32 %v1145, %v1262
  %v1306 = vadd.f32 %v1146, %v1264
  %v1307 = vadd.f32 %v1147, %v1266
  %v1308 = vadd.f32 %v1148, %v1268
  %v1309 = vadd.f32 %v1149, %v1270
  %v1310 = vadd.f32 %v1150, %v1272
  %v1311 = vadd.f32 %v1151, %v1274
  %v1312 = vadd.f32 %v1152, %v1276
  %v1313 = vadd.f32 %v1153, %v1278
  %v1314 = vadd.f32 %v1154, %v1280
  %v1315 = vadd.f32 %v1155, %v1282
  %v1316 = vadd.f32 %v1156, %v1284
  %v1317 = vld [vmem:[%s996 + $0x2] sm:$0xff]
  %v1318 = vld [vmem:[%s996 + $0xa] sm:$0xff]
  %v1319 = vld [vmem:[%s996 + $0x1a] sm:$0xff]
  %v1320 = vld [vmem:[%s996 + $0x22] sm:$0xff]
  %v1321 = vld [vmem:[%s996 + $0x32] sm:$0xff]
  %v1322 = vld [vmem:[%s996 + $0x3a] sm:$0xff]
  %v1323 = vld [vmem:[%s996 + $0x4a] sm:$0xff]
  %v1324 = vld [vmem:[%s996 + $0x52] sm:$0xff]
  %v1325 = vld [vmem:[%s996 + $0x62] sm:$0xff]
  %v1326 = vld [vmem:[%s996 + $0x6a] sm:$0xff]
  %v1327 = vld [vmem:[%s996 + $0x7a] sm:$0xff]
  %v1328 = vld [vmem:[%s996 + $0x82] sm:$0xff]
  %v1329 = vld [vmem:[%s996 + $0x92] sm:$0xff]
  %v1330 = vld [vmem:[%s996 + $0x9a] sm:$0xff]
  %v1331 = vld [vmem:[%s996 + $0xaa] sm:$0xff]
  %v1332 = vld [vmem:[%s996 + $0xb2] sm:$0xff]
  %v1333 = vld [vmem:[%s996 + $0xc2] sm:$0xff]
  %v1334 = vld [vmem:[%s996 + $0xca] sm:$0xff]
  %v1335 = vld [vmem:[%s996 + $0xda] sm:$0xff]
  %v1336 = vld [vmem:[%s996 + $0xe2] sm:$0xff]
  %v1337 = vld [vmem:[%s996 + $0xf2] sm:$0xff]
  %v1338 = vld [vmem:[%s996 + $0xfa] sm:$0xff]
  %v1339 = vld [vmem:[%s996 + $0x10a] sm:$0xff]
  %v1340 = vld [vmem:[%s996 + $0x112] sm:$0xff]
  %v1341 = vld [vmem:[%s996 + $0x122] sm:$0xff]
  %v1342 = vld [vmem:[%s996 + $0x12a] sm:$0xff]
  %v1343 = vld [vmem:[%s996 + $0x13a] sm:$0xff]
  %v1344 = vld [vmem:[%s996 + $0x142] sm:$0xff]
  %v1345 = vld [vmem:[%s996 + $0x152] sm:$0xff]
  %v1346 = vld [vmem:[%s996 + $0x15a] sm:$0xff]
  %v1347 = vld [vmem:[%s996 + $0x16a] sm:$0xff]
  %v1348 = vld [vmem:[%s996 + $0x172] sm:$0xff]
  %v1349 = vsel %vm131, %v1317, 0.0
  %v1350 = vsel %vm131, %v1318, 0.0
  %v1351 = vsel %vm131, %v1319, 0.0
  %v1352 = vsel %vm131, %v1320, 0.0
  %v1353 = vsel %vm131, %v1321, 0.0
  %v1354 = vsel %vm131, %v1322, 0.0
  %v1355 = vsel %vm131, %v1323, 0.0
  %v1356 = vsel %vm131, %v1324, 0.0
  %v1357 = vsel %vm131, %v1325, 0.0
  %v1358 = vsel %vm131, %v1326, 0.0
  %v1359 = vsel %vm131, %v1327, 0.0
  %v1360 = vsel %vm131, %v1328, 0.0
  %v1361 = vsel %vm131, %v1329, 0.0
  %v1362 = vsel %vm131, %v1330, 0.0
  %v1363 = vsel %vm131, %v1331, 0.0
  %v1364 = vsel %vm131, %v1332, 0.0
  %v1365 = vsel %vm131, %v1333, 0.0
  %v1366 = vsel %vm131, %v1334, 0.0
  %v1367 = vsel %vm131, %v1335, 0.0
  %v1368 = vsel %vm131, %v1336, 0.0
  %v1369 = vsel %vm131, %v1337, 0.0
  %v1370 = vsel %vm131, %v1338, 0.0
  %v1371 = vsel %vm131, %v1339, 0.0
  %v1372 = vsel %vm131, %v1340, 0.0
  %v1373 = vsel %vm131, %v1341, 0.0
  %v1374 = vsel %vm131, %v1342, 0.0
  %v1375 = vsel %vm131, %v1343, 0.0
  %v1376 = vsel %vm131, %v1344, 0.0
  %v1377 = vsel %vm131, %v1345, 0.0
  %v1378 = vsel %vm131, %v1346, 0.0
  %v1379 = vsel %vm131, %v1347, 0.0
  %v1380 = vsel %vm131, %v1348, 0.0
  %1381 = vrot.lane.b32.xlu0 %v1349, 32
  %v1382 = vpop.permute.xlu0 %1381
  %1383 = vrot.lane.b32.xlu0 %v1350, 32
  %v1384 = vpop.permute.xlu0 %1383
  %1385 = vrot.lane.b32.xlu0 %v1351, 32
  %v1386 = vpop.permute.xlu0 %1385
  %1387 = vrot.lane.b32.xlu0 %v1352, 32
  %v1388 = vpop.permute.xlu0 %1387
  %1389 = vrot.lane.b32.xlu0 %v1353, 32
  %v1390 = vpop.permute.xlu0 %1389
  %1391 = vrot.lane.b32.xlu0 %v1354, 32
  %v1392 = vpop.permute.xlu0 %1391
  %1393 = vrot.lane.b32.xlu0 %v1355, 32
  %v1394 = vpop.permute.xlu0 %1393
  %1395 = vrot.lane.b32.xlu0 %v1356, 32
  %v1396 = vpop.permute.xlu0 %1395
  %1397 = vrot.lane.b32.xlu0 %v1357, 32
  %v1398 = vpop.permute.xlu0 %1397
  %1399 = vrot.lane.b32.xlu0 %v1358, 32
  %v1400 = vpop.permute.xlu0 %1399
  %1401 = vrot.lane.b32.xlu0 %v1359, 32
  %v1402 = vpop.permute.xlu0 %1401
  %1403 = vrot.lane.b32.xlu0 %v1360, 32
  %v1404 = vpop.permute.xlu0 %1403
  %1405 = vrot.lane.b32.xlu0 %v1361, 32
  %v1406 = vpop.permute.xlu0 %1405
  %1407 = vrot.lane.b32.xlu0 %v1362, 32
  %v1408 = vpop.permute.xlu0 %1407
  %1409 = vrot.lane.b32.xlu0 %v1363, 32
  %v1410 = vpop.permute.xlu0 %1409
  %1411 = vrot.lane.b32.xlu0 %v1364, 32
  %v1412 = vpop.permute.xlu0 %1411
  %1413 = vrot.lane.b32.xlu0 %v1365, 32
  %v1414 = vpop.permute.xlu0 %1413
  %1415 = vrot.lane.b32.xlu0 %v1366, 32
  %v1416 = vpop.permute.xlu0 %1415
  %1417 = vrot.lane.b32.xlu0 %v1367, 32
  %v1418 = vpop.permute.xlu0 %1417
  %1419 = vrot.lane.b32.xlu0 %v1368, 32
  %v1420 = vpop.permute.xlu0 %1419
  %1421 = vrot.lane.b32.xlu0 %v1369, 32
  %v1422 = vpop.permute.xlu0 %1421
  %1423 = vrot.lane.b32.xlu0 %v1370, 32
  %v1424 = vpop.permute.xlu0 %1423
  %1425 = vrot.lane.b32.xlu0 %v1371, 32
  %v1426 = vpop.permute.xlu0 %1425
  %1427 = vrot.lane.b32.xlu0 %v1372, 32
  %v1428 = vpop.permute.xlu0 %1427
  %1429 = vrot.lane.b32.xlu0 %v1373, 32
  %v1430 = vpop.permute.xlu0 %1429
  %1431 = vrot.lane.b32.xlu0 %v1374, 32
  %v1432 = vpop.permute.xlu0 %1431
  %1433 = vrot.lane.b32.xlu0 %v1375, 32
  %v1434 = vpop.permute.xlu0 %1433
  %1435 = vrot.lane.b32.xlu0 %v1376, 32
  %v1436 = vpop.permute.xlu0 %1435
  %1437 = vrot.lane.b32.xlu0 %v1377, 32
  %v1438 = vpop.permute.xlu0 %1437
  %1439 = vrot.lane.b32.xlu0 %v1378, 32
  %v1440 = vpop.permute.xlu0 %1439
  %1441 = vrot.lane.b32.xlu0 %v1379, 32
  %v1442 = vpop.permute.xlu0 %1441
  %1443 = vrot.lane.b32.xlu0 %v1380, 32
  %v1444 = vpop.permute.xlu0 %1443
  %v1445 = vadd.f32 %v1285, %v1382
  %v1446 = vadd.f32 %v1286, %v1384
  %v1447 = vadd.f32 %v1287, %v1386
  %v1448 = vadd.f32 %v1288, %v1388
  %v1449 = vadd.f32 %v1289, %v1390
  %v1450 = vadd.f32 %v1290, %v1392
  %v1451 = vadd.f32 %v1291, %v1394
  %v1452 = vadd.f32 %v1292, %v1396
  %v1453 = vadd.f32 %v1293, %v1398
  %v1454 = vadd.f32 %v1294, %v1400
  %v1455 = vadd.f32 %v1295, %v1402
  %v1456 = vadd.f32 %v1296, %v1404
  %v1457 = vadd.f32 %v1297, %v1406
  %v1458 = vadd.f32 %v1298, %v1408
  %v1459 = vadd.f32 %v1299, %v1410
  %v1460 = vadd.f32 %v1300, %v1412
  %v1461 = vadd.f32 %v1301, %v1414
  %v1462 = vadd.f32 %v1302, %v1416
  %v1463 = vadd.f32 %v1303, %v1418
  %v1464 = vadd.f32 %v1304, %v1420
  %v1465 = vadd.f32 %v1305, %v1422
  %v1466 = vadd.f32 %v1306, %v1424
  %v1467 = vadd.f32 %v1307, %v1426
  %v1468 = vadd.f32 %v1308, %v1428
  %v1469 = vadd.f32 %v1309, %v1430
  %v1470 = vadd.f32 %v1310, %v1432
  %v1471 = vadd.f32 %v1311, %v1434
  %v1472 = vadd.f32 %v1312, %v1436
  %v1473 = vadd.f32 %v1313, %v1438
  %v1474 = vadd.f32 %v1314, %v1440
  %v1475 = vadd.f32 %v1315, %v1442
  %v1476 = vadd.f32 %v1316, %v1444
  %v1477 = vpack.c.bf16 %v1446, %v1445
  %v1478 = vpack.c.bf16 %v1448, %v1447
  %v1479 = vpack.c.bf16 %v1450, %v1449
  %v1480 = vpack.c.bf16 %v1452, %v1451
  %v1481 = vpack.c.bf16 %v1454, %v1453
  %v1482 = vpack.c.bf16 %v1456, %v1455
  %v1483 = vpack.c.bf16 %v1458, %v1457
  %v1484 = vpack.c.bf16 %v1460, %v1459
  %v1485 = vpack.c.bf16 %v1462, %v1461
  %v1486 = vpack.c.bf16 %v1464, %v1463
  %v1487 = vpack.c.bf16 %v1466, %v1465
  %v1488 = vpack.c.bf16 %v1468, %v1467
  %v1489 = vpack.c.bf16 %v1470, %v1469
  %v1490 = vpack.c.bf16 %v1472, %v1471
  %v1491 = vpack.c.bf16 %v1474, %v1473
  %v1492 = vpack.c.bf16 %v1476, %v1475
  %v1493 = vld [vmem:[%s1] sm:$0xff]
  %v1494 = vld [vmem:[%s1 + $0x8] sm:$0xff]
  %v1495 = vld [vmem:[%s1 + $0x10] sm:$0xff]
  %v1496 = vld [vmem:[%s1 + $0x18] sm:$0xff]
  %v1497 = vld [vmem:[%s1 + $0x20] sm:$0xff]
  %v1498 = vld [vmem:[%s1 + $0x28] sm:$0xff]
  %v1499 = vld [vmem:[%s1 + $0x30] sm:$0xff]
  %v1500 = vld [vmem:[%s1 + $0x38] sm:$0xff]
  %v1501 = vld [vmem:[%s1 + $0x40] sm:$0xff]
  %v1502 = vld [vmem:[%s1 + $0x48] sm:$0xff]
  %v1503 = vld [vmem:[%s1 + $0x50] sm:$0xff]
  %v1504 = vld [vmem:[%s1 + $0x58] sm:$0xff]
  %v1505 = vld [vmem:[%s1 + $0x60] sm:$0xff]
  %v1506 = vld [vmem:[%s1 + $0x68] sm:$0xff]
  %v1507 = vld [vmem:[%s1 + $0x70] sm:$0xff]
  %v1508 = vld [vmem:[%s1 + $0x78] sm:$0xff]
  %v1525 = vunpack.c.l.b16 %v1493
  %v1526 = vunpack.c.h.b16 %v1493
  %v1527 = vunpack.c.l.b16 %v1494
  %v1528 = vunpack.c.h.b16 %v1494
  %v1529 = vunpack.c.l.b16 %v1495
  %v1530 = vunpack.c.h.b16 %v1495
  %v1531 = vunpack.c.l.b16 %v1496
  %v1532 = vunpack.c.h.b16 %v1496
  %v1533 = vunpack.c.l.b16 %v1497
  %v1534 = vunpack.c.h.b16 %v1497
  %v1535 = vunpack.c.l.b16 %v1498
  %v1536 = vunpack.c.h.b16 %v1498
  %v1537 = vunpack.c.l.b16 %v1499
  %v1538 = vunpack.c.h.b16 %v1499
  %v1539 = vunpack.c.l.b16 %v1500
  %v1540 = vunpack.c.h.b16 %v1500
  %v1541 = vunpack.c.l.b16 %v1501
  %v1542 = vunpack.c.h.b16 %v1501
  %v1543 = vunpack.c.l.b16 %v1502
  %v1544 = vunpack.c.h.b16 %v1502
  %v1545 = vunpack.c.l.b16 %v1503
  %v1546 = vunpack.c.h.b16 %v1503
  %v1547 = vunpack.c.l.b16 %v1504
  %v1548 = vunpack.c.h.b16 %v1504
  %v1549 = vunpack.c.l.b16 %v1505
  %v1550 = vunpack.c.h.b16 %v1505
  %v1551 = vunpack.c.l.b16 %v1506
  %v1552 = vunpack.c.h.b16 %v1506
  %v1553 = vunpack.c.l.b16 %v1507
  %v1554 = vunpack.c.h.b16 %v1507
  %v1555 = vunpack.c.l.b16 %v1508
  %v1556 = vunpack.c.h.b16 %v1508
  %v1557 = vpack.c.b16 %v1527, %v1525
  %v1558 = vpack.c.b16 %v1528, %v1526
  %v1559 = vpack.c.b16 %v1531, %v1529
  %v1560 = vpack.c.b16 %v1532, %v1530
  %v1561 = vpack.c.b16 %v1535, %v1533
  %v1562 = vpack.c.b16 %v1536, %v1534
  %v1563 = vpack.c.b16 %v1539, %v1537
  %v1564 = vpack.c.b16 %v1540, %v1538
  %v1565 = vpack.c.b16 %v1543, %v1541
  %v1566 = vpack.c.b16 %v1544, %v1542
  %v1567 = vpack.c.b16 %v1547, %v1545
  %v1568 = vpack.c.b16 %v1548, %v1546
  %v1569 = vpack.c.b16 %v1551, %v1549
  %v1570 = vpack.c.b16 %v1552, %v1550
  %v1571 = vpack.c.b16 %v1555, %v1553
  %v1572 = vpack.c.b16 %v1556, %v1554
  %1589 = vmatprep.subr.bf16.mxu0 %v1558
  %1590 = vmatpush1.bf16.msra.mxu0 %v1557
  %1591 = vmatprep.subr.bf16.mxu0 %v1560
  %1592 = vmatpush1.bf16.msra.mxu0 %v1559
  %1593 = vmatprep.subr.bf16.mxu0 %v1562
  %1594 = vmatpush1.bf16.msra.mxu0 %v1561
  %1595 = vmatprep.subr.bf16.mxu0 %v1564
  %1596 = vmatpush1.bf16.msra.mxu0 %v1563
  %1597 = vmatprep.subr.bf16.mxu0 %v1566
  %1598 = vmatpush1.bf16.msra.mxu0 %v1565
  %1599 = vmatprep.subr.bf16.mxu0 %v1568
  %1600 = vmatpush1.bf16.msra.mxu0 %v1567
  %1601 = vmatprep.subr.bf16.mxu0 %v1570
  %1602 = vmatpush1.bf16.msra.mxu0 %v1569
  %1603 = vmatprep.subr.bf16.mxu0 %v1572
  %1604 = vmatpush1.bf16.msra.mxu0 %v1571
  %1605 = vmatprep.subr.bf16.mxu0 0
  %1606 = vmatpush1.bf16.msra.mxu0 0
  %1607 = vmatprep.subr.bf16.mxu0 0
  %1608 = vmatpush1.bf16.msra.mxu0 0
  %1609 = vmatprep.subr.bf16.mxu0 0
  %1610 = vmatpush1.bf16.msra.mxu0 0
  %1611 = vmatprep.subr.bf16.mxu0 0
  %1612 = vmatpush1.bf16.msra.mxu0 0
  %1613 = vmatprep.subr.bf16.mxu0 0
  %1614 = vmatpush1.bf16.msra.mxu0 0
  %1615 = vmatprep.subr.bf16.mxu0 0
  %1616 = vmatpush1.bf16.msra.mxu0 0
  %1617 = vmatprep.subr.bf16.mxu0 0
  %1618 = vmatpush1.bf16.msra.mxu0 0
  %1619 = vmatprep.subr.bf16.mxu0 0
  %1620 = vmatpush1.bf16.msra.mxu0 0
  %1621 = vmatprep.mubr.bf16.mxu0 0
  %1622 = vmatmul.mubr.bf16.gmra.mrb[0].mxu0 %v1477
  %v1623 = vpop.f32.mrb[0].mxu0
  %v1624 = vadd.f32 0.0, %v1623
  %v1625 = vpop.f32.mrb[0].mxu0
  %v1626 = vadd.f32 0.0, %v1625
  %v1627 = vpop.f32.mrb[0].mxu0
  %v1628 = vadd.f32 0.0, %v1627
  %v1629 = vpop.f32.mrb[0].mxu0
  %v1630 = vadd.f32 0.0, %v1629
  %1631 = vmatprep.mubr.bf16.mxu0 0
  %1632 = vmatmul.mubr.bf16.gmra.mrb[0].mxu0 %v1478
  %v1633 = vpop.f32.mrb[0].mxu0
  %v1634 = vadd.f32 0.0, %v1633
  %v1635 = vpop.f32.mrb[0].mxu0
  %v1636 = vadd.f32 0.0, %v1635
  %v1637 = vpop.f32.mrb[0].mxu0
  %v1638 = vadd.f32 0.0, %v1637
  %v1639 = vpop.f32.mrb[0].mxu0
  %v1640 = vadd.f32 0.0, %v1639
  %1641 = vmatprep.mubr.bf16.mxu0 0
  %1642 = vmatmul.mubr.bf16.gmra.mrb[0].mxu0 %v1479
  %v1643 = vpop.f32.mrb[0].mxu0
  %v1644 = vadd.f32 0.0, %v1643
  %v1645 = vpop.f32.mrb[0].mxu0
  %v1646 = vadd.f32 0.0, %v1645
  %v1647 = vpop.f32.mrb[0].mxu0
  %v1648 = vadd.f32 0.0, %v1647
  %v1649 = vpop.f32.mrb[0].mxu0
  %v1650 = vadd.f32 0.0, %v1649
  %1651 = vmatprep.mubr.bf16.mxu0 0
  %1652 = vmatmul.mubr.bf16.gmra.mrb[0].mxu0 %v1480
  %v1653 = vpop.f32.mrb[0].mxu0
  %v1654 = vadd.f32 0.0, %v1653
  %v1655 = vpop.f32.mrb[0].mxu0
  %v1656 = vadd.f32 0.0, %v1655
  %v1657 = vpop.f32.mrb[0].mxu0
  %v1658 = vadd.f32 0.0, %v1657
  %v1659 = vpop.f32.mrb[0].mxu0
  %v1660 = vadd.f32 0.0, %v1659
  %1661 = vmatprep.mubr.bf16.mxu0 0
  %1662 = vmatmul.mubr.bf16.gmra.mrb[0].mxu0 %v1481
  %v1663 = vpop.f32.mrb[0].mxu0
  %v1664 = vadd.f32 0.0, %v1663
  %v1665 = vpop.f32.mrb[0].mxu0
  %v1666 = vadd.f32 0.0, %v1665
  %v1667 = vpop.f32.mrb[0].mxu0
  %v1668 = vadd.f32 0.0, %v1667
  %v1669 = vpop.f32.mrb[0].mxu0
  %v1670 = vadd.f32 0.0, %v1669
  %1671 = vmatprep.mubr.bf16.mxu0 0
  %1672 = vmatmul.mubr.bf16.gmra.mrb[0].mxu0 %v1482
  %v1673 = vpop.f32.mrb[0].mxu0
  %v1674 = vadd.f32 0.0, %v1673
  %v1675 = vpop.f32.mrb[0].mxu0
  %v1676 = vadd.f32 0.0, %v1675
  %v1677 = vpop.f32.mrb[0].mxu0
  %v1678 = vadd.f32 0.0, %v1677
  %v1679 = vpop.f32.mrb[0].mxu0
  %v1680 = vadd.f32 0.0, %v1679
  %1681 = vmatprep.mubr.bf16.mxu0 0
  %1682 = vmatmul.mubr.bf16.gmra.mrb[0].mxu0 %v1483
  %v1683 = vpop.f32.mrb[0].mxu0
  %v1684 = vadd.f32 0.0, %v1683
  %v1685 = vpop.f32.mrb[0].mxu0
  %v1686 = vadd.f32 0.0, %v1685
  %v1687 = vpop.f32.mrb[0].mxu0
  %v1688 = vadd.f32 0.0, %v1687
  %v1689 = vpop.f32.mrb[0].mxu0
  %v1690 = vadd.f32 0.0, %v1689
  %1691 = vmatprep.mubr.bf16.mxu0 0
  %1692 = vmatmul.mubr.bf16.gmra.mrb[0].mxu0 %v1484
  %v1693 = vpop.f32.mrb[0].mxu0
  %v1694 = vadd.f32 0.0, %v1693
  %v1695 = vpop.f32.mrb[0].mxu0
  %v1696 = vadd.f32 0.0, %v1695
  %v1697 = vpop.f32.mrb[0].mxu0
  %v1698 = vadd.f32 0.0, %v1697
  %v1699 = vpop.f32.mrb[0].mxu0
  %v1700 = vadd.f32 0.0, %v1699
  %1701 = vmatprep.mubr.bf16.mxu0 0
  %1702 = vmatmul.mubr.bf16.gmra.mrb[0].mxu0 %v1485
  %v1703 = vpop.f32.mrb[0].mxu0
  %v1704 = vadd.f32 0.0, %v1703
  %v1705 = vpop.f32.mrb[0].mxu0
  %v1706 = vadd.f32 0.0, %v1705
  %v1707 = vpop.f32.mrb[0].mxu0
  %v1708 = vadd.f32 0.0, %v1707
  %v1709 = vpop.f32.mrb[0].mxu0
  %v1710 = vadd.f32 0.0, %v1709
  %1711 = vmatprep.mubr.bf16.mxu0 0
  %1712 = vmatmul.mubr.bf16.gmra.mrb[0].mxu0 %v1486
  %v1713 = vpop.f32.mrb[0].mxu0
  %v1714 = vadd.f32 0.0, %v1713
  %v1715 = vpop.f32.mrb[0].mxu0
  %v1716 = vadd.f32 0.0, %v1715
  %v1717 = vpop.f32.mrb[0].mxu0
  %v1718 = vadd.f32 0.0, %v1717
  %v1719 = vpop.f32.mrb[0].mxu0
  %v1720 = vadd.f32 0.0, %v1719
  %1721 = vmatprep.mubr.bf16.mxu0 0
  %1722 = vmatmul.mubr.bf16.gmra.mrb[0].mxu0 %v1487
  %v1723 = vpop.f32.mrb[0].mxu0
  %v1724 = vadd.f32 0.0, %v1723
  %v1725 = vpop.f32.mrb[0].mxu0
  %v1726 = vadd.f32 0.0, %v1725
  %v1727 = vpop.f32.mrb[0].mxu0
  %v1728 = vadd.f32 0.0, %v1727
  %v1729 = vpop.f32.mrb[0].mxu0
  %v1730 = vadd.f32 0.0, %v1729
  %1731 = vmatprep.mubr.bf16.mxu0 0
  %1732 = vmatmul.mubr.bf16.gmra.mrb[0].mxu0 %v1488
  %v1733 = vpop.f32.mrb[0].mxu0
  %v1734 = vadd.f32 0.0, %v1733
  %v1735 = vpop.f32.mrb[0].mxu0
  %v1736 = vadd.f32 0.0, %v1735
  %v1737 = vpop.f32.mrb[0].mxu0
  %v1738 = vadd.f32 0.0, %v1737
  %v1739 = vpop.f32.mrb[0].mxu0
  %v1740 = vadd.f32 0.0, %v1739
  %1741 = vmatprep.mubr.bf16.mxu0 0
  %1742 = vmatmul.mubr.bf16.gmra.mrb[0].mxu0 %v1489
  %v1743 = vpop.f32.mrb[0].mxu0
  %v1744 = vadd.f32 0.0, %v1743
  %v1745 = vpop.f32.mrb[0].mxu0
  %v1746 = vadd.f32 0.0, %v1745
  %v1747 = vpop.f32.mrb[0].mxu0
  %v1748 = vadd.f32 0.0, %v1747
  %v1749 = vpop.f32.mrb[0].mxu0
  %v1750 = vadd.f32 0.0, %v1749
  %1751 = vmatprep.mubr.bf16.mxu0 0
  %1752 = vmatmul.mubr.bf16.gmra.mrb[0].mxu0 %v1490
  %v1753 = vpop.f32.mrb[0].mxu0
  %v1754 = vadd.f32 0.0, %v1753
  %v1755 = vpop.f32.mrb[0].mxu0
  %v1756 = vadd.f32 0.0, %v1755
  %v1757 = vpop.f32.mrb[0].mxu0
  %v1758 = vadd.f32 0.0, %v1757
  %v1759 = vpop.f32.mrb[0].mxu0
  %v1760 = vadd.f32 0.0, %v1759
  %1761 = vmatprep.mubr.bf16.mxu0 0
  %1762 = vmatmul.mubr.bf16.gmra.mrb[0].mxu0 %v1491
  %v1763 = vpop.f32.mrb[0].mxu0
  %v1764 = vadd.f32 0.0, %v1763
  %v1765 = vpop.f32.mrb[0].mxu0
  %v1766 = vadd.f32 0.0, %v1765
  %v1767 = vpop.f32.mrb[0].mxu0
  %v1768 = vadd.f32 0.0, %v1767
  %v1769 = vpop.f32.mrb[0].mxu0
  %v1770 = vadd.f32 0.0, %v1769
  %1771 = vmatprep.mubr.bf16.mxu0 0
  %1772 = vmatmul.mubr.bf16.gmra.mrb[0].mxu0 %v1492
  %v1773 = vpop.f32.mrb[0].mxu0
  %v1774 = vadd.f32 0.0, %v1773
  %v1775 = vpop.f32.mrb[0].mxu0
  %v1776 = vadd.f32 0.0, %v1775
  %v1777 = vpop.f32.mrb[0].mxu0
  %v1778 = vadd.f32 0.0, %v1777
  %v1779 = vpop.f32.mrb[0].mxu0
  %v1780 = vadd.f32 0.0, %v1779
  %1781 = vdwg.mxu0
  %v1782 = vld [vmem:[%s5] sm:$0xff]
  %v1783 = vld [vmem:[%s5 + $0x8] sm:$0xff]
  %v1784 = vld [vmem:[%s5 + $0x10] sm:$0xff]
  %v1785 = vld [vmem:[%s5 + $0x18] sm:$0xff]
  %v1786 = vld [vmem:[%s5 + $0x20] sm:$0xff]
  %v1787 = vld [vmem:[%s5 + $0x28] sm:$0xff]
  %v1788 = vld [vmem:[%s5 + $0x30] sm:$0xff]
  %v1789 = vld [vmem:[%s5 + $0x38] sm:$0xff]
  %v1790 = vld [vmem:[%s5 + $0x40] sm:$0xff]
  %v1791 = vld [vmem:[%s5 + $0x48] sm:$0xff]
  %v1792 = vld [vmem:[%s5 + $0x50] sm:$0xff]
  %v1793 = vld [vmem:[%s5 + $0x58] sm:$0xff]
  %v1794 = vld [vmem:[%s5 + $0x60] sm:$0xff]
  %v1795 = vld [vmem:[%s5 + $0x68] sm:$0xff]
  %v1796 = vld [vmem:[%s5 + $0x70] sm:$0xff]
  %v1797 = vld [vmem:[%s5 + $0x78] sm:$0xff]
  %v1798 = vld [vmem:[%s5 + $0x80] sm:$0xff]
  %v1799 = vld [vmem:[%s5 + $0x88] sm:$0xff]
  %v1800 = vld [vmem:[%s5 + $0x90] sm:$0xff]
  %v1801 = vld [vmem:[%s5 + $0x98] sm:$0xff]
  %v1802 = vld [vmem:[%s5 + $0xa0] sm:$0xff]
  %v1803 = vld [vmem:[%s5 + $0xa8] sm:$0xff]
  %v1804 = vld [vmem:[%s5 + $0xb0] sm:$0xff]
  %v1805 = vld [vmem:[%s5 + $0xb8] sm:$0xff]
  %v1806 = vld [vmem:[%s5 + $0xc0] sm:$0xff]
  %v1807 = vld [vmem:[%s5 + $0xc8] sm:$0xff]
  %v1808 = vld [vmem:[%s5 + $0xd0] sm:$0xff]
  %v1809 = vld [vmem:[%s5 + $0xd8] sm:$0xff]
  %v1810 = vld [vmem:[%s5 + $0xe0] sm:$0xff]
  %v1811 = vld [vmem:[%s5 + $0xe8] sm:$0xff]
  %v1812 = vld [vmem:[%s5 + $0xf0] sm:$0xff]
  %v1813 = vld [vmem:[%s5 + $0xf8] sm:$0xff]
  %v1814 = vpack.c.bf16 %v1628, %v1624
  %v1815 = vpack.c.bf16 %v1638, %v1634
  %v1816 = vpack.c.bf16 %v1648, %v1644
  %v1817 = vpack.c.bf16 %v1658, %v1654
  %v1818 = vpack.c.bf16 %v1668, %v1664
  %v1819 = vpack.c.bf16 %v1678, %v1674
  %v1820 = vpack.c.bf16 %v1688, %v1684
  %v1821 = vpack.c.bf16 %v1698, %v1694
  %v1822 = vpack.c.bf16 %v1708, %v1704
  %v1823 = vpack.c.bf16 %v1718, %v1714
  %v1824 = vpack.c.bf16 %v1728, %v1724
  %v1825 = vpack.c.bf16 %v1738, %v1734
  %v1826 = vpack.c.bf16 %v1748, %v1744
  %v1827 = vpack.c.bf16 %v1758, %v1754
  %v1828 = vpack.c.bf16 %v1768, %v1764
  %v1829 = vpack.c.bf16 %v1778, %v1774
  %v1830 = vld [vmem:[%s2] sm:$0x1]
  %v1832 = vlaneseq
  %v1833 = vshrl.u32 %v1832, 7
  %v1834 = vsub.s32 0, %v1833
  %v1835 = vrot.slane %v1830, %v1834
  %v1869 = vunpack.c.l.b16 %v1782
  %v1870 = vunpack.c.h.b16 %v1782
  %v1871 = vunpack.c.l.b16 %v1783
  %v1872 = vunpack.c.h.b16 %v1783
  %v1873 = vunpack.c.l.b16 %v1784
  %v1874 = vunpack.c.h.b16 %v1784
  %v1875 = vunpack.c.l.b16 %v1785
  %v1876 = vunpack.c.h.b16 %v1785
  %v1877 = vunpack.c.l.b16 %v1786
  %v1878 = vunpack.c.h.b16 %v1786
  %v1879 = vunpack.c.l.b16 %v1787
  %v1880 = vunpack.c.h.b16 %v1787
  %v1881 = vunpack.c.l.b16 %v1788
  %v1882 = vunpack.c.h.b16 %v1788
  %v1883 = vunpack.c.l.b16 %v1789
  %v1884 = vunpack.c.h.b16 %v1789
  %v1885 = vunpack.c.l.b16 %v1790
  %v1886 = vunpack.c.h.b16 %v1790
  %v1887 = vunpack.c.l.b16 %v1791
  %v1888 = vunpack.c.h.b16 %v1791
  %v1889 = vunpack.c.l.b16 %v1792
  %v1890 = vunpack.c.h.b16 %v1792
  %v1891 = vunpack.c.l.b16 %v1793
  %v1892 = vunpack.c.h.b16 %v1793
  %v1893 = vunpack.c.l.b16 %v1794
  %v1894 = vunpack.c.h.b16 %v1794
  %v1895 = vunpack.c.l.b16 %v1795
  %v1896 = vunpack.c.h.b16 %v1795
  %v1897 = vunpack.c.l.b16 %v1796
  %v1898 = vunpack.c.h.b16 %v1796
  %v1899 = vunpack.c.l.b16 %v1797
  %v1900 = vunpack.c.h.b16 %v1797
  %v1901 = vunpack.c.l.b16 %v1798
  %v1902 = vunpack.c.h.b16 %v1798
  %v1903 = vunpack.c.l.b16 %v1799
  %v1904 = vunpack.c.h.b16 %v1799
  %v1905 = vunpack.c.l.b16 %v1800
  %v1906 = vunpack.c.h.b16 %v1800
  %v1907 = vunpack.c.l.b16 %v1801
  %v1908 = vunpack.c.h.b16 %v1801
  %v1909 = vunpack.c.l.b16 %v1802
  %v1910 = vunpack.c.h.b16 %v1802
  %v1911 = vunpack.c.l.b16 %v1803
  %v1912 = vunpack.c.h.b16 %v1803
  %v1913 = vunpack.c.l.b16 %v1804
  %v1914 = vunpack.c.h.b16 %v1804
  %v1915 = vunpack.c.l.b16 %v1805
  %v1916 = vunpack.c.h.b16 %v1805
  %v1917 = vunpack.c.l.b16 %v1806
  %v1918 = vunpack.c.h.b16 %v1806
  %v1919 = vunpack.c.l.b16 %v1807
  %v1920 = vunpack.c.h.b16 %v1807
  %v1921 = vunpack.c.l.b16 %v1808
  %v1922 = vunpack.c.h.b16 %v1808
  %v1923 = vunpack.c.l.b16 %v1809
  %v1924 = vunpack.c.h.b16 %v1809
  %v1925 = vunpack.c.l.b16 %v1810
  %v1926 = vunpack.c.h.b16 %v1810
  %v1927 = vunpack.c.l.b16 %v1811
  %v1928 = vunpack.c.h.b16 %v1811
  %v1929 = vunpack.c.l.b16 %v1812
  %v1930 = vunpack.c.h.b16 %v1812
  %v1931 = vunpack.c.l.b16 %v1813
  %v1932 = vunpack.c.h.b16 %v1813
  %v1933 = vpack.c.b16 %v1871, %v1869
  %v1934 = vpack.c.b16 %v1872, %v1870
  %v1935 = vpack.c.b16 %v1875, %v1873
  %v1936 = vpack.c.b16 %v1876, %v1874
  %v1937 = vpack.c.b16 %v1879, %v1877
  %v1938 = vpack.c.b16 %v1880, %v1878
  %v1939 = vpack.c.b16 %v1883, %v1881
  %v1940 = vpack.c.b16 %v1884, %v1882
  %v1941 = vpack.c.b16 %v1887, %v1885
  %v1942 = vpack.c.b16 %v1888, %v1886
  %v1943 = vpack.c.b16 %v1891, %v1889
  %v1944 = vpack.c.b16 %v1892, %v1890
  %v1945 = vpack.c.b16 %v1895, %v1893
  %v1946 = vpack.c.b16 %v1896, %v1894
  %v1947 = vpack.c.b16 %v1899, %v1897
  %v1948 = vpack.c.b16 %v1900, %v1898
  %v1949 = vpack.c.b16 %v1903, %v1901
  %v1950 = vpack.c.b16 %v1904, %v1902
  %v1951 = vpack.c.b16 %v1907, %v1905
  %v1952 = vpack.c.b16 %v1908, %v1906
  %v1953 = vpack.c.b16 %v1911, %v1909
  %v1954 = vpack.c.b16 %v1912, %v1910
  %v1955 = vpack.c.b16 %v1915, %v1913
  %v1956 = vpack.c.b16 %v1916, %v1914
  %v1957 = vpack.c.b16 %v1919, %v1917
  %v1958 = vpack.c.b16 %v1920, %v1918
  %v1959 = vpack.c.b16 %v1923, %v1921
  %v1960 = vpack.c.b16 %v1924, %v1922
  %v1961 = vpack.c.b16 %v1927, %v1925
  %v1962 = vpack.c.b16 %v1928, %v1926
  %v1963 = vpack.c.b16 %v1931, %v1929
  %v1964 = vpack.c.b16 %v1932, %v1930
  %1997 = vmatprep.subr.bf16.mxu0 0
  %1998 = vmatpush1.bf16.msra.mxu0 %v1814
  %1999 = vmatprep.subr.bf16.mxu0 0
  %2000 = vmatpush1.bf16.msra.mxu0 %v1815
  %2001 = vmatprep.subr.bf16.mxu0 0
  %2002 = vmatpush1.bf16.msra.mxu0 %v1816
  %2003 = vmatprep.subr.bf16.mxu0 0
  %2004 = vmatpush1.bf16.msra.mxu0 %v1817
  %2005 = vmatprep.subr.bf16.mxu0 0
  %2006 = vmatpush1.bf16.msra.mxu0 %v1818
  %2007 = vmatprep.subr.bf16.mxu0 0
  %2008 = vmatpush1.bf16.msra.mxu0 %v1819
  %2009 = vmatprep.subr.bf16.mxu0 0
  %2010 = vmatpush1.bf16.msra.mxu0 %v1820
  %2011 = vmatprep.subr.bf16.mxu0 0
  %2012 = vmatpush1.bf16.msra.mxu0 %v1821
  %2013 = vmatprep.subr.bf16.mxu0 0
  %2014 = vmatpush1.bf16.msra.mxu0 %v1822
  %2015 = vmatprep.subr.bf16.mxu0 0
  %2016 = vmatpush1.bf16.msra.mxu0 %v1823
  %2017 = vmatprep.subr.bf16.mxu0 0
  %2018 = vmatpush1.bf16.msra.mxu0 %v1824
  %2019 = vmatprep.subr.bf16.mxu0 0
  %2020 = vmatpush1.bf16.msra.mxu0 %v1825
  %2021 = vmatprep.subr.bf16.mxu0 0
  %2022 = vmatpush1.bf16.msra.mxu0 %v1826
  %2023 = vmatprep.subr.bf16.mxu0 0
  %2024 = vmatpush1.bf16.msra.mxu0 %v1827
  %2025 = vmatprep.subr.bf16.mxu0 0
  %2026 = vmatpush1.bf16.msra.mxu0 %v1828
  %2027 = vmatprep.subr.bf16.mxu0 0
  %2028 = vmatpush1.bf16.msra.mxu0 %v1829
  %2029 = vmatprep.mubr.bf16.mxu0 %v1934
  %2030 = vmatmul.mubr.bf16.gmra.mrb[0].mxu0 %v1933
  %v2031 = vpop.f32.mrb[0].mxu0
  %v2032 = vadd.f32 %v1835, %v2031
  %v2033 = vpop.f32.mrb[0].mxu0
  %v2034 = vpop.f32.mrb[0].mxu0
  %v2035 = vadd.f32 %v1835, %v2034
  %v2036 = vpop.f32.mrb[0].mxu0
  %2037 = vmatprep.mubr.bf16.mxu0 %v1936
  %2038 = vmatmul.mubr.bf16.gmra.mrb[0].mxu0 %v1935
  %v2039 = vpop.f32.mrb[0].mxu0
  %v2040 = vadd.f32 %v1835, %v2039
  %v2041 = vpop.f32.mrb[0].mxu0
  %v2042 = vpop.f32.mrb[0].mxu0
  %v2043 = vadd.f32 %v1835, %v2042
  %v2044 = vpop.f32.mrb[0].mxu0
  %2045 = vmatprep.mubr.bf16.mxu0 %v1938
  %2046 = vmatmul.mubr.bf16.gmra.mrb[0].mxu0 %v1937
  %v2047 = vpop.f32.mrb[0].mxu0
  %v2048 = vadd.f32 %v1835, %v2047
  %v2049 = vpop.f32.mrb[0].mxu0
  %v2050 = vpop.f32.mrb[0].mxu0
  %v2051 = vadd.f32 %v1835, %v2050
  %v2052 = vpop.f32.mrb[0].mxu0
  %2053 = vmatprep.mubr.bf16.mxu0 %v1940
  %2054 = vmatmul.mubr.bf16.gmra.mrb[0].mxu0 %v1939
  %v2055 = vpop.f32.mrb[0].mxu0
  %v2056 = vadd.f32 %v1835, %v2055
  %v2057 = vpop.f32.mrb[0].mxu0
  %v2058 = vpop.f32.mrb[0].mxu0
  %v2059 = vadd.f32 %v1835, %v2058
  %v2060 = vpop.f32.mrb[0].mxu0
  %2061 = vmatprep.mubr.bf16.mxu0 %v1942
  %2062 = vmatmul.mubr.bf16.gmra.mrb[0].mxu0 %v1941
  %v2063 = vpop.f32.mrb[0].mxu0
  %v2064 = vadd.f32 %v1835, %v2063
  %v2065 = vpop.f32.mrb[0].mxu0
  %v2066 = vpop.f32.mrb[0].mxu0
  %v2067 = vadd.f32 %v1835, %v2066
  %v2068 = vpop.f32.mrb[0].mxu0
  %2069 = vmatprep.mubr.bf16.mxu0 %v1944
  %2070 = vmatmul.mubr.bf16.gmra.mrb[0].mxu0 %v1943
  %v2071 = vpop.f32.mrb[0].mxu0
  %v2072 = vadd.f32 %v1835, %v2071
  %v2073 = vpop.f32.mrb[0].mxu0
  %v2074 = vpop.f32.mrb[0].mxu0
  %v2075 = vadd.f32 %v1835, %v2074
  %v2076 = vpop.f32.mrb[0].mxu0
  %2077 = vmatprep.mubr.bf16.mxu0 %v1946
  %2078 = vmatmul.mubr.bf16.gmra.mrb[0].mxu0 %v1945
  %v2079 = vpop.f32.mrb[0].mxu0
  %v2080 = vadd.f32 %v1835, %v2079
  %v2081 = vpop.f32.mrb[0].mxu0
  %v2082 = vpop.f32.mrb[0].mxu0
  %v2083 = vadd.f32 %v1835, %v2082
  %v2084 = vpop.f32.mrb[0].mxu0
  %2085 = vmatprep.mubr.bf16.mxu0 %v1948
  %2086 = vmatmul.mubr.bf16.gmra.mrb[0].mxu0 %v1947
  %v2087 = vpop.f32.mrb[0].mxu0
  %v2088 = vadd.f32 %v1835, %v2087
  %v2089 = vpop.f32.mrb[0].mxu0
  %v2090 = vpop.f32.mrb[0].mxu0
  %v2091 = vadd.f32 %v1835, %v2090
  %v2092 = vpop.f32.mrb[0].mxu0
  %2093 = vmatprep.mubr.bf16.mxu0 %v1950
  %2094 = vmatmul.mubr.bf16.gmra.mrb[0].mxu0 %v1949
  %v2095 = vpop.f32.mrb[0].mxu0
  %v2096 = vadd.f32 %v1835, %v2095
  %v2097 = vpop.f32.mrb[0].mxu0
  %v2098 = vpop.f32.mrb[0].mxu0
  %v2099 = vadd.f32 %v1835, %v2098
  %v2100 = vpop.f32.mrb[0].mxu0
  %2101 = vmatprep.mubr.bf16.mxu0 %v1952
  %2102 = vmatmul.mubr.bf16.gmra.mrb[0].mxu0 %v1951
  %v2103 = vpop.f32.mrb[0].mxu0
  %v2104 = vadd.f32 %v1835, %v2103
  %v2105 = vpop.f32.mrb[0].mxu0
  %v2106 = vpop.f32.mrb[0].mxu0
  %v2107 = vadd.f32 %v1835, %v2106
  %v2108 = vpop.f32.mrb[0].mxu0
  %2109 = vmatprep.mubr.bf16.mxu0 %v1954
  %2110 = vmatmul.mubr.bf16.gmra.mrb[0].mxu0 %v1953
  %v2111 = vpop.f32.mrb[0].mxu0
  %v2112 = vadd.f32 %v1835, %v2111
  %v2113 = vpop.f32.mrb[0].mxu0
  %v2114 = vpop.f32.mrb[0].mxu0
  %v2115 = vadd.f32 %v1835, %v2114
  %v2116 = vpop.f32.mrb[0].mxu0
  %2117 = vmatprep.mubr.bf16.mxu0 %v1956
  %2118 = vmatmul.mubr.bf16.gmra.mrb[0].mxu0 %v1955
  %v2119 = vpop.f32.mrb[0].mxu0
  %v2120 = vadd.f32 %v1835, %v2119
  %v2121 = vpop.f32.mrb[0].mxu0
  %v2122 = vpop.f32.mrb[0].mxu0
  %v2123 = vadd.f32 %v1835, %v2122
  %v2124 = vpop.f32.mrb[0].mxu0
  %2125 = vmatprep.mubr.bf16.mxu0 %v1958
  %2126 = vmatmul.mubr.bf16.gmra.mrb[0].mxu0 %v1957
  %v2127 = vpop.f32.mrb[0].mxu0
  %v2128 = vadd.f32 %v1835, %v2127
  %v2129 = vpop.f32.mrb[0].mxu0
  %v2130 = vpop.f32.mrb[0].mxu0
  %v2131 = vadd.f32 %v1835, %v2130
  %v2132 = vpop.f32.mrb[0].mxu0
  %2133 = vmatprep.mubr.bf16.mxu0 %v1960
  %2134 = vmatmul.mubr.bf16.gmra.mrb[0].mxu0 %v1959
  %v2135 = vpop.f32.mrb[0].mxu0
  %v2136 = vadd.f32 %v1835, %v2135
  %v2137 = vpop.f32.mrb[0].mxu0
  %v2138 = vpop.f32.mrb[0].mxu0
  %v2139 = vadd.f32 %v1835, %v2138
  %v2140 = vpop.f32.mrb[0].mxu0
  %2141 = vmatprep.mubr.bf16.mxu0 %v1962
  %2142 = vmatmul.mubr.bf16.gmra.mrb[0].mxu0 %v1961
  %v2143 = vpop.f32.mrb[0].mxu0
  %v2144 = vadd.f32 %v1835, %v2143
  %v2145 = vpop.f32.mrb[0].mxu0
  %v2146 = vpop.f32.mrb[0].mxu0
  %v2147 = vadd.f32 %v1835, %v2146
  %v2148 = vpop.f32.mrb[0].mxu0
  %2149 = vmatprep.mubr.bf16.mxu0 %v1964
  %2150 = vmatmul.mubr.bf16.gmra.mrb[0].mxu0 %v1963
  %v2151 = vpop.f32.mrb[0].mxu0
  %v2152 = vadd.f32 %v1835, %v2151
  %v2153 = vpop.f32.mrb[0].mxu0
  %v2154 = vpop.f32.mrb[0].mxu0
  %v2155 = vadd.f32 %v1835, %v2154
  %v2156 = vpop.f32.mrb[0].mxu0
  %2157 = vdwg.mxu0
  %v2158 = vmax.f32 %v2032, 0.0
  %v2159 = vmax.f32 %v2035, 0.0
  %v2160 = vmax.f32 %v2040, 0.0
  %v2161 = vmax.f32 %v2043, 0.0
  %v2162 = vmax.f32 %v2048, 0.0
  %v2163 = vmax.f32 %v2051, 0.0
  %v2164 = vmax.f32 %v2056, 0.0
  %v2165 = vmax.f32 %v2059, 0.0
  %v2166 = vmax.f32 %v2064, 0.0
  %v2167 = vmax.f32 %v2067, 0.0
  %v2168 = vmax.f32 %v2072, 0.0
  %v2169 = vmax.f32 %v2075, 0.0
  %v2170 = vmax.f32 %v2080, 0.0
  %v2171 = vmax.f32 %v2083, 0.0
  %v2172 = vmax.f32 %v2088, 0.0
  %v2173 = vmax.f32 %v2091, 0.0
  %v2174 = vmax.f32 %v2096, 0.0
  %v2175 = vmax.f32 %v2099, 0.0
  %v2176 = vmax.f32 %v2104, 0.0
  %v2177 = vmax.f32 %v2107, 0.0
  %v2178 = vmax.f32 %v2112, 0.0
  %v2179 = vmax.f32 %v2115, 0.0
  %v2180 = vmax.f32 %v2120, 0.0
  %v2181 = vmax.f32 %v2123, 0.0
  %v2182 = vmax.f32 %v2128, 0.0
  %v2183 = vmax.f32 %v2131, 0.0
  %v2184 = vmax.f32 %v2136, 0.0
  %v2185 = vmax.f32 %v2139, 0.0
  %v2186 = vmax.f32 %v2144, 0.0
  %v2187 = vmax.f32 %v2147, 0.0
  %v2188 = vmax.f32 %v2152, 0.0
  %v2189 = vmax.f32 %v2155, 0.0
  %2190 = vst [vmem:[%s31 + $0x1] sm:$0xff] %v2158
  %2191 = vst [vmem:[%s31 + $0x9] sm:$0xff] %v2159
  %2192 = vst [vmem:[%s31 + $0x19] sm:$0xff] %v2160
  %2193 = vst [vmem:[%s31 + $0x21] sm:$0xff] %v2161
  %2194 = vst [vmem:[%s31 + $0x31] sm:$0xff] %v2162
  %2195 = vst [vmem:[%s31 + $0x39] sm:$0xff] %v2163
  %2196 = vst [vmem:[%s31 + $0x49] sm:$0xff] %v2164
  %2197 = vst [vmem:[%s31 + $0x51] sm:$0xff] %v2165
  %2198 = vst [vmem:[%s31 + $0x61] sm:$0xff] %v2166
  %2199 = vst [vmem:[%s31 + $0x69] sm:$0xff] %v2167
  %2200 = vst [vmem:[%s31 + $0x79] sm:$0xff] %v2168
  %2201 = vst [vmem:[%s31 + $0x81] sm:$0xff] %v2169
  %2202 = vst [vmem:[%s31 + $0x91] sm:$0xff] %v2170
  %2203 = vst [vmem:[%s31 + $0x99] sm:$0xff] %v2171
  %2204 = vst [vmem:[%s31 + $0xa9] sm:$0xff] %v2172
  %2205 = vst [vmem:[%s31 + $0xb1] sm:$0xff] %v2173
  %2206 = vst [vmem:[%s31 + $0xc1] sm:$0xff] %v2174
  %2207 = vst [vmem:[%s31 + $0xc9] sm:$0xff] %v2175
  %2208 = vst [vmem:[%s31 + $0xd9] sm:$0xff] %v2176
  %2209 = vst [vmem:[%s31 + $0xe1] sm:$0xff] %v2177
  %2210 = vst [vmem:[%s31 + $0xf1] sm:$0xff] %v2178
  %2211 = vst [vmem:[%s31 + $0xf9] sm:$0xff] %v2179
  %2212 = vst [vmem:[%s31 + $0x109] sm:$0xff] %v2180
  %2213 = vst [vmem:[%s31 + $0x111] sm:$0xff] %v2181
  %2214 = vst [vmem:[%s31 + $0x121] sm:$0xff] %v2182
  %2215 = vst [vmem:[%s31 + $0x129] sm:$0xff] %v2183
  %2216 = vst [vmem:[%s31 + $0x139] sm:$0xff] %v2184
  %2217 = vst [vmem:[%s31 + $0x141] sm:$0xff] %v2185
  %2218 = vst [vmem:[%s31 + $0x151] sm:$0xff] %v2186
  %2219 = vst [vmem:[%s31 + $0x159] sm:$0xff] %v2187
  %2220 = vst [vmem:[%s31 + $0x169] sm:$0xff] %v2188
  %2221 = vst [vmem:[%s31 + $0x171] sm:$0xff] %v2189
  %vm2222 = vcmp.lt.s32.totalorder %v65, 8
  %v2223 = vld [vmem:[#allocation2] sm:$0xff]
  %v2224 = vld [vmem:[#allocation2 + $0x8] sm:$0xff]
  %v2225 = vld [vmem:[#allocation2 + $0x18] sm:$0xff]
  %v2226 = vld [vmem:[#allocation2 + $0x20] sm:$0xff]
  %v2227 = vld [vmem:[#allocation2 + $0x30] sm:$0xff]
  %v2228 = vld [vmem:[#allocation2 + $0x38] sm:$0xff]
  %v2229 = vld [vmem:[#allocation2 + $0x48] sm:$0xff]
  %v2230 = vld [vmem:[#allocation2 + $0x50] sm:$0xff]
  %v2231 = vld [vmem:[#allocation2 + $0x60] sm:$0xff]
  %v2232 = vld [vmem:[#allocation2 + $0x68] sm:$0xff]
  %v2233 = vld [vmem:[#allocation2 + $0x78] sm:$0xff]
  %v2234 = vld [vmem:[#allocation2 + $0x80] sm:$0xff]
  %v2235 = vld [vmem:[#allocation2 + $0x90] sm:$0xff]
  %v2236 = vld [vmem:[#allocation2 + $0x98] sm:$0xff]
  %v2237 = vld [vmem:[#allocation2 + $0xa8] sm:$0xff]
  %v2238 = vld [vmem:[#allocation2 + $0xb0] sm:$0xff]
  %v2239 = vld [vmem:[#allocation2 + $0xc0] sm:$0xff]
  %v2240 = vld [vmem:[#allocation2 + $0xc8] sm:$0xff]
  %v2241 = vld [vmem:[#allocation2 + $0xd8] sm:$0xff]
  %v2242 = vld [vmem:[#allocation2 + $0xe0] sm:$0xff]
  %v2243 = vld [vmem:[#allocation2 + $0xf0] sm:$0xff]
  %v2244 = vld [vmem:[#allocation2 + $0xf8] sm:$0xff]
  %v2245 = vld [vmem:[#allocation2 + $0x108] sm:$0xff]
  %v2246 = vld [vmem:[#allocation2 + $0x110] sm:$0xff]
  %v2247 = vld [vmem:[#allocation2 + $0x120] sm:$0xff]
  %v2248 = vld [vmem:[#allocation2 + $0x128] sm:$0xff]
  %v2249 = vld [vmem:[#allocation2 + $0x138] sm:$0xff]
  %v2250 = vld [vmem:[#allocation2 + $0x140] sm:$0xff]
  %v2251 = vld [vmem:[#allocation2 + $0x150] sm:$0xff]
  %v2252 = vld [vmem:[#allocation2 + $0x158] sm:$0xff]
  %v2253 = vld [vmem:[#allocation2 + $0x168] sm:$0xff]
  %v2254 = vld [vmem:[#allocation2 + $0x170] sm:$0xff]
  %v2255 = vsel %vm2222, %v2223, 0.0
  %v2256 = vsel %vm2222, %v2224, 0.0
  %v2257 = vsel %vm2222, %v2225, 0.0
  %v2258 = vsel %vm2222, %v2226, 0.0
  %v2259 = vsel %vm2222, %v2227, 0.0
  %v2260 = vsel %vm2222, %v2228, 0.0
  %v2261 = vsel %vm2222, %v2229, 0.0
  %v2262 = vsel %vm2222, %v2230, 0.0
  %v2263 = vsel %vm2222, %v2231, 0.0
  %v2264 = vsel %vm2222, %v2232, 0.0
  %v2265 = vsel %vm2222, %v2233, 0.0
  %v2266 = vsel %vm2222, %v2234, 0.0
  %v2267 = vsel %vm2222, %v2235, 0.0
  %v2268 = vsel %vm2222, %v2236, 0.0
  %v2269 = vsel %vm2222, %v2237, 0.0
  %v2270 = vsel %vm2222, %v2238, 0.0
  %v2271 = vsel %vm2222, %v2239, 0.0
  %v2272 = vsel %vm2222, %v2240, 0.0
  %v2273 = vsel %vm2222, %v2241, 0.0
  %v2274 = vsel %vm2222, %v2242, 0.0
  %v2275 = vsel %vm2222, %v2243, 0.0
  %v2276 = vsel %vm2222, %v2244, 0.0
  %v2277 = vsel %vm2222, %v2245, 0.0
  %v2278 = vsel %vm2222, %v2246, 0.0
  %v2279 = vsel %vm2222, %v2247, 0.0
  %v2280 = vsel %vm2222, %v2248, 0.0
  %v2281 = vsel %vm2222, %v2249, 0.0
  %v2282 = vsel %vm2222, %v2250, 0.0
  %v2283 = vsel %vm2222, %v2251, 0.0
  %v2284 = vsel %vm2222, %v2252, 0.0
  %v2285 = vsel %vm2222, %v2253, 0.0
  %v2286 = vsel %vm2222, %v2254, 0.0
  %v2287 = vld [vmem:[#allocation2 + $0x1] sm:$0xff]
  %v2288 = vld [vmem:[#allocation2 + $0x9] sm:$0xff]
  %v2289 = vld [vmem:[#allocation2 + $0x19] sm:$0xff]
  %v2290 = vld [vmem:[#allocation2 + $0x21] sm:$0xff]
  %v2291 = vld [vmem:[#allocation2 + $0x31] sm:$0xff]
  %v2292 = vld [vmem:[#allocation2 + $0x39] sm:$0xff]
  %v2293 = vld [vmem:[#allocation2 + $0x49] sm:$0xff]
  %v2294 = vld [vmem:[#allocation2 + $0x51] sm:$0xff]
  %v2295 = vld [vmem:[#allocation2 + $0x61] sm:$0xff]
  %v2296 = vld [vmem:[#allocation2 + $0x69] sm:$0xff]
  %v2297 = vld [vmem:[#allocation2 + $0x79] sm:$0xff]
  %v2298 = vld [vmem:[#allocation2 + $0x81] sm:$0xff]
  %v2299 = vld [vmem:[#allocation2 + $0x91] sm:$0xff]
  %v2300 = vld [vmem:[#allocation2 + $0x99] sm:$0xff]
  %v2301 = vld [vmem:[#allocation2 + $0xa9] sm:$0xff]
  %v2302 = vld [vmem:[#allocation2 + $0xb1] sm:$0xff]
  %v2303 = vld [vmem:[#allocation2 + $0xc1] sm:$0xff]
  %v2304 = vld [vmem:[#allocation2 + $0xc9] sm:$0xff]
  %v2305 = vld [vmem:[#allocation2 + $0xd9] sm:$0xff]
  %v2306 = vld [vmem:[#allocation2 + $0xe1] sm:$0xff]
  %v2307 = vld [vmem:[#allocation2 + $0xf1] sm:$0xff]
  %v2308 = vld [vmem:[#allocation2 + $0xf9] sm:$0xff]
  %v2309 = vld [vmem:[#allocation2 + $0x109] sm:$0xff]
  %v2310 = vld [vmem:[#allocation2 + $0x111] sm:$0xff]
  %v2311 = vld [vmem:[#allocation2 + $0x121] sm:$0xff]
  %v2312 = vld [vmem:[#allocation2 + $0x129] sm:$0xff]
  %v2313 = vld [vmem:[#allocation2 + $0x139] sm:$0xff]
  %v2314 = vld [vmem:[#allocation2 + $0x141] sm:$0xff]
  %v2315 = vld [vmem:[#allocation2 + $0x151] sm:$0xff]
  %v2316 = vld [vmem:[#allocation2 + $0x159] sm:$0xff]
  %v2317 = vld [vmem:[#allocation2 + $0x169] sm:$0xff]
  %v2318 = vld [vmem:[#allocation2 + $0x171] sm:$0xff]
  %v2319 = vsel %vm2222, %v2287, 0.0
  %v2320 = vsel %vm2222, %v2288, 0.0
  %v2321 = vsel %vm2222, %v2289, 0.0
  %v2322 = vsel %vm2222, %v2290, 0.0
  %v2323 = vsel %vm2222, %v2291, 0.0
  %v2324 = vsel %vm2222, %v2292, 0.0
  %v2325 = vsel %vm2222, %v2293, 0.0
  %v2326 = vsel %vm2222, %v2294, 0.0
  %v2327 = vsel %vm2222, %v2295, 0.0
  %v2328 = vsel %vm2222, %v2296, 0.0
  %v2329 = vsel %vm2222, %v2297, 0.0
  %v2330 = vsel %vm2222, %v2298, 0.0
  %v2331 = vsel %vm2222, %v2299, 0.0
  %v2332 = vsel %vm2222, %v2300, 0.0
  %v2333 = vsel %vm2222, %v2301, 0.0
  %v2334 = vsel %vm2222, %v2302, 0.0
  %v2335 = vsel %vm2222, %v2303, 0.0
  %v2336 = vsel %vm2222, %v2304, 0.0
  %v2337 = vsel %vm2222, %v2305, 0.0
  %v2338 = vsel %vm2222, %v2306, 0.0
  %v2339 = vsel %vm2222, %v2307, 0.0
  %v2340 = vsel %vm2222, %v2308, 0.0
  %v2341 = vsel %vm2222, %v2309, 0.0
  %v2342 = vsel %vm2222, %v2310, 0.0
  %v2343 = vsel %vm2222, %v2311, 0.0
  %v2344 = vsel %vm2222, %v2312, 0.0
  %v2345 = vsel %vm2222, %v2313, 0.0
  %v2346 = vsel %vm2222, %v2314, 0.0
  %v2347 = vsel %vm2222, %v2315, 0.0
  %v2348 = vsel %vm2222, %v2316, 0.0
  %v2349 = vsel %vm2222, %v2317, 0.0
  %v2350 = vsel %vm2222, %v2318, 0.0
  %2351 = vrot.lane.b32.xlu0 %v2319, 8
  %v2352 = vpop.permute.xlu0 %2351
  %2353 = vrot.lane.b32.xlu0 %v2320, 8
  %v2354 = vpop.permute.xlu0 %2353
  %2355 = vrot.lane.b32.xlu0 %v2321, 8
  %v2356 = vpop.permute.xlu0 %2355
  %2357 = vrot.lane.b32.xlu0 %v2322, 8
  %v2358 = vpop.permute.xlu0 %2357
  %2359 = vrot.lane.b32.xlu0 %v2323, 8
  %v2360 = vpop.permute.xlu0 %2359
  %2361 = vrot.lane.b32.xlu0 %v2324, 8
  %v2362 = vpop.permute.xlu0 %2361
  %2363 = vrot.lane.b32.xlu0 %v2325, 8
  %v2364 = vpop.permute.xlu0 %2363
  %2365 = vrot.lane.b32.xlu0 %v2326, 8
  %v2366 = vpop.permute.xlu0 %2365
  %2367 = vrot.lane.b32.xlu0 %v2327, 8
  %v2368 = vpop.permute.xlu0 %2367
  %2369 = vrot.lane.b32.xlu0 %v2328, 8
  %v2370 = vpop.permute.xlu0 %2369
  %2371 = vrot.lane.b32.xlu0 %v2329, 8
  %v2372 = vpop.permute.xlu0 %2371
  %2373 = vrot.lane.b32.xlu0 %v2330, 8
  %v2374 = vpop.permute.xlu0 %2373
  %2375 = vrot.lane.b32.xlu0 %v2331, 8
  %v2376 = vpop.permute.xlu0 %2375
  %2377 = vrot.lane.b32.xlu0 %v2332, 8
  %v2378 = vpop.permute.xlu0 %2377
  %2379 = vrot.lane.b32.xlu0 %v2333, 8
  %v2380 = vpop.permute.xlu0 %2379
  %2381 = vrot.lane.b32.xlu0 %v2334, 8
  %v2382 = vpop.permute.xlu0 %2381
  %2383 = vrot.lane.b32.xlu0 %v2335, 8
  %v2384 = vpop.permute.xlu0 %2383
  %2385 = vrot.lane.b32.xlu0 %v2336, 8
  %v2386 = vpop.permute.xlu0 %2385
  %2387 = vrot.lane.b32.xlu0 %v2337, 8
  %v2388 = vpop.permute.xlu0 %2387
  %2389 = vrot.lane.b32.xlu0 %v2338, 8
  %v2390 = vpop.permute.xlu0 %2389
  %2391 = vrot.lane.b32.xlu0 %v2339, 8
  %v2392 = vpop.permute.xlu0 %2391
  %2393 = vrot.lane.b32.xlu0 %v2340, 8
  %v2394 = vpop.permute.xlu0 %2393
  %2395 = vrot.lane.b32.xlu0 %v2341, 8
  %v2396 = vpop.permute.xlu0 %2395
  %2397 = vrot.lane.b32.xlu0 %v2342, 8
  %v2398 = vpop.permute.xlu0 %2397
  %2399 = vrot.lane.b32.xlu0 %v2343, 8
  %v2400 = vpop.permute.xlu0 %2399
  %2401 = vrot.lane.b32.xlu0 %v2344, 8
  %v2402 = vpop.permute.xlu0 %2401
  %2403 = vrot.lane.b32.xlu0 %v2345, 8
  %v2404 = vpop.permute.xlu0 %2403
  %2405 = vrot.lane.b32.xlu0 %v2346, 8
  %v2406 = vpop.permute.xlu0 %2405
  %2407 = vrot.lane.b32.xlu0 %v2347, 8
  %v2408 = vpop.permute.xlu0 %2407
  %2409 = vrot.lane.b32.xlu0 %v2348, 8
  %v2410 = vpop.permute.xlu0 %2409
  %2411 = vrot.lane.b32.xlu0 %v2349, 8
  %v2412 = vpop.permute.xlu0 %2411
  %2413 = vrot.lane.b32.xlu0 %v2350, 8
  %v2414 = vpop.permute.xlu0 %2413
  %v2415 = vadd.f32 %v2255, %v2352
  %v2416 = vadd.f32 %v2256, %v2354
  %v2417 = vadd.f32 %v2257, %v2356
  %v2418 = vadd.f32 %v2258, %v2358
  %v2419 = vadd.f32 %v2259, %v2360
  %v2420 = vadd.f32 %v2260, %v2362
  %v2421 = vadd.f32 %v2261, %v2364
  %v2422 = vadd.f32 %v2262, %v2366
  %v2423 = vadd.f32 %v2263, %v2368
  %v2424 = vadd.f32 %v2264, %v2370
  %v2425 = vadd.f32 %v2265, %v2372
  %v2426 = vadd.f32 %v2266, %v2374
  %v2427 = vadd.f32 %v2267, %v2376
  %v2428 = vadd.f32 %v2268, %v2378
  %v2429 = vadd.f32 %v2269, %v2380
  %v2430 = vadd.f32 %v2270, %v2382
  %v2431 = vadd.f32 %v2271, %v2384
  %v2432 = vadd.f32 %v2272, %v2386
  %v2433 = vadd.f32 %v2273, %v2388
  %v2434 = vadd.f32 %v2274, %v2390
  %v2435 = vadd.f32 %v2275, %v2392
  %v2436 = vadd.f32 %v2276, %v2394
  %v2437 = vadd.f32 %v2277, %v2396
  %v2438 = vadd.f32 %v2278, %v2398
  %v2439 = vadd.f32 %v2279, %v2400
  %v2440 = vadd.f32 %v2280, %v2402
  %v2441 = vadd.f32 %v2281, %v2404
  %v2442 = vadd.f32 %v2282, %v2406
  %v2443 = vadd.f32 %v2283, %v2408
  %v2444 = vadd.f32 %v2284, %v2410
  %v2445 = vadd.f32 %v2285, %v2412
  %v2446 = vadd.f32 %v2286, %v2414
  %v2447 = vld [vmem:[#allocation2 + $0x2] sm:$0xff]
  %v2448 = vld [vmem:[#allocation2 + $0xa] sm:$0xff]
  %v2449 = vld [vmem:[#allocation2 + $0x1a] sm:$0xff]
  %v2450 = vld [vmem:[#allocation2 + $0x22] sm:$0xff]
  %v2451 = vld [vmem:[#allocation2 + $0x32] sm:$0xff]
  %v2452 = vld [vmem:[#allocation2 + $0x3a] sm:$0xff]
  %v2453 = vld [vmem:[#allocation2 + $0x4a] sm:$0xff]
  %v2454 = vld [vmem:[#allocation2 + $0x52] sm:$0xff]
  %v2455 = vld [vmem:[#allocation2 + $0x62] sm:$0xff]
  %v2456 = vld [vmem:[#allocation2 + $0x6a] sm:$0xff]
  %v2457 = vld [vmem:[#allocation2 + $0x7a] sm:$0xff]
  %v2458 = vld [vmem:[#allocation2 + $0x82] sm:$0xff]
  %v2459 = vld [vmem:[#allocation2 + $0x92] sm:$0xff]
  %v2460 = vld [vmem:[#allocation2 + $0x9a] sm:$0xff]
  %v2461 = vld [vmem:[#allocation2 + $0xaa] sm:$0xff]
  %v2462 = vld [vmem:[#allocation2 + $0xb2] sm:$0xff]
  %v2463 = vld [vmem:[#allocation2 + $0xc2] sm:$0xff]
  %v2464 = vld [vmem:[#allocation2 + $0xca] sm:$0xff]
  %v2465 = vld [vmem:[#allocation2 + $0xda] sm:$0xff]
  %v2466 = vld [vmem:[#allocation2 + $0xe2] sm:$0xff]
  %v2467 = vld [vmem:[#allocation2 + $0xf2] sm:$0xff]
  %v2468 = vld [vmem:[#allocation2 + $0xfa] sm:$0xff]
  %v2469 = vld [vmem:[#allocation2 + $0x10a] sm:$0xff]
  %v2470 = vld [vmem:[#allocation2 + $0x112] sm:$0xff]
  %v2471 = vld [vmem:[#allocation2 + $0x122] sm:$0xff]
  %v2472 = vld [vmem:[#allocation2 + $0x12a] sm:$0xff]
  %v2473 = vld [vmem:[#allocation2 + $0x13a] sm:$0xff]
  %v2474 = vld [vmem:[#allocation2 + $0x142] sm:$0xff]
  %v2475 = vld [vmem:[#allocation2 + $0x152] sm:$0xff]
  %v2476 = vld [vmem:[#allocation2 + $0x15a] sm:$0xff]
  %v2477 = vld [vmem:[#allocation2 + $0x16a] sm:$0xff]
  %v2478 = vld [vmem:[#allocation2 + $0x172] sm:$0xff]
  %v2479 = vsel %vm2222, %v2447, 0.0
  %v2480 = vsel %vm2222, %v2448, 0.0
  %v2481 = vsel %vm2222, %v2449, 0.0
  %v2482 = vsel %vm2222, %v2450, 0.0
  %v2483 = vsel %vm2222, %v2451, 0.0
  %v2484 = vsel %vm2222, %v2452, 0.0
  %v2485 = vsel %vm2222, %v2453, 0.0
  %v2486 = vsel %vm2222, %v2454, 0.0
  %v2487 = vsel %vm2222, %v2455, 0.0
  %v2488 = vsel %vm2222, %v2456, 0.0
  %v2489 = vsel %vm2222, %v2457, 0.0
  %v2490 = vsel %vm2222, %v2458, 0.0
  %v2491 = vsel %vm2222, %v2459, 0.0
  %v2492 = vsel %vm2222, %v2460, 0.0
  %v2493 = vsel %vm2222, %v2461, 0.0
  %v2494 = vsel %vm2222, %v2462, 0.0
  %v2495 = vsel %vm2222, %v2463, 0.0
  %v2496 = vsel %vm2222, %v2464, 0.0
  %v2497 = vsel %vm2222, %v2465, 0.0
  %v2498 = vsel %vm2222, %v2466, 0.0
  %v2499 = vsel %vm2222, %v2467, 0.0
  %v2500 = vsel %vm2222, %v2468, 0.0
  %v2501 = vsel %vm2222, %v2469, 0.0
  %v2502 = vsel %vm2222, %v2470, 0.0
  %v2503 = vsel %vm2222, %v2471, 0.0
  %v2504 = vsel %vm2222, %v2472, 0.0
  %v2505 = vsel %vm2222, %v2473, 0.0
  %v2506 = vsel %vm2222, %v2474, 0.0
  %v2507 = vsel %vm2222, %v2475, 0.0
  %v2508 = vsel %vm2222, %v2476, 0.0
  %v2509 = vsel %vm2222, %v2477, 0.0
  %v2510 = vsel %vm2222, %v2478, 0.0
  %2511 = vrot.lane.b32.xlu0 %v2479, 16
  %v2512 = vpop.permute.xlu0 %2511
  %2513 = vrot.lane.b32.xlu0 %v2480, 16
  %v2514 = vpop.permute.xlu0 %2513
  %2515 = vrot.lane.b32.xlu0 %v2481, 16
  %v2516 = vpop.permute.xlu0 %2515
  %2517 = vrot.lane.b32.xlu0 %v2482, 16
  %v2518 = vpop.permute.xlu0 %2517
  %2519 = vrot.lane.b32.xlu0 %v2483, 16
  %v2520 = vpop.permute.xlu0 %2519
  %2521 = vrot.lane.b32.xlu0 %v2484, 16
  %v2522 = vpop.permute.xlu0 %2521
  %2523 = vrot.lane.b32.xlu0 %v2485, 16
  %v2524 = vpop.permute.xlu0 %2523
  %2525 = vrot.lane.b32.xlu0 %v2486, 16
  %v2526 = vpop.permute.xlu0 %2525
  %2527 = vrot.lane.b32.xlu0 %v2487, 16
  %v2528 = vpop.permute.xlu0 %2527
  %2529 = vrot.lane.b32.xlu0 %v2488, 16
  %v2530 = vpop.permute.xlu0 %2529
  %2531 = vrot.lane.b32.xlu0 %v2489, 16
  %v2532 = vpop.permute.xlu0 %2531
  %2533 = vrot.lane.b32.xlu0 %v2490, 16
  %v2534 = vpop.permute.xlu0 %2533
  %2535 = vrot.lane.b32.xlu0 %v2491, 16
  %v2536 = vpop.permute.xlu0 %2535
  %2537 = vrot.lane.b32.xlu0 %v2492, 16
  %v2538 = vpop.permute.xlu0 %2537
  %2539 = vrot.lane.b32.xlu0 %v2493, 16
  %v2540 = vpop.permute.xlu0 %2539
  %2541 = vrot.lane.b32.xlu0 %v2494, 16
  %v2542 = vpop.permute.xlu0 %2541
  %2543 = vrot.lane.b32.xlu0 %v2495, 16
  %v2544 = vpop.permute.xlu0 %2543
  %2545 = vrot.lane.b32.xlu0 %v2496, 16
  %v2546 = vpop.permute.xlu0 %2545
  %2547 = vrot.lane.b32.xlu0 %v2497, 16
  %v2548 = vpop.permute.xlu0 %2547
  %2549 = vrot.lane.b32.xlu0 %v2498, 16
  %v2550 = vpop.permute.xlu0 %2549
  %2551 = vrot.lane.b32.xlu0 %v2499, 16
  %v2552 = vpop.permute.xlu0 %2551
  %2553 = vrot.lane.b32.xlu0 %v2500, 16
  %v2554 = vpop.permute.xlu0 %2553
  %2555 = vrot.lane.b32.xlu0 %v2501, 16
  %v2556 = vpop.permute.xlu0 %2555
  %2557 = vrot.lane.b32.xlu0 %v2502, 16
  %v2558 = vpop.permute.xlu0 %2557
  %2559 = vrot.lane.b32.xlu0 %v2503, 16
  %v2560 = vpop.permute.xlu0 %2559
  %2561 = vrot.lane.b32.xlu0 %v2504, 16
  %v2562 = vpop.permute.xlu0 %2561
  %2563 = vrot.lane.b32.xlu0 %v2505, 16
  %v2564 = vpop.permute.xlu0 %2563
  %2565 = vrot.lane.b32.xlu0 %v2506, 16
  %v2566 = vpop.permute.xlu0 %2565
  %2567 = vrot.lane.b32.xlu0 %v2507, 16
  %v2568 = vpop.permute.xlu0 %2567
  %2569 = vrot.lane.b32.xlu0 %v2508, 16
  %v2570 = vpop.permute.xlu0 %2569
  %2571 = vrot.lane.b32.xlu0 %v2509, 16
  %v2572 = vpop.permute.xlu0 %2571
  %2573 = vrot.lane.b32.xlu0 %v2510, 16
  %v2574 = vpop.permute.xlu0 %2573
  %v2575 = vadd.f32 %v2415, %v2512
  %v2576 = vadd.f32 %v2416, %v2514
  %v2577 = vadd.f32 %v2417, %v2516
  %v2578 = vadd.f32 %v2418, %v2518
  %v2579 = vadd.f32 %v2419, %v2520
  %v2580 = vadd.f32 %v2420, %v2522
  %v2581 = vadd.f32 %v2421, %v2524
  %v2582 = vadd.f32 %v2422, %v2526
  %v2583 = vadd.f32 %v2423, %v2528
  %v2584 = vadd.f32 %v2424, %v2530
  %v2585 = vadd.f32 %v2425, %v2532
  %v2586 = vadd.f32 %v2426, %v2534
  %v2587 = vadd.f32 %v2427, %v2536
  %v2588 = vadd.f32 %v2428, %v2538
  %v2589 = vadd.f32 %v2429, %v2540
  %v2590 = vadd.f32 %v2430, %v2542
  %v2591 = vadd.f32 %v2431, %v2544
  %v2592 = vadd.f32 %v2432, %v2546
  %v2593 = vadd.f32 %v2433, %v2548
  %v2594 = vadd.f32 %v2434, %v2550
  %v2595 = vadd.f32 %v2435, %v2552
  %v2596 = vadd.f32 %v2436, %v2554
  %v2597 = vadd.f32 %v2437, %v2556
  %v2598 = vadd.f32 %v2438, %v2558
  %v2599 = vadd.f32 %v2439, %v2560
  %v2600 = vadd.f32 %v2440, %v2562
  %v2601 = vadd.f32 %v2441, %v2564
  %v2602 = vadd.f32 %v2442, %v2566
  %v2603 = vadd.f32 %v2443, %v2568
  %v2604 = vadd.f32 %v2444, %v2570
  %v2605 = vadd.f32 %v2445, %v2572
  %v2606 = vadd.f32 %v2446, %v2574
  %v2607 = vld [vmem:[%s31] sm:$0xff]
  %v2608 = vld [vmem:[%s31 + $0x8] sm:$0xff]
  %v2609 = vld [vmem:[%s31 + $0x18] sm:$0xff]
  %v2610 = vld [vmem:[%s31 + $0x20] sm:$0xff]
  %v2611 = vld [vmem:[%s31 + $0x30] sm:$0xff]
  %v2612 = vld [vmem:[%s31 + $0x38] sm:$0xff]
  %v2613 = vld [vmem:[%s31 + $0x48] sm:$0xff]
  %v2614 = vld [vmem:[%s31 + $0x50] sm:$0xff]
  %v2615 = vld [vmem:[%s31 + $0x60] sm:$0xff]
  %v2616 = vld [vmem:[%s31 + $0x68] sm:$0xff]
  %v2617 = vld [vmem:[%s31 + $0x78] sm:$0xff]
  %v2618 = vld [vmem:[%s31 + $0x80] sm:$0xff]
  %v2619 = vld [vmem:[%s31 + $0x90] sm:$0xff]
  %v2620 = vld [vmem:[%s31 + $0x98] sm:$0xff]
  %v2621 = vld [vmem:[%s31 + $0xa8] sm:$0xff]
  %v2622 = vld [vmem:[%s31 + $0xb0] sm:$0xff]
  %v2623 = vld [vmem:[%s31 + $0xc0] sm:$0xff]
  %v2624 = vld [vmem:[%s31 + $0xc8] sm:$0xff]
  %v2625 = vld [vmem:[%s31 + $0xd8] sm:$0xff]
  %v2626 = vld [vmem:[%s31 + $0xe0] sm:$0xff]
  %v2627 = vld [vmem:[%s31 + $0xf0] sm:$0xff]
  %v2628 = vld [vmem:[%s31 + $0xf8] sm:$0xff]
  %v2629 = vld [vmem:[%s31 + $0x108] sm:$0xff]
  %v2630 = vld [vmem:[%s31 + $0x110] sm:$0xff]
  %v2631 = vld [vmem:[%s31 + $0x120] sm:$0xff]
  %v2632 = vld [vmem:[%s31 + $0x128] sm:$0xff]
  %v2633 = vld [vmem:[%s31 + $0x138] sm:$0xff]
  %v2634 = vld [vmem:[%s31 + $0x140] sm:$0xff]
  %v2635 = vld [vmem:[%s31 + $0x150] sm:$0xff]
  %v2636 = vld [vmem:[%s31 + $0x158] sm:$0xff]
  %v2637 = vld [vmem:[%s31 + $0x168] sm:$0xff]
  %v2638 = vld [vmem:[%s31 + $0x170] sm:$0xff]
  %v2639 = vsel %vm2222, %v2607, 0.0
  %v2640 = vsel %vm2222, %v2608, 0.0
  %v2641 = vsel %vm2222, %v2609, 0.0
  %v2642 = vsel %vm2222, %v2610, 0.0
  %v2643 = vsel %vm2222, %v2611, 0.0
  %v2644 = vsel %vm2222, %v2612, 0.0
  %v2645 = vsel %vm2222, %v2613, 0.0
  %v2646 = vsel %vm2222, %v2614, 0.0
  %v2647 = vsel %vm2222, %v2615, 0.0
  %v2648 = vsel %vm2222, %v2616, 0.0
  %v2649 = vsel %vm2222, %v2617, 0.0
  %v2650 = vsel %vm2222, %v2618, 0.0
  %v2651 = vsel %vm2222, %v2619, 0.0
  %v2652 = vsel %vm2222, %v2620, 0.0
  %v2653 = vsel %vm2222, %v2621, 0.0
  %v2654 = vsel %vm2222, %v2622, 0.0
  %v2655 = vsel %vm2222, %v2623, 0.0
  %v2656 = vsel %vm2222, %v2624, 0.0
  %v2657 = vsel %vm2222, %v2625, 0.0
  %v2658 = vsel %vm2222, %v2626, 0.0
  %v2659 = vsel %vm2222, %v2627, 0.0
  %v2660 = vsel %vm2222, %v2628, 0.0
  %v2661 = vsel %vm2222, %v2629, 0.0
  %v2662 = vsel %vm2222, %v2630, 0.0
  %v2663 = vsel %vm2222, %v2631, 0.0
  %v2664 = vsel %vm2222, %v2632, 0.0
  %v2665 = vsel %vm2222, %v2633, 0.0
  %v2666 = vsel %vm2222, %v2634, 0.0
  %v2667 = vsel %vm2222, %v2635, 0.0
  %v2668 = vsel %vm2222, %v2636, 0.0
  %v2669 = vsel %vm2222, %v2637, 0.0
  %v2670 = vsel %vm2222, %v2638, 0.0
  %2671 = vrot.lane.b32.xlu0 %v2639, 24
  %v2672 = vpop.permute.xlu0 %2671
  %2673 = vrot.lane.b32.xlu0 %v2640, 24
  %v2674 = vpop.permute.xlu0 %2673
  %2675 = vrot.lane.b32.xlu0 %v2641, 24
  %v2676 = vpop.permute.xlu0 %2675
  %2677 = vrot.lane.b32.xlu0 %v2642, 24
  %v2678 = vpop.permute.xlu0 %2677
  %2679 = vrot.lane.b32.xlu0 %v2643, 24
  %v2680 = vpop.permute.xlu0 %2679
  %2681 = vrot.lane.b32.xlu0 %v2644, 24
  %v2682 = vpop.permute.xlu0 %2681
  %2683 = vrot.lane.b32.xlu0 %v2645, 24
  %v2684 = vpop.permute.xlu0 %2683
  %2685 = vrot.lane.b32.xlu0 %v2646, 24
  %v2686 = vpop.permute.xlu0 %2685
  %2687 = vrot.lane.b32.xlu0 %v2647, 24
  %v2688 = vpop.permute.xlu0 %2687
  %2689 = vrot.lane.b32.xlu0 %v2648, 24
  %v2690 = vpop.permute.xlu0 %2689
  %2691 = vrot.lane.b32.xlu0 %v2649, 24
  %v2692 = vpop.permute.xlu0 %2691
  %2693 = vrot.lane.b32.xlu0 %v2650, 24
  %v2694 = vpop.permute.xlu0 %2693
  %2695 = vrot.lane.b32.xlu0 %v2651, 24
  %v2696 = vpop.permute.xlu0 %2695
  %2697 = vrot.lane.b32.xlu0 %v2652, 24
  %v2698 = vpop.permute.xlu0 %2697
  %2699 = vrot.lane.b32.xlu0 %v2653, 24
  %v2700 = vpop.permute.xlu0 %2699
  %2701 = vrot.lane.b32.xlu0 %v2654, 24
  %v2702 = vpop.permute.xlu0 %2701
  %2703 = vrot.lane.b32.xlu0 %v2655, 24
  %v2704 = vpop.permute.xlu0 %2703
  %2705 = vrot.lane.b32.xlu0 %v2656, 24
  %v2706 = vpop.permute.xlu0 %2705
  %2707 = vrot.lane.b32.xlu0 %v2657, 24
  %v2708 = vpop.permute.xlu0 %2707
  %2709 = vrot.lane.b32.xlu0 %v2658, 24
  %v2710 = vpop.permute.xlu0 %2709
  %2711 = vrot.lane.b32.xlu0 %v2659, 24
  %v2712 = vpop.permute.xlu0 %2711
  %2713 = vrot.lane.b32.xlu0 %v2660, 24
  %v2714 = vpop.permute.xlu0 %2713
  %2715 = vrot.lane.b32.xlu0 %v2661, 24
  %v2716 = vpop.permute.xlu0 %2715
  %2717 = vrot.lane.b32.xlu0 %v2662, 24
  %v2718 = vpop.permute.xlu0 %2717
  %2719 = vrot.lane.b32.xlu0 %v2663, 24
  %v2720 = vpop.permute.xlu0 %2719
  %2721 = vrot.lane.b32.xlu0 %v2664, 24
  %v2722 = vpop.permute.xlu0 %2721
  %2723 = vrot.lane.b32.xlu0 %v2665, 24
  %v2724 = vpop.permute.xlu0 %2723
  %2725 = vrot.lane.b32.xlu0 %v2666, 24
  %v2726 = vpop.permute.xlu0 %2725
  %2727 = vrot.lane.b32.xlu0 %v2667, 24
  %v2728 = vpop.permute.xlu0 %2727
  %2729 = vrot.lane.b32.xlu0 %v2668, 24
  %v2730 = vpop.permute.xlu0 %2729
  %2731 = vrot.lane.b32.xlu0 %v2669, 24
  %v2732 = vpop.permute.xlu0 %2731
  %2733 = vrot.lane.b32.xlu0 %v2670, 24
  %v2734 = vpop.permute.xlu0 %2733
  %v2735 = vadd.f32 %v2575, %v2672
  %v2736 = vadd.f32 %v2576, %v2674
  %v2737 = vadd.f32 %v2577, %v2676
  %v2738 = vadd.f32 %v2578, %v2678
  %v2739 = vadd.f32 %v2579, %v2680
  %v2740 = vadd.f32 %v2580, %v2682
  %v2741 = vadd.f32 %v2581, %v2684
  %v2742 = vadd.f32 %v2582, %v2686
  %v2743 = vadd.f32 %v2583, %v2688
  %v2744 = vadd.f32 %v2584, %v2690
  %v2745 = vadd.f32 %v2585, %v2692
  %v2746 = vadd.f32 %v2586, %v2694
  %v2747 = vadd.f32 %v2587, %v2696
  %v2748 = vadd.f32 %v2588, %v2698
  %v2749 = vadd.f32 %v2589, %v2700
  %v2750 = vadd.f32 %v2590, %v2702
  %v2751 = vadd.f32 %v2591, %v2704
  %v2752 = vadd.f32 %v2592, %v2706
  %v2753 = vadd.f32 %v2593, %v2708
  %v2754 = vadd.f32 %v2594, %v2710
  %v2755 = vadd.f32 %v2595, %v2712
  %v2756 = vadd.f32 %v2596, %v2714
  %v2757 = vadd.f32 %v2597, %v2716
  %v2758 = vadd.f32 %v2598, %v2718
  %v2759 = vadd.f32 %v2599, %v2720
  %v2760 = vadd.f32 %v2600, %v2722
  %v2761 = vadd.f32 %v2601, %v2724
  %v2762 = vadd.f32 %v2602, %v2726
  %v2763 = vadd.f32 %v2603, %v2728
  %v2764 = vadd.f32 %v2604, %v2730
  %v2765 = vadd.f32 %v2605, %v2732
  %v2766 = vadd.f32 %v2606, %v2734
  %v2767 = vld [vmem:[%s31 + $0x1] sm:$0xff]
  %v2768 = vld [vmem:[%s31 + $0x9] sm:$0xff]
  %v2769 = vld [vmem:[%s31 + $0x19] sm:$0xff]
  %v2770 = vld [vmem:[%s31 + $0x21] sm:$0xff]
  %v2771 = vld [vmem:[%s31 + $0x31] sm:$0xff]
  %v2772 = vld [vmem:[%s31 + $0x39] sm:$0xff]
  %v2773 = vld [vmem:[%s31 + $0x49] sm:$0xff]
  %v2774 = vld [vmem:[%s31 + $0x51] sm:$0xff]
  %v2775 = vld [vmem:[%s31 + $0x61] sm:$0xff]
  %v2776 = vld [vmem:[%s31 + $0x69] sm:$0xff]
  %v2777 = vld [vmem:[%s31 + $0x79] sm:$0xff]
  %v2778 = vld [vmem:[%s31 + $0x81] sm:$0xff]
  %v2779 = vld [vmem:[%s31 + $0x91] sm:$0xff]
  %v2780 = vld [vmem:[%s31 + $0x99] sm:$0xff]
  %v2781 = vld [vmem:[%s31 + $0xa9] sm:$0xff]
  %v2782 = vld [vmem:[%s31 + $0xb1] sm:$0xff]
  %v2783 = vld [vmem:[%s31 + $0xc1] sm:$0xff]
  %v2784 = vld [vmem:[%s31 + $0xc9] sm:$0xff]
  %v2785 = vld [vmem:[%s31 + $0xd9] sm:$0xff]
  %v2786 = vld [vmem:[%s31 + $0xe1] sm:$0xff]
  %v2787 = vld [vmem:[%s31 + $0xf1] sm:$0xff]
  %v2788 = vld [vmem:[%s31 + $0xf9] sm:$0xff]
  %v2789 = vld [vmem:[%s31 + $0x109] sm:$0xff]
  %v2790 = vld [vmem:[%s31 + $0x111] sm:$0xff]
  %v2791 = vld [vmem:[%s31 + $0x121] sm:$0xff]
  %v2792 = vld [vmem:[%s31 + $0x129] sm:$0xff]
  %v2793 = vld [vmem:[%s31 + $0x139] sm:$0xff]
  %v2794 = vld [vmem:[%s31 + $0x141] sm:$0xff]
  %v2795 = vld [vmem:[%s31 + $0x151] sm:$0xff]
  %v2796 = vld [vmem:[%s31 + $0x159] sm:$0xff]
  %v2797 = vld [vmem:[%s31 + $0x169] sm:$0xff]
  %v2798 = vld [vmem:[%s31 + $0x171] sm:$0xff]
  %v2799 = vsel %vm2222, %v2767, 0.0
  %v2800 = vsel %vm2222, %v2768, 0.0
  %v2801 = vsel %vm2222, %v2769, 0.0
  %v2802 = vsel %vm2222, %v2770, 0.0
  %v2803 = vsel %vm2222, %v2771, 0.0
  %v2804 = vsel %vm2222, %v2772, 0.0
  %v2805 = vsel %vm2222, %v2773, 0.0
  %v2806 = vsel %vm2222, %v2774, 0.0
  %v2807 = vsel %vm2222, %v2775, 0.0
  %v2808 = vsel %vm2222, %v2776, 0.0
  %v2809 = vsel %vm2222, %v2777, 0.0
  %v2810 = vsel %vm2222, %v2778, 0.0
  %v2811 = vsel %vm2222, %v2779, 0.0
  %v2812 = vsel %vm2222, %v2780, 0.0
  %v2813 = vsel %vm2222, %v2781, 0.0
  %v2814 = vsel %vm2222, %v2782, 0.0
  %v2815 = vsel %vm2222, %v2783, 0.0
  %v2816 = vsel %vm2222, %v2784, 0.0
  %v2817 = vsel %vm2222, %v2785, 0.0
  %v2818 = vsel %vm2222, %v2786, 0.0
  %v2819 = vsel %vm2222, %v2787, 0.0
  %v2820 = vsel %vm2222, %v2788, 0.0
  %v2821 = vsel %vm2222, %v2789, 0.0
  %v2822 = vsel %vm2222, %v2790, 0.0
  %v2823 = vsel %vm2222, %v2791, 0.0
  %v2824 = vsel %vm2222, %v2792, 0.0
  %v2825 = vsel %vm2222, %v2793, 0.0
  %v2826 = vsel %vm2222, %v2794, 0.0
  %v2827 = vsel %vm2222, %v2795, 0.0
  %v2828 = vsel %vm2222, %v2796, 0.0
  %v2829 = vsel %vm2222, %v2797, 0.0
  %v2830 = vsel %vm2222, %v2798, 0.0
  %2831 = vrot.lane.b32.xlu0 %v2799, 32
  %v2832 = vpop.permute.xlu0 %2831
  %2833 = vrot.lane.b32.xlu0 %v2800, 32
  %v2834 = vpop.permute.xlu0 %2833
  %2835 = vrot.lane.b32.xlu0 %v2801, 32
  %v2836 = vpop.permute.xlu0 %2835
  %2837 = vrot.lane.b32.xlu0 %v2802, 32
  %v2838 = vpop.permute.xlu0 %2837
  %2839 = vrot.lane.b32.xlu0 %v2803, 32
  %v2840 = vpop.permute.xlu0 %2839
  %2841 = vrot.lane.b32.xlu0 %v2804, 32
  %v2842 = vpop.permute.xlu0 %2841
  %2843 = vrot.lane.b32.xlu0 %v2805, 32
  %v2844 = vpop.permute.xlu0 %2843
  %2845 = vrot.lane.b32.xlu0 %v2806, 32
  %v2846 = vpop.permute.xlu0 %2845
  %2847 = vrot.lane.b32.xlu0 %v2807, 32
  %v2848 = vpop.permute.xlu0 %2847
  %2849 = vrot.lane.b32.xlu0 %v2808, 32
  %v2850 = vpop.permute.xlu0 %2849
  %2851 = vrot.lane.b32.xlu0 %v2809, 32
  %v2852 = vpop.permute.xlu0 %2851
  %2853 = vrot.lane.b32.xlu0 %v2810, 32
  %v2854 = vpop.permute.xlu0 %2853
  %2855 = vrot.lane.b32.xlu0 %v2811, 32
  %v2856 = vpop.permute.xlu0 %2855
  %2857 = vrot.lane.b32.xlu0 %v2812, 32
  %v2858 = vpop.permute.xlu0 %2857
  %2859 = vrot.lane.b32.xlu0 %v2813, 32
  %v2860 = vpop.permute.xlu0 %2859
  %2861 = vrot.lane.b32.xlu0 %v2814, 32
  %v2862 = vpop.permute.xlu0 %2861
  %2863 = vrot.lane.b32.xlu0 %v2815, 32
  %v2864 = vpop.permute.xlu0 %2863
  %2865 = vrot.lane.b32.xlu0 %v2816, 32
  %v2866 = vpop.permute.xlu0 %2865
  %2867 = vrot.lane.b32.xlu0 %v2817, 32
  %v2868 = vpop.permute.xlu0 %2867
  %2869 = vrot.lane.b32.xlu0 %v2818, 32
  %v2870 = vpop.permute.xlu0 %2869
  %2871 = vrot.lane.b32.xlu0 %v2819, 32
  %v2872 = vpop.permute.xlu0 %2871
  %2873 = vrot.lane.b32.xlu0 %v2820, 32
  %v2874 = vpop.permute.xlu0 %2873
  %2875 = vrot.lane.b32.xlu0 %v2821, 32
  %v2876 = vpop.permute.xlu0 %2875
  %2877 = vrot.lane.b32.xlu0 %v2822, 32
  %v2878 = vpop.permute.xlu0 %2877
  %2879 = vrot.lane.b32.xlu0 %v2823, 32
  %v2880 = vpop.permute.xlu0 %2879
  %2881 = vrot.lane.b32.xlu0 %v2824, 32
  %v2882 = vpop.permute.xlu0 %2881
  %2883 = vrot.lane.b32.xlu0 %v2825, 32
  %v2884 = vpop.permute.xlu0 %2883
  %2885 = vrot.lane.b32.xlu0 %v2826, 32
  %v2886 = vpop.permute.xlu0 %2885
  %2887 = vrot.lane.b32.xlu0 %v2827, 32
  %v2888 = vpop.permute.xlu0 %2887
  %2889 = vrot.lane.b32.xlu0 %v2828, 32
  %v2890 = vpop.permute.xlu0 %2889
  %2891 = vrot.lane.b32.xlu0 %v2829, 32
  %v2892 = vpop.permute.xlu0 %2891
  %2893 = vrot.lane.b32.xlu0 %v2830, 32
  %v2894 = vpop.permute.xlu0 %2893
  %v2895 = vadd.f32 %v2735, %v2832
  %v2896 = vadd.f32 %v2736, %v2834
  %v2897 = vadd.f32 %v2737, %v2836
  %v2898 = vadd.f32 %v2738, %v2838
  %v2899 = vadd.f32 %v2739, %v2840
  %v2900 = vadd.f32 %v2740, %v2842
  %v2901 = vadd.f32 %v2741, %v2844
  %v2902 = vadd.f32 %v2742, %v2846
  %v2903 = vadd.f32 %v2743, %v2848
  %v2904 = vadd.f32 %v2744, %v2850
  %v2905 = vadd.f32 %v2745, %v2852
  %v2906 = vadd.f32 %v2746, %v2854
  %v2907 = vadd.f32 %v2747, %v2856
  %v2908 = vadd.f32 %v2748, %v2858
  %v2909 = vadd.f32 %v2749, %v2860
  %v2910 = vadd.f32 %v2750, %v2862
  %v2911 = vadd.f32 %v2751, %v2864
  %v2912 = vadd.f32 %v2752, %v2866
  %v2913 = vadd.f32 %v2753, %v2868
  %v2914 = vadd.f32 %v2754, %v2870
  %v2915 = vadd.f32 %v2755, %v2872
  %v2916 = vadd.f32 %v2756, %v2874
  %v2917 = vadd.f32 %v2757, %v2876
  %v2918 = vadd.f32 %v2758, %v2878
  %v2919 = vadd.f32 %v2759, %v2880
  %v2920 = vadd.f32 %v2760, %v2882
  %v2921 = vadd.f32 %v2761, %v2884
  %v2922 = vadd.f32 %v2762, %v2886
  %v2923 = vadd.f32 %v2763, %v2888
  %v2924 = vadd.f32 %v2764, %v2890
  %v2925 = vadd.f32 %v2765, %v2892
  %v2926 = vadd.f32 %v2766, %v2894
  %v2927 = vld [vmem:[%s31 + $0x2] sm:$0xff]
  %v2928 = vld [vmem:[%s31 + $0xa] sm:$0xff]
  %v2929 = vld [vmem:[%s31 + $0x1a] sm:$0xff]
  %v2930 = vld [vmem:[%s31 + $0x22] sm:$0xff]
  %v2931 = vld [vmem:[%s31 + $0x32] sm:$0xff]
  %v2932 = vld [vmem:[%s31 + $0x3a] sm:$0xff]
  %v2933 = vld [vmem:[%s31 + $0x4a] sm:$0xff]
  %v2934 = vld [vmem:[%s31 + $0x52] sm:$0xff]
  %v2935 = vld [vmem:[%s31 + $0x62] sm:$0xff]
  %v2936 = vld [vmem:[%s31 + $0x6a] sm:$0xff]
  %v2937 = vld [vmem:[%s31 + $0x7a] sm:$0xff]
  %v2938 = vld [vmem:[%s31 + $0x82] sm:$0xff]
  %v2939 = vld [vmem:[%s31 + $0x92] sm:$0xff]
  %v2940 = vld [vmem:[%s31 + $0x9a] sm:$0xff]
  %v2941 = vld [vmem:[%s31 + $0xaa] sm:$0xff]
  %v2942 = vld [vmem:[%s31 + $0xb2] sm:$0xff]
  %v2943 = vld [vmem:[%s31 + $0xc2] sm:$0xff]
  %v2944 = vld [vmem:[%s31 + $0xca] sm:$0xff]
  %v2945 = vld [vmem:[%s31 + $0xda] sm:$0xff]
  %v2946 = vld [vmem:[%s31 + $0xe2] sm:$0xff]
  %v2947 = vld [vmem:[%s31 + $0xf2] sm:$0xff]
  %v2948 = vld [vmem:[%s31 + $0xfa] sm:$0xff]
  %v2949 = vld [vmem:[%s31 + $0x10a] sm:$0xff]
  %v2950 = vld [vmem:[%s31 + $0x112] sm:$0xff]
  %v2951 = vld [vmem:[%s31 + $0x122] sm:$0xff]
  %v2952 = vld [vmem:[%s31 + $0x12a] sm:$0xff]
  %v2953 = vld [vmem:[%s31 + $0x13a] sm:$0xff]
  %v2954 = vld [vmem:[%s31 + $0x142] sm:$0xff]
  %v2955 = vld [vmem:[%s31 + $0x152] sm:$0xff]
  %v2956 = vld [vmem:[%s31 + $0x15a] sm:$0xff]
  %v2957 = vld [vmem:[%s31 + $0x16a] sm:$0xff]
  %v2958 = vld [vmem:[%s31 + $0x172] sm:$0xff]
  %v2959 = vsel %vm2222, %v2927, 0.0
  %v2960 = vsel %vm2222, %v2928, 0.0
  %v2961 = vsel %vm2222, %v2929, 0.0
  %v2962 = vsel %vm2222, %v2930, 0.0
  %v2963 = vsel %vm2222, %v2931, 0.0
  %v2964 = vsel %vm2222, %v2932, 0.0
  %v2965 = vsel %vm2222, %v2933, 0.0
  %v2966 = vsel %vm2222, %v2934, 0.0
  %v2967 = vsel %vm2222, %v2935, 0.0
  %v2968 = vsel %vm2222, %v2936, 0.0
  %v2969 = vsel %vm2222, %v2937, 0.0
  %v2970 = vsel %vm2222, %v2938, 0.0
  %v2971 = vsel %vm2222, %v2939, 0.0
  %v2972 = vsel %vm2222, %v2940, 0.0
  %v2973 = vsel %vm2222, %v2941, 0.0
  %v2974 = vsel %vm2222, %v2942, 0.0
  %v2975 = vsel %vm2222, %v2943, 0.0
  %v2976 = vsel %vm2222, %v2944, 0.0
  %v2977 = vsel %vm2222, %v2945, 0.0
  %v2978 = vsel %vm2222, %v2946, 0.0
  %v2979 = vsel %vm2222, %v2947, 0.0
  %v2980 = vsel %vm2222, %v2948, 0.0
  %v2981 = vsel %vm2222, %v2949, 0.0
  %v2982 = vsel %vm2222, %v2950, 0.0
  %v2983 = vsel %vm2222, %v2951, 0.0
  %v2984 = vsel %vm2222, %v2952, 0.0
  %v2985 = vsel %vm2222, %v2953, 0.0
  %v2986 = vsel %vm2222, %v2954, 0.0
  %v2987 = vsel %vm2222, %v2955, 0.0
  %v2988 = vsel %vm2222, %v2956, 0.0
  %v2989 = vsel %vm2222, %v2957, 0.0
  %v2990 = vsel %vm2222, %v2958, 0.0
  %2991 = vrot.lane.b32.xlu0 %v2959, 40
  %v2992 = vpop.permute.xlu0 %2991
  %2993 = vrot.lane.b32.xlu0 %v2960, 40
  %v2994 = vpop.permute.xlu0 %2993
  %2995 = vrot.lane.b32.xlu0 %v2961, 40
  %v2996 = vpop.permute.xlu0 %2995
  %2997 = vrot.lane.b32.xlu0 %v2962, 40
  %v2998 = vpop.permute.xlu0 %2997
  %2999 = vrot.lane.b32.xlu0 %v2963, 40
  %v3000 = vpop.permute.xlu0 %2999
  %3001 = vrot.lane.b32.xlu0 %v2964, 40
  %v3002 = vpop.permute.xlu0 %3001
  %3003 = vrot.lane.b32.xlu0 %v2965, 40
  %v3004 = vpop.permute.xlu0 %3003
  %3005 = vrot.lane.b32.xlu0 %v2966, 40
  %v3006 = vpop.permute.xlu0 %3005
  %3007 = vrot.lane.b32.xlu0 %v2967, 40
  %v3008 = vpop.permute.xlu0 %3007
  %3009 = vrot.lane.b32.xlu0 %v2968, 40
  %v3010 = vpop.permute.xlu0 %3009
  %3011 = vrot.lane.b32.xlu0 %v2969, 40
  %v3012 = vpop.permute.xlu0 %3011
  %3013 = vrot.lane.b32.xlu0 %v2970, 40
  %v3014 = vpop.permute.xlu0 %3013
  %3015 = vrot.lane.b32.xlu0 %v2971, 40
  %v3016 = vpop.permute.xlu0 %3015
  %3017 = vrot.lane.b32.xlu0 %v2972, 40
  %v3018 = vpop.permute.xlu0 %3017
  %3019 = vrot.lane.b32.xlu0 %v2973, 40
  %v3020 = vpop.permute.xlu0 %3019
  %3021 = vrot.lane.b32.xlu0 %v2974, 40
  %v3022 = vpop.permute.xlu0 %3021
  %3023 = vrot.lane.b32.xlu0 %v2975, 40
  %v3024 = vpop.permute.xlu0 %3023
  %3025 = vrot.lane.b32.xlu0 %v2976, 40
  %v3026 = vpop.permute.xlu0 %3025
  %3027 = vrot.lane.b32.xlu0 %v2977, 40
  %v3028 = vpop.permute.xlu0 %3027
  %3029 = vrot.lane.b32.xlu0 %v2978, 40
  %v3030 = vpop.permute.xlu0 %3029
  %3031 = vrot.lane.b32.xlu0 %v2979, 40
  %v3032 = vpop.permute.xlu0 %3031
  %3033 = vrot.lane.b32.xlu0 %v2980, 40
  %v3034 = vpop.permute.xlu0 %3033
  %3035 = vrot.lane.b32.xlu0 %v2981, 40
  %v3036 = vpop.permute.xlu0 %3035
  %3037 = vrot.lane.b32.xlu0 %v2982, 40
  %v3038 = vpop.permute.xlu0 %3037
  %3039 = vrot.lane.b32.xlu0 %v2983, 40
  %v3040 = vpop.permute.xlu0 %3039
  %3041 = vrot.lane.b32.xlu0 %v2984, 40
  %v3042 = vpop.permute.xlu0 %3041
  %3043 = vrot.lane.b32.xlu0 %v2985, 40
  %v3044 = vpop.permute.xlu0 %3043
  %3045 = vrot.lane.b32.xlu0 %v2986, 40
  %v3046 = vpop.permute.xlu0 %3045
  %3047 = vrot.lane.b32.xlu0 %v2987, 40
  %v3048 = vpop.permute.xlu0 %3047
  %3049 = vrot.lane.b32.xlu0 %v2988, 40
  %v3050 = vpop.permute.xlu0 %3049
  %3051 = vrot.lane.b32.xlu0 %v2989, 40
  %v3052 = vpop.permute.xlu0 %3051
  %3053 = vrot.lane.b32.xlu0 %v2990, 40
  %v3054 = vpop.permute.xlu0 %3053
  %v3055 = vadd.f32 %v2895, %v2992
  %v3056 = vadd.f32 %v2896, %v2994
  %v3057 = vadd.f32 %v2897, %v2996
  %v3058 = vadd.f32 %v2898, %v2998
  %v3059 = vadd.f32 %v2899, %v3000
  %v3060 = vadd.f32 %v2900, %v3002
  %v3061 = vadd.f32 %v2901, %v3004
  %v3062 = vadd.f32 %v2902, %v3006
  %v3063 = vadd.f32 %v2903, %v3008
  %v3064 = vadd.f32 %v2904, %v3010
  %v3065 = vadd.f32 %v2905, %v3012
  %v3066 = vadd.f32 %v2906, %v3014
  %v3067 = vadd.f32 %v2907, %v3016
  %v3068 = vadd.f32 %v2908, %v3018
  %v3069 = vadd.f32 %v2909, %v3020
  %v3070 = vadd.f32 %v2910, %v3022
  %v3071 = vadd.f32 %v2911, %v3024
  %v3072 = vadd.f32 %v2912, %v3026
  %v3073 = vadd.f32 %v2913, %v3028
  %v3074 = vadd.f32 %v2914, %v3030
  %v3075 = vadd.f32 %v2915, %v3032
  %v3076 = vadd.f32 %v2916, %v3034
  %v3077 = vadd.f32 %v2917, %v3036
  %v3078 = vadd.f32 %v2918, %v3038
  %v3079 = vadd.f32 %v2919, %v3040
  %v3080 = vadd.f32 %v2920, %v3042
  %v3081 = vadd.f32 %v2921, %v3044
  %v3082 = vadd.f32 %v2922, %v3046
  %v3083 = vadd.f32 %v2923, %v3048
  %v3084 = vadd.f32 %v2924, %v3050
  %v3085 = vadd.f32 %v2925, %v3052
  %v3086 = vadd.f32 %v2926, %v3054
  %v3087 = vld [vmem:[%s996] sm:$0xff]
  %v3088 = vld [vmem:[%s996 + $0x8] sm:$0xff]
  %v3089 = vld [vmem:[%s996 + $0x18] sm:$0xff]
  %v3090 = vld [vmem:[%s996 + $0x20] sm:$0xff]
  %v3091 = vld [vmem:[%s996 + $0x30] sm:$0xff]
  %v3092 = vld [vmem:[%s996 + $0x38] sm:$0xff]
  %v3093 = vld [vmem:[%s996 + $0x48] sm:$0xff]
  %v3094 = vld [vmem:[%s996 + $0x50] sm:$0xff]
  %v3095 = vld [vmem:[%s996 + $0x60] sm:$0xff]
  %v3096 = vld [vmem:[%s996 + $0x68] sm:$0xff]
  %v3097 = vld [vmem:[%s996 + $0x78] sm:$0xff]
  %v3098 = vld [vmem:[%s996 + $0x80] sm:$0xff]
  %v3099 = vld [vmem:[%s996 + $0x90] sm:$0xff]
  %v3100 = vld [vmem:[%s996 + $0x98] sm:$0xff]
  %v3101 = vld [vmem:[%s996 + $0xa8] sm:$0xff]
  %v3102 = vld [vmem:[%s996 + $0xb0] sm:$0xff]
  %v3103 = vld [vmem:[%s996 + $0xc0] sm:$0xff]
  %v3104 = vld [vmem:[%s996 + $0xc8] sm:$0xff]
  %v3105 = vld [vmem:[%s996 + $0xd8] sm:$0xff]
  %v3106 = vld [vmem:[%s996 + $0xe0] sm:$0xff]
  %v3107 = vld [vmem:[%s996 + $0xf0] sm:$0xff]
  %v3108 = vld [vmem:[%s996 + $0xf8] sm:$0xff]
  %v3109 = vld [vmem:[%s996 + $0x108] sm:$0xff]
  %v3110 = vld [vmem:[%s996 + $0x110] sm:$0xff]
  %v3111 = vld [vmem:[%s996 + $0x120] sm:$0xff]
  %v3112 = vld [vmem:[%s996 + $0x128] sm:$0xff]
  %v3113 = vld [vmem:[%s996 + $0x138] sm:$0xff]
  %v3114 = vld [vmem:[%s996 + $0x140] sm:$0xff]
  %v3115 = vld [vmem:[%s996 + $0x150] sm:$0xff]
  %v3116 = vld [vmem:[%s996 + $0x158] sm:$0xff]
  %v3117 = vld [vmem:[%s996 + $0x168] sm:$0xff]
  %v3118 = vld [vmem:[%s996 + $0x170] sm:$0xff]
  %v3119 = vsel %vm2222, %v3087, 0.0
  %v3120 = vsel %vm2222, %v3088, 0.0
  %v3121 = vsel %vm2222, %v3089, 0.0
  %v3122 = vsel %vm2222, %v3090, 0.0
  %v3123 = vsel %vm2222, %v3091, 0.0
  %v3124 = vsel %vm2222, %v3092, 0.0
  %v3125 = vsel %vm2222, %v3093, 0.0
  %v3126 = vsel %vm2222, %v3094, 0.0
  %v3127 = vsel %vm2222, %v3095, 0.0
  %v3128 = vsel %vm2222, %v3096, 0.0
  %v3129 = vsel %vm2222, %v3097, 0.0
  %v3130 = vsel %vm2222, %v3098, 0.0
  %v3131 = vsel %vm2222, %v3099, 0.0
  %v3132 = vsel %vm2222, %v3100, 0.0
  %v3133 = vsel %vm2222, %v3101, 0.0
  %v3134 = vsel %vm2222, %v3102, 0.0
  %v3135 = vsel %vm2222, %v3103, 0.0
  %v3136 = vsel %vm2222, %v3104, 0.0
  %v3137 = vsel %vm2222, %v3105, 0.0
  %v3138 = vsel %vm2222, %v3106, 0.0
  %v3139 = vsel %vm2222, %v3107, 0.0
  %v3140 = vsel %vm2222, %v3108, 0.0
  %v3141 = vsel %vm2222, %v3109, 0.0
  %v3142 = vsel %vm2222, %v3110, 0.0
  %v3143 = vsel %vm2222, %v3111, 0.0
  %v3144 = vsel %vm2222, %v3112, 0.0
  %v3145 = vsel %vm2222, %v3113, 0.0
  %v3146 = vsel %vm2222, %v3114, 0.0
  %v3147 = vsel %vm2222, %v3115, 0.0
  %v3148 = vsel %vm2222, %v3116, 0.0
  %v3149 = vsel %vm2222, %v3117, 0.0
  %v3150 = vsel %vm2222, %v3118, 0.0
  %3151 = vrot.lane.b32.xlu0 %v3119, 48
  %v3152 = vpop.permute.xlu0 %3151
  %3153 = vrot.lane.b32.xlu0 %v3120, 48
  %v3154 = vpop.permute.xlu0 %3153
  %3155 = vrot.lane.b32.xlu0 %v3121, 48
  %v3156 = vpop.permute.xlu0 %3155
  %3157 = vrot.lane.b32.xlu0 %v3122, 48
  %v3158 = vpop.permute.xlu0 %3157
  %3159 = vrot.lane.b32.xlu0 %v3123, 48
  %v3160 = vpop.permute.xlu0 %3159
  %3161 = vrot.lane.b32.xlu0 %v3124, 48
  %v3162 = vpop.permute.xlu0 %3161
  %3163 = vrot.lane.b32.xlu0 %v3125, 48
  %v3164 = vpop.permute.xlu0 %3163
  %3165 = vrot.lane.b32.xlu0 %v3126, 48
  %v3166 = vpop.permute.xlu0 %3165
  %3167 = vrot.lane.b32.xlu0 %v3127, 48
  %v3168 = vpop.permute.xlu0 %3167
  %3169 = vrot.lane.b32.xlu0 %v3128, 48
  %v3170 = vpop.permute.xlu0 %3169
  %3171 = vrot.lane.b32.xlu0 %v3129, 48
  %v3172 = vpop.permute.xlu0 %3171
  %3173 = vrot.lane.b32.xlu0 %v3130, 48
  %v3174 = vpop.permute.xlu0 %3173
  %3175 = vrot.lane.b32.xlu0 %v3131, 48
  %v3176 = vpop.permute.xlu0 %3175
  %3177 = vrot.lane.b32.xlu0 %v3132, 48
  %v3178 = vpop.permute.xlu0 %3177
  %3179 = vrot.lane.b32.xlu0 %v3133, 48
  %v3180 = vpop.permute.xlu0 %3179
  %3181 = vrot.lane.b32.xlu0 %v3134, 48
  %v3182 = vpop.permute.xlu0 %3181
  %3183 = vrot.lane.b32.xlu0 %v3135, 48
  %v3184 = vpop.permute.xlu0 %3183
  %3185 = vrot.lane.b32.xlu0 %v3136, 48
  %v3186 = vpop.permute.xlu0 %3185
  %3187 = vrot.lane.b32.xlu0 %v3137, 48
  %v3188 = vpop.permute.xlu0 %3187
  %3189 = vrot.lane.b32.xlu0 %v3138, 48
  %v3190 = vpop.permute.xlu0 %3189
  %3191 = vrot.lane.b32.xlu0 %v3139, 48
  %v3192 = vpop.permute.xlu0 %3191
  %3193 = vrot.lane.b32.xlu0 %v3140, 48
  %v3194 = vpop.permute.xlu0 %3193
  %3195 = vrot.lane.b32.xlu0 %v3141, 48
  %v3196 = vpop.permute.xlu0 %3195
  %3197 = vrot.lane.b32.xlu0 %v3142, 48
  %v3198 = vpop.permute.xlu0 %3197
  %3199 = vrot.lane.b32.xlu0 %v3143, 48
  %v3200 = vpop.permute.xlu0 %3199
  %3201 = vrot.lane.b32.xlu0 %v3144, 48
  %v3202 = vpop.permute.xlu0 %3201
  %3203 = vrot.lane.b32.xlu0 %v3145, 48
  %v3204 = vpop.permute.xlu0 %3203
  %3205 = vrot.lane.b32.xlu0 %v3146, 48
  %v3206 = vpop.permute.xlu0 %3205
  %3207 = vrot.lane.b32.xlu0 %v3147, 48
  %v3208 = vpop.permute.xlu0 %3207
  %3209 = vrot.lane.b32.xlu0 %v3148, 48
  %v3210 = vpop.permute.xlu0 %3209
  %3211 = vrot.lane.b32.xlu0 %v3149, 48
  %v3212 = vpop.permute.xlu0 %3211
  %3213 = vrot.lane.b32.xlu0 %v3150, 48
  %v3214 = vpop.permute.xlu0 %3213
  %v3215 = vadd.f32 %v3055, %v3152
  %v3216 = vadd.f32 %v3056, %v3154
  %v3217 = vadd.f32 %v3057, %v3156
  %v3218 = vadd.f32 %v3058, %v3158
  %v3219 = vadd.f32 %v3059, %v3160
  %v3220 = vadd.f32 %v3060, %v3162
  %v3221 = vadd.f32 %v3061, %v3164
  %v3222 = vadd.f32 %v3062, %v3166
  %v3223 = vadd.f32 %v3063, %v3168
  %v3224 = vadd.f32 %v3064, %v3170
  %v3225 = vadd.f32 %v3065, %v3172
  %v3226 = vadd.f32 %v3066, %v3174
  %v3227 = vadd.f32 %v3067, %v3176
  %v3228 = vadd.f32 %v3068, %v3178
  %v3229 = vadd.f32 %v3069, %v3180
  %v3230 = vadd.f32 %v3070, %v3182
  %v3231 = vadd.f32 %v3071, %v3184
  %v3232 = vadd.f32 %v3072, %v3186
  %v3233 = vadd.f32 %v3073, %v3188
  %v3234 = vadd.f32 %v3074, %v3190
  %v3235 = vadd.f32 %v3075, %v3192
  %v3236 = vadd.f32 %v3076, %v3194
  %v3237 = vadd.f32 %v3077, %v3196
  %v3238 = vadd.f32 %v3078, %v3198
  %v3239 = vadd.f32 %v3079, %v3200
  %v3240 = vadd.f32 %v3080, %v3202
  %v3241 = vadd.f32 %v3081, %v3204
  %v3242 = vadd.f32 %v3082, %v3206
  %v3243 = vadd.f32 %v3083, %v3208
  %v3244 = vadd.f32 %v3084, %v3210
  %v3245 = vadd.f32 %v3085, %v3212
  %v3246 = vadd.f32 %v3086, %v3214
  %v3247 = vld [vmem:[%s996 + $0x1] sm:$0xff]
  %v3248 = vld [vmem:[%s996 + $0x9] sm:$0xff]
  %v3249 = vld [vmem:[%s996 + $0x19] sm:$0xff]
  %v3250 = vld [vmem:[%s996 + $0x21] sm:$0xff]
  %v3251 = vld [vmem:[%s996 + $0x31] sm:$0xff]
  %v3252 = vld [vmem:[%s996 + $0x39] sm:$0xff]
  %v3253 = vld [vmem:[%s996 + $0x49] sm:$0xff]
  %v3254 = vld [vmem:[%s996 + $0x51] sm:$0xff]
  %v3255 = vld [vmem:[%s996 + $0x61] sm:$0xff]
  %v3256 = vld [vmem:[%s996 + $0x69] sm:$0xff]
  %v3257 = vld [vmem:[%s996 + $0x79] sm:$0xff]
  %v3258 = vld [vmem:[%s996 + $0x81] sm:$0xff]
  %v3259 = vld [vmem:[%s996 + $0x91] sm:$0xff]
  %v3260 = vld [vmem:[%s996 + $0x99] sm:$0xff]
  %v3261 = vld [vmem:[%s996 + $0xa9] sm:$0xff]
  %v3262 = vld [vmem:[%s996 + $0xb1] sm:$0xff]
  %v3263 = vld [vmem:[%s996 + $0xc1] sm:$0xff]
  %v3264 = vld [vmem:[%s996 + $0xc9] sm:$0xff]
  %v3265 = vld [vmem:[%s996 + $0xd9] sm:$0xff]
  %v3266 = vld [vmem:[%s996 + $0xe1] sm:$0xff]
  %v3267 = vld [vmem:[%s996 + $0xf1] sm:$0xff]
  %v3268 = vld [vmem:[%s996 + $0xf9] sm:$0xff]
  %v3269 = vld [vmem:[%s996 + $0x109] sm:$0xff]
  %v3270 = vld [vmem:[%s996 + $0x111] sm:$0xff]
  %v3271 = vld [vmem:[%s996 + $0x121] sm:$0xff]
  %v3272 = vld [vmem:[%s996 + $0x129] sm:$0xff]
  %v3273 = vld [vmem:[%s996 + $0x139] sm:$0xff]
  %v3274 = vld [vmem:[%s996 + $0x141] sm:$0xff]
  %v3275 = vld [vmem:[%s996 + $0x151] sm:$0xff]
  %v3276 = vld [vmem:[%s996 + $0x159] sm:$0xff]
  %v3277 = vld [vmem:[%s996 + $0x169] sm:$0xff]
  %v3278 = vld [vmem:[%s996 + $0x171] sm:$0xff]
  %v3279 = vsel %vm2222, %v3247, 0.0
  %v3280 = vsel %vm2222, %v3248, 0.0
  %v3281 = vsel %vm2222, %v3249, 0.0
  %v3282 = vsel %vm2222, %v3250, 0.0
  %v3283 = vsel %vm2222, %v3251, 0.0
  %v3284 = vsel %vm2222, %v3252, 0.0
  %v3285 = vsel %vm2222, %v3253, 0.0
  %v3286 = vsel %vm2222, %v3254, 0.0
  %v3287 = vsel %vm2222, %v3255, 0.0
  %v3288 = vsel %vm2222, %v3256, 0.0
  %v3289 = vsel %vm2222, %v3257, 0.0
  %v3290 = vsel %vm2222, %v3258, 0.0
  %v3291 = vsel %vm2222, %v3259, 0.0
  %v3292 = vsel %vm2222, %v3260, 0.0
  %v3293 = vsel %vm2222, %v3261, 0.0
  %v3294 = vsel %vm2222, %v3262, 0.0
  %v3295 = vsel %vm2222, %v3263, 0.0
  %v3296 = vsel %vm2222, %v3264, 0.0
  %v3297 = vsel %vm2222, %v3265, 0.0
  %v3298 = vsel %vm2222, %v3266, 0.0
  %v3299 = vsel %vm2222, %v3267, 0.0
  %v3300 = vsel %vm2222, %v3268, 0.0
  %v3301 = vsel %vm2222, %v3269, 0.0
  %v3302 = vsel %vm2222, %v3270, 0.0
  %v3303 = vsel %vm2222, %v3271, 0.0
  %v3304 = vsel %vm2222, %v3272, 0.0
  %v3305 = vsel %vm2222, %v3273, 0.0
  %v3306 = vsel %vm2222, %v3274, 0.0
  %v3307 = vsel %vm2222, %v3275, 0.0
  %v3308 = vsel %vm2222, %v3276, 0.0
  %v3309 = vsel %vm2222, %v3277, 0.0
  %v3310 = vsel %vm2222, %v3278, 0.0
  %3311 = vrot.lane.b32.xlu0 %v3279, 56
  %v3312 = vpop.permute.xlu0 %3311
  %3313 = vrot.lane.b32.xlu0 %v3280, 56
  %v3314 = vpop.permute.xlu0 %3313
  %3315 = vrot.lane.b32.xlu0 %v3281, 56
  %v3316 = vpop.permute.xlu0 %3315
  %3317 = vrot.lane.b32.xlu0 %v3282, 56
  %v3318 = vpop.permute.xlu0 %3317
  %3319 = vrot.lane.b32.xlu0 %v3283, 56
  %v3320 = vpop.permute.xlu0 %3319
  %3321 = vrot.lane.b32.xlu0 %v3284, 56
  %v3322 = vpop.permute.xlu0 %3321
  %3323 = vrot.lane.b32.xlu0 %v3285, 56
  %v3324 = vpop.permute.xlu0 %3323
  %3325 = vrot.lane.b32.xlu0 %v3286, 56
  %v3326 = vpop.permute.xlu0 %3325
  %3327 = vrot.lane.b32.xlu0 %v3287, 56
  %v3328 = vpop.permute.xlu0 %3327
  %3329 = vrot.lane.b32.xlu0 %v3288, 56
  %v3330 = vpop.permute.xlu0 %3329
  %3331 = vrot.lane.b32.xlu0 %v3289, 56
  %v3332 = vpop.permute.xlu0 %3331
  %3333 = vrot.lane.b32.xlu0 %v3290, 56
  %v3334 = vpop.permute.xlu0 %3333
  %3335 = vrot.lane.b32.xlu0 %v3291, 56
  %v3336 = vpop.permute.xlu0 %3335
  %3337 = vrot.lane.b32.xlu0 %v3292, 56
  %v3338 = vpop.permute.xlu0 %3337
  %3339 = vrot.lane.b32.xlu0 %v3293, 56
  %v3340 = vpop.permute.xlu0 %3339
  %3341 = vrot.lane.b32.xlu0 %v3294, 56
  %v3342 = vpop.permute.xlu0 %3341
  %3343 = vrot.lane.b32.xlu0 %v3295, 56
  %v3344 = vpop.permute.xlu0 %3343
  %3345 = vrot.lane.b32.xlu0 %v3296, 56
  %v3346 = vpop.permute.xlu0 %3345
  %3347 = vrot.lane.b32.xlu0 %v3297, 56
  %v3348 = vpop.permute.xlu0 %3347
  %3349 = vrot.lane.b32.xlu0 %v3298, 56
  %v3350 = vpop.permute.xlu0 %3349
  %3351 = vrot.lane.b32.xlu0 %v3299, 56
  %v3352 = vpop.permute.xlu0 %3351
  %3353 = vrot.lane.b32.xlu0 %v3300, 56
  %v3354 = vpop.permute.xlu0 %3353
  %3355 = vrot.lane.b32.xlu0 %v3301, 56
  %v3356 = vpop.permute.xlu0 %3355
  %3357 = vrot.lane.b32.xlu0 %v3302, 56
  %v3358 = vpop.permute.xlu0 %3357
  %3359 = vrot.lane.b32.xlu0 %v3303, 56
  %v3360 = vpop.permute.xlu0 %3359
  %3361 = vrot.lane.b32.xlu0 %v3304, 56
  %v3362 = vpop.permute.xlu0 %3361
  %3363 = vrot.lane.b32.xlu0 %v3305, 56
  %v3364 = vpop.permute.xlu0 %3363
  %3365 = vrot.lane.b32.xlu0 %v3306, 56
  %v3366 = vpop.permute.xlu0 %3365
  %3367 = vrot.lane.b32.xlu0 %v3307, 56
  %v3368 = vpop.permute.xlu0 %3367
  %3369 = vrot.lane.b32.xlu0 %v3308, 56
  %v3370 = vpop.permute.xlu0 %3369
  %3371 = vrot.lane.b32.xlu0 %v3309, 56
  %v3372 = vpop.permute.xlu0 %3371
  %3373 = vrot.lane.b32.xlu0 %v3310, 56
  %v3374 = vpop.permute.xlu0 %3373
  %v3375 = vadd.f32 %v3215, %v3312
  %v3376 = vadd.f32 %v3216, %v3314
  %v3377 = vadd.f32 %v3217, %v3316
  %v3378 = vadd.f32 %v3218, %v3318
  %v3379 = vadd.f32 %v3219, %v3320
  %v3380 = vadd.f32 %v3220, %v3322
  %v3381 = vadd.f32 %v3221, %v3324
  %v3382 = vadd.f32 %v3222, %v3326
  %v3383 = vadd.f32 %v3223, %v3328
  %v3384 = vadd.f32 %v3224, %v3330
  %v3385 = vadd.f32 %v3225, %v3332
  %v3386 = vadd.f32 %v3226, %v3334
  %v3387 = vadd.f32 %v3227, %v3336
  %v3388 = vadd.f32 %v3228, %v3338
  %v3389 = vadd.f32 %v3229, %v3340
  %v3390 = vadd.f32 %v3230, %v3342
  %v3391 = vadd.f32 %v3231, %v3344
  %v3392 = vadd.f32 %v3232, %v3346
  %v3393 = vadd.f32 %v3233, %v3348
  %v3394 = vadd.f32 %v3234, %v3350
  %v3395 = vadd.f32 %v3235, %v3352
  %v3396 = vadd.f32 %v3236, %v3354
  %v3397 = vadd.f32 %v3237, %v3356
  %v3398 = vadd.f32 %v3238, %v3358
  %v3399 = vadd.f32 %v3239, %v3360
  %v3400 = vadd.f32 %v3240, %v3362
  %v3401 = vadd.f32 %v3241, %v3364
  %v3402 = vadd.f32 %v3242, %v3366
  %v3403 = vadd.f32 %v3243, %v3368
  %v3404 = vadd.f32 %v3244, %v3370
  %v3405 = vadd.f32 %v3245, %v3372
  %v3406 = vadd.f32 %v3246, %v3374
  %v3407 = vld [vmem:[%s996 + $0x2] sm:$0xff]
  %v3408 = vld [vmem:[%s996 + $0xa] sm:$0xff]
  %v3409 = vld [vmem:[%s996 + $0x1a] sm:$0xff]
  %v3410 = vld [vmem:[%s996 + $0x22] sm:$0xff]
  %v3411 = vld [vmem:[%s996 + $0x32] sm:$0xff]
  %v3412 = vld [vmem:[%s996 + $0x3a] sm:$0xff]
  %v3413 = vld [vmem:[%s996 + $0x4a] sm:$0xff]
  %v3414 = vld [vmem:[%s996 + $0x52] sm:$0xff]
  %v3415 = vld [vmem:[%s996 + $0x62] sm:$0xff]
  %v3416 = vld [vmem:[%s996 + $0x6a] sm:$0xff]
  %v3417 = vld [vmem:[%s996 + $0x7a] sm:$0xff]
  %v3418 = vld [vmem:[%s996 + $0x82] sm:$0xff]
  %v3419 = vld [vmem:[%s996 + $0x92] sm:$0xff]
  %v3420 = vld [vmem:[%s996 + $0x9a] sm:$0xff]
  %v3421 = vld [vmem:[%s996 + $0xaa] sm:$0xff]
  %v3422 = vld [vmem:[%s996 + $0xb2] sm:$0xff]
  %v3423 = vld [vmem:[%s996 + $0xc2] sm:$0xff]
  %v3424 = vld [vmem:[%s996 + $0xca] sm:$0xff]
  %v3425 = vld [vmem:[%s996 + $0xda] sm:$0xff]
  %v3426 = vld [vmem:[%s996 + $0xe2] sm:$0xff]
  %v3427 = vld [vmem:[%s996 + $0xf2] sm:$0xff]
  %v3428 = vld [vmem:[%s996 + $0xfa] sm:$0xff]
  %v3429 = vld [vmem:[%s996 + $0x10a] sm:$0xff]
  %v3430 = vld [vmem:[%s996 + $0x112] sm:$0xff]
  %v3431 = vld [vmem:[%s996 + $0x122] sm:$0xff]
  %v3432 = vld [vmem:[%s996 + $0x12a] sm:$0xff]
  %v3433 = vld [vmem:[%s996 + $0x13a] sm:$0xff]
  %v3434 = vld [vmem:[%s996 + $0x142] sm:$0xff]
  %v3435 = vld [vmem:[%s996 + $0x152] sm:$0xff]
  %v3436 = vld [vmem:[%s996 + $0x15a] sm:$0xff]
  %v3437 = vld [vmem:[%s996 + $0x16a] sm:$0xff]
  %v3438 = vld [vmem:[%s996 + $0x172] sm:$0xff]
  %v3439 = vsel %vm2222, %v3407, 0.0
  %v3440 = vsel %vm2222, %v3408, 0.0
  %v3441 = vsel %vm2222, %v3409, 0.0
  %v3442 = vsel %vm2222, %v3410, 0.0
  %v3443 = vsel %vm2222, %v3411, 0.0
  %v3444 = vsel %vm2222, %v3412, 0.0
  %v3445 = vsel %vm2222, %v3413, 0.0
  %v3446 = vsel %vm2222, %v3414, 0.0
  %v3447 = vsel %vm2222, %v3415, 0.0
  %v3448 = vsel %vm2222, %v3416, 0.0
  %v3449 = vsel %vm2222, %v3417, 0.0
  %v3450 = vsel %vm2222, %v3418, 0.0
  %v3451 = vsel %vm2222, %v3419, 0.0
  %v3452 = vsel %vm2222, %v3420, 0.0
  %v3453 = vsel %vm2222, %v3421, 0.0
  %v3454 = vsel %vm2222, %v3422, 0.0
  %v3455 = vsel %vm2222, %v3423, 0.0
  %v3456 = vsel %vm2222, %v3424, 0.0
  %v3457 = vsel %vm2222, %v3425, 0.0
  %v3458 = vsel %vm2222, %v3426, 0.0
  %v3459 = vsel %vm2222, %v3427, 0.0
  %v3460 = vsel %vm2222, %v3428, 0.0
  %v3461 = vsel %vm2222, %v3429, 0.0
  %v3462 = vsel %vm2222, %v3430, 0.0
  %v3463 = vsel %vm2222, %v3431, 0.0
  %v3464 = vsel %vm2222, %v3432, 0.0
  %v3465 = vsel %vm2222, %v3433, 0.0
  %v3466 = vsel %vm2222, %v3434, 0.0
  %v3467 = vsel %vm2222, %v3435, 0.0
  %v3468 = vsel %vm2222, %v3436, 0.0
  %v3469 = vsel %vm2222, %v3437, 0.0
  %v3470 = vsel %vm2222, %v3438, 0.0
  %3471 = vrot.lane.b32.xlu0 %v3439, 64
  %v3472 = vpop.permute.xlu0 %3471
  %3473 = vrot.lane.b32.xlu0 %v3440, 64
  %v3474 = vpop.permute.xlu0 %3473
  %3475 = vrot.lane.b32.xlu0 %v3441, 64
  %v3476 = vpop.permute.xlu0 %3475
  %3477 = vrot.lane.b32.xlu0 %v3442, 64
  %v3478 = vpop.permute.xlu0 %3477
  %3479 = vrot.lane.b32.xlu0 %v3443, 64
  %v3480 = vpop.permute.xlu0 %3479
  %3481 = vrot.lane.b32.xlu0 %v3444, 64
  %v3482 = vpop.permute.xlu0 %3481
  %3483 = vrot.lane.b32.xlu0 %v3445, 64
  %v3484 = vpop.permute.xlu0 %3483
  %3485 = vrot.lane.b32.xlu0 %v3446, 64
  %v3486 = vpop.permute.xlu0 %3485
  %3487 = vrot.lane.b32.xlu0 %v3447, 64
  %v3488 = vpop.permute.xlu0 %3487
  %3489 = vrot.lane.b32.xlu0 %v3448, 64
  %v3490 = vpop.permute.xlu0 %3489
  %3491 = vrot.lane.b32.xlu0 %v3449, 64
  %v3492 = vpop.permute.xlu0 %3491
  %3493 = vrot.lane.b32.xlu0 %v3450, 64
  %v3494 = vpop.permute.xlu0 %3493
  %3495 = vrot.lane.b32.xlu0 %v3451, 64
  %v3496 = vpop.permute.xlu0 %3495
  %3497 = vrot.lane.b32.xlu0 %v3452, 64
  %v3498 = vpop.permute.xlu0 %3497
  %3499 = vrot.lane.b32.xlu0 %v3453, 64
  %v3500 = vpop.permute.xlu0 %3499
  %3501 = vrot.lane.b32.xlu0 %v3454, 64
  %v3502 = vpop.permute.xlu0 %3501
  %3503 = vrot.lane.b32.xlu0 %v3455, 64
  %v3504 = vpop.permute.xlu0 %3503
  %3505 = vrot.lane.b32.xlu0 %v3456, 64
  %v3506 = vpop.permute.xlu0 %3505
  %3507 = vrot.lane.b32.xlu0 %v3457, 64
  %v3508 = vpop.permute.xlu0 %3507
  %3509 = vrot.lane.b32.xlu0 %v3458, 64
  %v3510 = vpop.permute.xlu0 %3509
  %3511 = vrot.lane.b32.xlu0 %v3459, 64
  %v3512 = vpop.permute.xlu0 %3511
  %3513 = vrot.lane.b32.xlu0 %v3460, 64
  %v3514 = vpop.permute.xlu0 %3513
  %3515 = vrot.lane.b32.xlu0 %v3461, 64
  %v3516 = vpop.permute.xlu0 %3515
  %3517 = vrot.lane.b32.xlu0 %v3462, 64
  %v3518 = vpop.permute.xlu0 %3517
  %3519 = vrot.lane.b32.xlu0 %v3463, 64
  %v3520 = vpop.permute.xlu0 %3519
  %3521 = vrot.lane.b32.xlu0 %v3464, 64
  %v3522 = vpop.permute.xlu0 %3521
  %3523 = vrot.lane.b32.xlu0 %v3465, 64
  %v3524 = vpop.permute.xlu0 %3523
  %3525 = vrot.lane.b32.xlu0 %v3466, 64
  %v3526 = vpop.permute.xlu0 %3525
  %3527 = vrot.lane.b32.xlu0 %v3467, 64
  %v3528 = vpop.permute.xlu0 %3527
  %3529 = vrot.lane.b32.xlu0 %v3468, 64
  %v3530 = vpop.permute.xlu0 %3529
  %3531 = vrot.lane.b32.xlu0 %v3469, 64
  %v3532 = vpop.permute.xlu0 %3531
  %3533 = vrot.lane.b32.xlu0 %v3470, 64
  %v3534 = vpop.permute.xlu0 %3533
  %v3535 = vadd.f32 %v3375, %v3472
  %v3536 = vadd.f32 %v3376, %v3474
  %v3537 = vadd.f32 %v3377, %v3476
  %v3538 = vadd.f32 %v3378, %v3478
  %v3539 = vadd.f32 %v3379, %v3480
  %v3540 = vadd.f32 %v3380, %v3482
  %v3541 = vadd.f32 %v3381, %v3484
  %v3542 = vadd.f32 %v3382, %v3486
  %v3543 = vadd.f32 %v3383, %v3488
  %v3544 = vadd.f32 %v3384, %v3490
  %v3545 = vadd.f32 %v3385, %v3492
  %v3546 = vadd.f32 %v3386, %v3494
  %v3547 = vadd.f32 %v3387, %v3496
  %v3548 = vadd.f32 %v3388, %v3498
  %v3549 = vadd.f32 %v3389, %v3500
  %v3550 = vadd.f32 %v3390, %v3502
  %v3551 = vadd.f32 %v3391, %v3504
  %v3552 = vadd.f32 %v3392, %v3506
  %v3553 = vadd.f32 %v3393, %v3508
  %v3554 = vadd.f32 %v3394, %v3510
  %v3555 = vadd.f32 %v3395, %v3512
  %v3556 = vadd.f32 %v3396, %v3514
  %v3557 = vadd.f32 %v3397, %v3516
  %v3558 = vadd.f32 %v3398, %v3518
  %v3559 = vadd.f32 %v3399, %v3520
  %v3560 = vadd.f32 %v3400, %v3522
  %v3561 = vadd.f32 %v3401, %v3524
  %v3562 = vadd.f32 %v3402, %v3526
  %v3563 = vadd.f32 %v3403, %v3528
  %v3564 = vadd.f32 %v3404, %v3530
  %v3565 = vadd.f32 %v3405, %v3532
  %v3566 = vadd.f32 %v3406, %v3534
  %v3567 = vpack.c.bf16 %v3536, %v3535
  %v3568 = vpack.c.bf16 %v3538, %v3537
  %v3569 = vpack.c.bf16 %v3540, %v3539
  %v3570 = vpack.c.bf16 %v3542, %v3541
  %v3571 = vpack.c.bf16 %v3544, %v3543
  %v3572 = vpack.c.bf16 %v3546, %v3545
  %v3573 = vpack.c.bf16 %v3548, %v3547
  %v3574 = vpack.c.bf16 %v3550, %v3549
  %v3575 = vpack.c.bf16 %v3552, %v3551
  %v3576 = vpack.c.bf16 %v3554, %v3553
  %v3577 = vpack.c.bf16 %v3556, %v3555
  %v3578 = vpack.c.bf16 %v3558, %v3557
  %v3579 = vpack.c.bf16 %v3560, %v3559
  %v3580 = vpack.c.bf16 %v3562, %v3561
  %v3581 = vpack.c.bf16 %v3564, %v3563
  %v3582 = vpack.c.bf16 %v3566, %v3565
  %v3583 = vld [vmem:[%s3] sm:$0xf]
  %v3584 = vld [vmem:[%s3 + $0x4] sm:$0xf]
  %v3585 = vld [vmem:[%s3 + $0x8] sm:$0xf]
  %v3586 = vld [vmem:[%s3 + $0xc] sm:$0xf]
  %v3587 = vld [vmem:[%s3 + $0x10] sm:$0xf]
  %v3588 = vld [vmem:[%s3 + $0x14] sm:$0xf]
  %v3589 = vld [vmem:[%s3 + $0x18] sm:$0xf]
  %v3590 = vld [vmem:[%s3 + $0x1c] sm:$0xf]
  %v3591 = vld [vmem:[%s3 + $0x20] sm:$0xf]
  %v3592 = vld [vmem:[%s3 + $0x24] sm:$0xf]
  %v3593 = vld [vmem:[%s3 + $0x28] sm:$0xf]
  %v3594 = vld [vmem:[%s3 + $0x2c] sm:$0xf]
  %v3595 = vld [vmem:[%s3 + $0x30] sm:$0xf]
  %v3596 = vld [vmem:[%s3 + $0x34] sm:$0xf]
  %v3597 = vld [vmem:[%s3 + $0x38] sm:$0xf]
  %v3598 = vld [vmem:[%s3 + $0x3c] sm:$0xf]
  %v3615 = vunpack.c.l.b16 %v3583
  %v3616 = vunpack.c.l.b16 %v3584
  %v3617 = vunpack.c.l.b16 %v3585
  %v3618 = vunpack.c.l.b16 %v3586
  %v3619 = vunpack.c.l.b16 %v3587
  %v3620 = vunpack.c.l.b16 %v3588
  %v3621 = vunpack.c.l.b16 %v3589
  %v3622 = vunpack.c.l.b16 %v3590
  %v3623 = vunpack.c.l.b16 %v3591
  %v3624 = vunpack.c.l.b16 %v3592
  %v3625 = vunpack.c.l.b16 %v3593
  %v3626 = vunpack.c.l.b16 %v3594
  %v3627 = vunpack.c.l.b16 %v3595
  %v3628 = vunpack.c.l.b16 %v3596
  %v3629 = vunpack.c.l.b16 %v3597
  %v3630 = vunpack.c.l.b16 %v3598
  %v3631 = vpack.c.b16 %v3616, %v3615
  %v3632 = vpack.c.b16 %v3618, %v3617
  %v3633 = vpack.c.b16 %v3620, %v3619
  %v3634 = vpack.c.b16 %v3622, %v3621
  %v3635 = vpack.c.b16 %v3624, %v3623
  %v3636 = vpack.c.b16 %v3626, %v3625
  %v3637 = vpack.c.b16 %v3628, %v3627
  %v3638 = vpack.c.b16 %v3630, %v3629
  %3647 = vmatprep.subr.bf16.mxu0 0
  %3648 = vmatpush1.bf16.msra.mxu0 %v3631
  %3649 = vmatprep.subr.bf16.mxu0 0
  %3650 = vmatpush1.bf16.msra.mxu0 %v3632
  %3651 = vmatprep.subr.bf16.mxu0 0
  %3652 = vmatpush1.bf16.msra.mxu0 %v3633
  %3653 = vmatprep.subr.bf16.mxu0 0
  %3654 = vmatpush1.bf16.msra.mxu0 %v3634
  %3655 = vmatprep.subr.bf16.mxu0 0
  %3656 = vmatpush1.bf16.msra.mxu0 %v3635
  %3657 = vmatprep.subr.bf16.mxu0 0
  %3658 = vmatpush1.bf16.msra.mxu0 %v3636
  %3659 = vmatprep.subr.bf16.mxu0 0
  %3660 = vmatpush1.bf16.msra.mxu0 %v3637
  %3661 = vmatprep.subr.bf16.mxu0 0
  %3662 = vmatpush1.bf16.msra.mxu0 %v3638
  %3663 = vmatprep.subr.bf16.mxu0 0
  %3664 = vmatpush1.bf16.msra.mxu0 0
  %3665 = vmatprep.subr.bf16.mxu0 0
  %3666 = vmatpush1.bf16.msra.mxu0 0
  %3667 = vmatprep.subr.bf16.mxu0 0
  %3668 = vmatpush1.bf16.msra.mxu0 0
  %3669 = vmatprep.subr.bf16.mxu0 0
  %3670 = vmatpush1.bf16.msra.mxu0 0
  %3671 = vmatprep.subr.bf16.mxu0 0
  %3672 = vmatpush1.bf16.msra.mxu0 0
  %3673 = vmatprep.subr.bf16.mxu0 0
  %3674 = vmatpush1.bf16.msra.mxu0 0
  %3675 = vmatprep.subr.bf16.mxu0 0
  %3676 = vmatpush1.bf16.msra.mxu0 0
  %3677 = vmatprep.subr.bf16.mxu0 0
  %3678 = vmatpush1.bf16.msra.mxu0 0
  %3679 = vmatprep.mubr.bf16.mxu0 0
  %3680 = vmatmul.mubr.bf16.gmra.mrb[0].mxu0 %v3567
  %v3681 = vpop.f32.mrb[0].mxu0
  %v3682 = vadd.f32 0.0, %v3681
  %v3683 = vpop.f32.mrb[0].mxu0
  %v3684 = vpop.f32.mrb[0].mxu0
  %v3685 = vadd.f32 0.0, %v3684
  %v3686 = vpop.f32.mrb[0].mxu0
  %3687 = vmatprep.mubr.bf16.mxu0 0
  %3688 = vmatmul.mubr.bf16.gmra.mrb[0].mxu0 %v3568
  %v3689 = vpop.f32.mrb[0].mxu0
  %v3690 = vadd.f32 0.0, %v3689
  %v3691 = vpop.f32.mrb[0].mxu0
  %v3692 = vpop.f32.mrb[0].mxu0
  %v3693 = vadd.f32 0.0, %v3692
  %v3694 = vpop.f32.mrb[0].mxu0
  %3695 = vmatprep.mubr.bf16.mxu0 0
  %3696 = vmatmul.mubr.bf16.gmra.mrb[0].mxu0 %v3569
  %v3697 = vpop.f32.mrb[0].mxu0
  %v3698 = vadd.f32 0.0, %v3697
  %v3699 = vpop.f32.mrb[0].mxu0
  %v3700 = vpop.f32.mrb[0].mxu0
  %v3701 = vadd.f32 0.0, %v3700
  %v3702 = vpop.f32.mrb[0].mxu0
  %3703 = vmatprep.mubr.bf16.mxu0 0
  %3704 = vmatmul.mubr.bf16.gmra.mrb[0].mxu0 %v3570
  %v3705 = vpop.f32.mrb[0].mxu0
  %v3706 = vadd.f32 0.0, %v3705
  %v3707 = vpop.f32.mrb[0].mxu0
  %v3708 = vpop.f32.mrb[0].mxu0
  %v3709 = vadd.f32 0.0, %v3708
  %v3710 = vpop.f32.mrb[0].mxu0
  %3711 = vmatprep.mubr.bf16.mxu0 0
  %3712 = vmatmul.mubr.bf16.gmra.mrb[0].mxu0 %v3571
  %v3713 = vpop.f32.mrb[0].mxu0
  %v3714 = vadd.f32 0.0, %v3713
  %v3715 = vpop.f32.mrb[0].mxu0
  %v3716 = vpop.f32.mrb[0].mxu0
  %v3717 = vadd.f32 0.0, %v3716
  %v3718 = vpop.f32.mrb[0].mxu0
  %3719 = vmatprep.mubr.bf16.mxu0 0
  %3720 = vmatmul.mubr.bf16.gmra.mrb[0].mxu0 %v3572
  %v3721 = vpop.f32.mrb[0].mxu0
  %v3722 = vadd.f32 0.0, %v3721
  %v3723 = vpop.f32.mrb[0].mxu0
  %v3724 = vpop.f32.mrb[0].mxu0
  %v3725 = vadd.f32 0.0, %v3724
  %v3726 = vpop.f32.mrb[0].mxu0
  %3727 = vmatprep.mubr.bf16.mxu0 0
  %3728 = vmatmul.mubr.bf16.gmra.mrb[0].mxu0 %v3573
  %v3729 = vpop.f32.mrb[0].mxu0
  %v3730 = vadd.f32 0.0, %v3729
  %v3731 = vpop.f32.mrb[0].mxu0
  %v3732 = vpop.f32.mrb[0].mxu0
  %v3733 = vadd.f32 0.0, %v3732
  %v3734 = vpop.f32.mrb[0].mxu0
  %3735 = vmatprep.mubr.bf16.mxu0 0
  %3736 = vmatmul.mubr.bf16.gmra.mrb[0].mxu0 %v3574
  %v3737 = vpop.f32.mrb[0].mxu0
  %v3738 = vadd.f32 0.0, %v3737
  %v3739 = vpop.f32.mrb[0].mxu0
  %v3740 = vpop.f32.mrb[0].mxu0
  %v3741 = vadd.f32 0.0, %v3740
  %v3742 = vpop.f32.mrb[0].mxu0
  %3743 = vmatprep.mubr.bf16.mxu0 0
  %3744 = vmatmul.mubr.bf16.gmra.mrb[0].mxu0 %v3575
  %v3745 = vpop.f32.mrb[0].mxu0
  %v3746 = vadd.f32 0.0, %v3745
  %v3747 = vpop.f32.mrb[0].mxu0
  %v3748 = vpop.f32.mrb[0].mxu0
  %v3749 = vadd.f32 0.0, %v3748
  %v3750 = vpop.f32.mrb[0].mxu0
  %3751 = vmatprep.mubr.bf16.mxu0 0
  %3752 = vmatmul.mubr.bf16.gmra.mrb[0].mxu0 %v3576
  %v3753 = vpop.f32.mrb[0].mxu0
  %v3754 = vadd.f32 0.0, %v3753
  %v3755 = vpop.f32.mrb[0].mxu0
  %v3756 = vpop.f32.mrb[0].mxu0
  %v3757 = vadd.f32 0.0, %v3756
  %v3758 = vpop.f32.mrb[0].mxu0
  %3759 = vmatprep.mubr.bf16.mxu0 0
  %3760 = vmatmul.mubr.bf16.gmra.mrb[0].mxu0 %v3577
  %v3761 = vpop.f32.mrb[0].mxu0
  %v3762 = vadd.f32 0.0, %v3761
  %v3763 = vpop.f32.mrb[0].mxu0
  %v3764 = vpop.f32.mrb[0].mxu0
  %v3765 = vadd.f32 0.0, %v3764
  %v3766 = vpop.f32.mrb[0].mxu0
  %3767 = vmatprep.mubr.bf16.mxu0 0
  %3768 = vmatmul.mubr.bf16.gmra.mrb[0].mxu0 %v3578
  %v3769 = vpop.f32.mrb[0].mxu0
  %v3770 = vadd.f32 0.0, %v3769
  %v3771 = vpop.f32.mrb[0].mxu0
  %v3772 = vpop.f32.mrb[0].mxu0
  %v3773 = vadd.f32 0.0, %v3772
  %v3774 = vpop.f32.mrb[0].mxu0
  %3775 = vmatprep.mubr.bf16.mxu0 0
  %3776 = vmatmul.mubr.bf16.gmra.mrb[0].mxu0 %v3579
  %v3777 = vpop.f32.mrb[0].mxu0
  %v3778 = vadd.f32 0.0, %v3777
  %v3779 = vpop.f32.mrb[0].mxu0
  %v3780 = vpop.f32.mrb[0].mxu0
  %v3781 = vadd.f32 0.0, %v3780
  %v3782 = vpop.f32.mrb[0].mxu0
  %3783 = vmatprep.mubr.bf16.mxu0 0
  %3784 = vmatmul.mubr.bf16.gmra.mrb[0].mxu0 %v3580
  %v3785 = vpop.f32.mrb[0].mxu0
  %v3786 = vadd.f32 0.0, %v3785
  %v3787 = vpop.f32.mrb[0].mxu0
  %v3788 = vpop.f32.mrb[0].mxu0
  %v3789 = vadd.f32 0.0, %v3788
  %v3790 = vpop.f32.mrb[0].mxu0
  %3791 = vmatprep.mubr.bf16.mxu0 0
  %3792 = vmatmul.mubr.bf16.gmra.mrb[0].mxu0 %v3581
  %v3793 = vpop.f32.mrb[0].mxu0
  %v3794 = vadd.f32 0.0, %v3793
  %v3795 = vpop.f32.mrb[0].mxu0
  %v3796 = vpop.f32.mrb[0].mxu0
  %v3797 = vadd.f32 0.0, %v3796
  %v3798 = vpop.f32.mrb[0].mxu0
  %3799 = vmatprep.mubr.bf16.mxu0 0
  %3800 = vmatmul.mubr.bf16.gmra.mrb[0].mxu0 %v3582
  %v3801 = vpop.f32.mrb[0].mxu0
  %v3802 = vadd.f32 0.0, %v3801
  %v3803 = vpop.f32.mrb[0].mxu0
  %v3804 = vpop.f32.mrb[0].mxu0
  %v3805 = vadd.f32 0.0, %v3804
  %v3806 = vpop.f32.mrb[0].mxu0
  %3807 = vdwg.mxu0
  %v3808 = vld [vmem:[%s5] sm:$0xff]
  %v3809 = vld [vmem:[%s5 + $0x8] sm:$0xff]
  %v3810 = vld [vmem:[%s5 + $0x10] sm:$0xff]
  %v3811 = vld [vmem:[%s5 + $0x18] sm:$0xff]
  %v3812 = vld [vmem:[%s5 + $0x20] sm:$0xff]
  %v3813 = vld [vmem:[%s5 + $0x28] sm:$0xff]
  %v3814 = vld [vmem:[%s5 + $0x30] sm:$0xff]
  %v3815 = vld [vmem:[%s5 + $0x38] sm:$0xff]
  %v3816 = vld [vmem:[%s5 + $0x40] sm:$0xff]
  %v3817 = vld [vmem:[%s5 + $0x48] sm:$0xff]
  %v3818 = vld [vmem:[%s5 + $0x50] sm:$0xff]
  %v3819 = vld [vmem:[%s5 + $0x58] sm:$0xff]
  %v3820 = vld [vmem:[%s5 + $0x60] sm:$0xff]
  %v3821 = vld [vmem:[%s5 + $0x68] sm:$0xff]
  %v3822 = vld [vmem:[%s5 + $0x70] sm:$0xff]
  %v3823 = vld [vmem:[%s5 + $0x78] sm:$0xff]
  %v3824 = vld [vmem:[%s5 + $0x80] sm:$0xff]
  %v3825 = vld [vmem:[%s5 + $0x88] sm:$0xff]
  %v3826 = vld [vmem:[%s5 + $0x90] sm:$0xff]
  %v3827 = vld [vmem:[%s5 + $0x98] sm:$0xff]
  %v3828 = vld [vmem:[%s5 + $0xa0] sm:$0xff]
  %v3829 = vld [vmem:[%s5 + $0xa8] sm:$0xff]
  %v3830 = vld [vmem:[%s5 + $0xb0] sm:$0xff]
  %v3831 = vld [vmem:[%s5 + $0xb8] sm:$0xff]
  %v3832 = vld [vmem:[%s5 + $0xc0] sm:$0xff]
  %v3833 = vld [vmem:[%s5 + $0xc8] sm:$0xff]
  %v3834 = vld [vmem:[%s5 + $0xd0] sm:$0xff]
  %v3835 = vld [vmem:[%s5 + $0xd8] sm:$0xff]
  %v3836 = vld [vmem:[%s5 + $0xe0] sm:$0xff]
  %v3837 = vld [vmem:[%s5 + $0xe8] sm:$0xff]
  %v3838 = vld [vmem:[%s5 + $0xf0] sm:$0xff]
  %v3839 = vld [vmem:[%s5 + $0xf8] sm:$0xff]
  %v3840 = vpack.c.bf16 %v3685, %v3682
  %v3841 = vpack.c.bf16 %v3693, %v3690
  %v3842 = vpack.c.bf16 %v3701, %v3698
  %v3843 = vpack.c.bf16 %v3709, %v3706
  %v3844 = vpack.c.bf16 %v3717, %v3714
  %v3845 = vpack.c.bf16 %v3725, %v3722
  %v3846 = vpack.c.bf16 %v3733, %v3730
  %v3847 = vpack.c.bf16 %v3741, %v3738
  %v3848 = vpack.c.bf16 %v3749, %v3746
  %v3849 = vpack.c.bf16 %v3757, %v3754
  %v3850 = vpack.c.bf16 %v3765, %v3762
  %v3851 = vpack.c.bf16 %v3773, %v3770
  %v3852 = vpack.c.bf16 %v3781, %v3778
  %v3853 = vpack.c.bf16 %v3789, %v3786
  %v3854 = vpack.c.bf16 %v3797, %v3794
  %v3855 = vpack.c.bf16 %v3805, %v3802
  %v3856 = vld [vmem:[%s4] sm:$0x1]
  %v3858 = vlaneseq
  %v3859 = vshrl.u32 %v3858, 7
  %v3860 = vsub.s32 0, %v3859
  %v3861 = vrot.slane %v3856, %v3860
  %v3895 = vunpack.c.l.b16 %v3808
  %v3896 = vunpack.c.h.b16 %v3808
  %v3897 = vunpack.c.l.b16 %v3809
  %v3898 = vunpack.c.h.b16 %v3809
  %v3899 = vunpack.c.l.b16 %v3810
  %v3900 = vunpack.c.h.b16 %v3810
  %v3901 = vunpack.c.l.b16 %v3811
  %v3902 = vunpack.c.h.b16 %v3811
  %v3903 = vunpack.c.l.b16 %v3812
  %v3904 = vunpack.c.h.b16 %v3812
  %v3905 = vunpack.c.l.b16 %v3813
  %v3906 = vunpack.c.h.b16 %v3813
  %v3907 = vunpack.c.l.b16 %v3814
  %v3908 = vunpack.c.h.b16 %v3814
  %v3909 = vunpack.c.l.b16 %v3815
  %v3910 = vunpack.c.h.b16 %v3815
  %v3911 = vunpack.c.l.b16 %v3816
  %v3912 = vunpack.c.h.b16 %v3816
  %v3913 = vunpack.c.l.b16 %v3817
  %v3914 = vunpack.c.h.b16 %v3817
  %v3915 = vunpack.c.l.b16 %v3818
  %v3916 = vunpack.c.h.b16 %v3818
  %v3917 = vunpack.c.l.b16 %v3819
  %v3918 = vunpack.c.h.b16 %v3819
  %v3919 = vunpack.c.l.b16 %v3820
  %v3920 = vunpack.c.h.b16 %v3820
  %v3921 = vunpack.c.l.b16 %v3821
  %v3922 = vunpack.c.h.b16 %v3821
  %v3923 = vunpack.c.l.b16 %v3822
  %v3924 = vunpack.c.h.b16 %v3822
  %v3925 = vunpack.c.l.b16 %v3823
  %v3926 = vunpack.c.h.b16 %v3823
  %v3927 = vunpack.c.l.b16 %v3824
  %v3928 = vunpack.c.h.b16 %v3824
  %v3929 = vunpack.c.l.b16 %v3825
  %v3930 = vunpack.c.h.b16 %v3825
  %v3931 = vunpack.c.l.b16 %v3826
  %v3932 = vunpack.c.h.b16 %v3826
  %v3933 = vunpack.c.l.b16 %v3827
  %v3934 = vunpack.c.h.b16 %v3827
  %v3935 = vunpack.c.l.b16 %v3828
  %v3936 = vunpack.c.h.b16 %v3828
  %v3937 = vunpack.c.l.b16 %v3829
  %v3938 = vunpack.c.h.b16 %v3829
  %v3939 = vunpack.c.l.b16 %v3830
  %v3940 = vunpack.c.h.b16 %v3830
  %v3941 = vunpack.c.l.b16 %v3831
  %v3942 = vunpack.c.h.b16 %v3831
  %v3943 = vunpack.c.l.b16 %v3832
  %v3944 = vunpack.c.h.b16 %v3832
  %v3945 = vunpack.c.l.b16 %v3833
  %v3946 = vunpack.c.h.b16 %v3833
  %v3947 = vunpack.c.l.b16 %v3834
  %v3948 = vunpack.c.h.b16 %v3834
  %v3949 = vunpack.c.l.b16 %v3835
  %v3950 = vunpack.c.h.b16 %v3835
  %v3951 = vunpack.c.l.b16 %v3836
  %v3952 = vunpack.c.h.b16 %v3836
  %v3953 = vunpack.c.l.b16 %v3837
  %v3954 = vunpack.c.h.b16 %v3837
  %v3955 = vunpack.c.l.b16 %v3838
  %v3956 = vunpack.c.h.b16 %v3838
  %v3957 = vunpack.c.l.b16 %v3839
  %v3958 = vunpack.c.h.b16 %v3839
  %v3959 = vpack.c.b16 %v3897, %v3895
  %v3960 = vpack.c.b16 %v3898, %v3896
  %v3961 = vpack.c.b16 %v3901, %v3899
  %v3962 = vpack.c.b16 %v3902, %v3900
  %v3963 = vpack.c.b16 %v3905, %v3903
  %v3964 = vpack.c.b16 %v3906, %v3904
  %v3965 = vpack.c.b16 %v3909, %v3907
  %v3966 = vpack.c.b16 %v3910, %v3908
  %v3967 = vpack.c.b16 %v3913, %v3911
  %v3968 = vpack.c.b16 %v3914, %v3912
  %v3969 = vpack.c.b16 %v3917, %v3915
  %v3970 = vpack.c.b16 %v3918, %v3916
  %v3971 = vpack.c.b16 %v3921, %v3919
  %v3972 = vpack.c.b16 %v3922, %v3920
  %v3973 = vpack.c.b16 %v3925, %v3923
  %v3974 = vpack.c.b16 %v3926, %v3924
  %v3975 = vpack.c.b16 %v3929, %v3927
  %v3976 = vpack.c.b16 %v3930, %v3928
  %v3977 = vpack.c.b16 %v3933, %v3931
  %v3978 = vpack.c.b16 %v3934, %v3932
  %v3979 = vpack.c.b16 %v3937, %v3935
  %v3980 = vpack.c.b16 %v3938, %v3936
  %v3981 = vpack.c.b16 %v3941, %v3939
  %v3982 = vpack.c.b16 %v3942, %v3940
  %v3983 = vpack.c.b16 %v3945, %v3943
  %v3984 = vpack.c.b16 %v3946, %v3944
  %v3985 = vpack.c.b16 %v3949, %v3947
  %v3986 = vpack.c.b16 %v3950, %v3948
  %v3987 = vpack.c.b16 %v3953, %v3951
  %v3988 = vpack.c.b16 %v3954, %v3952
  %v3989 = vpack.c.b16 %v3957, %v3955
  %v3990 = vpack.c.b16 %v3958, %v3956
  %4023 = vmatprep.subr.bf16.mxu0 0
  %4024 = vmatpush1.bf16.msra.mxu0 %v3840
  %4025 = vmatprep.subr.bf16.mxu0 0
  %4026 = vmatpush1.bf16.msra.mxu0 %v3841
  %4027 = vmatprep.subr.bf16.mxu0 0
  %4028 = vmatpush1.bf16.msra.mxu0 %v3842
  %4029 = vmatprep.subr.bf16.mxu0 0
  %4030 = vmatpush1.bf16.msra.mxu0 %v3843
  %4031 = vmatprep.subr.bf16.mxu0 0
  %4032 = vmatpush1.bf16.msra.mxu0 %v3844
  %4033 = vmatprep.subr.bf16.mxu0 0
  %4034 = vmatpush1.bf16.msra.mxu0 %v3845
  %4035 = vmatprep.subr.bf16.mxu0 0
  %4036 = vmatpush1.bf16.msra.mxu0 %v3846
  %4037 = vmatprep.subr.bf16.mxu0 0
  %4038 = vmatpush1.bf16.msra.mxu0 %v3847
  %4039 = vmatprep.subr.bf16.mxu0 0
  %4040 = vmatpush1.bf16.msra.mxu0 %v3848
  %4041 = vmatprep.subr.bf16.mxu0 0
  %4042 = vmatpush1.bf16.msra.mxu0 %v3849
  %4043 = vmatprep.subr.bf16.mxu0 0
  %4044 = vmatpush1.bf16.msra.mxu0 %v3850
  %4045 = vmatprep.subr.bf16.mxu0 0
  %4046 = vmatpush1.bf16.msra.mxu0 %v3851
  %4047 = vmatprep.subr.bf16.mxu0 0
  %4048 = vmatpush1.bf16.msra.mxu0 %v3852
  %4049 = vmatprep.subr.bf16.mxu0 0
  %4050 = vmatpush1.bf16.msra.mxu0 %v3853
  %4051 = vmatprep.subr.bf16.mxu0 0
  %4052 = vmatpush1.bf16.msra.mxu0 %v3854
  %4053 = vmatprep.subr.bf16.mxu0 0
  %4054 = vmatpush1.bf16.msra.mxu0 %v3855
  %4055 = vmatprep.mubr.bf16.mxu0 %v3960
  %4056 = vmatmul.mubr.bf16.gmra.mrb[0].mxu0 %v3959
  %v4057 = vpop.f32.mrb[0].mxu0
  %v4058 = vadd.f32 %v3861, %v4057
  %v4059 = vpop.f32.mrb[0].mxu0
  %v4060 = vpop.f32.mrb[0].mxu0
  %v4061 = vadd.f32 %v3861, %v4060
  %v4062 = vpop.f32.mrb[0].mxu0
  %4063 = vmatprep.mubr.bf16.mxu0 %v3962
  %4064 = vmatmul.mubr.bf16.gmra.mrb[0].mxu0 %v3961
  %v4065 = vpop.f32.mrb[0].mxu0
  %v4066 = vadd.f32 %v3861, %v4065
  %v4067 = vpop.f32.mrb[0].mxu0
  %v4068 = vpop.f32.mrb[0].mxu0
  %v4069 = vadd.f32 %v3861, %v4068
  %v4070 = vpop.f32.mrb[0].mxu0
  %4071 = vmatprep.mubr.bf16.mxu0 %v3964
  %4072 = vmatmul.mubr.bf16.gmra.mrb[0].mxu0 %v3963
  %v4073 = vpop.f32.mrb[0].mxu0
  %v4074 = vadd.f32 %v3861, %v4073
  %v4075 = vpop.f32.mrb[0].mxu0
  %v4076 = vpop.f32.mrb[0].mxu0
  %v4077 = vadd.f32 %v3861, %v4076
  %v4078 = vpop.f32.mrb[0].mxu0
  %4079 = vmatprep.mubr.bf16.mxu0 %v3966
  %4080 = vmatmul.mubr.bf16.gmra.mrb[0].mxu0 %v3965
  %v4081 = vpop.f32.mrb[0].mxu0
  %v4082 = vadd.f32 %v3861, %v4081
  %v4083 = vpop.f32.mrb[0].mxu0
  %v4084 = vpop.f32.mrb[0].mxu0
  %v4085 = vadd.f32 %v3861, %v4084
  %v4086 = vpop.f32.mrb[0].mxu0
  %4087 = vmatprep.mubr.bf16.mxu0 %v3968
  %4088 = vmatmul.mubr.bf16.gmra.mrb[0].mxu0 %v3967
  %v4089 = vpop.f32.mrb[0].mxu0
  %v4090 = vadd.f32 %v3861, %v4089
  %v4091 = vpop.f32.mrb[0].mxu0
  %v4092 = vpop.f32.mrb[0].mxu0
  %v4093 = vadd.f32 %v3861, %v4092
  %v4094 = vpop.f32.mrb[0].mxu0
  %4095 = vmatprep.mubr.bf16.mxu0 %v3970
  %4096 = vmatmul.mubr.bf16.gmra.mrb[0].mxu0 %v3969
  %v4097 = vpop.f32.mrb[0].mxu0
  %v4098 = vadd.f32 %v3861, %v4097
  %v4099 = vpop.f32.mrb[0].mxu0
  %v4100 = vpop.f32.mrb[0].mxu0
  %v4101 = vadd.f32 %v3861, %v4100
  %v4102 = vpop.f32.mrb[0].mxu0
  %4103 = vmatprep.mubr.bf16.mxu0 %v3972
  %4104 = vmatmul.mubr.bf16.gmra.mrb[0].mxu0 %v3971
  %v4105 = vpop.f32.mrb[0].mxu0
  %v4106 = vadd.f32 %v3861, %v4105
  %v4107 = vpop.f32.mrb[0].mxu0
  %v4108 = vpop.f32.mrb[0].mxu0
  %v4109 = vadd.f32 %v3861, %v4108
  %v4110 = vpop.f32.mrb[0].mxu0
  %4111 = vmatprep.mubr.bf16.mxu0 %v3974
  %4112 = vmatmul.mubr.bf16.gmra.mrb[0].mxu0 %v3973
  %v4113 = vpop.f32.mrb[0].mxu0
  %v4114 = vadd.f32 %v3861, %v4113
  %v4115 = vpop.f32.mrb[0].mxu0
  %v4116 = vpop.f32.mrb[0].mxu0
  %v4117 = vadd.f32 %v3861, %v4116
  %v4118 = vpop.f32.mrb[0].mxu0
  %4119 = vmatprep.mubr.bf16.mxu0 %v3976
  %4120 = vmatmul.mubr.bf16.gmra.mrb[0].mxu0 %v3975
  %v4121 = vpop.f32.mrb[0].mxu0
  %v4122 = vadd.f32 %v3861, %v4121
  %v4123 = vpop.f32.mrb[0].mxu0
  %v4124 = vpop.f32.mrb[0].mxu0
  %v4125 = vadd.f32 %v3861, %v4124
  %v4126 = vpop.f32.mrb[0].mxu0
  %4127 = vmatprep.mubr.bf16.mxu0 %v3978
  %4128 = vmatmul.mubr.bf16.gmra.mrb[0].mxu0 %v3977
  %v4129 = vpop.f32.mrb[0].mxu0
  %v4130 = vadd.f32 %v3861, %v4129
  %v4131 = vpop.f32.mrb[0].mxu0
  %v4132 = vpop.f32.mrb[0].mxu0
  %v4133 = vadd.f32 %v3861, %v4132
  %v4134 = vpop.f32.mrb[0].mxu0
  %4135 = vmatprep.mubr.bf16.mxu0 %v3980
  %4136 = vmatmul.mubr.bf16.gmra.mrb[0].mxu0 %v3979
  %v4137 = vpop.f32.mrb[0].mxu0
  %v4138 = vadd.f32 %v3861, %v4137
  %v4139 = vpop.f32.mrb[0].mxu0
  %v4140 = vpop.f32.mrb[0].mxu0
  %v4141 = vadd.f32 %v3861, %v4140
  %v4142 = vpop.f32.mrb[0].mxu0
  %4143 = vmatprep.mubr.bf16.mxu0 %v3982
  %4144 = vmatmul.mubr.bf16.gmra.mrb[0].mxu0 %v3981
  %v4145 = vpop.f32.mrb[0].mxu0
  %v4146 = vadd.f32 %v3861, %v4145
  %v4147 = vpop.f32.mrb[0].mxu0
  %v4148 = vpop.f32.mrb[0].mxu0
  %v4149 = vadd.f32 %v3861, %v4148
  %v4150 = vpop.f32.mrb[0].mxu0
  %4151 = vmatprep.mubr.bf16.mxu0 %v3984
  %4152 = vmatmul.mubr.bf16.gmra.mrb[0].mxu0 %v3983
  %v4153 = vpop.f32.mrb[0].mxu0
  %v4154 = vadd.f32 %v3861, %v4153
  %v4155 = vpop.f32.mrb[0].mxu0
  %v4156 = vpop.f32.mrb[0].mxu0
  %v4157 = vadd.f32 %v3861, %v4156
  %v4158 = vpop.f32.mrb[0].mxu0
  %4159 = vmatprep.mubr.bf16.mxu0 %v3986
  %4160 = vmatmul.mubr.bf16.gmra.mrb[0].mxu0 %v3985
  %v4161 = vpop.f32.mrb[0].mxu0
  %v4162 = vadd.f32 %v3861, %v4161
  %v4163 = vpop.f32.mrb[0].mxu0
  %v4164 = vpop.f32.mrb[0].mxu0
  %v4165 = vadd.f32 %v3861, %v4164
  %v4166 = vpop.f32.mrb[0].mxu0
  %4167 = vmatprep.mubr.bf16.mxu0 %v3988
  %4168 = vmatmul.mubr.bf16.gmra.mrb[0].mxu0 %v3987
  %v4169 = vpop.f32.mrb[0].mxu0
  %v4170 = vadd.f32 %v3861, %v4169
  %v4171 = vpop.f32.mrb[0].mxu0
  %v4172 = vpop.f32.mrb[0].mxu0
  %v4173 = vadd.f32 %v3861, %v4172
  %v4174 = vpop.f32.mrb[0].mxu0
  %4175 = vmatprep.mubr.bf16.mxu0 %v3990
  %4176 = vmatmul.mubr.bf16.gmra.mrb[0].mxu0 %v3989
  %v4177 = vpop.f32.mrb[0].mxu0
  %v4178 = vadd.f32 %v3861, %v4177
  %v4179 = vpop.f32.mrb[0].mxu0
  %v4180 = vpop.f32.mrb[0].mxu0
  %v4181 = vadd.f32 %v3861, %v4180
  %v4182 = vpop.f32.mrb[0].mxu0
  %4183 = vdwg.mxu0
  %v4184 = vadd.f32 %v4058, %v1626
  %v4185 = vadd.f32 %v4061, %v1630
  %v4186 = vadd.f32 %v4066, %v1636
  %v4187 = vadd.f32 %v4069, %v1640
  %v4188 = vadd.f32 %v4074, %v1646
  %v4189 = vadd.f32 %v4077, %v1650
  %v4190 = vadd.f32 %v4082, %v1656
  %v4191 = vadd.f32 %v4085, %v1660
  %v4192 = vadd.f32 %v4090, %v1666
  %v4193 = vadd.f32 %v4093, %v1670
  %v4194 = vadd.f32 %v4098, %v1676
  %v4195 = vadd.f32 %v4101, %v1680
  %v4196 = vadd.f32 %v4106, %v1686
  %v4197 = vadd.f32 %v4109, %v1690
  %v4198 = vadd.f32 %v4114, %v1696
  %v4199 = vadd.f32 %v4117, %v1700
  %v4200 = vadd.f32 %v4122, %v1706
  %v4201 = vadd.f32 %v4125, %v1710
  %v4202 = vadd.f32 %v4130, %v1716
  %v4203 = vadd.f32 %v4133, %v1720
  %v4204 = vadd.f32 %v4138, %v1726
  %v4205 = vadd.f32 %v4141, %v1730
  %v4206 = vadd.f32 %v4146, %v1736
  %v4207 = vadd.f32 %v4149, %v1740
  %v4208 = vadd.f32 %v4154, %v1746
  %v4209 = vadd.f32 %v4157, %v1750
  %v4210 = vadd.f32 %v4162, %v1756
  %v4211 = vadd.f32 %v4165, %v1760
  %v4212 = vadd.f32 %v4170, %v1766
  %v4213 = vadd.f32 %v4173, %v1770
  %v4214 = vadd.f32 %v4178, %v1776
  %v4215 = vadd.f32 %v4181, %v1780
  %v4216 = vmax.f32 %v4184, 0.0
  %v4217 = vmax.f32 %v4185, 0.0
  %v4218 = vmax.f32 %v4186, 0.0
  %v4219 = vmax.f32 %v4187, 0.0
  %v4220 = vmax.f32 %v4188, 0.0
  %v4221 = vmax.f32 %v4189, 0.0
  %v4222 = vmax.f32 %v4190, 0.0
  %v4223 = vmax.f32 %v4191, 0.0
  %v4224 = vmax.f32 %v4192, 0.0
  %v4225 = vmax.f32 %v4193, 0.0
  %v4226 = vmax.f32 %v4194, 0.0
  %v4227 = vmax.f32 %v4195, 0.0
  %v4228 = vmax.f32 %v4196, 0.0
  %v4229 = vmax.f32 %v4197, 0.0
  %v4230 = vmax.f32 %v4198, 0.0
  %v4231 = vmax.f32 %v4199, 0.0
  %v4232 = vmax.f32 %v4200, 0.0
  %v4233 = vmax.f32 %v4201, 0.0
  %v4234 = vmax.f32 %v4202, 0.0
  %v4235 = vmax.f32 %v4203, 0.0
  %v4236 = vmax.f32 %v4204, 0.0
  %v4237 = vmax.f32 %v4205, 0.0
  %v4238 = vmax.f32 %v4206, 0.0
  %v4239 = vmax.f32 %v4207, 0.0
  %v4240 = vmax.f32 %v4208, 0.0
  %v4241 = vmax.f32 %v4209, 0.0
  %v4242 = vmax.f32 %v4210, 0.0
  %v4243 = vmax.f32 %v4211, 0.0
  %v4244 = vmax.f32 %v4212, 0.0
  %v4245 = vmax.f32 %v4213, 0.0
  %v4246 = vmax.f32 %v4214, 0.0
  %v4247 = vmax.f32 %v4215, 0.0
  %vm4248 = vcmask 64512
  %4249 = vst.msk [vmem:[%s6] sm:$0xff] %vm4248, %v4216
  %4250 = vst.msk [vmem:[%s6 + $0x8] sm:$0xff] %vm4248, %v4217
  %4251 = vst.msk [vmem:[%s6 + $0x10] sm:$0xff] %vm4248, %v4218
  %4252 = vst.msk [vmem:[%s6 + $0x18] sm:$0xff] %vm4248, %v4219
  %4253 = vst.msk [vmem:[%s6 + $0x20] sm:$0xff] %vm4248, %v4220
  %4254 = vst.msk [vmem:[%s6 + $0x28] sm:$0xff] %vm4248, %v4221
  %4255 = vst.msk [vmem:[%s6 + $0x30] sm:$0xff] %vm4248, %v4222
  %4256 = vst.msk [vmem:[%s6 + $0x38] sm:$0xff] %vm4248, %v4223
  %4257 = vst.msk [vmem:[%s6 + $0x40] sm:$0xff] %vm4248, %v4224
  %4258 = vst.msk [vmem:[%s6 + $0x48] sm:$0xff] %vm4248, %v4225
  %4259 = vst.msk [vmem:[%s6 + $0x50] sm:$0xff] %vm4248, %v4226
  %4260 = vst.msk [vmem:[%s6 + $0x58] sm:$0xff] %vm4248, %v4227
  %4261 = vst.msk [vmem:[%s6 + $0x60] sm:$0xff] %vm4248, %v4228
  %4262 = vst.msk [vmem:[%s6 + $0x68] sm:$0xff] %vm4248, %v4229
  %4263 = vst.msk [vmem:[%s6 + $0x70] sm:$0xff] %vm4248, %v4230
  %4264 = vst.msk [vmem:[%s6 + $0x78] sm:$0xff] %vm4248, %v4231
  %4265 = vst.msk [vmem:[%s6 + $0x80] sm:$0xff] %vm4248, %v4232
  %4266 = vst.msk [vmem:[%s6 + $0x88] sm:$0xff] %vm4248, %v4233
  %4267 = vst.msk [vmem:[%s6 + $0x90] sm:$0xff] %vm4248, %v4234
  %4268 = vst.msk [vmem:[%s6 + $0x98] sm:$0xff] %vm4248, %v4235
  %4269 = vst.msk [vmem:[%s6 + $0xa0] sm:$0xff] %vm4248, %v4236
  %4270 = vst.msk [vmem:[%s6 + $0xa8] sm:$0xff] %vm4248, %v4237
  %4271 = vst.msk [vmem:[%s6 + $0xb0] sm:$0xff] %vm4248, %v4238
  %4272 = vst.msk [vmem:[%s6 + $0xb8] sm:$0xff] %vm4248, %v4239
  %4273 = vst.msk [vmem:[%s6 + $0xc0] sm:$0xff] %vm4248, %v4240
  %4274 = vst.msk [vmem:[%s6 + $0xc8] sm:$0xff] %vm4248, %v4241
  %4275 = vst.msk [vmem:[%s6 + $0xd0] sm:$0xff] %vm4248, %v4242
  %4276 = vst.msk [vmem:[%s6 + $0xd8] sm:$0xff] %vm4248, %v4243
  %4277 = vst.msk [vmem:[%s6 + $0xe0] sm:$0xff] %vm4248, %v4244
  %4278 = vst.msk [vmem:[%s6 + $0xe8] sm:$0xff] %vm4248, %v4245
  %4279 = vst.msk [vmem:[%s6 + $0xf0] sm:$0xff] %vm4248, %v4246
  %4280 = vst.msk [vmem:[%s6 + $0xf8] sm:$0xff] %vm4248, %v4247
  %s4281 = scalar_lea.vmem %s0, 256
  %v4282 = vld [vmem:[%s4281] sm:$0xff]
  %v4283 = vld [vmem:[%s4281 + $0x8] sm:$0xff]
  %v4284 = vld [vmem:[%s4281 + $0x10] sm:$0xff]
  %v4285 = vld [vmem:[%s4281 + $0x18] sm:$0xff]
  %v4286 = vld [vmem:[%s4281 + $0x20] sm:$0xff]
  %v4287 = vld [vmem:[%s4281 + $0x28] sm:$0xff]
  %v4288 = vld [vmem:[%s4281 + $0x30] sm:$0xff]
  %v4289 = vld [vmem:[%s4281 + $0x38] sm:$0xff]
  %v4290 = vld [vmem:[%s4281 + $0x40] sm:$0xff]
  %v4291 = vld [vmem:[%s4281 + $0x48] sm:$0xff]
  %v4292 = vld [vmem:[%s4281 + $0x50] sm:$0xff]
  %v4293 = vld [vmem:[%s4281 + $0x58] sm:$0xff]
  %v4294 = vld [vmem:[%s4281 + $0x60] sm:$0xff]
  %v4295 = vld [vmem:[%s4281 + $0x68] sm:$0xff]
  %v4296 = vld [vmem:[%s4281 + $0x70] sm:$0xff]
  %v4297 = vld [vmem:[%s4281 + $0x78] sm:$0xff]
  %v4298 = vld [vmem:[%s4281 + $0x80] sm:$0xff]
  %v4299 = vld [vmem:[%s4281 + $0x88] sm:$0xff]
  %v4300 = vld [vmem:[%s4281 + $0x90] sm:$0xff]
  %v4301 = vld [vmem:[%s4281 + $0x98] sm:$0xff]
  %v4302 = vld [vmem:[%s4281 + $0xa0] sm:$0xff]
  %v4303 = vld [vmem:[%s4281 + $0xa8] sm:$0xff]
  %v4304 = vld [vmem:[%s4281 + $0xb0] sm:$0xff]
  %v4305 = vld [vmem:[%s4281 + $0xb8] sm:$0xff]
  %v4306 = vld [vmem:[%s4281 + $0xc0] sm:$0xff]
  %v4307 = vld [vmem:[%s4281 + $0xc8] sm:$0xff]
  %v4308 = vld [vmem:[%s4281 + $0xd0] sm:$0xff]
  %v4309 = vld [vmem:[%s4281 + $0xd8] sm:$0xff]
  %v4310 = vld [vmem:[%s4281 + $0xe0] sm:$0xff]
  %v4311 = vld [vmem:[%s4281 + $0xe8] sm:$0xff]
  %v4312 = vld [vmem:[%s4281 + $0xf0] sm:$0xff]
  %v4313 = vld [vmem:[%s4281 + $0xf8] sm:$0xff]
  %4314 = vst.msk [vmem:[%s31 + $0x1] sm:$0xff] %vm98, %v4282
  %4315 = vst.msk [vmem:[%s31 + $0x9] sm:$0xff] %vm98, %v4283
  %4316 = vst.msk [vmem:[%s31 + $0x19] sm:$0xff] %vm98, %v4284
  %4317 = vst.msk [vmem:[%s31 + $0x21] sm:$0xff] %vm98, %v4285
  %4318 = vst.msk [vmem:[%s31 + $0x31] sm:$0xff] %vm98, %v4286
  %4319 = vst.msk [vmem:[%s31 + $0x39] sm:$0xff] %vm98, %v4287
  %4320 = vst.msk [vmem:[%s31 + $0x49] sm:$0xff] %vm98, %v4288
  %4321 = vst.msk [vmem:[%s31 + $0x51] sm:$0xff] %vm98, %v4289
  %4322 = vst.msk [vmem:[%s31 + $0x61] sm:$0xff] %vm98, %v4290
  %4323 = vst.msk [vmem:[%s31 + $0x69] sm:$0xff] %vm98, %v4291
  %4324 = vst.msk [vmem:[%s31 + $0x79] sm:$0xff] %vm98, %v4292
  %4325 = vst.msk [vmem:[%s31 + $0x81] sm:$0xff] %vm98, %v4293
  %4326 = vst.msk [vmem:[%s31 + $0x91] sm:$0xff] %vm98, %v4294
  %4327 = vst.msk [vmem:[%s31 + $0x99] sm:$0xff] %vm98, %v4295
  %4328 = vst.msk [vmem:[%s31 + $0xa9] sm:$0xff] %vm98, %v4296
  %4329 = vst.msk [vmem:[%s31 + $0xb1] sm:$0xff] %vm98, %v4297
  %4330 = vst.msk [vmem:[%s31 + $0xc1] sm:$0xff] %vm98, %v4298
  %4331 = vst.msk [vmem:[%s31 + $0xc9] sm:$0xff] %vm98, %v4299
  %4332 = vst.msk [vmem:[%s31 + $0xd9] sm:$0xff] %vm98, %v4300
  %4333 = vst.msk [vmem:[%s31 + $0xe1] sm:$0xff] %vm98, %v4301
  %4334 = vst.msk [vmem:[%s31 + $0xf1] sm:$0xff] %vm98, %v4302
  %4335 = vst.msk [vmem:[%s31 + $0xf9] sm:$0xff] %vm98, %v4303
  %4336 = vst.msk [vmem:[%s31 + $0x109] sm:$0xff] %vm98, %v4304
  %4337 = vst.msk [vmem:[%s31 + $0x111] sm:$0xff] %vm98, %v4305
  %4338 = vst.msk [vmem:[%s31 + $0x121] sm:$0xff] %vm98, %v4306
  %4339 = vst.msk [vmem:[%s31 + $0x129] sm:$0xff] %vm98, %v4307
  %4340 = vst.msk [vmem:[%s31 + $0x139] sm:$0xff] %vm98, %v4308
  %4341 = vst.msk [vmem:[%s31 + $0x141] sm:$0xff] %vm98, %v4309
  %4342 = vst.msk [vmem:[%s31 + $0x151] sm:$0xff] %vm98, %v4310
  %4343 = vst.msk [vmem:[%s31 + $0x159] sm:$0xff] %vm98, %v4311
  %4344 = vst.msk [vmem:[%s31 + $0x169] sm:$0xff] %vm98, %v4312
  %4345 = vst.msk [vmem:[%s31 + $0x171] sm:$0xff] %vm98, %v4313
  %v4346 = vld [vmem:[#allocation2] sm:$0xff]
  %v4347 = vld [vmem:[#allocation2 + $0x8] sm:$0xff]
  %v4348 = vld [vmem:[#allocation2 + $0x18] sm:$0xff]
  %v4349 = vld [vmem:[#allocation2 + $0x20] sm:$0xff]
  %v4350 = vld [vmem:[#allocation2 + $0x30] sm:$0xff]
  %v4351 = vld [vmem:[#allocation2 + $0x38] sm:$0xff]
  %v4352 = vld [vmem:[#allocation2 + $0x48] sm:$0xff]
  %v4353 = vld [vmem:[#allocation2 + $0x50] sm:$0xff]
  %v4354 = vld [vmem:[#allocation2 + $0x60] sm:$0xff]
  %v4355 = vld [vmem:[#allocation2 + $0x68] sm:$0xff]
  %v4356 = vld [vmem:[#allocation2 + $0x78] sm:$0xff]
  %v4357 = vld [vmem:[#allocation2 + $0x80] sm:$0xff]
  %v4358 = vld [vmem:[#allocation2 + $0x90] sm:$0xff]
  %v4359 = vld [vmem:[#allocation2 + $0x98] sm:$0xff]
  %v4360 = vld [vmem:[#allocation2 + $0xa8] sm:$0xff]
  %v4361 = vld [vmem:[#allocation2 + $0xb0] sm:$0xff]
  %v4362 = vld [vmem:[#allocation2 + $0xc0] sm:$0xff]
  %v4363 = vld [vmem:[#allocation2 + $0xc8] sm:$0xff]
  %v4364 = vld [vmem:[#allocation2 + $0xd8] sm:$0xff]
  %v4365 = vld [vmem:[#allocation2 + $0xe0] sm:$0xff]
  %v4366 = vld [vmem:[#allocation2 + $0xf0] sm:$0xff]
  %v4367 = vld [vmem:[#allocation2 + $0xf8] sm:$0xff]
  %v4368 = vld [vmem:[#allocation2 + $0x108] sm:$0xff]
  %v4369 = vld [vmem:[#allocation2 + $0x110] sm:$0xff]
  %v4370 = vld [vmem:[#allocation2 + $0x120] sm:$0xff]
  %v4371 = vld [vmem:[#allocation2 + $0x128] sm:$0xff]
  %v4372 = vld [vmem:[#allocation2 + $0x138] sm:$0xff]
  %v4373 = vld [vmem:[#allocation2 + $0x140] sm:$0xff]
  %v4374 = vld [vmem:[#allocation2 + $0x150] sm:$0xff]
  %v4375 = vld [vmem:[#allocation2 + $0x158] sm:$0xff]
  %v4376 = vld [vmem:[#allocation2 + $0x168] sm:$0xff]
  %v4377 = vld [vmem:[#allocation2 + $0x170] sm:$0xff]
  %v4378 = vsel %vm131, %v4346, 0.0
  %v4379 = vsel %vm131, %v4347, 0.0
  %v4380 = vsel %vm131, %v4348, 0.0
  %v4381 = vsel %vm131, %v4349, 0.0
  %v4382 = vsel %vm131, %v4350, 0.0
  %v4383 = vsel %vm131, %v4351, 0.0
  %v4384 = vsel %vm131, %v4352, 0.0
  %v4385 = vsel %vm131, %v4353, 0.0
  %v4386 = vsel %vm131, %v4354, 0.0
  %v4387 = vsel %vm131, %v4355, 0.0
  %v4388 = vsel %vm131, %v4356, 0.0
  %v4389 = vsel %vm131, %v4357, 0.0
  %v4390 = vsel %vm131, %v4358, 0.0
  %v4391 = vsel %vm131, %v4359, 0.0
  %v4392 = vsel %vm131, %v4360, 0.0
  %v4393 = vsel %vm131, %v4361, 0.0
  %v4394 = vsel %vm131, %v4362, 0.0
  %v4395 = vsel %vm131, %v4363, 0.0
  %v4396 = vsel %vm131, %v4364, 0.0
  %v4397 = vsel %vm131, %v4365, 0.0
  %v4398 = vsel %vm131, %v4366, 0.0
  %v4399 = vsel %vm131, %v4367, 0.0
  %v4400 = vsel %vm131, %v4368, 0.0
  %v4401 = vsel %vm131, %v4369, 0.0
  %v4402 = vsel %vm131, %v4370, 0.0
  %v4403 = vsel %vm131, %v4371, 0.0
  %v4404 = vsel %vm131, %v4372, 0.0
  %v4405 = vsel %vm131, %v4373, 0.0
  %v4406 = vsel %vm131, %v4374, 0.0
  %v4407 = vsel %vm131, %v4375, 0.0
  %v4408 = vsel %vm131, %v4376, 0.0
  %v4409 = vsel %vm131, %v4377, 0.0
  %v4410 = vld [vmem:[#allocation2 + $0x1] sm:$0xff]
  %v4411 = vld [vmem:[#allocation2 + $0x9] sm:$0xff]
  %v4412 = vld [vmem:[#allocation2 + $0x19] sm:$0xff]
  %v4413 = vld [vmem:[#allocation2 + $0x21] sm:$0xff]
  %v4414 = vld [vmem:[#allocation2 + $0x31] sm:$0xff]
  %v4415 = vld [vmem:[#allocation2 + $0x39] sm:$0xff]
  %v4416 = vld [vmem:[#allocation2 + $0x49] sm:$0xff]
  %v4417 = vld [vmem:[#allocation2 + $0x51] sm:$0xff]
  %v4418 = vld [vmem:[#allocation2 + $0x61] sm:$0xff]
  %v4419 = vld [vmem:[#allocation2 + $0x69] sm:$0xff]
  %v4420 = vld [vmem:[#allocation2 + $0x79] sm:$0xff]
  %v4421 = vld [vmem:[#allocation2 + $0x81] sm:$0xff]
  %v4422 = vld [vmem:[#allocation2 + $0x91] sm:$0xff]
  %v4423 = vld [vmem:[#allocation2 + $0x99] sm:$0xff]
  %v4424 = vld [vmem:[#allocation2 + $0xa9] sm:$0xff]
  %v4425 = vld [vmem:[#allocation2 + $0xb1] sm:$0xff]
  %v4426 = vld [vmem:[#allocation2 + $0xc1] sm:$0xff]
  %v4427 = vld [vmem:[#allocation2 + $0xc9] sm:$0xff]
  %v4428 = vld [vmem:[#allocation2 + $0xd9] sm:$0xff]
  %v4429 = vld [vmem:[#allocation2 + $0xe1] sm:$0xff]
  %v4430 = vld [vmem:[#allocation2 + $0xf1] sm:$0xff]
  %v4431 = vld [vmem:[#allocation2 + $0xf9] sm:$0xff]
  %v4432 = vld [vmem:[#allocation2 + $0x109] sm:$0xff]
  %v4433 = vld [vmem:[#allocation2 + $0x111] sm:$0xff]
  %v4434 = vld [vmem:[#allocation2 + $0x121] sm:$0xff]
  %v4435 = vld [vmem:[#allocation2 + $0x129] sm:$0xff]
  %v4436 = vld [vmem:[#allocation2 + $0x139] sm:$0xff]
  %v4437 = vld [vmem:[#allocation2 + $0x141] sm:$0xff]
  %v4438 = vld [vmem:[#allocation2 + $0x151] sm:$0xff]
  %v4439 = vld [vmem:[#allocation2 + $0x159] sm:$0xff]
  %v4440 = vld [vmem:[#allocation2 + $0x169] sm:$0xff]
  %v4441 = vld [vmem:[#allocation2 + $0x171] sm:$0xff]
  %v4442 = vsel %vm131, %v4410, 0.0
  %v4443 = vsel %vm131, %v4411, 0.0
  %v4444 = vsel %vm131, %v4412, 0.0
  %v4445 = vsel %vm131, %v4413, 0.0
  %v4446 = vsel %vm131, %v4414, 0.0
  %v4447 = vsel %vm131, %v4415, 0.0
  %v4448 = vsel %vm131, %v4416, 0.0
  %v4449 = vsel %vm131, %v4417, 0.0
  %v4450 = vsel %vm131, %v4418, 0.0
  %v4451 = vsel %vm131, %v4419, 0.0
  %v4452 = vsel %vm131, %v4420, 0.0
  %v4453 = vsel %vm131, %v4421, 0.0
  %v4454 = vsel %vm131, %v4422, 0.0
  %v4455 = vsel %vm131, %v4423, 0.0
  %v4456 = vsel %vm131, %v4424, 0.0
  %v4457 = vsel %vm131, %v4425, 0.0
  %v4458 = vsel %vm131, %v4426, 0.0
  %v4459 = vsel %vm131, %v4427, 0.0
  %v4460 = vsel %vm131, %v4428, 0.0
  %v4461 = vsel %vm131, %v4429, 0.0
  %v4462 = vsel %vm131, %v4430, 0.0
  %v4463 = vsel %vm131, %v4431, 0.0
  %v4464 = vsel %vm131, %v4432, 0.0
  %v4465 = vsel %vm131, %v4433, 0.0
  %v4466 = vsel %vm131, %v4434, 0.0
  %v4467 = vsel %vm131, %v4435, 0.0
  %v4468 = vsel %vm131, %v4436, 0.0
  %v4469 = vsel %vm131, %v4437, 0.0
  %v4470 = vsel %vm131, %v4438, 0.0
  %v4471 = vsel %vm131, %v4439, 0.0
  %v4472 = vsel %vm131, %v4440, 0.0
  %v4473 = vsel %vm131, %v4441, 0.0
  %4474 = vrot.lane.b32.xlu0 %v4442, 4
  %v4475 = vpop.permute.xlu0 %4474
  %4476 = vrot.lane.b32.xlu0 %v4443, 4
  %v4477 = vpop.permute.xlu0 %4476
  %4478 = vrot.lane.b32.xlu0 %v4444, 4
  %v4479 = vpop.permute.xlu0 %4478
  %4480 = vrot.lane.b32.xlu0 %v4445, 4
  %v4481 = vpop.permute.xlu0 %4480
  %4482 = vrot.lane.b32.xlu0 %v4446, 4
  %v4483 = vpop.permute.xlu0 %4482
  %4484 = vrot.lane.b32.xlu0 %v4447, 4
  %v4485 = vpop.permute.xlu0 %4484
  %4486 = vrot.lane.b32.xlu0 %v4448, 4
  %v4487 = vpop.permute.xlu0 %4486
  %4488 = vrot.lane.b32.xlu0 %v4449, 4
  %v4489 = vpop.permute.xlu0 %4488
  %4490 = vrot.lane.b32.xlu0 %v4450, 4
  %v4491 = vpop.permute.xlu0 %4490
  %4492 = vrot.lane.b32.xlu0 %v4451, 4
  %v4493 = vpop.permute.xlu0 %4492
  %4494 = vrot.lane.b32.xlu0 %v4452, 4
  %v4495 = vpop.permute.xlu0 %4494
  %4496 = vrot.lane.b32.xlu0 %v4453, 4
  %v4497 = vpop.permute.xlu0 %4496
  %4498 = vrot.lane.b32.xlu0 %v4454, 4
  %v4499 = vpop.permute.xlu0 %4498
  %4500 = vrot.lane.b32.xlu0 %v4455, 4
  %v4501 = vpop.permute.xlu0 %4500
  %4502 = vrot.lane.b32.xlu0 %v4456, 4
  %v4503 = vpop.permute.xlu0 %4502
  %4504 = vrot.lane.b32.xlu0 %v4457, 4
  %v4505 = vpop.permute.xlu0 %4504
  %4506 = vrot.lane.b32.xlu0 %v4458, 4
  %v4507 = vpop.permute.xlu0 %4506
  %4508 = vrot.lane.b32.xlu0 %v4459, 4
  %v4509 = vpop.permute.xlu0 %4508
  %4510 = vrot.lane.b32.xlu0 %v4460, 4
  %v4511 = vpop.permute.xlu0 %4510
  %4512 = vrot.lane.b32.xlu0 %v4461, 4
  %v4513 = vpop.permute.xlu0 %4512
  %4514 = vrot.lane.b32.xlu0 %v4462, 4
  %v4515 = vpop.permute.xlu0 %4514
  %4516 = vrot.lane.b32.xlu0 %v4463, 4
  %v4517 = vpop.permute.xlu0 %4516
  %4518 = vrot.lane.b32.xlu0 %v4464, 4
  %v4519 = vpop.permute.xlu0 %4518
  %4520 = vrot.lane.b32.xlu0 %v4465, 4
  %v4521 = vpop.permute.xlu0 %4520
  %4522 = vrot.lane.b32.xlu0 %v4466, 4
  %v4523 = vpop.permute.xlu0 %4522
  %4524 = vrot.lane.b32.xlu0 %v4467, 4
  %v4525 = vpop.permute.xlu0 %4524
  %4526 = vrot.lane.b32.xlu0 %v4468, 4
  %v4527 = vpop.permute.xlu0 %4526
  %4528 = vrot.lane.b32.xlu0 %v4469, 4
  %v4529 = vpop.permute.xlu0 %4528
  %4530 = vrot.lane.b32.xlu0 %v4470, 4
  %v4531 = vpop.permute.xlu0 %4530
  %4532 = vrot.lane.b32.xlu0 %v4471, 4
  %v4533 = vpop.permute.xlu0 %4532
  %4534 = vrot.lane.b32.xlu0 %v4472, 4
  %v4535 = vpop.permute.xlu0 %4534
  %4536 = vrot.lane.b32.xlu0 %v4473, 4
  %v4537 = vpop.permute.xlu0 %4536
  %v4538 = vadd.f32 %v4378, %v4475
  %v4539 = vadd.f32 %v4379, %v4477
  %v4540 = vadd.f32 %v4380, %v4479
  %v4541 = vadd.f32 %v4381, %v4481
  %v4542 = vadd.f32 %v4382, %v4483
  %v4543 = vadd.f32 %v4383, %v4485
  %v4544 = vadd.f32 %v4384, %v4487
  %v4545 = vadd.f32 %v4385, %v4489
  %v4546 = vadd.f32 %v4386, %v4491
  %v4547 = vadd.f32 %v4387, %v4493
  %v4548 = vadd.f32 %v4388, %v4495
  %v4549 = vadd.f32 %v4389, %v4497
  %v4550 = vadd.f32 %v4390, %v4499
  %v4551 = vadd.f32 %v4391, %v4501
  %v4552 = vadd.f32 %v4392, %v4503
  %v4553 = vadd.f32 %v4393, %v4505
  %v4554 = vadd.f32 %v4394, %v4507
  %v4555 = vadd.f32 %v4395, %v4509
  %v4556 = vadd.f32 %v4396, %v4511
  %v4557 = vadd.f32 %v4397, %v4513
  %v4558 = vadd.f32 %v4398, %v4515
  %v4559 = vadd.f32 %v4399, %v4517
  %v4560 = vadd.f32 %v4400, %v4519
  %v4561 = vadd.f32 %v4401, %v4521
  %v4562 = vadd.f32 %v4402, %v4523
  %v4563 = vadd.f32 %v4403, %v4525
  %v4564 = vadd.f32 %v4404, %v4527
  %v4565 = vadd.f32 %v4405, %v4529
  %v4566 = vadd.f32 %v4406, %v4531
  %v4567 = vadd.f32 %v4407, %v4533
  %v4568 = vadd.f32 %v4408, %v4535
  %v4569 = vadd.f32 %v4409, %v4537
  %v4570 = vld [vmem:[#allocation2 + $0x2] sm:$0xff]
  %v4571 = vld [vmem:[#allocation2 + $0xa] sm:$0xff]
  %v4572 = vld [vmem:[#allocation2 + $0x1a] sm:$0xff]
  %v4573 = vld [vmem:[#allocation2 + $0x22] sm:$0xff]
  %v4574 = vld [vmem:[#allocation2 + $0x32] sm:$0xff]
  %v4575 = vld [vmem:[#allocation2 + $0x3a] sm:$0xff]
  %v4576 = vld [vmem:[#allocation2 + $0x4a] sm:$0xff]
  %v4577 = vld [vmem:[#allocation2 + $0x52] sm:$0xff]
  %v4578 = vld [vmem:[#allocation2 + $0x62] sm:$0xff]
  %v4579 = vld [vmem:[#allocation2 + $0x6a] sm:$0xff]
  %v4580 = vld [vmem:[#allocation2 + $0x7a] sm:$0xff]
  %v4581 = vld [vmem:[#allocation2 + $0x82] sm:$0xff]
  %v4582 = vld [vmem:[#allocation2 + $0x92] sm:$0xff]
  %v4583 = vld [vmem:[#allocation2 + $0x9a] sm:$0xff]
  %v4584 = vld [vmem:[#allocation2 + $0xaa] sm:$0xff]
  %v4585 = vld [vmem:[#allocation2 + $0xb2] sm:$0xff]
  %v4586 = vld [vmem:[#allocation2 + $0xc2] sm:$0xff]
  %v4587 = vld [vmem:[#allocation2 + $0xca] sm:$0xff]
  %v4588 = vld [vmem:[#allocation2 + $0xda] sm:$0xff]
  %v4589 = vld [vmem:[#allocation2 + $0xe2] sm:$0xff]
  %v4590 = vld [vmem:[#allocation2 + $0xf2] sm:$0xff]
  %v4591 = vld [vmem:[#allocation2 + $0xfa] sm:$0xff]
  %v4592 = vld [vmem:[#allocation2 + $0x10a] sm:$0xff]
  %v4593 = vld [vmem:[#allocation2 + $0x112] sm:$0xff]
  %v4594 = vld [vmem:[#allocation2 + $0x122] sm:$0xff]
  %v4595 = vld [vmem:[#allocation2 + $0x12a] sm:$0xff]
  %v4596 = vld [vmem:[#allocation2 + $0x13a] sm:$0xff]
  %v4597 = vld [vmem:[#allocation2 + $0x142] sm:$0xff]
  %v4598 = vld [vmem:[#allocation2 + $0x152] sm:$0xff]
  %v4599 = vld [vmem:[#allocation2 + $0x15a] sm:$0xff]
  %v4600 = vld [vmem:[#allocation2 + $0x16a] sm:$0xff]
  %v4601 = vld [vmem:[#allocation2 + $0x172] sm:$0xff]
  %v4602 = vsel %vm131, %v4570, 0.0
  %v4603 = vsel %vm131, %v4571, 0.0
  %v4604 = vsel %vm131, %v4572, 0.0
  %v4605 = vsel %vm131, %v4573, 0.0
  %v4606 = vsel %vm131, %v4574, 0.0
  %v4607 = vsel %vm131, %v4575, 0.0
  %v4608 = vsel %vm131, %v4576, 0.0
  %v4609 = vsel %vm131, %v4577, 0.0
  %v4610 = vsel %vm131, %v4578, 0.0
  %v4611 = vsel %vm131, %v4579, 0.0
  %v4612 = vsel %vm131, %v4580, 0.0
  %v4613 = vsel %vm131, %v4581, 0.0
  %v4614 = vsel %vm131, %v4582, 0.0
  %v4615 = vsel %vm131, %v4583, 0.0
  %v4616 = vsel %vm131, %v4584, 0.0
  %v4617 = vsel %vm131, %v4585, 0.0
  %v4618 = vsel %vm131, %v4586, 0.0
  %v4619 = vsel %vm131, %v4587, 0.0
  %v4620 = vsel %vm131, %v4588, 0.0
  %v4621 = vsel %vm131, %v4589, 0.0
  %v4622 = vsel %vm131, %v4590, 0.0
  %v4623 = vsel %vm131, %v4591, 0.0
  %v4624 = vsel %vm131, %v4592, 0.0
  %v4625 = vsel %vm131, %v4593, 0.0
  %v4626 = vsel %vm131, %v4594, 0.0
  %v4627 = vsel %vm131, %v4595, 0.0
  %v4628 = vsel %vm131, %v4596, 0.0
  %v4629 = vsel %vm131, %v4597, 0.0
  %v4630 = vsel %vm131, %v4598, 0.0
  %v4631 = vsel %vm131, %v4599, 0.0
  %v4632 = vsel %vm131, %v4600, 0.0
  %v4633 = vsel %vm131, %v4601, 0.0
  %4634 = vrot.lane.b32.xlu0 %v4602, 8
  %v4635 = vpop.permute.xlu0 %4634
  %4636 = vrot.lane.b32.xlu0 %v4603, 8
  %v4637 = vpop.permute.xlu0 %4636
  %4638 = vrot.lane.b32.xlu0 %v4604, 8
  %v4639 = vpop.permute.xlu0 %4638
  %4640 = vrot.lane.b32.xlu0 %v4605, 8
  %v4641 = vpop.permute.xlu0 %4640
  %4642 = vrot.lane.b32.xlu0 %v4606, 8
  %v4643 = vpop.permute.xlu0 %4642
  %4644 = vrot.lane.b32.xlu0 %v4607, 8
  %v4645 = vpop.permute.xlu0 %4644
  %4646 = vrot.lane.b32.xlu0 %v4608, 8
  %v4647 = vpop.permute.xlu0 %4646
  %4648 = vrot.lane.b32.xlu0 %v4609, 8
  %v4649 = vpop.permute.xlu0 %4648
  %4650 = vrot.lane.b32.xlu0 %v4610, 8
  %v4651 = vpop.permute.xlu0 %4650
  %4652 = vrot.lane.b32.xlu0 %v4611, 8
  %v4653 = vpop.permute.xlu0 %4652
  %4654 = vrot.lane.b32.xlu0 %v4612, 8
  %v4655 = vpop.permute.xlu0 %4654
  %4656 = vrot.lane.b32.xlu0 %v4613, 8
  %v4657 = vpop.permute.xlu0 %4656
  %4658 = vrot.lane.b32.xlu0 %v4614, 8
  %v4659 = vpop.permute.xlu0 %4658
  %4660 = vrot.lane.b32.xlu0 %v4615, 8
  %v4661 = vpop.permute.xlu0 %4660
  %4662 = vrot.lane.b32.xlu0 %v4616, 8
  %v4663 = vpop.permute.xlu0 %4662
  %4664 = vrot.lane.b32.xlu0 %v4617, 8
  %v4665 = vpop.permute.xlu0 %4664
  %4666 = vrot.lane.b32.xlu0 %v4618, 8
  %v4667 = vpop.permute.xlu0 %4666
  %4668 = vrot.lane.b32.xlu0 %v4619, 8
  %v4669 = vpop.permute.xlu0 %4668
  %4670 = vrot.lane.b32.xlu0 %v4620, 8
  %v4671 = vpop.permute.xlu0 %4670
  %4672 = vrot.lane.b32.xlu0 %v4621, 8
  %v4673 = vpop.permute.xlu0 %4672
  %4674 = vrot.lane.b32.xlu0 %v4622, 8
  %v4675 = vpop.permute.xlu0 %4674
  %4676 = vrot.lane.b32.xlu0 %v4623, 8
  %v4677 = vpop.permute.xlu0 %4676
  %4678 = vrot.lane.b32.xlu0 %v4624, 8
  %v4679 = vpop.permute.xlu0 %4678
  %4680 = vrot.lane.b32.xlu0 %v4625, 8
  %v4681 = vpop.permute.xlu0 %4680
  %4682 = vrot.lane.b32.xlu0 %v4626, 8
  %v4683 = vpop.permute.xlu0 %4682
  %4684 = vrot.lane.b32.xlu0 %v4627, 8
  %v4685 = vpop.permute.xlu0 %4684
  %4686 = vrot.lane.b32.xlu0 %v4628, 8
  %v4687 = vpop.permute.xlu0 %4686
  %4688 = vrot.lane.b32.xlu0 %v4629, 8
  %v4689 = vpop.permute.xlu0 %4688
  %4690 = vrot.lane.b32.xlu0 %v4630, 8
  %v4691 = vpop.permute.xlu0 %4690
  %4692 = vrot.lane.b32.xlu0 %v4631, 8
  %v4693 = vpop.permute.xlu0 %4692
  %4694 = vrot.lane.b32.xlu0 %v4632, 8
  %v4695 = vpop.permute.xlu0 %4694
  %4696 = vrot.lane.b32.xlu0 %v4633, 8
  %v4697 = vpop.permute.xlu0 %4696
  %v4698 = vadd.f32 %v4538, %v4635
  %v4699 = vadd.f32 %v4539, %v4637
  %v4700 = vadd.f32 %v4540, %v4639
  %v4701 = vadd.f32 %v4541, %v4641
  %v4702 = vadd.f32 %v4542, %v4643
  %v4703 = vadd.f32 %v4543, %v4645
  %v4704 = vadd.f32 %v4544, %v4647
  %v4705 = vadd.f32 %v4545, %v4649
  %v4706 = vadd.f32 %v4546, %v4651
  %v4707 = vadd.f32 %v4547, %v4653
  %v4708 = vadd.f32 %v4548, %v4655
  %v4709 = vadd.f32 %v4549, %v4657
  %v4710 = vadd.f32 %v4550, %v4659
  %v4711 = vadd.f32 %v4551, %v4661
  %v4712 = vadd.f32 %v4552, %v4663
  %v4713 = vadd.f32 %v4553, %v4665
  %v4714 = vadd.f32 %v4554, %v4667
  %v4715 = vadd.f32 %v4555, %v4669
  %v4716 = vadd.f32 %v4556, %v4671
  %v4717 = vadd.f32 %v4557, %v4673
  %v4718 = vadd.f32 %v4558, %v4675
  %v4719 = vadd.f32 %v4559, %v4677
  %v4720 = vadd.f32 %v4560, %v4679
  %v4721 = vadd.f32 %v4561, %v4681
  %v4722 = vadd.f32 %v4562, %v4683
  %v4723 = vadd.f32 %v4563, %v4685
  %v4724 = vadd.f32 %v4564, %v4687
  %v4725 = vadd.f32 %v4565, %v4689
  %v4726 = vadd.f32 %v4566, %v4691
  %v4727 = vadd.f32 %v4567, %v4693
  %v4728 = vadd.f32 %v4568, %v4695
  %v4729 = vadd.f32 %v4569, %v4697
  %v4730 = vld [vmem:[%s31] sm:$0xff]
  %v4731 = vld [vmem:[%s31 + $0x8] sm:$0xff]
  %v4732 = vld [vmem:[%s31 + $0x18] sm:$0xff]
  %v4733 = vld [vmem:[%s31 + $0x20] sm:$0xff]
  %v4734 = vld [vmem:[%s31 + $0x30] sm:$0xff]
  %v4735 = vld [vmem:[%s31 + $0x38] sm:$0xff]
  %v4736 = vld [vmem:[%s31 + $0x48] sm:$0xff]
  %v4737 = vld [vmem:[%s31 + $0x50] sm:$0xff]
  %v4738 = vld [vmem:[%s31 + $0x60] sm:$0xff]
  %v4739 = vld [vmem:[%s31 + $0x68] sm:$0xff]
  %v4740 = vld [vmem:[%s31 + $0x78] sm:$0xff]
  %v4741 = vld [vmem:[%s31 + $0x80] sm:$0xff]
  %v4742 = vld [vmem:[%s31 + $0x90] sm:$0xff]
  %v4743 = vld [vmem:[%s31 + $0x98] sm:$0xff]
  %v4744 = vld [vmem:[%s31 + $0xa8] sm:$0xff]
  %v4745 = vld [vmem:[%s31 + $0xb0] sm:$0xff]
  %v4746 = vld [vmem:[%s31 + $0xc0] sm:$0xff]
  %v4747 = vld [vmem:[%s31 + $0xc8] sm:$0xff]
  %v4748 = vld [vmem:[%s31 + $0xd8] sm:$0xff]
  %v4749 = vld [vmem:[%s31 + $0xe0] sm:$0xff]
  %v4750 = vld [vmem:[%s31 + $0xf0] sm:$0xff]
  %v4751 = vld [vmem:[%s31 + $0xf8] sm:$0xff]
  %v4752 = vld [vmem:[%s31 + $0x108] sm:$0xff]
  %v4753 = vld [vmem:[%s31 + $0x110] sm:$0xff]
  %v4754 = vld [vmem:[%s31 + $0x120] sm:$0xff]
  %v4755 = vld [vmem:[%s31 + $0x128] sm:$0xff]
  %v4756 = vld [vmem:[%s31 + $0x138] sm:$0xff]
  %v4757 = vld [vmem:[%s31 + $0x140] sm:$0xff]
  %v4758 = vld [vmem:[%s31 + $0x150] sm:$0xff]
  %v4759 = vld [vmem:[%s31 + $0x158] sm:$0xff]
  %v4760 = vld [vmem:[%s31 + $0x168] sm:$0xff]
  %v4761 = vld [vmem:[%s31 + $0x170] sm:$0xff]
  %v4762 = vsel %vm131, %v4730, 0.0
  %v4763 = vsel %vm131, %v4731, 0.0
  %v4764 = vsel %vm131, %v4732, 0.0
  %v4765 = vsel %vm131, %v4733, 0.0
  %v4766 = vsel %vm131, %v4734, 0.0
  %v4767 = vsel %vm131, %v4735, 0.0
  %v4768 = vsel %vm131, %v4736, 0.0
  %v4769 = vsel %vm131, %v4737, 0.0
  %v4770 = vsel %vm131, %v4738, 0.0
  %v4771 = vsel %vm131, %v4739, 0.0
  %v4772 = vsel %vm131, %v4740, 0.0
  %v4773 = vsel %vm131, %v4741, 0.0
  %v4774 = vsel %vm131, %v4742, 0.0
  %v4775 = vsel %vm131, %v4743, 0.0
  %v4776 = vsel %vm131, %v4744, 0.0
  %v4777 = vsel %vm131, %v4745, 0.0
  %v4778 = vsel %vm131, %v4746, 0.0
  %v4779 = vsel %vm131, %v4747, 0.0
  %v4780 = vsel %vm131, %v4748, 0.0
  %v4781 = vsel %vm131, %v4749, 0.0
  %v4782 = vsel %vm131, %v4750, 0.0
  %v4783 = vsel %vm131, %v4751, 0.0
  %v4784 = vsel %vm131, %v4752, 0.0
  %v4785 = vsel %vm131, %v4753, 0.0
  %v4786 = vsel %vm131, %v4754, 0.0
  %v4787 = vsel %vm131, %v4755, 0.0
  %v4788 = vsel %vm131, %v4756, 0.0
  %v4789 = vsel %vm131, %v4757, 0.0
  %v4790 = vsel %vm131, %v4758, 0.0
  %v4791 = vsel %vm131, %v4759, 0.0
  %v4792 = vsel %vm131, %v4760, 0.0
  %v4793 = vsel %vm131, %v4761, 0.0
  %4794 = vrot.lane.b32.xlu0 %v4762, 12
  %v4795 = vpop.permute.xlu0 %4794
  %4796 = vrot.lane.b32.xlu0 %v4763, 12
  %v4797 = vpop.permute.xlu0 %4796
  %4798 = vrot.lane.b32.xlu0 %v4764, 12
  %v4799 = vpop.permute.xlu0 %4798
  %4800 = vrot.lane.b32.xlu0 %v4765, 12
  %v4801 = vpop.permute.xlu0 %4800
  %4802 = vrot.lane.b32.xlu0 %v4766, 12
  %v4803 = vpop.permute.xlu0 %4802
  %4804 = vrot.lane.b32.xlu0 %v4767, 12
  %v4805 = vpop.permute.xlu0 %4804
  %4806 = vrot.lane.b32.xlu0 %v4768, 12
  %v4807 = vpop.permute.xlu0 %4806
  %4808 = vrot.lane.b32.xlu0 %v4769, 12
  %v4809 = vpop.permute.xlu0 %4808
  %4810 = vrot.lane.b32.xlu0 %v4770, 12
  %v4811 = vpop.permute.xlu0 %4810
  %4812 = vrot.lane.b32.xlu0 %v4771, 12
  %v4813 = vpop.permute.xlu0 %4812
  %4814 = vrot.lane.b32.xlu0 %v4772, 12
  %v4815 = vpop.permute.xlu0 %4814
  %4816 = vrot.lane.b32.xlu0 %v4773, 12
  %v4817 = vpop.permute.xlu0 %4816
  %4818 = vrot.lane.b32.xlu0 %v4774, 12
  %v4819 = vpop.permute.xlu0 %4818
  %4820 = vrot.lane.b32.xlu0 %v4775, 12
  %v4821 = vpop.permute.xlu0 %4820
  %4822 = vrot.lane.b32.xlu0 %v4776, 12
  %v4823 = vpop.permute.xlu0 %4822
  %4824 = vrot.lane.b32.xlu0 %v4777, 12
  %v4825 = vpop.permute.xlu0 %4824
  %4826 = vrot.lane.b32.xlu0 %v4778, 12
  %v4827 = vpop.permute.xlu0 %4826
  %4828 = vrot.lane.b32.xlu0 %v4779, 12
  %v4829 = vpop.permute.xlu0 %4828
  %4830 = vrot.lane.b32.xlu0 %v4780, 12
  %v4831 = vpop.permute.xlu0 %4830
  %4832 = vrot.lane.b32.xlu0 %v4781, 12
  %v4833 = vpop.permute.xlu0 %4832
  %4834 = vrot.lane.b32.xlu0 %v4782, 12
  %v4835 = vpop.permute.xlu0 %4834
  %4836 = vrot.lane.b32.xlu0 %v4783, 12
  %v4837 = vpop.permute.xlu0 %4836
  %4838 = vrot.lane.b32.xlu0 %v4784, 12
  %v4839 = vpop.permute.xlu0 %4838
  %4840 = vrot.lane.b32.xlu0 %v4785, 12
  %v4841 = vpop.permute.xlu0 %4840
  %4842 = vrot.lane.b32.xlu0 %v4786, 12
  %v4843 = vpop.permute.xlu0 %4842
  %4844 = vrot.lane.b32.xlu0 %v4787, 12
  %v4845 = vpop.permute.xlu0 %4844
  %4846 = vrot.lane.b32.xlu0 %v4788, 12
  %v4847 = vpop.permute.xlu0 %4846
  %4848 = vrot.lane.b32.xlu0 %v4789, 12
  %v4849 = vpop.permute.xlu0 %4848
  %4850 = vrot.lane.b32.xlu0 %v4790, 12
  %v4851 = vpop.permute.xlu0 %4850
  %4852 = vrot.lane.b32.xlu0 %v4791, 12
  %v4853 = vpop.permute.xlu0 %4852
  %4854 = vrot.lane.b32.xlu0 %v4792, 12
  %v4855 = vpop.permute.xlu0 %4854
  %4856 = vrot.lane.b32.xlu0 %v4793, 12
  %v4857 = vpop.permute.xlu0 %4856
  %v4858 = vadd.f32 %v4698, %v4795
  %v4859 = vadd.f32 %v4699, %v4797
  %v4860 = vadd.f32 %v4700, %v4799
  %v4861 = vadd.f32 %v4701, %v4801
  %v4862 = vadd.f32 %v4702, %v4803
  %v4863 = vadd.f32 %v4703, %v4805
  %v4864 = vadd.f32 %v4704, %v4807
  %v4865 = vadd.f32 %v4705, %v4809
  %v4866 = vadd.f32 %v4706, %v4811
  %v4867 = vadd.f32 %v4707, %v4813
  %v4868 = vadd.f32 %v4708, %v4815
  %v4869 = vadd.f32 %v4709, %v4817
  %v4870 = vadd.f32 %v4710, %v4819
  %v4871 = vadd.f32 %v4711, %v4821
  %v4872 = vadd.f32 %v4712, %v4823
  %v4873 = vadd.f32 %v4713, %v4825
  %v4874 = vadd.f32 %v4714, %v4827
  %v4875 = vadd.f32 %v4715, %v4829
  %v4876 = vadd.f32 %v4716, %v4831
  %v4877 = vadd.f32 %v4717, %v4833
  %v4878 = vadd.f32 %v4718, %v4835
  %v4879 = vadd.f32 %v4719, %v4837
  %v4880 = vadd.f32 %v4720, %v4839
  %v4881 = vadd.f32 %v4721, %v4841
  %v4882 = vadd.f32 %v4722, %v4843
  %v4883 = vadd.f32 %v4723, %v4845
  %v4884 = vadd.f32 %v4724, %v4847
  %v4885 = vadd.f32 %v4725, %v4849
  %v4886 = vadd.f32 %v4726, %v4851
  %v4887 = vadd.f32 %v4727, %v4853
  %v4888 = vadd.f32 %v4728, %v4855
  %v4889 = vadd.f32 %v4729, %v4857
  %v4890 = vld [vmem:[%s31 + $0x1] sm:$0xff]
  %v4891 = vld [vmem:[%s31 + $0x9] sm:$0xff]
  %v4892 = vld [vmem:[%s31 + $0x19] sm:$0xff]
  %v4893 = vld [vmem:[%s31 + $0x21] sm:$0xff]
  %v4894 = vld [vmem:[%s31 + $0x31] sm:$0xff]
  %v4895 = vld [vmem:[%s31 + $0x39] sm:$0xff]
  %v4896 = vld [vmem:[%s31 + $0x49] sm:$0xff]
  %v4897 = vld [vmem:[%s31 + $0x51] sm:$0xff]
  %v4898 = vld [vmem:[%s31 + $0x61] sm:$0xff]
  %v4899 = vld [vmem:[%s31 + $0x69] sm:$0xff]
  %v4900 = vld [vmem:[%s31 + $0x79] sm:$0xff]
  %v4901 = vld [vmem:[%s31 + $0x81] sm:$0xff]
  %v4902 = vld [vmem:[%s31 + $0x91] sm:$0xff]
  %v4903 = vld [vmem:[%s31 + $0x99] sm:$0xff]
  %v4904 = vld [vmem:[%s31 + $0xa9] sm:$0xff]
  %v4905 = vld [vmem:[%s31 + $0xb1] sm:$0xff]
  %v4906 = vld [vmem:[%s31 + $0xc1] sm:$0xff]
  %v4907 = vld [vmem:[%s31 + $0xc9] sm:$0xff]
  %v4908 = vld [vmem:[%s31 + $0xd9] sm:$0xff]
  %v4909 = vld [vmem:[%s31 + $0xe1] sm:$0xff]
  %v4910 = vld [vmem:[%s31 + $0xf1] sm:$0xff]
  %v4911 = vld [vmem:[%s31 + $0xf9] sm:$0xff]
  %v4912 = vld [vmem:[%s31 + $0x109] sm:$0xff]
  %v4913 = vld [vmem:[%s31 + $0x111] sm:$0xff]
  %v4914 = vld [vmem:[%s31 + $0x121] sm:$0xff]
  %v4915 = vld [vmem:[%s31 + $0x129] sm:$0xff]
  %v4916 = vld [vmem:[%s31 + $0x139] sm:$0xff]
  %v4917 = vld [vmem:[%s31 + $0x141] sm:$0xff]
  %v4918 = vld [vmem:[%s31 + $0x151] sm:$0xff]
  %v4919 = vld [vmem:[%s31 + $0x159] sm:$0xff]
  %v4920 = vld [vmem:[%s31 + $0x169] sm:$0xff]
  %v4921 = vld [vmem:[%s31 + $0x171] sm:$0xff]
  %v4922 = vsel %vm131, %v4890, 0.0
  %v4923 = vsel %vm131, %v4891, 0.0
  %v4924 = vsel %vm131, %v4892, 0.0
  %v4925 = vsel %vm131, %v4893, 0.0
  %v4926 = vsel %vm131, %v4894, 0.0
  %v4927 = vsel %vm131, %v4895, 0.0
  %v4928 = vsel %vm131, %v4896, 0.0
  %v4929 = vsel %vm131, %v4897, 0.0
  %v4930 = vsel %vm131, %v4898, 0.0
  %v4931 = vsel %vm131, %v4899, 0.0
  %v4932 = vsel %vm131, %v4900, 0.0
  %v4933 = vsel %vm131, %v4901, 0.0
  %v4934 = vsel %vm131, %v4902, 0.0
  %v4935 = vsel %vm131, %v4903, 0.0
  %v4936 = vsel %vm131, %v4904, 0.0
  %v4937 = vsel %vm131, %v4905, 0.0
  %v4938 = vsel %vm131, %v4906, 0.0
  %v4939 = vsel %vm131, %v4907, 0.0
  %v4940 = vsel %vm131, %v4908, 0.0
  %v4941 = vsel %vm131, %v4909, 0.0
  %v4942 = vsel %vm131, %v4910, 0.0
  %v4943 = vsel %vm131, %v4911, 0.0
  %v4944 = vsel %vm131, %v4912, 0.0
  %v4945 = vsel %vm131, %v4913, 0.0
  %v4946 = vsel %vm131, %v4914, 0.0
  %v4947 = vsel %vm131, %v4915, 0.0
  %v4948 = vsel %vm131, %v4916, 0.0
  %v4949 = vsel %vm131, %v4917, 0.0
  %v4950 = vsel %vm131, %v4918, 0.0
  %v4951 = vsel %vm131, %v4919, 0.0
  %v4952 = vsel %vm131, %v4920, 0.0
  %v4953 = vsel %vm131, %v4921, 0.0
  %4954 = vrot.lane.b32.xlu0 %v4922, 16
  %v4955 = vpop.permute.xlu0 %4954
  %4956 = vrot.lane.b32.xlu0 %v4923, 16
  %v4957 = vpop.permute.xlu0 %4956
  %4958 = vrot.lane.b32.xlu0 %v4924, 16
  %v4959 = vpop.permute.xlu0 %4958
  %4960 = vrot.lane.b32.xlu0 %v4925, 16
  %v4961 = vpop.permute.xlu0 %4960
  %4962 = vrot.lane.b32.xlu0 %v4926, 16
  %v4963 = vpop.permute.xlu0 %4962
  %4964 = vrot.lane.b32.xlu0 %v4927, 16
  %v4965 = vpop.permute.xlu0 %4964
  %4966 = vrot.lane.b32.xlu0 %v4928, 16
  %v4967 = vpop.permute.xlu0 %4966
  %4968 = vrot.lane.b32.xlu0 %v4929, 16
  %v4969 = vpop.permute.xlu0 %4968
  %4970 = vrot.lane.b32.xlu0 %v4930, 16
  %v4971 = vpop.permute.xlu0 %4970
  %4972 = vrot.lane.b32.xlu0 %v4931, 16
  %v4973 = vpop.permute.xlu0 %4972
  %4974 = vrot.lane.b32.xlu0 %v4932, 16
  %v4975 = vpop.permute.xlu0 %4974
  %4976 = vrot.lane.b32.xlu0 %v4933, 16
  %v4977 = vpop.permute.xlu0 %4976
  %4978 = vrot.lane.b32.xlu0 %v4934, 16
  %v4979 = vpop.permute.xlu0 %4978
  %4980 = vrot.lane.b32.xlu0 %v4935, 16
  %v4981 = vpop.permute.xlu0 %4980
  %4982 = vrot.lane.b32.xlu0 %v4936, 16
  %v4983 = vpop.permute.xlu0 %4982
  %4984 = vrot.lane.b32.xlu0 %v4937, 16
  %v4985 = vpop.permute.xlu0 %4984
  %4986 = vrot.lane.b32.xlu0 %v4938, 16
  %v4987 = vpop.permute.xlu0 %4986
  %4988 = vrot.lane.b32.xlu0 %v4939, 16
  %v4989 = vpop.permute.xlu0 %4988
  %4990 = vrot.lane.b32.xlu0 %v4940, 16
  %v4991 = vpop.permute.xlu0 %4990
  %4992 = vrot.lane.b32.xlu0 %v4941, 16
  %v4993 = vpop.permute.xlu0 %4992
  %4994 = vrot.lane.b32.xlu0 %v4942, 16
  %v4995 = vpop.permute.xlu0 %4994
  %4996 = vrot.lane.b32.xlu0 %v4943, 16
  %v4997 = vpop.permute.xlu0 %4996
  %4998 = vrot.lane.b32.xlu0 %v4944, 16
  %v4999 = vpop.permute.xlu0 %4998
  %5000 = vrot.lane.b32.xlu0 %v4945, 16
  %v5001 = vpop.permute.xlu0 %5000
  %5002 = vrot.lane.b32.xlu0 %v4946, 16
  %v5003 = vpop.permute.xlu0 %5002
  %5004 = vrot.lane.b32.xlu0 %v4947, 16
  %v5005 = vpop.permute.xlu0 %5004
  %5006 = vrot.lane.b32.xlu0 %v4948, 16
  %v5007 = vpop.permute.xlu0 %5006
  %5008 = vrot.lane.b32.xlu0 %v4949, 16
  %v5009 = vpop.permute.xlu0 %5008
  %5010 = vrot.lane.b32.xlu0 %v4950, 16
  %v5011 = vpop.permute.xlu0 %5010
  %5012 = vrot.lane.b32.xlu0 %v4951, 16
  %v5013 = vpop.permute.xlu0 %5012
  %5014 = vrot.lane.b32.xlu0 %v4952, 16
  %v5015 = vpop.permute.xlu0 %5014
  %5016 = vrot.lane.b32.xlu0 %v4953, 16
  %v5017 = vpop.permute.xlu0 %5016
  %v5018 = vadd.f32 %v4858, %v4955
  %v5019 = vadd.f32 %v4859, %v4957
  %v5020 = vadd.f32 %v4860, %v4959
  %v5021 = vadd.f32 %v4861, %v4961
  %v5022 = vadd.f32 %v4862, %v4963
  %v5023 = vadd.f32 %v4863, %v4965
  %v5024 = vadd.f32 %v4864, %v4967
  %v5025 = vadd.f32 %v4865, %v4969
  %v5026 = vadd.f32 %v4866, %v4971
  %v5027 = vadd.f32 %v4867, %v4973
  %v5028 = vadd.f32 %v4868, %v4975
  %v5029 = vadd.f32 %v4869, %v4977
  %v5030 = vadd.f32 %v4870, %v4979
  %v5031 = vadd.f32 %v4871, %v4981
  %v5032 = vadd.f32 %v4872, %v4983
  %v5033 = vadd.f32 %v4873, %v4985
  %v5034 = vadd.f32 %v4874, %v4987
  %v5035 = vadd.f32 %v4875, %v4989
  %v5036 = vadd.f32 %v4876, %v4991
  %v5037 = vadd.f32 %v4877, %v4993
  %v5038 = vadd.f32 %v4878, %v4995
  %v5039 = vadd.f32 %v4879, %v4997
  %v5040 = vadd.f32 %v4880, %v4999
  %v5041 = vadd.f32 %v4881, %v5001
  %v5042 = vadd.f32 %v4882, %v5003
  %v5043 = vadd.f32 %v4883, %v5005
  %v5044 = vadd.f32 %v4884, %v5007
  %v5045 = vadd.f32 %v4885, %v5009
  %v5046 = vadd.f32 %v4886, %v5011
  %v5047 = vadd.f32 %v4887, %v5013
  %v5048 = vadd.f32 %v4888, %v5015
  %v5049 = vadd.f32 %v4889, %v5017
  %v5050 = vld [vmem:[%s31 + $0x2] sm:$0xff]
  %v5051 = vld [vmem:[%s31 + $0xa] sm:$0xff]
  %v5052 = vld [vmem:[%s31 + $0x1a] sm:$0xff]
  %v5053 = vld [vmem:[%s31 + $0x22] sm:$0xff]
  %v5054 = vld [vmem:[%s31 + $0x32] sm:$0xff]
  %v5055 = vld [vmem:[%s31 + $0x3a] sm:$0xff]
  %v5056 = vld [vmem:[%s31 + $0x4a] sm:$0xff]
  %v5057 = vld [vmem:[%s31 + $0x52] sm:$0xff]
  %v5058 = vld [vmem:[%s31 + $0x62] sm:$0xff]
  %v5059 = vld [vmem:[%s31 + $0x6a] sm:$0xff]
  %v5060 = vld [vmem:[%s31 + $0x7a] sm:$0xff]
  %v5061 = vld [vmem:[%s31 + $0x82] sm:$0xff]
  %v5062 = vld [vmem:[%s31 + $0x92] sm:$0xff]
  %v5063 = vld [vmem:[%s31 + $0x9a] sm:$0xff]
  %v5064 = vld [vmem:[%s31 + $0xaa] sm:$0xff]
  %v5065 = vld [vmem:[%s31 + $0xb2] sm:$0xff]
  %v5066 = vld [vmem:[%s31 + $0xc2] sm:$0xff]
  %v5067 = vld [vmem:[%s31 + $0xca] sm:$0xff]
  %v5068 = vld [vmem:[%s31 + $0xda] sm:$0xff]
  %v5069 = vld [vmem:[%s31 + $0xe2] sm:$0xff]
  %v5070 = vld [vmem:[%s31 + $0xf2] sm:$0xff]
  %v5071 = vld [vmem:[%s31 + $0xfa] sm:$0xff]
  %v5072 = vld [vmem:[%s31 + $0x10a] sm:$0xff]
  %v5073 = vld [vmem:[%s31 + $0x112] sm:$0xff]
  %v5074 = vld [vmem:[%s31 + $0x122] sm:$0xff]
  %v5075 = vld [vmem:[%s31 + $0x12a] sm:$0xff]
  %v5076 = vld [vmem:[%s31 + $0x13a] sm:$0xff]
  %v5077 = vld [vmem:[%s31 + $0x142] sm:$0xff]
  %v5078 = vld [vmem:[%s31 + $0x152] sm:$0xff]
  %v5079 = vld [vmem:[%s31 + $0x15a] sm:$0xff]
  %v5080 = vld [vmem:[%s31 + $0x16a] sm:$0xff]
  %v5081 = vld [vmem:[%s31 + $0x172] sm:$0xff]
  %v5082 = vsel %vm131, %v5050, 0.0
  %v5083 = vsel %vm131, %v5051, 0.0
  %v5084 = vsel %vm131, %v5052, 0.0
  %v5085 = vsel %vm131, %v5053, 0.0
  %v5086 = vsel %vm131, %v5054, 0.0
  %v5087 = vsel %vm131, %v5055, 0.0
  %v5088 = vsel %vm131, %v5056, 0.0
  %v5089 = vsel %vm131, %v5057, 0.0
  %v5090 = vsel %vm131, %v5058, 0.0
  %v5091 = vsel %vm131, %v5059, 0.0
  %v5092 = vsel %vm131, %v5060, 0.0
  %v5093 = vsel %vm131, %v5061, 0.0
  %v5094 = vsel %vm131, %v5062, 0.0
  %v5095 = vsel %vm131, %v5063, 0.0
  %v5096 = vsel %vm131, %v5064, 0.0
  %v5097 = vsel %vm131, %v5065, 0.0
  %v5098 = vsel %vm131, %v5066, 0.0
  %v5099 = vsel %vm131, %v5067, 0.0
  %v5100 = vsel %vm131, %v5068, 0.0
  %v5101 = vsel %vm131, %v5069, 0.0
  %v5102 = vsel %vm131, %v5070, 0.0
  %v5103 = vsel %vm131, %v5071, 0.0
  %v5104 = vsel %vm131, %v5072, 0.0
  %v5105 = vsel %vm131, %v5073, 0.0
  %v5106 = vsel %vm131, %v5074, 0.0
  %v5107 = vsel %vm131, %v5075, 0.0
  %v5108 = vsel %vm131, %v5076, 0.0
  %v5109 = vsel %vm131, %v5077, 0.0
  %v5110 = vsel %vm131, %v5078, 0.0
  %v5111 = vsel %vm131, %v5079, 0.0
  %v5112 = vsel %vm131, %v5080, 0.0
  %v5113 = vsel %vm131, %v5081, 0.0
  %5114 = vrot.lane.b32.xlu0 %v5082, 20
  %v5115 = vpop.permute.xlu0 %5114
  %5116 = vrot.lane.b32.xlu0 %v5083, 20
  %v5117 = vpop.permute.xlu0 %5116
  %5118 = vrot.lane.b32.xlu0 %v5084, 20
  %v5119 = vpop.permute.xlu0 %5118
  %5120 = vrot.lane.b32.xlu0 %v5085, 20
  %v5121 = vpop.permute.xlu0 %5120
  %5122 = vrot.lane.b32.xlu0 %v5086, 20
  %v5123 = vpop.permute.xlu0 %5122
  %5124 = vrot.lane.b32.xlu0 %v5087, 20
  %v5125 = vpop.permute.xlu0 %5124
  %5126 = vrot.lane.b32.xlu0 %v5088, 20
  %v5127 = vpop.permute.xlu0 %5126
  %5128 = vrot.lane.b32.xlu0 %v5089, 20
  %v5129 = vpop.permute.xlu0 %5128
  %5130 = vrot.lane.b32.xlu0 %v5090, 20
  %v5131 = vpop.permute.xlu0 %5130
  %5132 = vrot.lane.b32.xlu0 %v5091, 20
  %v5133 = vpop.permute.xlu0 %5132
  %5134 = vrot.lane.b32.xlu0 %v5092, 20
  %v5135 = vpop.permute.xlu0 %5134
  %5136 = vrot.lane.b32.xlu0 %v5093, 20
  %v5137 = vpop.permute.xlu0 %5136
  %5138 = vrot.lane.b32.xlu0 %v5094, 20
  %v5139 = vpop.permute.xlu0 %5138
  %5140 = vrot.lane.b32.xlu0 %v5095, 20
  %v5141 = vpop.permute.xlu0 %5140
  %5142 = vrot.lane.b32.xlu0 %v5096, 20
  %v5143 = vpop.permute.xlu0 %5142
  %5144 = vrot.lane.b32.xlu0 %v5097, 20
  %v5145 = vpop.permute.xlu0 %5144
  %5146 = vrot.lane.b32.xlu0 %v5098, 20
  %v5147 = vpop.permute.xlu0 %5146
  %5148 = vrot.lane.b32.xlu0 %v5099, 20
  %v5149 = vpop.permute.xlu0 %5148
  %5150 = vrot.lane.b32.xlu0 %v5100, 20
  %v5151 = vpop.permute.xlu0 %5150
  %5152 = vrot.lane.b32.xlu0 %v5101, 20
  %v5153 = vpop.permute.xlu0 %5152
  %5154 = vrot.lane.b32.xlu0 %v5102, 20
  %v5155 = vpop.permute.xlu0 %5154
  %5156 = vrot.lane.b32.xlu0 %v5103, 20
  %v5157 = vpop.permute.xlu0 %5156
  %5158 = vrot.lane.b32.xlu0 %v5104, 20
  %v5159 = vpop.permute.xlu0 %5158
  %5160 = vrot.lane.b32.xlu0 %v5105, 20
  %v5161 = vpop.permute.xlu0 %5160
  %5162 = vrot.lane.b32.xlu0 %v5106, 20
  %v5163 = vpop.permute.xlu0 %5162
  %5164 = vrot.lane.b32.xlu0 %v5107, 20
  %v5165 = vpop.permute.xlu0 %5164
  %5166 = vrot.lane.b32.xlu0 %v5108, 20
  %v5167 = vpop.permute.xlu0 %5166
  %5168 = vrot.lane.b32.xlu0 %v5109, 20
  %v5169 = vpop.permute.xlu0 %5168
  %5170 = vrot.lane.b32.xlu0 %v5110, 20
  %v5171 = vpop.permute.xlu0 %5170
  %5172 = vrot.lane.b32.xlu0 %v5111, 20
  %v5173 = vpop.permute.xlu0 %5172
  %5174 = vrot.lane.b32.xlu0 %v5112, 20
  %v5175 = vpop.permute.xlu0 %5174
  %5176 = vrot.lane.b32.xlu0 %v5113, 20
  %v5177 = vpop.permute.xlu0 %5176
  %v5178 = vadd.f32 %v5018, %v5115
  %v5179 = vadd.f32 %v5019, %v5117
  %v5180 = vadd.f32 %v5020, %v5119
  %v5181 = vadd.f32 %v5021, %v5121
  %v5182 = vadd.f32 %v5022, %v5123
  %v5183 = vadd.f32 %v5023, %v5125
  %v5184 = vadd.f32 %v5024, %v5127
  %v5185 = vadd.f32 %v5025, %v5129
  %v5186 = vadd.f32 %v5026, %v5131
  %v5187 = vadd.f32 %v5027, %v5133
  %v5188 = vadd.f32 %v5028, %v5135
  %v5189 = vadd.f32 %v5029, %v5137
  %v5190 = vadd.f32 %v5030, %v5139
  %v5191 = vadd.f32 %v5031, %v5141
  %v5192 = vadd.f32 %v5032, %v5143
  %v5193 = vadd.f32 %v5033, %v5145
  %v5194 = vadd.f32 %v5034, %v5147
  %v5195 = vadd.f32 %v5035, %v5149
  %v5196 = vadd.f32 %v5036, %v5151
  %v5197 = vadd.f32 %v5037, %v5153
  %v5198 = vadd.f32 %v5038, %v5155
  %v5199 = vadd.f32 %v5039, %v5157
  %v5200 = vadd.f32 %v5040, %v5159
  %v5201 = vadd.f32 %v5041, %v5161
  %v5202 = vadd.f32 %v5042, %v5163
  %v5203 = vadd.f32 %v5043, %v5165
  %v5204 = vadd.f32 %v5044, %v5167
  %v5205 = vadd.f32 %v5045, %v5169
  %v5206 = vadd.f32 %v5046, %v5171
  %v5207 = vadd.f32 %v5047, %v5173
  %v5208 = vadd.f32 %v5048, %v5175
  %v5209 = vadd.f32 %v5049, %v5177
  %v5210 = vld [vmem:[%s996] sm:$0xff]
  %v5211 = vld [vmem:[%s996 + $0x8] sm:$0xff]
  %v5212 = vld [vmem:[%s996 + $0x18] sm:$0xff]
  %v5213 = vld [vmem:[%s996 + $0x20] sm:$0xff]
  %v5214 = vld [vmem:[%s996 + $0x30] sm:$0xff]
  %v5215 = vld [vmem:[%s996 + $0x38] sm:$0xff]
  %v5216 = vld [vmem:[%s996 + $0x48] sm:$0xff]
  %v5217 = vld [vmem:[%s996 + $0x50] sm:$0xff]
  %v5218 = vld [vmem:[%s996 + $0x60] sm:$0xff]
  %v5219 = vld [vmem:[%s996 + $0x68] sm:$0xff]
  %v5220 = vld [vmem:[%s996 + $0x78] sm:$0xff]
  %v5221 = vld [vmem:[%s996 + $0x80] sm:$0xff]
  %v5222 = vld [vmem:[%s996 + $0x90] sm:$0xff]
  %v5223 = vld [vmem:[%s996 + $0x98] sm:$0xff]
  %v5224 = vld [vmem:[%s996 + $0xa8] sm:$0xff]
  %v5225 = vld [vmem:[%s996 + $0xb0] sm:$0xff]
  %v5226 = vld [vmem:[%s996 + $0xc0] sm:$0xff]
  %v5227 = vld [vmem:[%s996 + $0xc8] sm:$0xff]
  %v5228 = vld [vmem:[%s996 + $0xd8] sm:$0xff]
  %v5229 = vld [vmem:[%s996 + $0xe0] sm:$0xff]
  %v5230 = vld [vmem:[%s996 + $0xf0] sm:$0xff]
  %v5231 = vld [vmem:[%s996 + $0xf8] sm:$0xff]
  %v5232 = vld [vmem:[%s996 + $0x108] sm:$0xff]
  %v5233 = vld [vmem:[%s996 + $0x110] sm:$0xff]
  %v5234 = vld [vmem:[%s996 + $0x120] sm:$0xff]
  %v5235 = vld [vmem:[%s996 + $0x128] sm:$0xff]
  %v5236 = vld [vmem:[%s996 + $0x138] sm:$0xff]
  %v5237 = vld [vmem:[%s996 + $0x140] sm:$0xff]
  %v5238 = vld [vmem:[%s996 + $0x150] sm:$0xff]
  %v5239 = vld [vmem:[%s996 + $0x158] sm:$0xff]
  %v5240 = vld [vmem:[%s996 + $0x168] sm:$0xff]
  %v5241 = vld [vmem:[%s996 + $0x170] sm:$0xff]
  %v5242 = vsel %vm131, %v5210, 0.0
  %v5243 = vsel %vm131, %v5211, 0.0
  %v5244 = vsel %vm131, %v5212, 0.0
  %v5245 = vsel %vm131, %v5213, 0.0
  %v5246 = vsel %vm131, %v5214, 0.0
  %v5247 = vsel %vm131, %v5215, 0.0
  %v5248 = vsel %vm131, %v5216, 0.0
  %v5249 = vsel %vm131, %v5217, 0.0
  %v5250 = vsel %vm131, %v5218, 0.0
  %v5251 = vsel %vm131, %v5219, 0.0
  %v5252 = vsel %vm131, %v5220, 0.0
  %v5253 = vsel %vm131, %v5221, 0.0
  %v5254 = vsel %vm131, %v5222, 0.0
  %v5255 = vsel %vm131, %v5223, 0.0
  %v5256 = vsel %vm131, %v5224, 0.0
  %v5257 = vsel %vm131, %v5225, 0.0
  %v5258 = vsel %vm131, %v5226, 0.0
  %v5259 = vsel %vm131, %v5227, 0.0
  %v5260 = vsel %vm131, %v5228, 0.0
  %v5261 = vsel %vm131, %v5229, 0.0
  %v5262 = vsel %vm131, %v5230, 0.0
  %v5263 = vsel %vm131, %v5231, 0.0
  %v5264 = vsel %vm131, %v5232, 0.0
  %v5265 = vsel %vm131, %v5233, 0.0
  %v5266 = vsel %vm131, %v5234, 0.0
  %v5267 = vsel %vm131, %v5235, 0.0
  %v5268 = vsel %vm131, %v5236, 0.0
  %v5269 = vsel %vm131, %v5237, 0.0
  %v5270 = vsel %vm131, %v5238, 0.0
  %v5271 = vsel %vm131, %v5239, 0.0
  %v5272 = vsel %vm131, %v5240, 0.0
  %v5273 = vsel %vm131, %v5241, 0.0
  %5274 = vrot.lane.b32.xlu0 %v5242, 24
  %v5275 = vpop.permute.xlu0 %5274
  %5276 = vrot.lane.b32.xlu0 %v5243, 24
  %v5277 = vpop.permute.xlu0 %5276
  %5278 = vrot.lane.b32.xlu0 %v5244, 24
  %v5279 = vpop.permute.xlu0 %5278
  %5280 = vrot.lane.b32.xlu0 %v5245, 24
  %v5281 = vpop.permute.xlu0 %5280
  %5282 = vrot.lane.b32.xlu0 %v5246, 24
  %v5283 = vpop.permute.xlu0 %5282
  %5284 = vrot.lane.b32.xlu0 %v5247, 24
  %v5285 = vpop.permute.xlu0 %5284
  %5286 = vrot.lane.b32.xlu0 %v5248, 24
  %v5287 = vpop.permute.xlu0 %5286
  %5288 = vrot.lane.b32.xlu0 %v5249, 24
  %v5289 = vpop.permute.xlu0 %5288
  %5290 = vrot.lane.b32.xlu0 %v5250, 24
  %v5291 = vpop.permute.xlu0 %5290
  %5292 = vrot.lane.b32.xlu0 %v5251, 24
  %v5293 = vpop.permute.xlu0 %5292
  %5294 = vrot.lane.b32.xlu0 %v5252, 24
  %v5295 = vpop.permute.xlu0 %5294
  %5296 = vrot.lane.b32.xlu0 %v5253, 24
  %v5297 = vpop.permute.xlu0 %5296
  %5298 = vrot.lane.b32.xlu0 %v5254, 24
  %v5299 = vpop.permute.xlu0 %5298
  %5300 = vrot.lane.b32.xlu0 %v5255, 24
  %v5301 = vpop.permute.xlu0 %5300
  %5302 = vrot.lane.b32.xlu0 %v5256, 24
  %v5303 = vpop.permute.xlu0 %5302
  %5304 = vrot.lane.b32.xlu0 %v5257, 24
  %v5305 = vpop.permute.xlu0 %5304
  %5306 = vrot.lane.b32.xlu0 %v5258, 24
  %v5307 = vpop.permute.xlu0 %5306
  %5308 = vrot.lane.b32.xlu0 %v5259, 24
  %v5309 = vpop.permute.xlu0 %5308
  %5310 = vrot.lane.b32.xlu0 %v5260, 24
  %v5311 = vpop.permute.xlu0 %5310
  %5312 = vrot.lane.b32.xlu0 %v5261, 24
  %v5313 = vpop.permute.xlu0 %5312
  %5314 = vrot.lane.b32.xlu0 %v5262, 24
  %v5315 = vpop.permute.xlu0 %5314
  %5316 = vrot.lane.b32.xlu0 %v5263, 24
  %v5317 = vpop.permute.xlu0 %5316
  %5318 = vrot.lane.b32.xlu0 %v5264, 24
  %v5319 = vpop.permute.xlu0 %5318
  %5320 = vrot.lane.b32.xlu0 %v5265, 24
  %v5321 = vpop.permute.xlu0 %5320
  %5322 = vrot.lane.b32.xlu0 %v5266, 24
  %v5323 = vpop.permute.xlu0 %5322
  %5324 = vrot.lane.b32.xlu0 %v5267, 24
  %v5325 = vpop.permute.xlu0 %5324
  %5326 = vrot.lane.b32.xlu0 %v5268, 24
  %v5327 = vpop.permute.xlu0 %5326
  %5328 = vrot.lane.b32.xlu0 %v5269, 24
  %v5329 = vpop.permute.xlu0 %5328
  %5330 = vrot.lane.b32.xlu0 %v5270, 24
  %v5331 = vpop.permute.xlu0 %5330
  %5332 = vrot.lane.b32.xlu0 %v5271, 24
  %v5333 = vpop.permute.xlu0 %5332
  %5334 = vrot.lane.b32.xlu0 %v5272, 24
  %v5335 = vpop.permute.xlu0 %5334
  %5336 = vrot.lane.b32.xlu0 %v5273, 24
  %v5337 = vpop.permute.xlu0 %5336
  %v5338 = vadd.f32 %v5178, %v5275
  %v5339 = vadd.f32 %v5179, %v5277
  %v5340 = vadd.f32 %v5180, %v5279
  %v5341 = vadd.f32 %v5181, %v5281
  %v5342 = vadd.f32 %v5182, %v5283
  %v5343 = vadd.f32 %v5183, %v5285
  %v5344 = vadd.f32 %v5184, %v5287
  %v5345 = vadd.f32 %v5185, %v5289
  %v5346 = vadd.f32 %v5186, %v5291
  %v5347 = vadd.f32 %v5187, %v5293
  %v5348 = vadd.f32 %v5188, %v5295
  %v5349 = vadd.f32 %v5189, %v5297
  %v5350 = vadd.f32 %v5190, %v5299
  %v5351 = vadd.f32 %v5191, %v5301
  %v5352 = vadd.f32 %v5192, %v5303
  %v5353 = vadd.f32 %v5193, %v5305
  %v5354 = vadd.f32 %v5194, %v5307
  %v5355 = vadd.f32 %v5195, %v5309
  %v5356 = vadd.f32 %v5196, %v5311
  %v5357 = vadd.f32 %v5197, %v5313
  %v5358 = vadd.f32 %v5198, %v5315
  %v5359 = vadd.f32 %v5199, %v5317
  %v5360 = vadd.f32 %v5200, %v5319
  %v5361 = vadd.f32 %v5201, %v5321
  %v5362 = vadd.f32 %v5202, %v5323
  %v5363 = vadd.f32 %v5203, %v5325
  %v5364 = vadd.f32 %v5204, %v5327
  %v5365 = vadd.f32 %v5205, %v5329
  %v5366 = vadd.f32 %v5206, %v5331
  %v5367 = vadd.f32 %v5207, %v5333
  %v5368 = vadd.f32 %v5208, %v5335
  %v5369 = vadd.f32 %v5209, %v5337
  %v5370 = vld [vmem:[%s996 + $0x1] sm:$0xff]
  %v5371 = vld [vmem:[%s996 + $0x9] sm:$0xff]
  %v5372 = vld [vmem:[%s996 + $0x19] sm:$0xff]
  %v5373 = vld [vmem:[%s996 + $0x21] sm:$0xff]
  %v5374 = vld [vmem:[%s996 + $0x31] sm:$0xff]
  %v5375 = vld [vmem:[%s996 + $0x39] sm:$0xff]
  %v5376 = vld [vmem:[%s996 + $0x49] sm:$0xff]
  %v5377 = vld [vmem:[%s996 + $0x51] sm:$0xff]
  %v5378 = vld [vmem:[%s996 + $0x61] sm:$0xff]
  %v5379 = vld [vmem:[%s996 + $0x69] sm:$0xff]
  %v5380 = vld [vmem:[%s996 + $0x79] sm:$0xff]
  %v5381 = vld [vmem:[%s996 + $0x81] sm:$0xff]
  %v5382 = vld [vmem:[%s996 + $0x91] sm:$0xff]
  %v5383 = vld [vmem:[%s996 + $0x99] sm:$0xff]
  %v5384 = vld [vmem:[%s996 + $0xa9] sm:$0xff]
  %v5385 = vld [vmem:[%s996 + $0xb1] sm:$0xff]
  %v5386 = vld [vmem:[%s996 + $0xc1] sm:$0xff]
  %v5387 = vld [vmem:[%s996 + $0xc9] sm:$0xff]
  %v5388 = vld [vmem:[%s996 + $0xd9] sm:$0xff]
  %v5389 = vld [vmem:[%s996 + $0xe1] sm:$0xff]
  %v5390 = vld [vmem:[%s996 + $0xf1] sm:$0xff]
  %v5391 = vld [vmem:[%s996 + $0xf9] sm:$0xff]
  %v5392 = vld [vmem:[%s996 + $0x109] sm:$0xff]
  %v5393 = vld [vmem:[%s996 + $0x111] sm:$0xff]
  %v5394 = vld [vmem:[%s996 + $0x121] sm:$0xff]
  %v5395 = vld [vmem:[%s996 + $0x129] sm:$0xff]
  %v5396 = vld [vmem:[%s996 + $0x139] sm:$0xff]
  %v5397 = vld [vmem:[%s996 + $0x141] sm:$0xff]
  %v5398 = vld [vmem:[%s996 + $0x151] sm:$0xff]
  %v5399 = vld [vmem:[%s996 + $0x159] sm:$0xff]
  %v5400 = vld [vmem:[%s996 + $0x169] sm:$0xff]
  %v5401 = vld [vmem:[%s996 + $0x171] sm:$0xff]
  %v5402 = vsel %vm131, %v5370, 0.0
  %v5403 = vsel %vm131, %v5371, 0.0
  %v5404 = vsel %vm131, %v5372, 0.0
  %v5405 = vsel %vm131, %v5373, 0.0
  %v5406 = vsel %vm131, %v5374, 0.0
  %v5407 = vsel %vm131, %v5375, 0.0
  %v5408 = vsel %vm131, %v5376, 0.0
  %v5409 = vsel %vm131, %v5377, 0.0
  %v5410 = vsel %vm131, %v5378, 0.0
  %v5411 = vsel %vm131, %v5379, 0.0
  %v5412 = vsel %vm131, %v5380, 0.0
  %v5413 = vsel %vm131, %v5381, 0.0
  %v5414 = vsel %vm131, %v5382, 0.0
  %v5415 = vsel %vm131, %v5383, 0.0
  %v5416 = vsel %vm131, %v5384, 0.0
  %v5417 = vsel %vm131, %v5385, 0.0
  %v5418 = vsel %vm131, %v5386, 0.0
  %v5419 = vsel %vm131, %v5387, 0.0
  %v5420 = vsel %vm131, %v5388, 0.0
  %v5421 = vsel %vm131, %v5389, 0.0
  %v5422 = vsel %vm131, %v5390, 0.0
  %v5423 = vsel %vm131, %v5391, 0.0
  %v5424 = vsel %vm131, %v5392, 0.0
  %v5425 = vsel %vm131, %v5393, 0.0
  %v5426 = vsel %vm131, %v5394, 0.0
  %v5427 = vsel %vm131, %v5395, 0.0
  %v5428 = vsel %vm131, %v5396, 0.0
  %v5429 = vsel %vm131, %v5397, 0.0
  %v5430 = vsel %vm131, %v5398, 0.0
  %v5431 = vsel %vm131, %v5399, 0.0
  %v5432 = vsel %vm131, %v5400, 0.0
  %v5433 = vsel %vm131, %v5401, 0.0
  %5434 = vrot.lane.b32.xlu0 %v5402, 28
  %v5435 = vpop.permute.xlu0 %5434
  %5436 = vrot.lane.b32.xlu0 %v5403, 28
  %v5437 = vpop.permute.xlu0 %5436
  %5438 = vrot.lane.b32.xlu0 %v5404, 28
  %v5439 = vpop.permute.xlu0 %5438
  %5440 = vrot.lane.b32.xlu0 %v5405, 28
  %v5441 = vpop.permute.xlu0 %5440
  %5442 = vrot.lane.b32.xlu0 %v5406, 28
  %v5443 = vpop.permute.xlu0 %5442
  %5444 = vrot.lane.b32.xlu0 %v5407, 28
  %v5445 = vpop.permute.xlu0 %5444
  %5446 = vrot.lane.b32.xlu0 %v5408, 28
  %v5447 = vpop.permute.xlu0 %5446
  %5448 = vrot.lane.b32.xlu0 %v5409, 28
  %v5449 = vpop.permute.xlu0 %5448
  %5450 = vrot.lane.b32.xlu0 %v5410, 28
  %v5451 = vpop.permute.xlu0 %5450
  %5452 = vrot.lane.b32.xlu0 %v5411, 28
  %v5453 = vpop.permute.xlu0 %5452
  %5454 = vrot.lane.b32.xlu0 %v5412, 28
  %v5455 = vpop.permute.xlu0 %5454
  %5456 = vrot.lane.b32.xlu0 %v5413, 28
  %v5457 = vpop.permute.xlu0 %5456
  %5458 = vrot.lane.b32.xlu0 %v5414, 28
  %v5459 = vpop.permute.xlu0 %5458
  %5460 = vrot.lane.b32.xlu0 %v5415, 28
  %v5461 = vpop.permute.xlu0 %5460
  %5462 = vrot.lane.b32.xlu0 %v5416, 28
  %v5463 = vpop.permute.xlu0 %5462
  %5464 = vrot.lane.b32.xlu0 %v5417, 28
  %v5465 = vpop.permute.xlu0 %5464
  %5466 = vrot.lane.b32.xlu0 %v5418, 28
  %v5467 = vpop.permute.xlu0 %5466
  %5468 = vrot.lane.b32.xlu0 %v5419, 28
  %v5469 = vpop.permute.xlu0 %5468
  %5470 = vrot.lane.b32.xlu0 %v5420, 28
  %v5471 = vpop.permute.xlu0 %5470
  %5472 = vrot.lane.b32.xlu0 %v5421, 28
  %v5473 = vpop.permute.xlu0 %5472
  %5474 = vrot.lane.b32.xlu0 %v5422, 28
  %v5475 = vpop.permute.xlu0 %5474
  %5476 = vrot.lane.b32.xlu0 %v5423, 28
  %v5477 = vpop.permute.xlu0 %5476
  %5478 = vrot.lane.b32.xlu0 %v5424, 28
  %v5479 = vpop.permute.xlu0 %5478
  %5480 = vrot.lane.b32.xlu0 %v5425, 28
  %v5481 = vpop.permute.xlu0 %5480
  %5482 = vrot.lane.b32.xlu0 %v5426, 28
  %v5483 = vpop.permute.xlu0 %5482
  %5484 = vrot.lane.b32.xlu0 %v5427, 28
  %v5485 = vpop.permute.xlu0 %5484
  %5486 = vrot.lane.b32.xlu0 %v5428, 28
  %v5487 = vpop.permute.xlu0 %5486
  %5488 = vrot.lane.b32.xlu0 %v5429, 28
  %v5489 = vpop.permute.xlu0 %5488
  %5490 = vrot.lane.b32.xlu0 %v5430, 28
  %v5491 = vpop.permute.xlu0 %5490
  %5492 = vrot.lane.b32.xlu0 %v5431, 28
  %v5493 = vpop.permute.xlu0 %5492
  %5494 = vrot.lane.b32.xlu0 %v5432, 28
  %v5495 = vpop.permute.xlu0 %5494
  %5496 = vrot.lane.b32.xlu0 %v5433, 28
  %v5497 = vpop.permute.xlu0 %5496
  %v5498 = vadd.f32 %v5338, %v5435
  %v5499 = vadd.f32 %v5339, %v5437
  %v5500 = vadd.f32 %v5340, %v5439
  %v5501 = vadd.f32 %v5341, %v5441
  %v5502 = vadd.f32 %v5342, %v5443
  %v5503 = vadd.f32 %v5343, %v5445
  %v5504 = vadd.f32 %v5344, %v5447
  %v5505 = vadd.f32 %v5345, %v5449
  %v5506 = vadd.f32 %v5346, %v5451
  %v5507 = vadd.f32 %v5347, %v5453
  %v5508 = vadd.f32 %v5348, %v5455
  %v5509 = vadd.f32 %v5349, %v5457
  %v5510 = vadd.f32 %v5350, %v5459
  %v5511 = vadd.f32 %v5351, %v5461
  %v5512 = vadd.f32 %v5352, %v5463
  %v5513 = vadd.f32 %v5353, %v5465
  %v5514 = vadd.f32 %v5354, %v5467
  %v5515 = vadd.f32 %v5355, %v5469
  %v5516 = vadd.f32 %v5356, %v5471
  %v5517 = vadd.f32 %v5357, %v5473
  %v5518 = vadd.f32 %v5358, %v5475
  %v5519 = vadd.f32 %v5359, %v5477
  %v5520 = vadd.f32 %v5360, %v5479
  %v5521 = vadd.f32 %v5361, %v5481
  %v5522 = vadd.f32 %v5362, %v5483
  %v5523 = vadd.f32 %v5363, %v5485
  %v5524 = vadd.f32 %v5364, %v5487
  %v5525 = vadd.f32 %v5365, %v5489
  %v5526 = vadd.f32 %v5366, %v5491
  %v5527 = vadd.f32 %v5367, %v5493
  %v5528 = vadd.f32 %v5368, %v5495
  %v5529 = vadd.f32 %v5369, %v5497
  %v5530 = vld [vmem:[%s996 + $0x2] sm:$0xff]
  %v5531 = vld [vmem:[%s996 + $0xa] sm:$0xff]
  %v5532 = vld [vmem:[%s996 + $0x1a] sm:$0xff]
  %v5533 = vld [vmem:[%s996 + $0x22] sm:$0xff]
  %v5534 = vld [vmem:[%s996 + $0x32] sm:$0xff]
  %v5535 = vld [vmem:[%s996 + $0x3a] sm:$0xff]
  %v5536 = vld [vmem:[%s996 + $0x4a] sm:$0xff]
  %v5537 = vld [vmem:[%s996 + $0x52] sm:$0xff]
  %v5538 = vld [vmem:[%s996 + $0x62] sm:$0xff]
  %v5539 = vld [vmem:[%s996 + $0x6a] sm:$0xff]
  %v5540 = vld [vmem:[%s996 + $0x7a] sm:$0xff]
  %v5541 = vld [vmem:[%s996 + $0x82] sm:$0xff]
  %v5542 = vld [vmem:[%s996 + $0x92] sm:$0xff]
  %v5543 = vld [vmem:[%s996 + $0x9a] sm:$0xff]
  %v5544 = vld [vmem:[%s996 + $0xaa] sm:$0xff]
  %v5545 = vld [vmem:[%s996 + $0xb2] sm:$0xff]
  %v5546 = vld [vmem:[%s996 + $0xc2] sm:$0xff]
  %v5547 = vld [vmem:[%s996 + $0xca] sm:$0xff]
  %v5548 = vld [vmem:[%s996 + $0xda] sm:$0xff]
  %v5549 = vld [vmem:[%s996 + $0xe2] sm:$0xff]
  %v5550 = vld [vmem:[%s996 + $0xf2] sm:$0xff]
  %v5551 = vld [vmem:[%s996 + $0xfa] sm:$0xff]
  %v5552 = vld [vmem:[%s996 + $0x10a] sm:$0xff]
  %v5553 = vld [vmem:[%s996 + $0x112] sm:$0xff]
  %v5554 = vld [vmem:[%s996 + $0x122] sm:$0xff]
  %v5555 = vld [vmem:[%s996 + $0x12a] sm:$0xff]
  %v5556 = vld [vmem:[%s996 + $0x13a] sm:$0xff]
  %v5557 = vld [vmem:[%s996 + $0x142] sm:$0xff]
  %v5558 = vld [vmem:[%s996 + $0x152] sm:$0xff]
  %v5559 = vld [vmem:[%s996 + $0x15a] sm:$0xff]
  %v5560 = vld [vmem:[%s996 + $0x16a] sm:$0xff]
  %v5561 = vld [vmem:[%s996 + $0x172] sm:$0xff]
  %v5562 = vsel %vm131, %v5530, 0.0
  %v5563 = vsel %vm131, %v5531, 0.0
  %v5564 = vsel %vm131, %v5532, 0.0
  %v5565 = vsel %vm131, %v5533, 0.0
  %v5566 = vsel %vm131, %v5534, 0.0
  %v5567 = vsel %vm131, %v5535, 0.0
  %v5568 = vsel %vm131, %v5536, 0.0
  %v5569 = vsel %vm131, %v5537, 0.0
  %v5570 = vsel %vm131, %v5538, 0.0
  %v5571 = vsel %vm131, %v5539, 0.0
  %v5572 = vsel %vm131, %v5540, 0.0
  %v5573 = vsel %vm131, %v5541, 0.0
  %v5574 = vsel %vm131, %v5542, 0.0
  %v5575 = vsel %vm131, %v5543, 0.0
  %v5576 = vsel %vm131, %v5544, 0.0
  %v5577 = vsel %vm131, %v5545, 0.0
  %v5578 = vsel %vm131, %v5546, 0.0
  %v5579 = vsel %vm131, %v5547, 0.0
  %v5580 = vsel %vm131, %v5548, 0.0
  %v5581 = vsel %vm131, %v5549, 0.0
  %v5582 = vsel %vm131, %v5550, 0.0
  %v5583 = vsel %vm131, %v5551, 0.0
  %v5584 = vsel %vm131, %v5552, 0.0
  %v5585 = vsel %vm131, %v5553, 0.0
  %v5586 = vsel %vm131, %v5554, 0.0
  %v5587 = vsel %vm131, %v5555, 0.0
  %v5588 = vsel %vm131, %v5556, 0.0
  %v5589 = vsel %vm131, %v5557, 0.0
  %v5590 = vsel %vm131, %v5558, 0.0
  %v5591 = vsel %vm131, %v5559, 0.0
  %v5592 = vsel %vm131, %v5560, 0.0
  %v5593 = vsel %vm131, %v5561, 0.0
  %5594 = vrot.lane.b32.xlu0 %v5562, 32
  %v5595 = vpop.permute.xlu0 %5594
  %5596 = vrot.lane.b32.xlu0 %v5563, 32
  %v5597 = vpop.permute.xlu0 %5596
  %5598 = vrot.lane.b32.xlu0 %v5564, 32
  %v5599 = vpop.permute.xlu0 %5598
  %5600 = vrot.lane.b32.xlu0 %v5565, 32
  %v5601 = vpop.permute.xlu0 %5600
  %5602 = vrot.lane.b32.xlu0 %v5566, 32
  %v5603 = vpop.permute.xlu0 %5602
  %5604 = vrot.lane.b32.xlu0 %v5567, 32
  %v5605 = vpop.permute.xlu0 %5604
  %5606 = vrot.lane.b32.xlu0 %v5568, 32
  %v5607 = vpop.permute.xlu0 %5606
  %5608 = vrot.lane.b32.xlu0 %v5569, 32
  %v5609 = vpop.permute.xlu0 %5608
  %5610 = vrot.lane.b32.xlu0 %v5570, 32
  %v5611 = vpop.permute.xlu0 %5610
  %5612 = vrot.lane.b32.xlu0 %v5571, 32
  %v5613 = vpop.permute.xlu0 %5612
  %5614 = vrot.lane.b32.xlu0 %v5572, 32
  %v5615 = vpop.permute.xlu0 %5614
  %5616 = vrot.lane.b32.xlu0 %v5573, 32
  %v5617 = vpop.permute.xlu0 %5616
  %5618 = vrot.lane.b32.xlu0 %v5574, 32
  %v5619 = vpop.permute.xlu0 %5618
  %5620 = vrot.lane.b32.xlu0 %v5575, 32
  %v5621 = vpop.permute.xlu0 %5620
  %5622 = vrot.lane.b32.xlu0 %v5576, 32
  %v5623 = vpop.permute.xlu0 %5622
  %5624 = vrot.lane.b32.xlu0 %v5577, 32
  %v5625 = vpop.permute.xlu0 %5624
  %5626 = vrot.lane.b32.xlu0 %v5578, 32
  %v5627 = vpop.permute.xlu0 %5626
  %5628 = vrot.lane.b32.xlu0 %v5579, 32
  %v5629 = vpop.permute.xlu0 %5628
  %5630 = vrot.lane.b32.xlu0 %v5580, 32
  %v5631 = vpop.permute.xlu0 %5630
  %5632 = vrot.lane.b32.xlu0 %v5581, 32
  %v5633 = vpop.permute.xlu0 %5632
  %5634 = vrot.lane.b32.xlu0 %v5582, 32
  %v5635 = vpop.permute.xlu0 %5634
  %5636 = vrot.lane.b32.xlu0 %v5583, 32
  %v5637 = vpop.permute.xlu0 %5636
  %5638 = vrot.lane.b32.xlu0 %v5584, 32
  %v5639 = vpop.permute.xlu0 %5638
  %5640 = vrot.lane.b32.xlu0 %v5585, 32
  %v5641 = vpop.permute.xlu0 %5640
  %5642 = vrot.lane.b32.xlu0 %v5586, 32
  %v5643 = vpop.permute.xlu0 %5642
  %5644 = vrot.lane.b32.xlu0 %v5587, 32
  %v5645 = vpop.permute.xlu0 %5644
  %5646 = vrot.lane.b32.xlu0 %v5588, 32
  %v5647 = vpop.permute.xlu0 %5646
  %5648 = vrot.lane.b32.xlu0 %v5589, 32
  %v5649 = vpop.permute.xlu0 %5648
  %5650 = vrot.lane.b32.xlu0 %v5590, 32
  %v5651 = vpop.permute.xlu0 %5650
  %5652 = vrot.lane.b32.xlu0 %v5591, 32
  %v5653 = vpop.permute.xlu0 %5652
  %5654 = vrot.lane.b32.xlu0 %v5592, 32
  %v5655 = vpop.permute.xlu0 %5654
  %5656 = vrot.lane.b32.xlu0 %v5593, 32
  %v5657 = vpop.permute.xlu0 %5656
  %v5658 = vadd.f32 %v5498, %v5595
  %v5659 = vadd.f32 %v5499, %v5597
  %v5660 = vadd.f32 %v5500, %v5599
  %v5661 = vadd.f32 %v5501, %v5601
  %v5662 = vadd.f32 %v5502, %v5603
  %v5663 = vadd.f32 %v5503, %v5605
  %v5664 = vadd.f32 %v5504, %v5607
  %v5665 = vadd.f32 %v5505, %v5609
  %v5666 = vadd.f32 %v5506, %v5611
  %v5667 = vadd.f32 %v5507, %v5613
  %v5668 = vadd.f32 %v5508, %v5615
  %v5669 = vadd.f32 %v5509, %v5617
  %v5670 = vadd.f32 %v5510, %v5619
  %v5671 = vadd.f32 %v5511, %v5621
  %v5672 = vadd.f32 %v5512, %v5623
  %v5673 = vadd.f32 %v5513, %v5625
  %v5674 = vadd.f32 %v5514, %v5627
  %v5675 = vadd.f32 %v5515, %v5629
  %v5676 = vadd.f32 %v5516, %v5631
  %v5677 = vadd.f32 %v5517, %v5633
  %v5678 = vadd.f32 %v5518, %v5635
  %v5679 = vadd.f32 %v5519, %v5637
  %v5680 = vadd.f32 %v5520, %v5639
  %v5681 = vadd.f32 %v5521, %v5641
  %v5682 = vadd.f32 %v5522, %v5643
  %v5683 = vadd.f32 %v5523, %v5645
  %v5684 = vadd.f32 %v5524, %v5647
  %v5685 = vadd.f32 %v5525, %v5649
  %v5686 = vadd.f32 %v5526, %v5651
  %v5687 = vadd.f32 %v5527, %v5653
  %v5688 = vadd.f32 %v5528, %v5655
  %v5689 = vadd.f32 %v5529, %v5657
  %v5690 = vpack.c.bf16 %v5659, %v5658
  %v5691 = vpack.c.bf16 %v5661, %v5660
  %v5692 = vpack.c.bf16 %v5663, %v5662
  %v5693 = vpack.c.bf16 %v5665, %v5664
  %v5694 = vpack.c.bf16 %v5667, %v5666
  %v5695 = vpack.c.bf16 %v5669, %v5668
  %v5696 = vpack.c.bf16 %v5671, %v5670
  %v5697 = vpack.c.bf16 %v5673, %v5672
  %v5698 = vpack.c.bf16 %v5675, %v5674
  %v5699 = vpack.c.bf16 %v5677, %v5676
  %v5700 = vpack.c.bf16 %v5679, %v5678
  %v5701 = vpack.c.bf16 %v5681, %v5680
  %v5702 = vpack.c.bf16 %v5683, %v5682
  %v5703 = vpack.c.bf16 %v5685, %v5684
  %v5704 = vpack.c.bf16 %v5687, %v5686
  %v5705 = vpack.c.bf16 %v5689, %v5688
  %v5706 = vld [vmem:[%s1] sm:$0xff]
  %v5707 = vld [vmem:[%s1 + $0x8] sm:$0xff]
  %v5708 = vld [vmem:[%s1 + $0x10] sm:$0xff]
  %v5709 = vld [vmem:[%s1 + $0x18] sm:$0xff]
  %v5710 = vld [vmem:[%s1 + $0x20] sm:$0xff]
  %v5711 = vld [vmem:[%s1 + $0x28] sm:$0xff]
  %v5712 = vld [vmem:[%s1 + $0x30] sm:$0xff]
  %v5713 = vld [vmem:[%s1 + $0x38] sm:$0xff]
  %v5714 = vld [vmem:[%s1 + $0x40] sm:$0xff]
  %v5715 = vld [vmem:[%s1 + $0x48] sm:$0xff]
  %v5716 = vld [vmem:[%s1 + $0x50] sm:$0xff]
  %v5717 = vld [vmem:[%s1 + $0x58] sm:$0xff]
  %v5718 = vld [vmem:[%s1 + $0x60] sm:$0xff]
  %v5719 = vld [vmem:[%s1 + $0x68] sm:$0xff]
  %v5720 = vld [vmem:[%s1 + $0x70] sm:$0xff]
  %v5721 = vld [vmem:[%s1 + $0x78] sm:$0xff]
  %v5738 = vunpack.c.l.b16 %v5706
  %v5739 = vunpack.c.h.b16 %v5706
  %v5740 = vunpack.c.l.b16 %v5707
  %v5741 = vunpack.c.h.b16 %v5707
  %v5742 = vunpack.c.l.b16 %v5708
  %v5743 = vunpack.c.h.b16 %v5708
  %v5744 = vunpack.c.l.b16 %v5709
  %v5745 = vunpack.c.h.b16 %v5709
  %v5746 = vunpack.c.l.b16 %v5710
  %v5747 = vunpack.c.h.b16 %v5710
  %v5748 = vunpack.c.l.b16 %v5711
  %v5749 = vunpack.c.h.b16 %v5711
  %v5750 = vunpack.c.l.b16 %v5712
  %v5751 = vunpack.c.h.b16 %v5712
  %v5752 = vunpack.c.l.b16 %v5713
  %v5753 = vunpack.c.h.b16 %v5713
  %v5754 = vunpack.c.l.b16 %v5714
  %v5755 = vunpack.c.h.b16 %v5714
  %v5756 = vunpack.c.l.b16 %v5715
  %v5757 = vunpack.c.h.b16 %v5715
  %v5758 = vunpack.c.l.b16 %v5716
  %v5759 = vunpack.c.h.b16 %v5716
  %v5760 = vunpack.c.l.b16 %v5717
  %v5761 = vunpack.c.h.b16 %v5717
  %v5762 = vunpack.c.l.b16 %v5718
  %v5763 = vunpack.c.h.b16 %v5718
  %v5764 = vunpack.c.l.b16 %v5719
  %v5765 = vunpack.c.h.b16 %v5719
  %v5766 = vunpack.c.l.b16 %v5720
  %v5767 = vunpack.c.h.b16 %v5720
  %v5768 = vunpack.c.l.b16 %v5721
  %v5769 = vunpack.c.h.b16 %v5721
  %v5770 = vpack.c.b16 %v5740, %v5738
  %v5771 = vpack.c.b16 %v5741, %v5739
  %v5772 = vpack.c.b16 %v5744, %v5742
  %v5773 = vpack.c.b16 %v5745, %v5743
  %v5774 = vpack.c.b16 %v5748, %v5746
  %v5775 = vpack.c.b16 %v5749, %v5747
  %v5776 = vpack.c.b16 %v5752, %v5750
  %v5777 = vpack.c.b16 %v5753, %v5751
  %v5778 = vpack.c.b16 %v5756, %v5754
  %v5779 = vpack.c.b16 %v5757, %v5755
  %v5780 = vpack.c.b16 %v5760, %v5758
  %v5781 = vpack.c.b16 %v5761, %v5759
  %v5782 = vpack.c.b16 %v5764, %v5762
  %v5783 = vpack.c.b16 %v5765, %v5763
  %v5784 = vpack.c.b16 %v5768, %v5766
  %v5785 = vpack.c.b16 %v5769, %v5767
  %5802 = vmatprep.subr.bf16.mxu0 %v5771
  %5803 = vmatpush1.bf16.msra.mxu0 %v5770
  %5804 = vmatprep.subr.bf16.mxu0 %v5773
  %5805 = vmatpush1.bf16.msra.mxu0 %v5772
  %5806 = vmatprep.subr.bf16.mxu0 %v5775
  %5807 = vmatpush1.bf16.msra.mxu0 %v5774
  %5808 = vmatprep.subr.bf16.mxu0 %v5777
  %5809 = vmatpush1.bf16.msra.mxu0 %v5776
  %5810 = vmatprep.subr.bf16.mxu0 %v5779
  %5811 = vmatpush1.bf16.msra.mxu0 %v5778
  %5812 = vmatprep.subr.bf16.mxu0 %v5781
  %5813 = vmatpush1.bf16.msra.mxu0 %v5780
  %5814 = vmatprep.subr.bf16.mxu0 %v5783
  %5815 = vmatpush1.bf16.msra.mxu0 %v5782
  %5816 = vmatprep.subr.bf16.mxu0 %v5785
  %5817 = vmatpush1.bf16.msra.mxu0 %v5784
  %5818 = vmatprep.subr.bf16.mxu0 0
  %5819 = vmatpush1.bf16.msra.mxu0 0
  %5820 = vmatprep.subr.bf16.mxu0 0
  %5821 = vmatpush1.bf16.msra.mxu0 0
  %5822 = vmatprep.subr.bf16.mxu0 0
  %5823 = vmatpush1.bf16.msra.mxu0 0
  %5824 = vmatprep.subr.bf16.mxu0 0
  %5825 = vmatpush1.bf16.msra.mxu0 0
  %5826 = vmatprep.subr.bf16.mxu0 0
  %5827 = vmatpush1.bf16.msra.mxu0 0
  %5828 = vmatprep.subr.bf16.mxu0 0
  %5829 = vmatpush1.bf16.msra.mxu0 0
  %5830 = vmatprep.subr.bf16.mxu0 0
  %5831 = vmatpush1.bf16.msra.mxu0 0
  %5832 = vmatprep.subr.bf16.mxu0 0
  %5833 = vmatpush1.bf16.msra.mxu0 0
  %5834 = vmatprep.mubr.bf16.mxu0 0
  %5835 = vmatmul.mubr.bf16.gmra.mrb[0].mxu0 %v5690
  %v5836 = vpop.f32.mrb[0].mxu0
  %v5837 = vadd.f32 0.0, %v5836
  %v5838 = vpop.f32.mrb[0].mxu0
  %v5839 = vadd.f32 0.0, %v5838
  %v5840 = vpop.f32.mrb[0].mxu0
  %v5841 = vadd.f32 0.0, %v5840
  %v5842 = vpop.f32.mrb[0].mxu0
  %v5843 = vadd.f32 0.0, %v5842
  %5844 = vmatprep.mubr.bf16.mxu0 0
  %5845 = vmatmul.mubr.bf16.gmra.mrb[0].mxu0 %v5691
  %v5846 = vpop.f32.mrb[0].mxu0
  %v5847 = vadd.f32 0.0, %v5846
  %v5848 = vpop.f32.mrb[0].mxu0
  %v5849 = vadd.f32 0.0, %v5848
  %v5850 = vpop.f32.mrb[0].mxu0
  %v5851 = vadd.f32 0.0, %v5850
  %v5852 = vpop.f32.mrb[0].mxu0
  %v5853 = vadd.f32 0.0, %v5852
  %5854 = vmatprep.mubr.bf16.mxu0 0
  %5855 = vmatmul.mubr.bf16.gmra.mrb[0].mxu0 %v5692
  %v5856 = vpop.f32.mrb[0].mxu0
  %v5857 = vadd.f32 0.0, %v5856
  %v5858 = vpop.f32.mrb[0].mxu0
  %v5859 = vadd.f32 0.0, %v5858
  %v5860 = vpop.f32.mrb[0].mxu0
  %v5861 = vadd.f32 0.0, %v5860
  %v5862 = vpop.f32.mrb[0].mxu0
  %v5863 = vadd.f32 0.0, %v5862
  %5864 = vmatprep.mubr.bf16.mxu0 0
  %5865 = vmatmul.mubr.bf16.gmra.mrb[0].mxu0 %v5693
  %v5866 = vpop.f32.mrb[0].mxu0
  %v5867 = vadd.f32 0.0, %v5866
  %v5868 = vpop.f32.mrb[0].mxu0
  %v5869 = vadd.f32 0.0, %v5868
  %v5870 = vpop.f32.mrb[0].mxu0
  %v5871 = vadd.f32 0.0, %v5870
  %v5872 = vpop.f32.mrb[0].mxu0
  %v5873 = vadd.f32 0.0, %v5872
  %5874 = vmatprep.mubr.bf16.mxu0 0
  %5875 = vmatmul.mubr.bf16.gmra.mrb[0].mxu0 %v5694
  %v5876 = vpop.f32.mrb[0].mxu0
  %v5877 = vadd.f32 0.0, %v5876
  %v5878 = vpop.f32.mrb[0].mxu0
  %v5879 = vadd.f32 0.0, %v5878
  %v5880 = vpop.f32.mrb[0].mxu0
  %v5881 = vadd.f32 0.0, %v5880
  %v5882 = vpop.f32.mrb[0].mxu0
  %v5883 = vadd.f32 0.0, %v5882
  %5884 = vmatprep.mubr.bf16.mxu0 0
  %5885 = vmatmul.mubr.bf16.gmra.mrb[0].mxu0 %v5695
  %v5886 = vpop.f32.mrb[0].mxu0
  %v5887 = vadd.f32 0.0, %v5886
  %v5888 = vpop.f32.mrb[0].mxu0
  %v5889 = vadd.f32 0.0, %v5888
  %v5890 = vpop.f32.mrb[0].mxu0
  %v5891 = vadd.f32 0.0, %v5890
  %v5892 = vpop.f32.mrb[0].mxu0
  %v5893 = vadd.f32 0.0, %v5892
  %5894 = vmatprep.mubr.bf16.mxu0 0
  %5895 = vmatmul.mubr.bf16.gmra.mrb[0].mxu0 %v5696
  %v5896 = vpop.f32.mrb[0].mxu0
  %v5897 = vadd.f32 0.0, %v5896
  %v5898 = vpop.f32.mrb[0].mxu0
  %v5899 = vadd.f32 0.0, %v5898
  %v5900 = vpop.f32.mrb[0].mxu0
  %v5901 = vadd.f32 0.0, %v5900
  %v5902 = vpop.f32.mrb[0].mxu0
  %v5903 = vadd.f32 0.0, %v5902
  %5904 = vmatprep.mubr.bf16.mxu0 0
  %5905 = vmatmul.mubr.bf16.gmra.mrb[0].mxu0 %v5697
  %v5906 = vpop.f32.mrb[0].mxu0
  %v5907 = vadd.f32 0.0, %v5906
  %v5908 = vpop.f32.mrb[0].mxu0
  %v5909 = vadd.f32 0.0, %v5908
  %v5910 = vpop.f32.mrb[0].mxu0
  %v5911 = vadd.f32 0.0, %v5910
  %v5912 = vpop.f32.mrb[0].mxu0
  %v5913 = vadd.f32 0.0, %v5912
  %5914 = vmatprep.mubr.bf16.mxu0 0
  %5915 = vmatmul.mubr.bf16.gmra.mrb[0].mxu0 %v5698
  %v5916 = vpop.f32.mrb[0].mxu0
  %v5917 = vadd.f32 0.0, %v5916
  %v5918 = vpop.f32.mrb[0].mxu0
  %v5919 = vadd.f32 0.0, %v5918
  %v5920 = vpop.f32.mrb[0].mxu0
  %v5921 = vadd.f32 0.0, %v5920
  %v5922 = vpop.f32.mrb[0].mxu0
  %v5923 = vadd.f32 0.0, %v5922
  %5924 = vmatprep.mubr.bf16.mxu0 0
  %5925 = vmatmul.mubr.bf16.gmra.mrb[0].mxu0 %v5699
  %v5926 = vpop.f32.mrb[0].mxu0
  %v5927 = vadd.f32 0.0, %v5926
  %v5928 = vpop.f32.mrb[0].mxu0
  %v5929 = vadd.f32 0.0, %v5928
  %v5930 = vpop.f32.mrb[0].mxu0
  %v5931 = vadd.f32 0.0, %v5930
  %v5932 = vpop.f32.mrb[0].mxu0
  %v5933 = vadd.f32 0.0, %v5932
  %5934 = vmatprep.mubr.bf16.mxu0 0
  %5935 = vmatmul.mubr.bf16.gmra.mrb[0].mxu0 %v5700
  %v5936 = vpop.f32.mrb[0].mxu0
  %v5937 = vadd.f32 0.0, %v5936
  %v5938 = vpop.f32.mrb[0].mxu0
  %v5939 = vadd.f32 0.0, %v5938
  %v5940 = vpop.f32.mrb[0].mxu0
  %v5941 = vadd.f32 0.0, %v5940
  %v5942 = vpop.f32.mrb[0].mxu0
  %v5943 = vadd.f32 0.0, %v5942
  %5944 = vmatprep.mubr.bf16.mxu0 0
  %5945 = vmatmul.mubr.bf16.gmra.mrb[0].mxu0 %v5701
  %v5946 = vpop.f32.mrb[0].mxu0
  %v5947 = vadd.f32 0.0, %v5946
  %v5948 = vpop.f32.mrb[0].mxu0
  %v5949 = vadd.f32 0.0, %v5948
  %v5950 = vpop.f32.mrb[0].mxu0
  %v5951 = vadd.f32 0.0, %v5950
  %v5952 = vpop.f32.mrb[0].mxu0
  %v5953 = vadd.f32 0.0, %v5952
  %5954 = vmatprep.mubr.bf16.mxu0 0
  %5955 = vmatmul.mubr.bf16.gmra.mrb[0].mxu0 %v5702
  %v5956 = vpop.f32.mrb[0].mxu0
  %v5957 = vadd.f32 0.0, %v5956
  %v5958 = vpop.f32.mrb[0].mxu0
  %v5959 = vadd.f32 0.0, %v5958
  %v5960 = vpop.f32.mrb[0].mxu0
  %v5961 = vadd.f32 0.0, %v5960
  %v5962 = vpop.f32.mrb[0].mxu0
  %v5963 = vadd.f32 0.0, %v5962
  %5964 = vmatprep.mubr.bf16.mxu0 0
  %5965 = vmatmul.mubr.bf16.gmra.mrb[0].mxu0 %v5703
  %v5966 = vpop.f32.mrb[0].mxu0
  %v5967 = vadd.f32 0.0, %v5966
  %v5968 = vpop.f32.mrb[0].mxu0
  %v5969 = vadd.f32 0.0, %v5968
  %v5970 = vpop.f32.mrb[0].mxu0
  %v5971 = vadd.f32 0.0, %v5970
  %v5972 = vpop.f32.mrb[0].mxu0
  %v5973 = vadd.f32 0.0, %v5972
  %5974 = vmatprep.mubr.bf16.mxu0 0
  %5975 = vmatmul.mubr.bf16.gmra.mrb[0].mxu0 %v5704
  %v5976 = vpop.f32.mrb[0].mxu0
  %v5977 = vadd.f32 0.0, %v5976
  %v5978 = vpop.f32.mrb[0].mxu0
  %v5979 = vadd.f32 0.0, %v5978
  %v5980 = vpop.f32.mrb[0].mxu0
  %v5981 = vadd.f32 0.0, %v5980
  %v5982 = vpop.f32.mrb[0].mxu0
  %v5983 = vadd.f32 0.0, %v5982
  %5984 = vmatprep.mubr.bf16.mxu0 0
  %5985 = vmatmul.mubr.bf16.gmra.mrb[0].mxu0 %v5705
  %v5986 = vpop.f32.mrb[0].mxu0
  %v5987 = vadd.f32 0.0, %v5986
  %v5988 = vpop.f32.mrb[0].mxu0
  %v5989 = vadd.f32 0.0, %v5988
  %v5990 = vpop.f32.mrb[0].mxu0
  %v5991 = vadd.f32 0.0, %v5990
  %v5992 = vpop.f32.mrb[0].mxu0
  %v5993 = vadd.f32 0.0, %v5992
  %5994 = vdwg.mxu0
  %v5995 = vld [vmem:[%s5] sm:$0xff]
  %v5996 = vld [vmem:[%s5 + $0x8] sm:$0xff]
  %v5997 = vld [vmem:[%s5 + $0x10] sm:$0xff]
  %v5998 = vld [vmem:[%s5 + $0x18] sm:$0xff]
  %v5999 = vld [vmem:[%s5 + $0x20] sm:$0xff]
  %v6000 = vld [vmem:[%s5 + $0x28] sm:$0xff]
  %v6001 = vld [vmem:[%s5 + $0x30] sm:$0xff]
  %v6002 = vld [vmem:[%s5 + $0x38] sm:$0xff]
  %v6003 = vld [vmem:[%s5 + $0x40] sm:$0xff]
  %v6004 = vld [vmem:[%s5 + $0x48] sm:$0xff]
  %v6005 = vld [vmem:[%s5 + $0x50] sm:$0xff]
  %v6006 = vld [vmem:[%s5 + $0x58] sm:$0xff]
  %v6007 = vld [vmem:[%s5 + $0x60] sm:$0xff]
  %v6008 = vld [vmem:[%s5 + $0x68] sm:$0xff]
  %v6009 = vld [vmem:[%s5 + $0x70] sm:$0xff]
  %v6010 = vld [vmem:[%s5 + $0x78] sm:$0xff]
  %v6011 = vld [vmem:[%s5 + $0x80] sm:$0xff]
  %v6012 = vld [vmem:[%s5 + $0x88] sm:$0xff]
  %v6013 = vld [vmem:[%s5 + $0x90] sm:$0xff]
  %v6014 = vld [vmem:[%s5 + $0x98] sm:$0xff]
  %v6015 = vld [vmem:[%s5 + $0xa0] sm:$0xff]
  %v6016 = vld [vmem:[%s5 + $0xa8] sm:$0xff]
  %v6017 = vld [vmem:[%s5 + $0xb0] sm:$0xff]
  %v6018 = vld [vmem:[%s5 + $0xb8] sm:$0xff]
  %v6019 = vld [vmem:[%s5 + $0xc0] sm:$0xff]
  %v6020 = vld [vmem:[%s5 + $0xc8] sm:$0xff]
  %v6021 = vld [vmem:[%s5 + $0xd0] sm:$0xff]
  %v6022 = vld [vmem:[%s5 + $0xd8] sm:$0xff]
  %v6023 = vld [vmem:[%s5 + $0xe0] sm:$0xff]
  %v6024 = vld [vmem:[%s5 + $0xe8] sm:$0xff]
  %v6025 = vld [vmem:[%s5 + $0xf0] sm:$0xff]
  %v6026 = vld [vmem:[%s5 + $0xf8] sm:$0xff]
  %v6027 = vpack.c.bf16 %v5841, %v5837
  %v6028 = vpack.c.bf16 %v5851, %v5847
  %v6029 = vpack.c.bf16 %v5861, %v5857
  %v6030 = vpack.c.bf16 %v5871, %v5867
  %v6031 = vpack.c.bf16 %v5881, %v5877
  %v6032 = vpack.c.bf16 %v5891, %v5887
  %v6033 = vpack.c.bf16 %v5901, %v5897
  %v6034 = vpack.c.bf16 %v5911, %v5907
  %v6035 = vpack.c.bf16 %v5921, %v5917
  %v6036 = vpack.c.bf16 %v5931, %v5927
  %v6037 = vpack.c.bf16 %v5941, %v5937
  %v6038 = vpack.c.bf16 %v5951, %v5947
  %v6039 = vpack.c.bf16 %v5961, %v5957
  %v6040 = vpack.c.bf16 %v5971, %v5967
  %v6041 = vpack.c.bf16 %v5981, %v5977
  %v6042 = vpack.c.bf16 %v5991, %v5987
  %v6043 = vld [vmem:[%s2] sm:$0x1]
  %v6045 = vlaneseq
  %v6046 = vshrl.u32 %v6045, 7
  %v6047 = vsub.s32 0, %v6046
  %v6048 = vrot.slane %v6043, %v6047
  %v6082 = vunpack.c.l.b16 %v5995
  %v6083 = vunpack.c.h.b16 %v5995
  %v6084 = vunpack.c.l.b16 %v5996
  %v6085 = vunpack.c.h.b16 %v5996
  %v6086 = vunpack.c.l.b16 %v5997
  %v6087 = vunpack.c.h.b16 %v5997
  %v6088 = vunpack.c.l.b16 %v5998
  %v6089 = vunpack.c.h.b16 %v5998
  %v6090 = vunpack.c.l.b16 %v5999
  %v6091 = vunpack.c.h.b16 %v5999
  %v6092 = vunpack.c.l.b16 %v6000
  %v6093 = vunpack.c.h.b16 %v6000
  %v6094 = vunpack.c.l.b16 %v6001
  %v6095 = vunpack.c.h.b16 %v6001
  %v6096 = vunpack.c.l.b16 %v6002
  %v6097 = vunpack.c.h.b16 %v6002
  %v6098 = vunpack.c.l.b16 %v6003
  %v6099 = vunpack.c.h.b16 %v6003
  %v6100 = vunpack.c.l.b16 %v6004
  %v6101 = vunpack.c.h.b16 %v6004
  %v6102 = vunpack.c.l.b16 %v6005
  %v6103 = vunpack.c.h.b16 %v6005
  %v6104 = vunpack.c.l.b16 %v6006
  %v6105 = vunpack.c.h.b16 %v6006
  %v6106 = vunpack.c.l.b16 %v6007
  %v6107 = vunpack.c.h.b16 %v6007
  %v6108 = vunpack.c.l.b16 %v6008
  %v6109 = vunpack.c.h.b16 %v6008
  %v6110 = vunpack.c.l.b16 %v6009
  %v6111 = vunpack.c.h.b16 %v6009
  %v6112 = vunpack.c.l.b16 %v6010
  %v6113 = vunpack.c.h.b16 %v6010
  %v6114 = vunpack.c.l.b16 %v6011
  %v6115 = vunpack.c.h.b16 %v6011
  %v6116 = vunpack.c.l.b16 %v6012
  %v6117 = vunpack.c.h.b16 %v6012
  %v6118 = vunpack.c.l.b16 %v6013
  %v6119 = vunpack.c.h.b16 %v6013
  %v6120 = vunpack.c.l.b16 %v6014
  %v6121 = vunpack.c.h.b16 %v6014
  %v6122 = vunpack.c.l.b16 %v6015
  %v6123 = vunpack.c.h.b16 %v6015
  %v6124 = vunpack.c.l.b16 %v6016
  %v6125 = vunpack.c.h.b16 %v6016
  %v6126 = vunpack.c.l.b16 %v6017
  %v6127 = vunpack.c.h.b16 %v6017
  %v6128 = vunpack.c.l.b16 %v6018
  %v6129 = vunpack.c.h.b16 %v6018
  %v6130 = vunpack.c.l.b16 %v6019
  %v6131 = vunpack.c.h.b16 %v6019
  %v6132 = vunpack.c.l.b16 %v6020
  %v6133 = vunpack.c.h.b16 %v6020
  %v6134 = vunpack.c.l.b16 %v6021
  %v6135 = vunpack.c.h.b16 %v6021
  %v6136 = vunpack.c.l.b16 %v6022
  %v6137 = vunpack.c.h.b16 %v6022
  %v6138 = vunpack.c.l.b16 %v6023
  %v6139 = vunpack.c.h.b16 %v6023
  %v6140 = vunpack.c.l.b16 %v6024
  %v6141 = vunpack.c.h.b16 %v6024
  %v6142 = vunpack.c.l.b16 %v6025
  %v6143 = vunpack.c.h.b16 %v6025
  %v6144 = vunpack.c.l.b16 %v6026
  %v6145 = vunpack.c.h.b16 %v6026
  %v6146 = vpack.c.b16 %v6084, %v6082
  %v6147 = vpack.c.b16 %v6085, %v6083
  %v6148 = vpack.c.b16 %v6088, %v6086
  %v6149 = vpack.c.b16 %v6089, %v6087
  %v6150 = vpack.c.b16 %v6092, %v6090
  %v6151 = vpack.c.b16 %v6093, %v6091
  %v6152 = vpack.c.b16 %v6096, %v6094
  %v6153 = vpack.c.b16 %v6097, %v6095
  %v6154 = vpack.c.b16 %v6100, %v6098
  %v6155 = vpack.c.b16 %v6101, %v6099
  %v6156 = vpack.c.b16 %v6104, %v6102
  %v6157 = vpack.c.b16 %v6105, %v6103
  %v6158 = vpack.c.b16 %v6108, %v6106
  %v6159 = vpack.c.b16 %v6109, %v6107
  %v6160 = vpack.c.b16 %v6112, %v6110
  %v6161 = vpack.c.b16 %v6113, %v6111
  %v6162 = vpack.c.b16 %v6116, %v6114
  %v6163 = vpack.c.b16 %v6117, %v6115
  %v6164 = vpack.c.b16 %v6120, %v6118
  %v6165 = vpack.c.b16 %v6121, %v6119
  %v6166 = vpack.c.b16 %v6124, %v6122
  %v6167 = vpack.c.b16 %v6125, %v6123
  %v6168 = vpack.c.b16 %v6128, %v6126
  %v6169 = vpack.c.b16 %v6129, %v6127
  %v6170 = vpack.c.b16 %v6132, %v6130
  %v6171 = vpack.c.b16 %v6133, %v6131
  %v6172 = vpack.c.b16 %v6136, %v6134
  %v6173 = vpack.c.b16 %v6137, %v6135
  %v6174 = vpack.c.b16 %v6140, %v6138
  %v6175 = vpack.c.b16 %v6141, %v6139
  %v6176 = vpack.c.b16 %v6144, %v6142
  %v6177 = vpack.c.b16 %v6145, %v6143
  %6210 = vmatprep.subr.bf16.mxu0 0
  %6211 = vmatpush1.bf16.msra.mxu0 %v6027
  %6212 = vmatprep.subr.bf16.mxu0 0
  %6213 = vmatpush1.bf16.msra.mxu0 %v6028
  %6214 = vmatprep.subr.bf16.mxu0 0
  %6215 = vmatpush1.bf16.msra.mxu0 %v6029
  %6216 = vmatprep.subr.bf16.mxu0 0
  %6217 = vmatpush1.bf16.msra.mxu0 %v6030
  %6218 = vmatprep.subr.bf16.mxu0 0
  %6219 = vmatpush1.bf16.msra.mxu0 %v6031
  %6220 = vmatprep.subr.bf16.mxu0 0
  %6221 = vmatpush1.bf16.msra.mxu0 %v6032
  %6222 = vmatprep.subr.bf16.mxu0 0
  %6223 = vmatpush1.bf16.msra.mxu0 %v6033
  %6224 = vmatprep.subr.bf16.mxu0 0
  %6225 = vmatpush1.bf16.msra.mxu0 %v6034
  %6226 = vmatprep.subr.bf16.mxu0 0
  %6227 = vmatpush1.bf16.msra.mxu0 %v6035
  %6228 = vmatprep.subr.bf16.mxu0 0
  %6229 = vmatpush1.bf16.msra.mxu0 %v6036
  %6230 = vmatprep.subr.bf16.mxu0 0
  %6231 = vmatpush1.bf16.msra.mxu0 %v6037
  %6232 = vmatprep.subr.bf16.mxu0 0
  %6233 = vmatpush1.bf16.msra.mxu0 %v6038
  %6234 = vmatprep.subr.bf16.mxu0 0
  %6235 = vmatpush1.bf16.msra.mxu0 %v6039
  %6236 = vmatprep.subr.bf16.mxu0 0
  %6237 = vmatpush1.bf16.msra.mxu0 %v6040
  %6238 = vmatprep.subr.bf16.mxu0 0
  %6239 = vmatpush1.bf16.msra.mxu0 %v6041
  %6240 = vmatprep.subr.bf16.mxu0 0
  %6241 = vmatpush1.bf16.msra.mxu0 %v6042
  %6242 = vmatprep.mubr.bf16.mxu0 %v6147
  %6243 = vmatmul.mubr.bf16.gmra.mrb[0].mxu0 %v6146
  %v6244 = vpop.f32.mrb[0].mxu0
  %v6245 = vadd.f32 %v6048, %v6244
  %v6246 = vpop.f32.mrb[0].mxu0
  %v6247 = vpop.f32.mrb[0].mxu0
  %v6248 = vadd.f32 %v6048, %v6247
  %v6249 = vpop.f32.mrb[0].mxu0
  %6250 = vmatprep.mubr.bf16.mxu0 %v6149
  %6251 = vmatmul.mubr.bf16.gmra.mrb[0].mxu0 %v6148
  %v6252 = vpop.f32.mrb[0].mxu0
  %v6253 = vadd.f32 %v6048, %v6252
  %v6254 = vpop.f32.mrb[0].mxu0
  %v6255 = vpop.f32.mrb[0].mxu0
  %v6256 = vadd.f32 %v6048, %v6255
  %v6257 = vpop.f32.mrb[0].mxu0
  %6258 = vmatprep.mubr.bf16.mxu0 %v6151
  %6259 = vmatmul.mubr.bf16.gmra.mrb[0].mxu0 %v6150
  %v6260 = vpop.f32.mrb[0].mxu0
  %v6261 = vadd.f32 %v6048, %v6260
  %v6262 = vpop.f32.mrb[0].mxu0
  %v6263 = vpop.f32.mrb[0].mxu0
  %v6264 = vadd.f32 %v6048, %v6263
  %v6265 = vpop.f32.mrb[0].mxu0
  %6266 = vmatprep.mubr.bf16.mxu0 %v6153
  %6267 = vmatmul.mubr.bf16.gmra.mrb[0].mxu0 %v6152
  %v6268 = vpop.f32.mrb[0].mxu0
  %v6269 = vadd.f32 %v6048, %v6268
  %v6270 = vpop.f32.mrb[0].mxu0
  %v6271 = vpop.f32.mrb[0].mxu0
  %v6272 = vadd.f32 %v6048, %v6271
  %v6273 = vpop.f32.mrb[0].mxu0
  %6274 = vmatprep.mubr.bf16.mxu0 %v6155
  %6275 = vmatmul.mubr.bf16.gmra.mrb[0].mxu0 %v6154
  %v6276 = vpop.f32.mrb[0].mxu0
  %v6277 = vadd.f32 %v6048, %v6276
  %v6278 = vpop.f32.mrb[0].mxu0
  %v6279 = vpop.f32.mrb[0].mxu0
  %v6280 = vadd.f32 %v6048, %v6279
  %v6281 = vpop.f32.mrb[0].mxu0
  %6282 = vmatprep.mubr.bf16.mxu0 %v6157
  %6283 = vmatmul.mubr.bf16.gmra.mrb[0].mxu0 %v6156
  %v6284 = vpop.f32.mrb[0].mxu0
  %v6285 = vadd.f32 %v6048, %v6284
  %v6286 = vpop.f32.mrb[0].mxu0
  %v6287 = vpop.f32.mrb[0].mxu0
  %v6288 = vadd.f32 %v6048, %v6287
  %v6289 = vpop.f32.mrb[0].mxu0
  %6290 = vmatprep.mubr.bf16.mxu0 %v6159
  %6291 = vmatmul.mubr.bf16.gmra.mrb[0].mxu0 %v6158
  %v6292 = vpop.f32.mrb[0].mxu0
  %v6293 = vadd.f32 %v6048, %v6292
  %v6294 = vpop.f32.mrb[0].mxu0
  %v6295 = vpop.f32.mrb[0].mxu0
  %v6296 = vadd.f32 %v6048, %v6295
  %v6297 = vpop.f32.mrb[0].mxu0
  %6298 = vmatprep.mubr.bf16.mxu0 %v6161
  %6299 = vmatmul.mubr.bf16.gmra.mrb[0].mxu0 %v6160
  %v6300 = vpop.f32.mrb[0].mxu0
  %v6301 = vadd.f32 %v6048, %v6300
  %v6302 = vpop.f32.mrb[0].mxu0
  %v6303 = vpop.f32.mrb[0].mxu0
  %v6304 = vadd.f32 %v6048, %v6303
  %v6305 = vpop.f32.mrb[0].mxu0
  %6306 = vmatprep.mubr.bf16.mxu0 %v6163
  %6307 = vmatmul.mubr.bf16.gmra.mrb[0].mxu0 %v6162
  %v6308 = vpop.f32.mrb[0].mxu0
  %v6309 = vadd.f32 %v6048, %v6308
  %v6310 = vpop.f32.mrb[0].mxu0
  %v6311 = vpop.f32.mrb[0].mxu0
  %v6312 = vadd.f32 %v6048, %v6311
  %v6313 = vpop.f32.mrb[0].mxu0
  %6314 = vmatprep.mubr.bf16.mxu0 %v6165
  %6315 = vmatmul.mubr.bf16.gmra.mrb[0].mxu0 %v6164
  %v6316 = vpop.f32.mrb[0].mxu0
  %v6317 = vadd.f32 %v6048, %v6316
  %v6318 = vpop.f32.mrb[0].mxu0
  %v6319 = vpop.f32.mrb[0].mxu0
  %v6320 = vadd.f32 %v6048, %v6319
  %v6321 = vpop.f32.mrb[0].mxu0
  %6322 = vmatprep.mubr.bf16.mxu0 %v6167
  %6323 = vmatmul.mubr.bf16.gmra.mrb[0].mxu0 %v6166
  %v6324 = vpop.f32.mrb[0].mxu0
  %v6325 = vadd.f32 %v6048, %v6324
  %v6326 = vpop.f32.mrb[0].mxu0
  %v6327 = vpop.f32.mrb[0].mxu0
  %v6328 = vadd.f32 %v6048, %v6327
  %v6329 = vpop.f32.mrb[0].mxu0
  %6330 = vmatprep.mubr.bf16.mxu0 %v6169
  %6331 = vmatmul.mubr.bf16.gmra.mrb[0].mxu0 %v6168
  %v6332 = vpop.f32.mrb[0].mxu0
  %v6333 = vadd.f32 %v6048, %v6332
  %v6334 = vpop.f32.mrb[0].mxu0
  %v6335 = vpop.f32.mrb[0].mxu0
  %v6336 = vadd.f32 %v6048, %v6335
  %v6337 = vpop.f32.mrb[0].mxu0
  %6338 = vmatprep.mubr.bf16.mxu0 %v6171
  %6339 = vmatmul.mubr.bf16.gmra.mrb[0].mxu0 %v6170
  %v6340 = vpop.f32.mrb[0].mxu0
  %v6341 = vadd.f32 %v6048, %v6340
  %v6342 = vpop.f32.mrb[0].mxu0
  %v6343 = vpop.f32.mrb[0].mxu0
  %v6344 = vadd.f32 %v6048, %v6343
  %v6345 = vpop.f32.mrb[0].mxu0
  %6346 = vmatprep.mubr.bf16.mxu0 %v6173
  %6347 = vmatmul.mubr.bf16.gmra.mrb[0].mxu0 %v6172
  %v6348 = vpop.f32.mrb[0].mxu0
  %v6349 = vadd.f32 %v6048, %v6348
  %v6350 = vpop.f32.mrb[0].mxu0
  %v6351 = vpop.f32.mrb[0].mxu0
  %v6352 = vadd.f32 %v6048, %v6351
  %v6353 = vpop.f32.mrb[0].mxu0
  %6354 = vmatprep.mubr.bf16.mxu0 %v6175
  %6355 = vmatmul.mubr.bf16.gmra.mrb[0].mxu0 %v6174
  %v6356 = vpop.f32.mrb[0].mxu0
  %v6357 = vadd.f32 %v6048, %v6356
  %v6358 = vpop.f32.mrb[0].mxu0
  %v6359 = vpop.f32.mrb[0].mxu0
  %v6360 = vadd.f32 %v6048, %v6359
  %v6361 = vpop.f32.mrb[0].mxu0
  %6362 = vmatprep.mubr.bf16.mxu0 %v6177
  %6363 = vmatmul.mubr.bf16.gmra.mrb[0].mxu0 %v6176
  %v6364 = vpop.f32.mrb[0].mxu0
  %v6365 = vadd.f32 %v6048, %v6364
  %v6366 = vpop.f32.mrb[0].mxu0
  %v6367 = vpop.f32.mrb[0].mxu0
  %v6368 = vadd.f32 %v6048, %v6367
  %v6369 = vpop.f32.mrb[0].mxu0
  %6370 = vdwg.mxu0
  %v6371 = vmax.f32 %v6245, 0.0
  %v6372 = vmax.f32 %v6248, 0.0
  %v6373 = vmax.f32 %v6253, 0.0
  %v6374 = vmax.f32 %v6256, 0.0
  %v6375 = vmax.f32 %v6261, 0.0
  %v6376 = vmax.f32 %v6264, 0.0
  %v6377 = vmax.f32 %v6269, 0.0
  %v6378 = vmax.f32 %v6272, 0.0
  %v6379 = vmax.f32 %v6277, 0.0
  %v6380 = vmax.f32 %v6280, 0.0
  %v6381 = vmax.f32 %v6285, 0.0
  %v6382 = vmax.f32 %v6288, 0.0
  %v6383 = vmax.f32 %v6293, 0.0
  %v6384 = vmax.f32 %v6296, 0.0
  %v6385 = vmax.f32 %v6301, 0.0
  %v6386 = vmax.f32 %v6304, 0.0
  %v6387 = vmax.f32 %v6309, 0.0
  %v6388 = vmax.f32 %v6312, 0.0
  %v6389 = vmax.f32 %v6317, 0.0
  %v6390 = vmax.f32 %v6320, 0.0
  %v6391 = vmax.f32 %v6325, 0.0
  %v6392 = vmax.f32 %v6328, 0.0
  %v6393 = vmax.f32 %v6333, 0.0
  %v6394 = vmax.f32 %v6336, 0.0
  %v6395 = vmax.f32 %v6341, 0.0
  %v6396 = vmax.f32 %v6344, 0.0
  %v6397 = vmax.f32 %v6349, 0.0
  %v6398 = vmax.f32 %v6352, 0.0
  %v6399 = vmax.f32 %v6357, 0.0
  %v6400 = vmax.f32 %v6360, 0.0
  %v6401 = vmax.f32 %v6365, 0.0
  %v6402 = vmax.f32 %v6368, 0.0
  %6403 = vst [vmem:[%s31 + $0x1] sm:$0xff] %v6371
  %6404 = vst [vmem:[%s31 + $0x9] sm:$0xff] %v6372
  %6405 = vst [vmem:[%s31 + $0x19] sm:$0xff] %v6373
  %6406 = vst [vmem:[%s31 + $0x21] sm:$0xff] %v6374
  %6407 = vst [vmem:[%s31 + $0x31] sm:$0xff] %v6375
  %6408 = vst [vmem:[%s31 + $0x39] sm:$0xff] %v6376
  %6409 = vst [vmem:[%s31 + $0x49] sm:$0xff] %v6377
  %6410 = vst [vmem:[%s31 + $0x51] sm:$0xff] %v6378
  %6411 = vst [vmem:[%s31 + $0x61] sm:$0xff] %v6379
  %6412 = vst [vmem:[%s31 + $0x69] sm:$0xff] %v6380
  %6413 = vst [vmem:[%s31 + $0x79] sm:$0xff] %v6381
  %6414 = vst [vmem:[%s31 + $0x81] sm:$0xff] %v6382
  %6415 = vst [vmem:[%s31 + $0x91] sm:$0xff] %v6383
  %6416 = vst [vmem:[%s31 + $0x99] sm:$0xff] %v6384
  %6417 = vst [vmem:[%s31 + $0xa9] sm:$0xff] %v6385
  %6418 = vst [vmem:[%s31 + $0xb1] sm:$0xff] %v6386
  %6419 = vst [vmem:[%s31 + $0xc1] sm:$0xff] %v6387
  %6420 = vst [vmem:[%s31 + $0xc9] sm:$0xff] %v6388
  %6421 = vst [vmem:[%s31 + $0xd9] sm:$0xff] %v6389
  %6422 = vst [vmem:[%s31 + $0xe1] sm:$0xff] %v6390
  %6423 = vst [vmem:[%s31 + $0xf1] sm:$0xff] %v6391
  %6424 = vst [vmem:[%s31 + $0xf9] sm:$0xff] %v6392
  %6425 = vst [vmem:[%s31 + $0x109] sm:$0xff] %v6393
  %6426 = vst [vmem:[%s31 + $0x111] sm:$0xff] %v6394
  %6427 = vst [vmem:[%s31 + $0x121] sm:$0xff] %v6395
  %6428 = vst [vmem:[%s31 + $0x129] sm:$0xff] %v6396
  %6429 = vst [vmem:[%s31 + $0x139] sm:$0xff] %v6397
  %6430 = vst [vmem:[%s31 + $0x141] sm:$0xff] %v6398
  %6431 = vst [vmem:[%s31 + $0x151] sm:$0xff] %v6399
  %6432 = vst [vmem:[%s31 + $0x159] sm:$0xff] %v6400
  %6433 = vst [vmem:[%s31 + $0x169] sm:$0xff] %v6401
  %6434 = vst [vmem:[%s31 + $0x171] sm:$0xff] %v6402
  %v6435 = vld [vmem:[#allocation2] sm:$0xff]
  %v6436 = vld [vmem:[#allocation2 + $0x8] sm:$0xff]
  %v6437 = vld [vmem:[#allocation2 + $0x18] sm:$0xff]
  %v6438 = vld [vmem:[#allocation2 + $0x20] sm:$0xff]
  %v6439 = vld [vmem:[#allocation2 + $0x30] sm:$0xff]
  %v6440 = vld [vmem:[#allocation2 + $0x38] sm:$0xff]
  %v6441 = vld [vmem:[#allocation2 + $0x48] sm:$0xff]
  %v6442 = vld [vmem:[#allocation2 + $0x50] sm:$0xff]
  %v6443 = vld [vmem:[#allocation2 + $0x60] sm:$0xff]
  %v6444 = vld [vmem:[#allocation2 + $0x68] sm:$0xff]
  %v6445 = vld [vmem:[#allocation2 + $0x78] sm:$0xff]
  %v6446 = vld [vmem:[#allocation2 + $0x80] sm:$0xff]
  %v6447 = vld [vmem:[#allocation2 + $0x90] sm:$0xff]
  %v6448 = vld [vmem:[#allocation2 + $0x98] sm:$0xff]
  %v6449 = vld [vmem:[#allocation2 + $0xa8] sm:$0xff]
  %v6450 = vld [vmem:[#allocation2 + $0xb0] sm:$0xff]
  %v6451 = vld [vmem:[#allocation2 + $0xc0] sm:$0xff]
  %v6452 = vld [vmem:[#allocation2 + $0xc8] sm:$0xff]
  %v6453 = vld [vmem:[#allocation2 + $0xd8] sm:$0xff]
  %v6454 = vld [vmem:[#allocation2 + $0xe0] sm:$0xff]
  %v6455 = vld [vmem:[#allocation2 + $0xf0] sm:$0xff]
  %v6456 = vld [vmem:[#allocation2 + $0xf8] sm:$0xff]
  %v6457 = vld [vmem:[#allocation2 + $0x108] sm:$0xff]
  %v6458 = vld [vmem:[#allocation2 + $0x110] sm:$0xff]
  %v6459 = vld [vmem:[#allocation2 + $0x120] sm:$0xff]
  %v6460 = vld [vmem:[#allocation2 + $0x128] sm:$0xff]
  %v6461 = vld [vmem:[#allocation2 + $0x138] sm:$0xff]
  %v6462 = vld [vmem:[#allocation2 + $0x140] sm:$0xff]
  %v6463 = vld [vmem:[#allocation2 + $0x150] sm:$0xff]
  %v6464 = vld [vmem:[#allocation2 + $0x158] sm:$0xff]
  %v6465 = vld [vmem:[#allocation2 + $0x168] sm:$0xff]
  %v6466 = vld [vmem:[#allocation2 + $0x170] sm:$0xff]
  %v6467 = vsel %vm2222, %v6435, 0.0
  %v6468 = vsel %vm2222, %v6436, 0.0
  %v6469 = vsel %vm2222, %v6437, 0.0
  %v6470 = vsel %vm2222, %v6438, 0.0
  %v6471 = vsel %vm2222, %v6439, 0.0
  %v6472 = vsel %vm2222, %v6440, 0.0
  %v6473 = vsel %vm2222, %v6441, 0.0
  %v6474 = vsel %vm2222, %v6442, 0.0
  %v6475 = vsel %vm2222, %v6443, 0.0
  %v6476 = vsel %vm2222, %v6444, 0.0
  %v6477 = vsel %vm2222, %v6445, 0.0
  %v6478 = vsel %vm2222, %v6446, 0.0
  %v6479 = vsel %vm2222, %v6447, 0.0
  %v6480 = vsel %vm2222, %v6448, 0.0
  %v6481 = vsel %vm2222, %v6449, 0.0
  %v6482 = vsel %vm2222, %v6450, 0.0
  %v6483 = vsel %vm2222, %v6451, 0.0
  %v6484 = vsel %vm2222, %v6452, 0.0
  %v6485 = vsel %vm2222, %v6453, 0.0
  %v6486 = vsel %vm2222, %v6454, 0.0
  %v6487 = vsel %vm2222, %v6455, 0.0
  %v6488 = vsel %vm2222, %v6456, 0.0
  %v6489 = vsel %vm2222, %v6457, 0.0
  %v6490 = vsel %vm2222, %v6458, 0.0
  %v6491 = vsel %vm2222, %v6459, 0.0
  %v6492 = vsel %vm2222, %v6460, 0.0
  %v6493 = vsel %vm2222, %v6461, 0.0
  %v6494 = vsel %vm2222, %v6462, 0.0
  %v6495 = vsel %vm2222, %v6463, 0.0
  %v6496 = vsel %vm2222, %v6464, 0.0
  %v6497 = vsel %vm2222, %v6465, 0.0
  %v6498 = vsel %vm2222, %v6466, 0.0
  %v6499 = vld [vmem:[#allocation2 + $0x1] sm:$0xff]
  %v6500 = vld [vmem:[#allocation2 + $0x9] sm:$0xff]
  %v6501 = vld [vmem:[#allocation2 + $0x19] sm:$0xff]
  %v6502 = vld [vmem:[#allocation2 + $0x21] sm:$0xff]
  %v6503 = vld [vmem:[#allocation2 + $0x31] sm:$0xff]
  %v6504 = vld [vmem:[#allocation2 + $0x39] sm:$0xff]
  %v6505 = vld [vmem:[#allocation2 + $0x49] sm:$0xff]
  %v6506 = vld [vmem:[#allocation2 + $0x51] sm:$0xff]
  %v6507 = vld [vmem:[#allocation2 + $0x61] sm:$0xff]
  %v6508 = vld [vmem:[#allocation2 + $0x69] sm:$0xff]
  %v6509 = vld [vmem:[#allocation2 + $0x79] sm:$0xff]
  %v6510 = vld [vmem:[#allocation2 + $0x81] sm:$0xff]
  %v6511 = vld [vmem:[#allocation2 + $0x91] sm:$0xff]
  %v6512 = vld [vmem:[#allocation2 + $0x99] sm:$0xff]
  %v6513 = vld [vmem:[#allocation2 + $0xa9] sm:$0xff]
  %v6514 = vld [vmem:[#allocation2 + $0xb1] sm:$0xff]
  %v6515 = vld [vmem:[#allocation2 + $0xc1] sm:$0xff]
  %v6516 = vld [vmem:[#allocation2 + $0xc9] sm:$0xff]
  %v6517 = vld [vmem:[#allocation2 + $0xd9] sm:$0xff]
  %v6518 = vld [vmem:[#allocation2 + $0xe1] sm:$0xff]
  %v6519 = vld [vmem:[#allocation2 + $0xf1] sm:$0xff]
  %v6520 = vld [vmem:[#allocation2 + $0xf9] sm:$0xff]
  %v6521 = vld [vmem:[#allocation2 + $0x109] sm:$0xff]
  %v6522 = vld [vmem:[#allocation2 + $0x111] sm:$0xff]
  %v6523 = vld [vmem:[#allocation2 + $0x121] sm:$0xff]
  %v6524 = vld [vmem:[#allocation2 + $0x129] sm:$0xff]
  %v6525 = vld [vmem:[#allocation2 + $0x139] sm:$0xff]
  %v6526 = vld [vmem:[#allocation2 + $0x141] sm:$0xff]
  %v6527 = vld [vmem:[#allocation2 + $0x151] sm:$0xff]
  %v6528 = vld [vmem:[#allocation2 + $0x159] sm:$0xff]
  %v6529 = vld [vmem:[#allocation2 + $0x169] sm:$0xff]
  %v6530 = vld [vmem:[#allocation2 + $0x171] sm:$0xff]
  %v6531 = vsel %vm2222, %v6499, 0.0
  %v6532 = vsel %vm2222, %v6500, 0.0
  %v6533 = vsel %vm2222, %v6501, 0.0
  %v6534 = vsel %vm2222, %v6502, 0.0
  %v6535 = vsel %vm2222, %v6503, 0.0
  %v6536 = vsel %vm2222, %v6504, 0.0
  %v6537 = vsel %vm2222, %v6505, 0.0
  %v6538 = vsel %vm2222, %v6506, 0.0
  %v6539 = vsel %vm2222, %v6507, 0.0
  %v6540 = vsel %vm2222, %v6508, 0.0
  %v6541 = vsel %vm2222, %v6509, 0.0
  %v6542 = vsel %vm2222, %v6510, 0.0
  %v6543 = vsel %vm2222, %v6511, 0.0
  %v6544 = vsel %vm2222, %v6512, 0.0
  %v6545 = vsel %vm2222, %v6513, 0.0
  %v6546 = vsel %vm2222, %v6514, 0.0
  %v6547 = vsel %vm2222, %v6515, 0.0
  %v6548 = vsel %vm2222, %v6516, 0.0
  %v6549 = vsel %vm2222, %v6517, 0.0
  %v6550 = vsel %vm2222, %v6518, 0.0
  %v6551 = vsel %vm2222, %v6519, 0.0
  %v6552 = vsel %vm2222, %v6520, 0.0
  %v6553 = vsel %vm2222, %v6521, 0.0
  %v6554 = vsel %vm2222, %v6522, 0.0
  %v6555 = vsel %vm2222, %v6523, 0.0
  %v6556 = vsel %vm2222, %v6524, 0.0
  %v6557 = vsel %vm2222, %v6525, 0.0
  %v6558 = vsel %vm2222, %v6526, 0.0
  %v6559 = vsel %vm2222, %v6527, 0.0
  %v6560 = vsel %vm2222, %v6528, 0.0
  %v6561 = vsel %vm2222, %v6529, 0.0
  %v6562 = vsel %vm2222, %v6530, 0.0
  %6563 = vrot.lane.b32.xlu0 %v6531, 8
  %v6564 = vpop.permute.xlu0 %6563
  %6565 = vrot.lane.b32.xlu0 %v6532, 8
  %v6566 = vpop.permute.xlu0 %6565
  %6567 = vrot.lane.b32.xlu0 %v6533, 8
  %v6568 = vpop.permute.xlu0 %6567
  %6569 = vrot.lane.b32.xlu0 %v6534, 8
  %v6570 = vpop.permute.xlu0 %6569
  %6571 = vrot.lane.b32.xlu0 %v6535, 8
  %v6572 = vpop.permute.xlu0 %6571
  %6573 = vrot.lane.b32.xlu0 %v6536, 8
  %v6574 = vpop.permute.xlu0 %6573
  %6575 = vrot.lane.b32.xlu0 %v6537, 8
  %v6576 = vpop.permute.xlu0 %6575
  %6577 = vrot.lane.b32.xlu0 %v6538, 8
  %v6578 = vpop.permute.xlu0 %6577
  %6579 = vrot.lane.b32.xlu0 %v6539, 8
  %v6580 = vpop.permute.xlu0 %6579
  %6581 = vrot.lane.b32.xlu0 %v6540, 8
  %v6582 = vpop.permute.xlu0 %6581
  %6583 = vrot.lane.b32.xlu0 %v6541, 8
  %v6584 = vpop.permute.xlu0 %6583
  %6585 = vrot.lane.b32.xlu0 %v6542, 8
  %v6586 = vpop.permute.xlu0 %6585
  %6587 = vrot.lane.b32.xlu0 %v6543, 8
  %v6588 = vpop.permute.xlu0 %6587
  %6589 = vrot.lane.b32.xlu0 %v6544, 8
  %v6590 = vpop.permute.xlu0 %6589
  %6591 = vrot.lane.b32.xlu0 %v6545, 8
  %v6592 = vpop.permute.xlu0 %6591
  %6593 = vrot.lane.b32.xlu0 %v6546, 8
  %v6594 = vpop.permute.xlu0 %6593
  %6595 = vrot.lane.b32.xlu0 %v6547, 8
  %v6596 = vpop.permute.xlu0 %6595
  %6597 = vrot.lane.b32.xlu0 %v6548, 8
  %v6598 = vpop.permute.xlu0 %6597
  %6599 = vrot.lane.b32.xlu0 %v6549, 8
  %v6600 = vpop.permute.xlu0 %6599
  %6601 = vrot.lane.b32.xlu0 %v6550, 8
  %v6602 = vpop.permute.xlu0 %6601
  %6603 = vrot.lane.b32.xlu0 %v6551, 8
  %v6604 = vpop.permute.xlu0 %6603
  %6605 = vrot.lane.b32.xlu0 %v6552, 8
  %v6606 = vpop.permute.xlu0 %6605
  %6607 = vrot.lane.b32.xlu0 %v6553, 8
  %v6608 = vpop.permute.xlu0 %6607
  %6609 = vrot.lane.b32.xlu0 %v6554, 8
  %v6610 = vpop.permute.xlu0 %6609
  %6611 = vrot.lane.b32.xlu0 %v6555, 8
  %v6612 = vpop.permute.xlu0 %6611
  %6613 = vrot.lane.b32.xlu0 %v6556, 8
  %v6614 = vpop.permute.xlu0 %6613
  %6615 = vrot.lane.b32.xlu0 %v6557, 8
  %v6616 = vpop.permute.xlu0 %6615
  %6617 = vrot.lane.b32.xlu0 %v6558, 8
  %v6618 = vpop.permute.xlu0 %6617
  %6619 = vrot.lane.b32.xlu0 %v6559, 8
  %v6620 = vpop.permute.xlu0 %6619
  %6621 = vrot.lane.b32.xlu0 %v6560, 8
  %v6622 = vpop.permute.xlu0 %6621
  %6623 = vrot.lane.b32.xlu0 %v6561, 8
  %v6624 = vpop.permute.xlu0 %6623
  %6625 = vrot.lane.b32.xlu0 %v6562, 8
  %v6626 = vpop.permute.xlu0 %6625
  %v6627 = vadd.f32 %v6467, %v6564
  %v6628 = vadd.f32 %v6468, %v6566
  %v6629 = vadd.f32 %v6469, %v6568
  %v6630 = vadd.f32 %v6470, %v6570
  %v6631 = vadd.f32 %v6471, %v6572
  %v6632 = vadd.f32 %v6472, %v6574
  %v6633 = vadd.f32 %v6473, %v6576
  %v6634 = vadd.f32 %v6474, %v6578
  %v6635 = vadd.f32 %v6475, %v6580
  %v6636 = vadd.f32 %v6476, %v6582
  %v6637 = vadd.f32 %v6477, %v6584
  %v6638 = vadd.f32 %v6478, %v6586
  %v6639 = vadd.f32 %v6479, %v6588
  %v6640 = vadd.f32 %v6480, %v6590
  %v6641 = vadd.f32 %v6481, %v6592
  %v6642 = vadd.f32 %v6482, %v6594
  %v6643 = vadd.f32 %v6483, %v6596
  %v6644 = vadd.f32 %v6484, %v6598
  %v6645 = vadd.f32 %v6485, %v6600
  %v6646 = vadd.f32 %v6486, %v6602
  %v6647 = vadd.f32 %v6487, %v6604
  %v6648 = vadd.f32 %v6488, %v6606
  %v6649 = vadd.f32 %v6489, %v6608
  %v6650 = vadd.f32 %v6490, %v6610
  %v6651 = vadd.f32 %v6491, %v6612
  %v6652 = vadd.f32 %v6492, %v6614
  %v6653 = vadd.f32 %v6493, %v6616
  %v6654 = vadd.f32 %v6494, %v6618
  %v6655 = vadd.f32 %v6495, %v6620
  %v6656 = vadd.f32 %v6496, %v6622
  %v6657 = vadd.f32 %v6497, %v6624
  %v6658 = vadd.f32 %v6498, %v6626
  %v6659 = vld [vmem:[#allocation2 + $0x2] sm:$0xff]
  %v6660 = vld [vmem:[#allocation2 + $0xa] sm:$0xff]
  %v6661 = vld [vmem:[#allocation2 + $0x1a] sm:$0xff]
  %v6662 = vld [vmem:[#allocation2 + $0x22] sm:$0xff]
  %v6663 = vld [vmem:[#allocation2 + $0x32] sm:$0xff]
  %v6664 = vld [vmem:[#allocation2 + $0x3a] sm:$0xff]
  %v6665 = vld [vmem:[#allocation2 + $0x4a] sm:$0xff]
  %v6666 = vld [vmem:[#allocation2 + $0x52] sm:$0xff]
  %v6667 = vld [vmem:[#allocation2 + $0x62] sm:$0xff]
  %v6668 = vld [vmem:[#allocation2 + $0x6a] sm:$0xff]
  %v6669 = vld [vmem:[#allocation2 + $0x7a] sm:$0xff]
  %v6670 = vld [vmem:[#allocation2 + $0x82] sm:$0xff]
  %v6671 = vld [vmem:[#allocation2 + $0x92] sm:$0xff]
  %v6672 = vld [vmem:[#allocation2 + $0x9a] sm:$0xff]
  %v6673 = vld [vmem:[#allocation2 + $0xaa] sm:$0xff]
  %v6674 = vld [vmem:[#allocation2 + $0xb2] sm:$0xff]
  %v6675 = vld [vmem:[#allocation2 + $0xc2] sm:$0xff]
  %v6676 = vld [vmem:[#allocation2 + $0xca] sm:$0xff]
  %v6677 = vld [vmem:[#allocation2 + $0xda] sm:$0xff]
  %v6678 = vld [vmem:[#allocation2 + $0xe2] sm:$0xff]
  %v6679 = vld [vmem:[#allocation2 + $0xf2] sm:$0xff]
  %v6680 = vld [vmem:[#allocation2 + $0xfa] sm:$0xff]
  %v6681 = vld [vmem:[#allocation2 + $0x10a] sm:$0xff]
  %v6682 = vld [vmem:[#allocation2 + $0x112] sm:$0xff]
  %v6683 = vld [vmem:[#allocation2 + $0x122] sm:$0xff]
  %v6684 = vld [vmem:[#allocation2 + $0x12a] sm:$0xff]
  %v6685 = vld [vmem:[#allocation2 + $0x13a] sm:$0xff]
  %v6686 = vld [vmem:[#allocation2 + $0x142] sm:$0xff]
  %v6687 = vld [vmem:[#allocation2 + $0x152] sm:$0xff]
  %v6688 = vld [vmem:[#allocation2 + $0x15a] sm:$0xff]
  %v6689 = vld [vmem:[#allocation2 + $0x16a] sm:$0xff]
  %v6690 = vld [vmem:[#allocation2 + $0x172] sm:$0xff]
  %v6691 = vsel %vm2222, %v6659, 0.0
  %v6692 = vsel %vm2222, %v6660, 0.0
  %v6693 = vsel %vm2222, %v6661, 0.0
  %v6694 = vsel %vm2222, %v6662, 0.0
  %v6695 = vsel %vm2222, %v6663, 0.0
  %v6696 = vsel %vm2222, %v6664, 0.0
  %v6697 = vsel %vm2222, %v6665, 0.0
  %v6698 = vsel %vm2222, %v6666, 0.0
  %v6699 = vsel %vm2222, %v6667, 0.0
  %v6700 = vsel %vm2222, %v6668, 0.0
  %v6701 = vsel %vm2222, %v6669, 0.0
  %v6702 = vsel %vm2222, %v6670, 0.0
  %v6703 = vsel %vm2222, %v6671, 0.0
  %v6704 = vsel %vm2222, %v6672, 0.0
  %v6705 = vsel %vm2222, %v6673, 0.0
  %v6706 = vsel %vm2222, %v6674, 0.0
  %v6707 = vsel %vm2222, %v6675, 0.0
  %v6708 = vsel %vm2222, %v6676, 0.0
  %v6709 = vsel %vm2222, %v6677, 0.0
  %v6710 = vsel %vm2222, %v6678, 0.0
  %v6711 = vsel %vm2222, %v6679, 0.0
  %v6712 = vsel %vm2222, %v6680, 0.0
  %v6713 = vsel %vm2222, %v6681, 0.0
  %v6714 = vsel %vm2222, %v6682, 0.0
  %v6715 = vsel %vm2222, %v6683, 0.0
  %v6716 = vsel %vm2222, %v6684, 0.0
  %v6717 = vsel %vm2222, %v6685, 0.0
  %v6718 = vsel %vm2222, %v6686, 0.0
  %v6719 = vsel %vm2222, %v6687, 0.0
  %v6720 = vsel %vm2222, %v6688, 0.0
  %v6721 = vsel %vm2222, %v6689, 0.0
  %v6722 = vsel %vm2222, %v6690, 0.0
  %6723 = vrot.lane.b32.xlu0 %v6691, 16
  %v6724 = vpop.permute.xlu0 %6723
  %6725 = vrot.lane.b32.xlu0 %v6692, 16
  %v6726 = vpop.permute.xlu0 %6725
  %6727 = vrot.lane.b32.xlu0 %v6693, 16
  %v6728 = vpop.permute.xlu0 %6727
  %6729 = vrot.lane.b32.xlu0 %v6694, 16
  %v6730 = vpop.permute.xlu0 %6729
  %6731 = vrot.lane.b32.xlu0 %v6695, 16
  %v6732 = vpop.permute.xlu0 %6731
  %6733 = vrot.lane.b32.xlu0 %v6696, 16
  %v6734 = vpop.permute.xlu0 %6733
  %6735 = vrot.lane.b32.xlu0 %v6697, 16
  %v6736 = vpop.permute.xlu0 %6735
  %6737 = vrot.lane.b32.xlu0 %v6698, 16
  %v6738 = vpop.permute.xlu0 %6737
  %6739 = vrot.lane.b32.xlu0 %v6699, 16
  %v6740 = vpop.permute.xlu0 %6739
  %6741 = vrot.lane.b32.xlu0 %v6700, 16
  %v6742 = vpop.permute.xlu0 %6741
  %6743 = vrot.lane.b32.xlu0 %v6701, 16
  %v6744 = vpop.permute.xlu0 %6743
  %6745 = vrot.lane.b32.xlu0 %v6702, 16
  %v6746 = vpop.permute.xlu0 %6745
  %6747 = vrot.lane.b32.xlu0 %v6703, 16
  %v6748 = vpop.permute.xlu0 %6747
  %6749 = vrot.lane.b32.xlu0 %v6704, 16
  %v6750 = vpop.permute.xlu0 %6749
  %6751 = vrot.lane.b32.xlu0 %v6705, 16
  %v6752 = vpop.permute.xlu0 %6751
  %6753 = vrot.lane.b32.xlu0 %v6706, 16
  %v6754 = vpop.permute.xlu0 %6753
  %6755 = vrot.lane.b32.xlu0 %v6707, 16
  %v6756 = vpop.permute.xlu0 %6755
  %6757 = vrot.lane.b32.xlu0 %v6708, 16
  %v6758 = vpop.permute.xlu0 %6757
  %6759 = vrot.lane.b32.xlu0 %v6709, 16
  %v6760 = vpop.permute.xlu0 %6759
  %6761 = vrot.lane.b32.xlu0 %v6710, 16
  %v6762 = vpop.permute.xlu0 %6761
  %6763 = vrot.lane.b32.xlu0 %v6711, 16
  %v6764 = vpop.permute.xlu0 %6763
  %6765 = vrot.lane.b32.xlu0 %v6712, 16
  %v6766 = vpop.permute.xlu0 %6765
  %6767 = vrot.lane.b32.xlu0 %v6713, 16
  %v6768 = vpop.permute.xlu0 %6767
  %6769 = vrot.lane.b32.xlu0 %v6714, 16
  %v6770 = vpop.permute.xlu0 %6769
  %6771 = vrot.lane.b32.xlu0 %v6715, 16
  %v6772 = vpop.permute.xlu0 %6771
  %6773 = vrot.lane.b32.xlu0 %v6716, 16
  %v6774 = vpop.permute.xlu0 %6773
  %6775 = vrot.lane.b32.xlu0 %v6717, 16
  %v6776 = vpop.permute.xlu0 %6775
  %6777 = vrot.lane.b32.xlu0 %v6718, 16
  %v6778 = vpop.permute.xlu0 %6777
  %6779 = vrot.lane.b32.xlu0 %v6719, 16
  %v6780 = vpop.permute.xlu0 %6779
  %6781 = vrot.lane.b32.xlu0 %v6720, 16
  %v6782 = vpop.permute.xlu0 %6781
  %6783 = vrot.lane.b32.xlu0 %v6721, 16
  %v6784 = vpop.permute.xlu0 %6783
  %6785 = vrot.lane.b32.xlu0 %v6722, 16
  %v6786 = vpop.permute.xlu0 %6785
  %v6787 = vadd.f32 %v6627, %v6724
  %v6788 = vadd.f32 %v6628, %v6726
  %v6789 = vadd.f32 %v6629, %v6728
  %v6790 = vadd.f32 %v6630, %v6730
  %v6791 = vadd.f32 %v6631, %v6732
  %v6792 = vadd.f32 %v6632, %v6734
  %v6793 = vadd.f32 %v6633, %v6736
  %v6794 = vadd.f32 %v6634, %v6738
  %v6795 = vadd.f32 %v6635, %v6740
  %v6796 = vadd.f32 %v6636, %v6742
  %v6797 = vadd.f32 %v6637, %v6744
  %v6798 = vadd.f32 %v6638, %v6746
  %v6799 = vadd.f32 %v6639, %v6748
  %v6800 = vadd.f32 %v6640, %v6750
  %v6801 = vadd.f32 %v6641, %v6752
  %v6802 = vadd.f32 %v6642, %v6754
  %v6803 = vadd.f32 %v6643, %v6756
  %v6804 = vadd.f32 %v6644, %v6758
  %v6805 = vadd.f32 %v6645, %v6760
  %v6806 = vadd.f32 %v6646, %v6762
  %v6807 = vadd.f32 %v6647, %v6764
  %v6808 = vadd.f32 %v6648, %v6766
  %v6809 = vadd.f32 %v6649, %v6768
  %v6810 = vadd.f32 %v6650, %v6770
  %v6811 = vadd.f32 %v6651, %v6772
  %v6812 = vadd.f32 %v6652, %v6774
  %v6813 = vadd.f32 %v6653, %v6776
  %v6814 = vadd.f32 %v6654, %v6778
  %v6815 = vadd.f32 %v6655, %v6780
  %v6816 = vadd.f32 %v6656, %v6782
  %v6817 = vadd.f32 %v6657, %v6784
  %v6818 = vadd.f32 %v6658, %v6786
  %v6819 = vld [vmem:[%s31] sm:$0xff]
  %v6820 = vld [vmem:[%s31 + $0x8] sm:$0xff]
  %v6821 = vld [vmem:[%s31 + $0x18] sm:$0xff]
  %v6822 = vld [vmem:[%s31 + $0x20] sm:$0xff]
  %v6823 = vld [vmem:[%s31 + $0x30] sm:$0xff]
  %v6824 = vld [vmem:[%s31 + $0x38] sm:$0xff]
  %v6825 = vld [vmem:[%s31 + $0x48] sm:$0xff]
  %v6826 = vld [vmem:[%s31 + $0x50] sm:$0xff]
  %v6827 = vld [vmem:[%s31 + $0x60] sm:$0xff]
  %v6828 = vld [vmem:[%s31 + $0x68] sm:$0xff]
  %v6829 = vld [vmem:[%s31 + $0x78] sm:$0xff]
  %v6830 = vld [vmem:[%s31 + $0x80] sm:$0xff]
  %v6831 = vld [vmem:[%s31 + $0x90] sm:$0xff]
  %v6832 = vld [vmem:[%s31 + $0x98] sm:$0xff]
  %v6833 = vld [vmem:[%s31 + $0xa8] sm:$0xff]
  %v6834 = vld [vmem:[%s31 + $0xb0] sm:$0xff]
  %v6835 = vld [vmem:[%s31 + $0xc0] sm:$0xff]
  %v6836 = vld [vmem:[%s31 + $0xc8] sm:$0xff]
  %v6837 = vld [vmem:[%s31 + $0xd8] sm:$0xff]
  %v6838 = vld [vmem:[%s31 + $0xe0] sm:$0xff]
  %v6839 = vld [vmem:[%s31 + $0xf0] sm:$0xff]
  %v6840 = vld [vmem:[%s31 + $0xf8] sm:$0xff]
  %v6841 = vld [vmem:[%s31 + $0x108] sm:$0xff]
  %v6842 = vld [vmem:[%s31 + $0x110] sm:$0xff]
  %v6843 = vld [vmem:[%s31 + $0x120] sm:$0xff]
  %v6844 = vld [vmem:[%s31 + $0x128] sm:$0xff]
  %v6845 = vld [vmem:[%s31 + $0x138] sm:$0xff]
  %v6846 = vld [vmem:[%s31 + $0x140] sm:$0xff]
  %v6847 = vld [vmem:[%s31 + $0x150] sm:$0xff]
  %v6848 = vld [vmem:[%s31 + $0x158] sm:$0xff]
  %v6849 = vld [vmem:[%s31 + $0x168] sm:$0xff]
  %v6850 = vld [vmem:[%s31 + $0x170] sm:$0xff]
  %v6851 = vsel %vm2222, %v6819, 0.0
  %v6852 = vsel %vm2222, %v6820, 0.0
  %v6853 = vsel %vm2222, %v6821, 0.0
  %v6854 = vsel %vm2222, %v6822, 0.0
  %v6855 = vsel %vm2222, %v6823, 0.0
  %v6856 = vsel %vm2222, %v6824, 0.0
  %v6857 = vsel %vm2222, %v6825, 0.0
  %v6858 = vsel %vm2222, %v6826, 0.0
  %v6859 = vsel %vm2222, %v6827, 0.0
  %v6860 = vsel %vm2222, %v6828, 0.0
  %v6861 = vsel %vm2222, %v6829, 0.0
  %v6862 = vsel %vm2222, %v6830, 0.0
  %v6863 = vsel %vm2222, %v6831, 0.0
  %v6864 = vsel %vm2222, %v6832, 0.0
  %v6865 = vsel %vm2222, %v6833, 0.0
  %v6866 = vsel %vm2222, %v6834, 0.0
  %v6867 = vsel %vm2222, %v6835, 0.0
  %v6868 = vsel %vm2222, %v6836, 0.0
  %v6869 = vsel %vm2222, %v6837, 0.0
  %v6870 = vsel %vm2222, %v6838, 0.0
  %v6871 = vsel %vm2222, %v6839, 0.0
  %v6872 = vsel %vm2222, %v6840, 0.0
  %v6873 = vsel %vm2222, %v6841, 0.0
  %v6874 = vsel %vm2222, %v6842, 0.0
  %v6875 = vsel %vm2222, %v6843, 0.0
  %v6876 = vsel %vm2222, %v6844, 0.0
  %v6877 = vsel %vm2222, %v6845, 0.0
  %v6878 = vsel %vm2222, %v6846, 0.0
  %v6879 = vsel %vm2222, %v6847, 0.0
  %v6880 = vsel %vm2222, %v6848, 0.0
  %v6881 = vsel %vm2222, %v6849, 0.0
  %v6882 = vsel %vm2222, %v6850, 0.0
  %6883 = vrot.lane.b32.xlu0 %v6851, 24
  %v6884 = vpop.permute.xlu0 %6883
  %6885 = vrot.lane.b32.xlu0 %v6852, 24
  %v6886 = vpop.permute.xlu0 %6885
  %6887 = vrot.lane.b32.xlu0 %v6853, 24
  %v6888 = vpop.permute.xlu0 %6887
  %6889 = vrot.lane.b32.xlu0 %v6854, 24
  %v6890 = vpop.permute.xlu0 %6889
  %6891 = vrot.lane.b32.xlu0 %v6855, 24
  %v6892 = vpop.permute.xlu0 %6891
  %6893 = vrot.lane.b32.xlu0 %v6856, 24
  %v6894 = vpop.permute.xlu0 %6893
  %6895 = vrot.lane.b32.xlu0 %v6857, 24
  %v6896 = vpop.permute.xlu0 %6895
  %6897 = vrot.lane.b32.xlu0 %v6858, 24
  %v6898 = vpop.permute.xlu0 %6897
  %6899 = vrot.lane.b32.xlu0 %v6859, 24
  %v6900 = vpop.permute.xlu0 %6899
  %6901 = vrot.lane.b32.xlu0 %v6860, 24
  %v6902 = vpop.permute.xlu0 %6901
  %6903 = vrot.lane.b32.xlu0 %v6861, 24
  %v6904 = vpop.permute.xlu0 %6903
  %6905 = vrot.lane.b32.xlu0 %v6862, 24
  %v6906 = vpop.permute.xlu0 %6905
  %6907 = vrot.lane.b32.xlu0 %v6863, 24
  %v6908 = vpop.permute.xlu0 %6907
  %6909 = vrot.lane.b32.xlu0 %v6864, 24
  %v6910 = vpop.permute.xlu0 %6909
  %6911 = vrot.lane.b32.xlu0 %v6865, 24
  %v6912 = vpop.permute.xlu0 %6911
  %6913 = vrot.lane.b32.xlu0 %v6866, 24
  %v6914 = vpop.permute.xlu0 %6913
  %6915 = vrot.lane.b32.xlu0 %v6867, 24
  %v6916 = vpop.permute.xlu0 %6915
  %6917 = vrot.lane.b32.xlu0 %v6868, 24
  %v6918 = vpop.permute.xlu0 %6917
  %6919 = vrot.lane.b32.xlu0 %v6869, 24
  %v6920 = vpop.permute.xlu0 %6919
  %6921 = vrot.lane.b32.xlu0 %v6870, 24
  %v6922 = vpop.permute.xlu0 %6921
  %6923 = vrot.lane.b32.xlu0 %v6871, 24
  %v6924 = vpop.permute.xlu0 %6923
  %6925 = vrot.lane.b32.xlu0 %v6872, 24
  %v6926 = vpop.permute.xlu0 %6925
  %6927 = vrot.lane.b32.xlu0 %v6873, 24
  %v6928 = vpop.permute.xlu0 %6927
  %6929 = vrot.lane.b32.xlu0 %v6874, 24
  %v6930 = vpop.permute.xlu0 %6929
  %6931 = vrot.lane.b32.xlu0 %v6875, 24
  %v6932 = vpop.permute.xlu0 %6931
  %6933 = vrot.lane.b32.xlu0 %v6876, 24
  %v6934 = vpop.permute.xlu0 %6933
  %6935 = vrot.lane.b32.xlu0 %v6877, 24
  %v6936 = vpop.permute.xlu0 %6935
  %6937 = vrot.lane.b32.xlu0 %v6878, 24
  %v6938 = vpop.permute.xlu0 %6937
  %6939 = vrot.lane.b32.xlu0 %v6879, 24
  %v6940 = vpop.permute.xlu0 %6939
  %6941 = vrot.lane.b32.xlu0 %v6880, 24
  %v6942 = vpop.permute.xlu0 %6941
  %6943 = vrot.lane.b32.xlu0 %v6881, 24
  %v6944 = vpop.permute.xlu0 %6943
  %6945 = vrot.lane.b32.xlu0 %v6882, 24
  %v6946 = vpop.permute.xlu0 %6945
  %v6947 = vadd.f32 %v6787, %v6884
  %v6948 = vadd.f32 %v6788, %v6886
  %v6949 = vadd.f32 %v6789, %v6888
  %v6950 = vadd.f32 %v6790, %v6890
  %v6951 = vadd.f32 %v6791, %v6892
  %v6952 = vadd.f32 %v6792, %v6894
  %v6953 = vadd.f32 %v6793, %v6896
  %v6954 = vadd.f32 %v6794, %v6898
  %v6955 = vadd.f32 %v6795, %v6900
  %v6956 = vadd.f32 %v6796, %v6902
  %v6957 = vadd.f32 %v6797, %v6904
  %v6958 = vadd.f32 %v6798, %v6906
  %v6959 = vadd.f32 %v6799, %v6908
  %v6960 = vadd.f32 %v6800, %v6910
  %v6961 = vadd.f32 %v6801, %v6912
  %v6962 = vadd.f32 %v6802, %v6914
  %v6963 = vadd.f32 %v6803, %v6916
  %v6964 = vadd.f32 %v6804, %v6918
  %v6965 = vadd.f32 %v6805, %v6920
  %v6966 = vadd.f32 %v6806, %v6922
  %v6967 = vadd.f32 %v6807, %v6924
  %v6968 = vadd.f32 %v6808, %v6926
  %v6969 = vadd.f32 %v6809, %v6928
  %v6970 = vadd.f32 %v6810, %v6930
  %v6971 = vadd.f32 %v6811, %v6932
  %v6972 = vadd.f32 %v6812, %v6934
  %v6973 = vadd.f32 %v6813, %v6936
  %v6974 = vadd.f32 %v6814, %v6938
  %v6975 = vadd.f32 %v6815, %v6940
  %v6976 = vadd.f32 %v6816, %v6942
  %v6977 = vadd.f32 %v6817, %v6944
  %v6978 = vadd.f32 %v6818, %v6946
  %v6979 = vld [vmem:[%s31 + $0x1] sm:$0xff]
  %v6980 = vld [vmem:[%s31 + $0x9] sm:$0xff]
  %v6981 = vld [vmem:[%s31 + $0x19] sm:$0xff]
  %v6982 = vld [vmem:[%s31 + $0x21] sm:$0xff]
  %v6983 = vld [vmem:[%s31 + $0x31] sm:$0xff]
  %v6984 = vld [vmem:[%s31 + $0x39] sm:$0xff]
  %v6985 = vld [vmem:[%s31 + $0x49] sm:$0xff]
  %v6986 = vld [vmem:[%s31 + $0x51] sm:$0xff]
  %v6987 = vld [vmem:[%s31 + $0x61] sm:$0xff]
  %v6988 = vld [vmem:[%s31 + $0x69] sm:$0xff]
  %v6989 = vld [vmem:[%s31 + $0x79] sm:$0xff]
  %v6990 = vld [vmem:[%s31 + $0x81] sm:$0xff]
  %v6991 = vld [vmem:[%s31 + $0x91] sm:$0xff]
  %v6992 = vld [vmem:[%s31 + $0x99] sm:$0xff]
  %v6993 = vld [vmem:[%s31 + $0xa9] sm:$0xff]
  %v6994 = vld [vmem:[%s31 + $0xb1] sm:$0xff]
  %v6995 = vld [vmem:[%s31 + $0xc1] sm:$0xff]
  %v6996 = vld [vmem:[%s31 + $0xc9] sm:$0xff]
  %v6997 = vld [vmem:[%s31 + $0xd9] sm:$0xff]
  %v6998 = vld [vmem:[%s31 + $0xe1] sm:$0xff]
  %v6999 = vld [vmem:[%s31 + $0xf1] sm:$0xff]
  %v7000 = vld [vmem:[%s31 + $0xf9] sm:$0xff]
  %v7001 = vld [vmem:[%s31 + $0x109] sm:$0xff]
  %v7002 = vld [vmem:[%s31 + $0x111] sm:$0xff]
  %v7003 = vld [vmem:[%s31 + $0x121] sm:$0xff]
  %v7004 = vld [vmem:[%s31 + $0x129] sm:$0xff]
  %v7005 = vld [vmem:[%s31 + $0x139] sm:$0xff]
  %v7006 = vld [vmem:[%s31 + $0x141] sm:$0xff]
  %v7007 = vld [vmem:[%s31 + $0x151] sm:$0xff]
  %v7008 = vld [vmem:[%s31 + $0x159] sm:$0xff]
  %v7009 = vld [vmem:[%s31 + $0x169] sm:$0xff]
  %v7010 = vld [vmem:[%s31 + $0x171] sm:$0xff]
  %v7011 = vsel %vm2222, %v6979, 0.0
  %v7012 = vsel %vm2222, %v6980, 0.0
  %v7013 = vsel %vm2222, %v6981, 0.0
  %v7014 = vsel %vm2222, %v6982, 0.0
  %v7015 = vsel %vm2222, %v6983, 0.0
  %v7016 = vsel %vm2222, %v6984, 0.0
  %v7017 = vsel %vm2222, %v6985, 0.0
  %v7018 = vsel %vm2222, %v6986, 0.0
  %v7019 = vsel %vm2222, %v6987, 0.0
  %v7020 = vsel %vm2222, %v6988, 0.0
  %v7021 = vsel %vm2222, %v6989, 0.0
  %v7022 = vsel %vm2222, %v6990, 0.0
  %v7023 = vsel %vm2222, %v6991, 0.0
  %v7024 = vsel %vm2222, %v6992, 0.0
  %v7025 = vsel %vm2222, %v6993, 0.0
  %v7026 = vsel %vm2222, %v6994, 0.0
  %v7027 = vsel %vm2222, %v6995, 0.0
  %v7028 = vsel %vm2222, %v6996, 0.0
  %v7029 = vsel %vm2222, %v6997, 0.0
  %v7030 = vsel %vm2222, %v6998, 0.0
  %v7031 = vsel %vm2222, %v6999, 0.0
  %v7032 = vsel %vm2222, %v7000, 0.0
  %v7033 = vsel %vm2222, %v7001, 0.0
  %v7034 = vsel %vm2222, %v7002, 0.0
  %v7035 = vsel %vm2222, %v7003, 0.0
  %v7036 = vsel %vm2222, %v7004, 0.0
  %v7037 = vsel %vm2222, %v7005, 0.0
  %v7038 = vsel %vm2222, %v7006, 0.0
  %v7039 = vsel %vm2222, %v7007, 0.0
  %v7040 = vsel %vm2222, %v7008, 0.0
  %v7041 = vsel %vm2222, %v7009, 0.0
  %v7042 = vsel %vm2222, %v7010, 0.0
  %7043 = vrot.lane.b32.xlu0 %v7011, 32
  %v7044 = vpop.permute.xlu0 %7043
  %7045 = vrot.lane.b32.xlu0 %v7012, 32
  %v7046 = vpop.permute.xlu0 %7045
  %7047 = vrot.lane.b32.xlu0 %v7013, 32
  %v7048 = vpop.permute.xlu0 %7047
  %7049 = vrot.lane.b32.xlu0 %v7014, 32
  %v7050 = vpop.permute.xlu0 %7049
  %7051 = vrot.lane.b32.xlu0 %v7015, 32
  %v7052 = vpop.permute.xlu0 %7051
  %7053 = vrot.lane.b32.xlu0 %v7016, 32
  %v7054 = vpop.permute.xlu0 %7053
  %7055 = vrot.lane.b32.xlu0 %v7017, 32
  %v7056 = vpop.permute.xlu0 %7055
  %7057 = vrot.lane.b32.xlu0 %v7018, 32
  %v7058 = vpop.permute.xlu0 %7057
  %7059 = vrot.lane.b32.xlu0 %v7019, 32
  %v7060 = vpop.permute.xlu0 %7059
  %7061 = vrot.lane.b32.xlu0 %v7020, 32
  %v7062 = vpop.permute.xlu0 %7061
  %7063 = vrot.lane.b32.xlu0 %v7021, 32
  %v7064 = vpop.permute.xlu0 %7063
  %7065 = vrot.lane.b32.xlu0 %v7022, 32
  %v7066 = vpop.permute.xlu0 %7065
  %7067 = vrot.lane.b32.xlu0 %v7023, 32
  %v7068 = vpop.permute.xlu0 %7067
  %7069 = vrot.lane.b32.xlu0 %v7024, 32
  %v7070 = vpop.permute.xlu0 %7069
  %7071 = vrot.lane.b32.xlu0 %v7025, 32
  %v7072 = vpop.permute.xlu0 %7071
  %7073 = vrot.lane.b32.xlu0 %v7026, 32
  %v7074 = vpop.permute.xlu0 %7073
  %7075 = vrot.lane.b32.xlu0 %v7027, 32
  %v7076 = vpop.permute.xlu0 %7075
  %7077 = vrot.lane.b32.xlu0 %v7028, 32
  %v7078 = vpop.permute.xlu0 %7077
  %7079 = vrot.lane.b32.xlu0 %v7029, 32
  %v7080 = vpop.permute.xlu0 %7079
  %7081 = vrot.lane.b32.xlu0 %v7030, 32
  %v7082 = vpop.permute.xlu0 %7081
  %7083 = vrot.lane.b32.xlu0 %v7031, 32
  %v7084 = vpop.permute.xlu0 %7083
  %7085 = vrot.lane.b32.xlu0 %v7032, 32
  %v7086 = vpop.permute.xlu0 %7085
  %7087 = vrot.lane.b32.xlu0 %v7033, 32
  %v7088 = vpop.permute.xlu0 %7087
  %7089 = vrot.lane.b32.xlu0 %v7034, 32
  %v7090 = vpop.permute.xlu0 %7089
  %7091 = vrot.lane.b32.xlu0 %v7035, 32
  %v7092 = vpop.permute.xlu0 %7091
  %7093 = vrot.lane.b32.xlu0 %v7036, 32
  %v7094 = vpop.permute.xlu0 %7093
  %7095 = vrot.lane.b32.xlu0 %v7037, 32
  %v7096 = vpop.permute.xlu0 %7095
  %7097 = vrot.lane.b32.xlu0 %v7038, 32
  %v7098 = vpop.permute.xlu0 %7097
  %7099 = vrot.lane.b32.xlu0 %v7039, 32
  %v7100 = vpop.permute.xlu0 %7099
  %7101 = vrot.lane.b32.xlu0 %v7040, 32
  %v7102 = vpop.permute.xlu0 %7101
  %7103 = vrot.lane.b32.xlu0 %v7041, 32
  %v7104 = vpop.permute.xlu0 %7103
  %7105 = vrot.lane.b32.xlu0 %v7042, 32
  %v7106 = vpop.permute.xlu0 %7105
  %v7107 = vadd.f32 %v6947, %v7044
  %v7108 = vadd.f32 %v6948, %v7046
  %v7109 = vadd.f32 %v6949, %v7048
  %v7110 = vadd.f32 %v6950, %v7050
  %v7111 = vadd.f32 %v6951, %v7052
  %v7112 = vadd.f32 %v6952, %v7054
  %v7113 = vadd.f32 %v6953, %v7056
  %v7114 = vadd.f32 %v6954, %v7058
  %v7115 = vadd.f32 %v6955, %v7060
  %v7116 = vadd.f32 %v6956, %v7062
  %v7117 = vadd.f32 %v6957, %v7064
  %v7118 = vadd.f32 %v6958, %v7066
  %v7119 = vadd.f32 %v6959, %v7068
  %v7120 = vadd.f32 %v6960, %v7070
  %v7121 = vadd.f32 %v6961, %v7072
  %v7122 = vadd.f32 %v6962, %v7074
  %v7123 = vadd.f32 %v6963, %v7076
  %v7124 = vadd.f32 %v6964, %v7078
  %v7125 = vadd.f32 %v6965, %v7080
  %v7126 = vadd.f32 %v6966, %v7082
  %v7127 = vadd.f32 %v6967, %v7084
  %v7128 = vadd.f32 %v6968, %v7086
  %v7129 = vadd.f32 %v6969, %v7088
  %v7130 = vadd.f32 %v6970, %v7090
  %v7131 = vadd.f32 %v6971, %v7092
  %v7132 = vadd.f32 %v6972, %v7094
  %v7133 = vadd.f32 %v6973, %v7096
  %v7134 = vadd.f32 %v6974, %v7098
  %v7135 = vadd.f32 %v6975, %v7100
  %v7136 = vadd.f32 %v6976, %v7102
  %v7137 = vadd.f32 %v6977, %v7104
  %v7138 = vadd.f32 %v6978, %v7106
  %v7139 = vld [vmem:[%s31 + $0x2] sm:$0xff]
  %v7140 = vld [vmem:[%s31 + $0xa] sm:$0xff]
  %v7141 = vld [vmem:[%s31 + $0x1a] sm:$0xff]
  %v7142 = vld [vmem:[%s31 + $0x22] sm:$0xff]
  %v7143 = vld [vmem:[%s31 + $0x32] sm:$0xff]
  %v7144 = vld [vmem:[%s31 + $0x3a] sm:$0xff]
  %v7145 = vld [vmem:[%s31 + $0x4a] sm:$0xff]
  %v7146 = vld [vmem:[%s31 + $0x52] sm:$0xff]
  %v7147 = vld [vmem:[%s31 + $0x62] sm:$0xff]
  %v7148 = vld [vmem:[%s31 + $0x6a] sm:$0xff]
  %v7149 = vld [vmem:[%s31 + $0x7a] sm:$0xff]
  %v7150 = vld [vmem:[%s31 + $0x82] sm:$0xff]
  %v7151 = vld [vmem:[%s31 + $0x92] sm:$0xff]
  %v7152 = vld [vmem:[%s31 + $0x9a] sm:$0xff]
  %v7153 = vld [vmem:[%s31 + $0xaa] sm:$0xff]
  %v7154 = vld [vmem:[%s31 + $0xb2] sm:$0xff]
  %v7155 = vld [vmem:[%s31 + $0xc2] sm:$0xff]
  %v7156 = vld [vmem:[%s31 + $0xca] sm:$0xff]
  %v7157 = vld [vmem:[%s31 + $0xda] sm:$0xff]
  %v7158 = vld [vmem:[%s31 + $0xe2] sm:$0xff]
  %v7159 = vld [vmem:[%s31 + $0xf2] sm:$0xff]
  %v7160 = vld [vmem:[%s31 + $0xfa] sm:$0xff]
  %v7161 = vld [vmem:[%s31 + $0x10a] sm:$0xff]
  %v7162 = vld [vmem:[%s31 + $0x112] sm:$0xff]
  %v7163 = vld [vmem:[%s31 + $0x122] sm:$0xff]
  %v7164 = vld [vmem:[%s31 + $0x12a] sm:$0xff]
  %v7165 = vld [vmem:[%s31 + $0x13a] sm:$0xff]
  %v7166 = vld [vmem:[%s31 + $0x142] sm:$0xff]
  %v7167 = vld [vmem:[%s31 + $0x152] sm:$0xff]
  %v7168 = vld [vmem:[%s31 + $0x15a] sm:$0xff]
  %v7169 = vld [vmem:[%s31 + $0x16a] sm:$0xff]
  %v7170 = vld [vmem:[%s31 + $0x172] sm:$0xff]
  %v7171 = vsel %vm2222, %v7139, 0.0
  %v7172 = vsel %vm2222, %v7140, 0.0
  %v7173 = vsel %vm2222, %v7141, 0.0
  %v7174 = vsel %vm2222, %v7142, 0.0
  %v7175 = vsel %vm2222, %v7143, 0.0
  %v7176 = vsel %vm2222, %v7144, 0.0
  %v7177 = vsel %vm2222, %v7145, 0.0
  %v7178 = vsel %vm2222, %v7146, 0.0
  %v7179 = vsel %vm2222, %v7147, 0.0
  %v7180 = vsel %vm2222, %v7148, 0.0
  %v7181 = vsel %vm2222, %v7149, 0.0
  %v7182 = vsel %vm2222, %v7150, 0.0
  %v7183 = vsel %vm2222, %v7151, 0.0
  %v7184 = vsel %vm2222, %v7152, 0.0
  %v7185 = vsel %vm2222, %v7153, 0.0
  %v7186 = vsel %vm2222, %v7154, 0.0
  %v7187 = vsel %vm2222, %v7155, 0.0
  %v7188 = vsel %vm2222, %v7156, 0.0
  %v7189 = vsel %vm2222, %v7157, 0.0
  %v7190 = vsel %vm2222, %v7158, 0.0
  %v7191 = vsel %vm2222, %v7159, 0.0
  %v7192 = vsel %vm2222, %v7160, 0.0
  %v7193 = vsel %vm2222, %v7161, 0.0
  %v7194 = vsel %vm2222, %v7162, 0.0
  %v7195 = vsel %vm2222, %v7163, 0.0
  %v7196 = vsel %vm2222, %v7164, 0.0
  %v7197 = vsel %vm2222, %v7165, 0.0
  %v7198 = vsel %vm2222, %v7166, 0.0
  %v7199 = vsel %vm2222, %v7167, 0.0
  %v7200 = vsel %vm2222, %v7168, 0.0
  %v7201 = vsel %vm2222, %v7169, 0.0
  %v7202 = vsel %vm2222, %v7170, 0.0
  %7203 = vrot.lane.b32.xlu0 %v7171, 40
  %v7204 = vpop.permute.xlu0 %7203
  %7205 = vrot.lane.b32.xlu0 %v7172, 40
  %v7206 = vpop.permute.xlu0 %7205
  %7207 = vrot.lane.b32.xlu0 %v7173, 40
  %v7208 = vpop.permute.xlu0 %7207
  %7209 = vrot.lane.b32.xlu0 %v7174, 40
  %v7210 = vpop.permute.xlu0 %7209
  %7211 = vrot.lane.b32.xlu0 %v7175, 40
  %v7212 = vpop.permute.xlu0 %7211
  %7213 = vrot.lane.b32.xlu0 %v7176, 40
  %v7214 = vpop.permute.xlu0 %7213
  %7215 = vrot.lane.b32.xlu0 %v7177, 40
  %v7216 = vpop.permute.xlu0 %7215
  %7217 = vrot.lane.b32.xlu0 %v7178, 40
  %v7218 = vpop.permute.xlu0 %7217
  %7219 = vrot.lane.b32.xlu0 %v7179, 40
  %v7220 = vpop.permute.xlu0 %7219
  %7221 = vrot.lane.b32.xlu0 %v7180, 40
  %v7222 = vpop.permute.xlu0 %7221
  %7223 = vrot.lane.b32.xlu0 %v7181, 40
  %v7224 = vpop.permute.xlu0 %7223
  %7225 = vrot.lane.b32.xlu0 %v7182, 40
  %v7226 = vpop.permute.xlu0 %7225
  %7227 = vrot.lane.b32.xlu0 %v7183, 40
  %v7228 = vpop.permute.xlu0 %7227
  %7229 = vrot.lane.b32.xlu0 %v7184, 40
  %v7230 = vpop.permute.xlu0 %7229
  %7231 = vrot.lane.b32.xlu0 %v7185, 40
  %v7232 = vpop.permute.xlu0 %7231
  %7233 = vrot.lane.b32.xlu0 %v7186, 40
  %v7234 = vpop.permute.xlu0 %7233
  %7235 = vrot.lane.b32.xlu0 %v7187, 40
  %v7236 = vpop.permute.xlu0 %7235
  %7237 = vrot.lane.b32.xlu0 %v7188, 40
  %v7238 = vpop.permute.xlu0 %7237
  %7239 = vrot.lane.b32.xlu0 %v7189, 40
  %v7240 = vpop.permute.xlu0 %7239
  %7241 = vrot.lane.b32.xlu0 %v7190, 40
  %v7242 = vpop.permute.xlu0 %7241
  %7243 = vrot.lane.b32.xlu0 %v7191, 40
  %v7244 = vpop.permute.xlu0 %7243
  %7245 = vrot.lane.b32.xlu0 %v7192, 40
  %v7246 = vpop.permute.xlu0 %7245
  %7247 = vrot.lane.b32.xlu0 %v7193, 40
  %v7248 = vpop.permute.xlu0 %7247
  %7249 = vrot.lane.b32.xlu0 %v7194, 40
  %v7250 = vpop.permute.xlu0 %7249
  %7251 = vrot.lane.b32.xlu0 %v7195, 40
  %v7252 = vpop.permute.xlu0 %7251
  %7253 = vrot.lane.b32.xlu0 %v7196, 40
  %v7254 = vpop.permute.xlu0 %7253
  %7255 = vrot.lane.b32.xlu0 %v7197, 40
  %v7256 = vpop.permute.xlu0 %7255
  %7257 = vrot.lane.b32.xlu0 %v7198, 40
  %v7258 = vpop.permute.xlu0 %7257
  %7259 = vrot.lane.b32.xlu0 %v7199, 40
  %v7260 = vpop.permute.xlu0 %7259
  %7261 = vrot.lane.b32.xlu0 %v7200, 40
  %v7262 = vpop.permute.xlu0 %7261
  %7263 = vrot.lane.b32.xlu0 %v7201, 40
  %v7264 = vpop.permute.xlu0 %7263
  %7265 = vrot.lane.b32.xlu0 %v7202, 40
  %v7266 = vpop.permute.xlu0 %7265
  %v7267 = vadd.f32 %v7107, %v7204
  %v7268 = vadd.f32 %v7108, %v7206
  %v7269 = vadd.f32 %v7109, %v7208
  %v7270 = vadd.f32 %v7110, %v7210
  %v7271 = vadd.f32 %v7111, %v7212
  %v7272 = vadd.f32 %v7112, %v7214
  %v7273 = vadd.f32 %v7113, %v7216
  %v7274 = vadd.f32 %v7114, %v7218
  %v7275 = vadd.f32 %v7115, %v7220
  %v7276 = vadd.f32 %v7116, %v7222
  %v7277 = vadd.f32 %v7117, %v7224
  %v7278 = vadd.f32 %v7118, %v7226
  %v7279 = vadd.f32 %v7119, %v7228
  %v7280 = vadd.f32 %v7120, %v7230
  %v7281 = vadd.f32 %v7121, %v7232
  %v7282 = vadd.f32 %v7122, %v7234
  %v7283 = vadd.f32 %v7123, %v7236
  %v7284 = vadd.f32 %v7124, %v7238
  %v7285 = vadd.f32 %v7125, %v7240
  %v7286 = vadd.f32 %v7126, %v7242
  %v7287 = vadd.f32 %v7127, %v7244
  %v7288 = vadd.f32 %v7128, %v7246
  %v7289 = vadd.f32 %v7129, %v7248
  %v7290 = vadd.f32 %v7130, %v7250
  %v7291 = vadd.f32 %v7131, %v7252
  %v7292 = vadd.f32 %v7132, %v7254
  %v7293 = vadd.f32 %v7133, %v7256
  %v7294 = vadd.f32 %v7134, %v7258
  %v7295 = vadd.f32 %v7135, %v7260
  %v7296 = vadd.f32 %v7136, %v7262
  %v7297 = vadd.f32 %v7137, %v7264
  %v7298 = vadd.f32 %v7138, %v7266
  %v7299 = vld [vmem:[%s996] sm:$0xff]
  %v7300 = vld [vmem:[%s996 + $0x8] sm:$0xff]
  %v7301 = vld [vmem:[%s996 + $0x18] sm:$0xff]
  %v7302 = vld [vmem:[%s996 + $0x20] sm:$0xff]
  %v7303 = vld [vmem:[%s996 + $0x30] sm:$0xff]
  %v7304 = vld [vmem:[%s996 + $0x38] sm:$0xff]
  %v7305 = vld [vmem:[%s996 + $0x48] sm:$0xff]
  %v7306 = vld [vmem:[%s996 + $0x50] sm:$0xff]
  %v7307 = vld [vmem:[%s996 + $0x60] sm:$0xff]
  %v7308 = vld [vmem:[%s996 + $0x68] sm:$0xff]
  %v7309 = vld [vmem:[%s996 + $0x78] sm:$0xff]
  %v7310 = vld [vmem:[%s996 + $0x80] sm:$0xff]
  %v7311 = vld [vmem:[%s996 + $0x90] sm:$0xff]
  %v7312 = vld [vmem:[%s996 + $0x98] sm:$0xff]
  %v7313 = vld [vmem:[%s996 + $0xa8] sm:$0xff]
  %v7314 = vld [vmem:[%s996 + $0xb0] sm:$0xff]
  %v7315 = vld [vmem:[%s996 + $0xc0] sm:$0xff]
  %v7316 = vld [vmem:[%s996 + $0xc8] sm:$0xff]
  %v7317 = vld [vmem:[%s996 + $0xd8] sm:$0xff]
  %v7318 = vld [vmem:[%s996 + $0xe0] sm:$0xff]
  %v7319 = vld [vmem:[%s996 + $0xf0] sm:$0xff]
  %v7320 = vld [vmem:[%s996 + $0xf8] sm:$0xff]
  %v7321 = vld [vmem:[%s996 + $0x108] sm:$0xff]
  %v7322 = vld [vmem:[%s996 + $0x110] sm:$0xff]
  %v7323 = vld [vmem:[%s996 + $0x120] sm:$0xff]
  %v7324 = vld [vmem:[%s996 + $0x128] sm:$0xff]
  %v7325 = vld [vmem:[%s996 + $0x138] sm:$0xff]
  %v7326 = vld [vmem:[%s996 + $0x140] sm:$0xff]
  %v7327 = vld [vmem:[%s996 + $0x150] sm:$0xff]
  %v7328 = vld [vmem:[%s996 + $0x158] sm:$0xff]
  %v7329 = vld [vmem:[%s996 + $0x168] sm:$0xff]
  %v7330 = vld [vmem:[%s996 + $0x170] sm:$0xff]
  %v7331 = vsel %vm2222, %v7299, 0.0
  %v7332 = vsel %vm2222, %v7300, 0.0
  %v7333 = vsel %vm2222, %v7301, 0.0
  %v7334 = vsel %vm2222, %v7302, 0.0
  %v7335 = vsel %vm2222, %v7303, 0.0
  %v7336 = vsel %vm2222, %v7304, 0.0
  %v7337 = vsel %vm2222, %v7305, 0.0
  %v7338 = vsel %vm2222, %v7306, 0.0
  %v7339 = vsel %vm2222, %v7307, 0.0
  %v7340 = vsel %vm2222, %v7308, 0.0
  %v7341 = vsel %vm2222, %v7309, 0.0
  %v7342 = vsel %vm2222, %v7310, 0.0
  %v7343 = vsel %vm2222, %v7311, 0.0
  %v7344 = vsel %vm2222, %v7312, 0.0
  %v7345 = vsel %vm2222, %v7313, 0.0
  %v7346 = vsel %vm2222, %v7314, 0.0
  %v7347 = vsel %vm2222, %v7315, 0.0
  %v7348 = vsel %vm2222, %v7316, 0.0
  %v7349 = vsel %vm2222, %v7317, 0.0
  %v7350 = vsel %vm2222, %v7318, 0.0
  %v7351 = vsel %vm2222, %v7319, 0.0
  %v7352 = vsel %vm2222, %v7320, 0.0
  %v7353 = vsel %vm2222, %v7321, 0.0
  %v7354 = vsel %vm2222, %v7322, 0.0
  %v7355 = vsel %vm2222, %v7323, 0.0
  %v7356 = vsel %vm2222, %v7324, 0.0
  %v7357 = vsel %vm2222, %v7325, 0.0
  %v7358 = vsel %vm2222, %v7326, 0.0
  %v7359 = vsel %vm2222, %v7327, 0.0
  %v7360 = vsel %vm2222, %v7328, 0.0
  %v7361 = vsel %vm2222, %v7329, 0.0
  %v7362 = vsel %vm2222, %v7330, 0.0
  %7363 = vrot.lane.b32.xlu0 %v7331, 48
  %v7364 = vpop.permute.xlu0 %7363
  %7365 = vrot.lane.b32.xlu0 %v7332, 48
  %v7366 = vpop.permute.xlu0 %7365
  %7367 = vrot.lane.b32.xlu0 %v7333, 48
  %v7368 = vpop.permute.xlu0 %7367
  %7369 = vrot.lane.b32.xlu0 %v7334, 48
  %v7370 = vpop.permute.xlu0 %7369
  %7371 = vrot.lane.b32.xlu0 %v7335, 48
  %v7372 = vpop.permute.xlu0 %7371
  %7373 = vrot.lane.b32.xlu0 %v7336, 48
  %v7374 = vpop.permute.xlu0 %7373
  %7375 = vrot.lane.b32.xlu0 %v7337, 48
  %v7376 = vpop.permute.xlu0 %7375
  %7377 = vrot.lane.b32.xlu0 %v7338, 48
  %v7378 = vpop.permute.xlu0 %7377
  %7379 = vrot.lane.b32.xlu0 %v7339, 48
  %v7380 = vpop.permute.xlu0 %7379
  %7381 = vrot.lane.b32.xlu0 %v7340, 48
  %v7382 = vpop.permute.xlu0 %7381
  %7383 = vrot.lane.b32.xlu0 %v7341, 48
  %v7384 = vpop.permute.xlu0 %7383
  %7385 = vrot.lane.b32.xlu0 %v7342, 48
  %v7386 = vpop.permute.xlu0 %7385
  %7387 = vrot.lane.b32.xlu0 %v7343, 48
  %v7388 = vpop.permute.xlu0 %7387
  %7389 = vrot.lane.b32.xlu0 %v7344, 48
  %v7390 = vpop.permute.xlu0 %7389
  %7391 = vrot.lane.b32.xlu0 %v7345, 48
  %v7392 = vpop.permute.xlu0 %7391
  %7393 = vrot.lane.b32.xlu0 %v7346, 48
  %v7394 = vpop.permute.xlu0 %7393
  %7395 = vrot.lane.b32.xlu0 %v7347, 48
  %v7396 = vpop.permute.xlu0 %7395
  %7397 = vrot.lane.b32.xlu0 %v7348, 48
  %v7398 = vpop.permute.xlu0 %7397
  %7399 = vrot.lane.b32.xlu0 %v7349, 48
  %v7400 = vpop.permute.xlu0 %7399
  %7401 = vrot.lane.b32.xlu0 %v7350, 48
  %v7402 = vpop.permute.xlu0 %7401
  %7403 = vrot.lane.b32.xlu0 %v7351, 48
  %v7404 = vpop.permute.xlu0 %7403
  %7405 = vrot.lane.b32.xlu0 %v7352, 48
  %v7406 = vpop.permute.xlu0 %7405
  %7407 = vrot.lane.b32.xlu0 %v7353, 48
  %v7408 = vpop.permute.xlu0 %7407
  %7409 = vrot.lane.b32.xlu0 %v7354, 48
  %v7410 = vpop.permute.xlu0 %7409
  %7411 = vrot.lane.b32.xlu0 %v7355, 48
  %v7412 = vpop.permute.xlu0 %7411
  %7413 = vrot.lane.b32.xlu0 %v7356, 48
  %v7414 = vpop.permute.xlu0 %7413
  %7415 = vrot.lane.b32.xlu0 %v7357, 48
  %v7416 = vpop.permute.xlu0 %7415
  %7417 = vrot.lane.b32.xlu0 %v7358, 48
  %v7418 = vpop.permute.xlu0 %7417
  %7419 = vrot.lane.b32.xlu0 %v7359, 48
  %v7420 = vpop.permute.xlu0 %7419
  %7421 = vrot.lane.b32.xlu0 %v7360, 48
  %v7422 = vpop.permute.xlu0 %7421
  %7423 = vrot.lane.b32.xlu0 %v7361, 48
  %v7424 = vpop.permute.xlu0 %7423
  %7425 = vrot.lane.b32.xlu0 %v7362, 48
  %v7426 = vpop.permute.xlu0 %7425
  %v7427 = vadd.f32 %v7267, %v7364
  %v7428 = vadd.f32 %v7268, %v7366
  %v7429 = vadd.f32 %v7269, %v7368
  %v7430 = vadd.f32 %v7270, %v7370
  %v7431 = vadd.f32 %v7271, %v7372
  %v7432 = vadd.f32 %v7272, %v7374
  %v7433 = vadd.f32 %v7273, %v7376
  %v7434 = vadd.f32 %v7274, %v7378
  %v7435 = vadd.f32 %v7275, %v7380
  %v7436 = vadd.f32 %v7276, %v7382
  %v7437 = vadd.f32 %v7277, %v7384
  %v7438 = vadd.f32 %v7278, %v7386
  %v7439 = vadd.f32 %v7279, %v7388
  %v7440 = vadd.f32 %v7280, %v7390
  %v7441 = vadd.f32 %v7281, %v7392
  %v7442 = vadd.f32 %v7282, %v7394
  %v7443 = vadd.f32 %v7283, %v7396
  %v7444 = vadd.f32 %v7284, %v7398
  %v7445 = vadd.f32 %v7285, %v7400
  %v7446 = vadd.f32 %v7286, %v7402
  %v7447 = vadd.f32 %v7287, %v7404
  %v7448 = vadd.f32 %v7288, %v7406
  %v7449 = vadd.f32 %v7289, %v7408
  %v7450 = vadd.f32 %v7290, %v7410
  %v7451 = vadd.f32 %v7291, %v7412
  %v7452 = vadd.f32 %v7292, %v7414
  %v7453 = vadd.f32 %v7293, %v7416
  %v7454 = vadd.f32 %v7294, %v7418
  %v7455 = vadd.f32 %v7295, %v7420
  %v7456 = vadd.f32 %v7296, %v7422
  %v7457 = vadd.f32 %v7297, %v7424
  %v7458 = vadd.f32 %v7298, %v7426
  %v7459 = vld [vmem:[%s996 + $0x1] sm:$0xff]
  %v7460 = vld [vmem:[%s996 + $0x9] sm:$0xff]
  %v7461 = vld [vmem:[%s996 + $0x19] sm:$0xff]
  %v7462 = vld [vmem:[%s996 + $0x21] sm:$0xff]
  %v7463 = vld [vmem:[%s996 + $0x31] sm:$0xff]
  %v7464 = vld [vmem:[%s996 + $0x39] sm:$0xff]
  %v7465 = vld [vmem:[%s996 + $0x49] sm:$0xff]
  %v7466 = vld [vmem:[%s996 + $0x51] sm:$0xff]
  %v7467 = vld [vmem:[%s996 + $0x61] sm:$0xff]
  %v7468 = vld [vmem:[%s996 + $0x69] sm:$0xff]
  %v7469 = vld [vmem:[%s996 + $0x79] sm:$0xff]
  %v7470 = vld [vmem:[%s996 + $0x81] sm:$0xff]
  %v7471 = vld [vmem:[%s996 + $0x91] sm:$0xff]
  %v7472 = vld [vmem:[%s996 + $0x99] sm:$0xff]
  %v7473 = vld [vmem:[%s996 + $0xa9] sm:$0xff]
  %v7474 = vld [vmem:[%s996 + $0xb1] sm:$0xff]
  %v7475 = vld [vmem:[%s996 + $0xc1] sm:$0xff]
  %v7476 = vld [vmem:[%s996 + $0xc9] sm:$0xff]
  %v7477 = vld [vmem:[%s996 + $0xd9] sm:$0xff]
  %v7478 = vld [vmem:[%s996 + $0xe1] sm:$0xff]
  %v7479 = vld [vmem:[%s996 + $0xf1] sm:$0xff]
  %v7480 = vld [vmem:[%s996 + $0xf9] sm:$0xff]
  %v7481 = vld [vmem:[%s996 + $0x109] sm:$0xff]
  %v7482 = vld [vmem:[%s996 + $0x111] sm:$0xff]
  %v7483 = vld [vmem:[%s996 + $0x121] sm:$0xff]
  %v7484 = vld [vmem:[%s996 + $0x129] sm:$0xff]
  %v7485 = vld [vmem:[%s996 + $0x139] sm:$0xff]
  %v7486 = vld [vmem:[%s996 + $0x141] sm:$0xff]
  %v7487 = vld [vmem:[%s996 + $0x151] sm:$0xff]
  %v7488 = vld [vmem:[%s996 + $0x159] sm:$0xff]
  %v7489 = vld [vmem:[%s996 + $0x169] sm:$0xff]
  %v7490 = vld [vmem:[%s996 + $0x171] sm:$0xff]
  %v7491 = vsel %vm2222, %v7459, 0.0
  %v7492 = vsel %vm2222, %v7460, 0.0
  %v7493 = vsel %vm2222, %v7461, 0.0
  %v7494 = vsel %vm2222, %v7462, 0.0
  %v7495 = vsel %vm2222, %v7463, 0.0
  %v7496 = vsel %vm2222, %v7464, 0.0
  %v7497 = vsel %vm2222, %v7465, 0.0
  %v7498 = vsel %vm2222, %v7466, 0.0
  %v7499 = vsel %vm2222, %v7467, 0.0
  %v7500 = vsel %vm2222, %v7468, 0.0
  %v7501 = vsel %vm2222, %v7469, 0.0
  %v7502 = vsel %vm2222, %v7470, 0.0
  %v7503 = vsel %vm2222, %v7471, 0.0
  %v7504 = vsel %vm2222, %v7472, 0.0
  %v7505 = vsel %vm2222, %v7473, 0.0
  %v7506 = vsel %vm2222, %v7474, 0.0
  %v7507 = vsel %vm2222, %v7475, 0.0
  %v7508 = vsel %vm2222, %v7476, 0.0
  %v7509 = vsel %vm2222, %v7477, 0.0
  %v7510 = vsel %vm2222, %v7478, 0.0
  %v7511 = vsel %vm2222, %v7479, 0.0
  %v7512 = vsel %vm2222, %v7480, 0.0
  %v7513 = vsel %vm2222, %v7481, 0.0
  %v7514 = vsel %vm2222, %v7482, 0.0
  %v7515 = vsel %vm2222, %v7483, 0.0
  %v7516 = vsel %vm2222, %v7484, 0.0
  %v7517 = vsel %vm2222, %v7485, 0.0
  %v7518 = vsel %vm2222, %v7486, 0.0
  %v7519 = vsel %vm2222, %v7487, 0.0
  %v7520 = vsel %vm2222, %v7488, 0.0
  %v7521 = vsel %vm2222, %v7489, 0.0
  %v7522 = vsel %vm2222, %v7490, 0.0
  %7523 = vrot.lane.b32.xlu0 %v7491, 56
  %v7524 = vpop.permute.xlu0 %7523
  %7525 = vrot.lane.b32.xlu0 %v7492, 56
  %v7526 = vpop.permute.xlu0 %7525
  %7527 = vrot.lane.b32.xlu0 %v7493, 56
  %v7528 = vpop.permute.xlu0 %7527
  %7529 = vrot.lane.b32.xlu0 %v7494, 56
  %v7530 = vpop.permute.xlu0 %7529
  %7531 = vrot.lane.b32.xlu0 %v7495, 56
  %v7532 = vpop.permute.xlu0 %7531
  %7533 = vrot.lane.b32.xlu0 %v7496, 56
  %v7534 = vpop.permute.xlu0 %7533
  %7535 = vrot.lane.b32.xlu0 %v7497, 56
  %v7536 = vpop.permute.xlu0 %7535
  %7537 = vrot.lane.b32.xlu0 %v7498, 56
  %v7538 = vpop.permute.xlu0 %7537
  %7539 = vrot.lane.b32.xlu0 %v7499, 56
  %v7540 = vpop.permute.xlu0 %7539
  %7541 = vrot.lane.b32.xlu0 %v7500, 56
  %v7542 = vpop.permute.xlu0 %7541
  %7543 = vrot.lane.b32.xlu0 %v7501, 56
  %v7544 = vpop.permute.xlu0 %7543
  %7545 = vrot.lane.b32.xlu0 %v7502, 56
  %v7546 = vpop.permute.xlu0 %7545
  %7547 = vrot.lane.b32.xlu0 %v7503, 56
  %v7548 = vpop.permute.xlu0 %7547
  %7549 = vrot.lane.b32.xlu0 %v7504, 56
  %v7550 = vpop.permute.xlu0 %7549
  %7551 = vrot.lane.b32.xlu0 %v7505, 56
  %v7552 = vpop.permute.xlu0 %7551
  %7553 = vrot.lane.b32.xlu0 %v7506, 56
  %v7554 = vpop.permute.xlu0 %7553
  %7555 = vrot.lane.b32.xlu0 %v7507, 56
  %v7556 = vpop.permute.xlu0 %7555
  %7557 = vrot.lane.b32.xlu0 %v7508, 56
  %v7558 = vpop.permute.xlu0 %7557
  %7559 = vrot.lane.b32.xlu0 %v7509, 56
  %v7560 = vpop.permute.xlu0 %7559
  %7561 = vrot.lane.b32.xlu0 %v7510, 56
  %v7562 = vpop.permute.xlu0 %7561
  %7563 = vrot.lane.b32.xlu0 %v7511, 56
  %v7564 = vpop.permute.xlu0 %7563
  %7565 = vrot.lane.b32.xlu0 %v7512, 56
  %v7566 = vpop.permute.xlu0 %7565
  %7567 = vrot.lane.b32.xlu0 %v7513, 56
  %v7568 = vpop.permute.xlu0 %7567
  %7569 = vrot.lane.b32.xlu0 %v7514, 56
  %v7570 = vpop.permute.xlu0 %7569
  %7571 = vrot.lane.b32.xlu0 %v7515, 56
  %v7572 = vpop.permute.xlu0 %7571
  %7573 = vrot.lane.b32.xlu0 %v7516, 56
  %v7574 = vpop.permute.xlu0 %7573
  %7575 = vrot.lane.b32.xlu0 %v7517, 56
  %v7576 = vpop.permute.xlu0 %7575
  %7577 = vrot.lane.b32.xlu0 %v7518, 56
  %v7578 = vpop.permute.xlu0 %7577
  %7579 = vrot.lane.b32.xlu0 %v7519, 56
  %v7580 = vpop.permute.xlu0 %7579
  %7581 = vrot.lane.b32.xlu0 %v7520, 56
  %v7582 = vpop.permute.xlu0 %7581
  %7583 = vrot.lane.b32.xlu0 %v7521, 56
  %v7584 = vpop.permute.xlu0 %7583
  %7585 = vrot.lane.b32.xlu0 %v7522, 56
  %v7586 = vpop.permute.xlu0 %7585
  %v7587 = vadd.f32 %v7427, %v7524
  %v7588 = vadd.f32 %v7428, %v7526
  %v7589 = vadd.f32 %v7429, %v7528
  %v7590 = vadd.f32 %v7430, %v7530
  %v7591 = vadd.f32 %v7431, %v7532
  %v7592 = vadd.f32 %v7432, %v7534
  %v7593 = vadd.f32 %v7433, %v7536
  %v7594 = vadd.f32 %v7434, %v7538
  %v7595 = vadd.f32 %v7435, %v7540
  %v7596 = vadd.f32 %v7436, %v7542
  %v7597 = vadd.f32 %v7437, %v7544
  %v7598 = vadd.f32 %v7438, %v7546
  %v7599 = vadd.f32 %v7439, %v7548
  %v7600 = vadd.f32 %v7440, %v7550
  %v7601 = vadd.f32 %v7441, %v7552
  %v7602 = vadd.f32 %v7442, %v7554
  %v7603 = vadd.f32 %v7443, %v7556
  %v7604 = vadd.f32 %v7444, %v7558
  %v7605 = vadd.f32 %v7445, %v7560
  %v7606 = vadd.f32 %v7446, %v7562
  %v7607 = vadd.f32 %v7447, %v7564
  %v7608 = vadd.f32 %v7448, %v7566
  %v7609 = vadd.f32 %v7449, %v7568
  %v7610 = vadd.f32 %v7450, %v7570
  %v7611 = vadd.f32 %v7451, %v7572
  %v7612 = vadd.f32 %v7452, %v7574
  %v7613 = vadd.f32 %v7453, %v7576
  %v7614 = vadd.f32 %v7454, %v7578
  %v7615 = vadd.f32 %v7455, %v7580
  %v7616 = vadd.f32 %v7456, %v7582
  %v7617 = vadd.f32 %v7457, %v7584
  %v7618 = vadd.f32 %v7458, %v7586
  %v7619 = vld [vmem:[%s996 + $0x2] sm:$0xff]
  %v7620 = vld [vmem:[%s996 + $0xa] sm:$0xff]
  %v7621 = vld [vmem:[%s996 + $0x1a] sm:$0xff]
  %v7622 = vld [vmem:[%s996 + $0x22] sm:$0xff]
  %v7623 = vld [vmem:[%s996 + $0x32] sm:$0xff]
  %v7624 = vld [vmem:[%s996 + $0x3a] sm:$0xff]
  %v7625 = vld [vmem:[%s996 + $0x4a] sm:$0xff]
  %v7626 = vld [vmem:[%s996 + $0x52] sm:$0xff]
  %v7627 = vld [vmem:[%s996 + $0x62] sm:$0xff]
  %v7628 = vld [vmem:[%s996 + $0x6a] sm:$0xff]
  %v7629 = vld [vmem:[%s996 + $0x7a] sm:$0xff]
  %v7630 = vld [vmem:[%s996 + $0x82] sm:$0xff]
  %v7631 = vld [vmem:[%s996 + $0x92] sm:$0xff]
  %v7632 = vld [vmem:[%s996 + $0x9a] sm:$0xff]
  %v7633 = vld [vmem:[%s996 + $0xaa] sm:$0xff]
  %v7634 = vld [vmem:[%s996 + $0xb2] sm:$0xff]
  %v7635 = vld [vmem:[%s996 + $0xc2] sm:$0xff]
  %v7636 = vld [vmem:[%s996 + $0xca] sm:$0xff]
  %v7637 = vld [vmem:[%s996 + $0xda] sm:$0xff]
  %v7638 = vld [vmem:[%s996 + $0xe2] sm:$0xff]
  %v7639 = vld [vmem:[%s996 + $0xf2] sm:$0xff]
  %v7640 = vld [vmem:[%s996 + $0xfa] sm:$0xff]
  %v7641 = vld [vmem:[%s996 + $0x10a] sm:$0xff]
  %v7642 = vld [vmem:[%s996 + $0x112] sm:$0xff]
  %v7643 = vld [vmem:[%s996 + $0x122] sm:$0xff]
  %v7644 = vld [vmem:[%s996 + $0x12a] sm:$0xff]
  %v7645 = vld [vmem:[%s996 + $0x13a] sm:$0xff]
  %v7646 = vld [vmem:[%s996 + $0x142] sm:$0xff]
  %v7647 = vld [vmem:[%s996 + $0x152] sm:$0xff]
  %v7648 = vld [vmem:[%s996 + $0x15a] sm:$0xff]
  %v7649 = vld [vmem:[%s996 + $0x16a] sm:$0xff]
  %v7650 = vld [vmem:[%s996 + $0x172] sm:$0xff]
  %v7651 = vsel %vm2222, %v7619, 0.0
  %v7652 = vsel %vm2222, %v7620, 0.0
  %v7653 = vsel %vm2222, %v7621, 0.0
  %v7654 = vsel %vm2222, %v7622, 0.0
  %v7655 = vsel %vm2222, %v7623, 0.0
  %v7656 = vsel %vm2222, %v7624, 0.0
  %v7657 = vsel %vm2222, %v7625, 0.0
  %v7658 = vsel %vm2222, %v7626, 0.0
  %v7659 = vsel %vm2222, %v7627, 0.0
  %v7660 = vsel %vm2222, %v7628, 0.0
  %v7661 = vsel %vm2222, %v7629, 0.0
  %v7662 = vsel %vm2222, %v7630, 0.0
  %v7663 = vsel %vm2222, %v7631, 0.0
  %v7664 = vsel %vm2222, %v7632, 0.0
  %v7665 = vsel %vm2222, %v7633, 0.0
  %v7666 = vsel %vm2222, %v7634, 0.0
  %v7667 = vsel %vm2222, %v7635, 0.0
  %v7668 = vsel %vm2222, %v7636, 0.0
  %v7669 = vsel %vm2222, %v7637, 0.0
  %v7670 = vsel %vm2222, %v7638, 0.0
  %v7671 = vsel %vm2222, %v7639, 0.0
  %v7672 = vsel %vm2222, %v7640, 0.0
  %v7673 = vsel %vm2222, %v7641, 0.0
  %v7674 = vsel %vm2222, %v7642, 0.0
  %v7675 = vsel %vm2222, %v7643, 0.0
  %v7676 = vsel %vm2222, %v7644, 0.0
  %v7677 = vsel %vm2222, %v7645, 0.0
  %v7678 = vsel %vm2222, %v7646, 0.0
  %v7679 = vsel %vm2222, %v7647, 0.0
  %v7680 = vsel %vm2222, %v7648, 0.0
  %v7681 = vsel %vm2222, %v7649, 0.0
  %v7682 = vsel %vm2222, %v7650, 0.0
  %7683 = vrot.lane.b32.xlu0 %v7651, 64
  %v7684 = vpop.permute.xlu0 %7683
  %7685 = vrot.lane.b32.xlu0 %v7652, 64
  %v7686 = vpop.permute.xlu0 %7685
  %7687 = vrot.lane.b32.xlu0 %v7653, 64
  %v7688 = vpop.permute.xlu0 %7687
  %7689 = vrot.lane.b32.xlu0 %v7654, 64
  %v7690 = vpop.permute.xlu0 %7689
  %7691 = vrot.lane.b32.xlu0 %v7655, 64
  %v7692 = vpop.permute.xlu0 %7691
  %7693 = vrot.lane.b32.xlu0 %v7656, 64
  %v7694 = vpop.permute.xlu0 %7693
  %7695 = vrot.lane.b32.xlu0 %v7657, 64
  %v7696 = vpop.permute.xlu0 %7695
  %7697 = vrot.lane.b32.xlu0 %v7658, 64
  %v7698 = vpop.permute.xlu0 %7697
  %7699 = vrot.lane.b32.xlu0 %v7659, 64
  %v7700 = vpop.permute.xlu0 %7699
  %7701 = vrot.lane.b32.xlu0 %v7660, 64
  %v7702 = vpop.permute.xlu0 %7701
  %7703 = vrot.lane.b32.xlu0 %v7661, 64
  %v7704 = vpop.permute.xlu0 %7703
  %7705 = vrot.lane.b32.xlu0 %v7662, 64
  %v7706 = vpop.permute.xlu0 %7705
  %7707 = vrot.lane.b32.xlu0 %v7663, 64
  %v7708 = vpop.permute.xlu0 %7707
  %7709 = vrot.lane.b32.xlu0 %v7664, 64
  %v7710 = vpop.permute.xlu0 %7709
  %7711 = vrot.lane.b32.xlu0 %v7665, 64
  %v7712 = vpop.permute.xlu0 %7711
  %7713 = vrot.lane.b32.xlu0 %v7666, 64
  %v7714 = vpop.permute.xlu0 %7713
  %7715 = vrot.lane.b32.xlu0 %v7667, 64
  %v7716 = vpop.permute.xlu0 %7715
  %7717 = vrot.lane.b32.xlu0 %v7668, 64
  %v7718 = vpop.permute.xlu0 %7717
  %7719 = vrot.lane.b32.xlu0 %v7669, 64
  %v7720 = vpop.permute.xlu0 %7719
  %7721 = vrot.lane.b32.xlu0 %v7670, 64
  %v7722 = vpop.permute.xlu0 %7721
  %7723 = vrot.lane.b32.xlu0 %v7671, 64
  %v7724 = vpop.permute.xlu0 %7723
  %7725 = vrot.lane.b32.xlu0 %v7672, 64
  %v7726 = vpop.permute.xlu0 %7725
  %7727 = vrot.lane.b32.xlu0 %v7673, 64
  %v7728 = vpop.permute.xlu0 %7727
  %7729 = vrot.lane.b32.xlu0 %v7674, 64
  %v7730 = vpop.permute.xlu0 %7729
  %7731 = vrot.lane.b32.xlu0 %v7675, 64
  %v7732 = vpop.permute.xlu0 %7731
  %7733 = vrot.lane.b32.xlu0 %v7676, 64
  %v7734 = vpop.permute.xlu0 %7733
  %7735 = vrot.lane.b32.xlu0 %v7677, 64
  %v7736 = vpop.permute.xlu0 %7735
  %7737 = vrot.lane.b32.xlu0 %v7678, 64
  %v7738 = vpop.permute.xlu0 %7737
  %7739 = vrot.lane.b32.xlu0 %v7679, 64
  %v7740 = vpop.permute.xlu0 %7739
  %7741 = vrot.lane.b32.xlu0 %v7680, 64
  %v7742 = vpop.permute.xlu0 %7741
  %7743 = vrot.lane.b32.xlu0 %v7681, 64
  %v7744 = vpop.permute.xlu0 %7743
  %7745 = vrot.lane.b32.xlu0 %v7682, 64
  %v7746 = vpop.permute.xlu0 %7745
  %v7747 = vadd.f32 %v7587, %v7684
  %v7748 = vadd.f32 %v7588, %v7686
  %v7749 = vadd.f32 %v7589, %v7688
  %v7750 = vadd.f32 %v7590, %v7690
  %v7751 = vadd.f32 %v7591, %v7692
  %v7752 = vadd.f32 %v7592, %v7694
  %v7753 = vadd.f32 %v7593, %v7696
  %v7754 = vadd.f32 %v7594, %v7698
  %v7755 = vadd.f32 %v7595, %v7700
  %v7756 = vadd.f32 %v7596, %v7702
  %v7757 = vadd.f32 %v7597, %v7704
  %v7758 = vadd.f32 %v7598, %v7706
  %v7759 = vadd.f32 %v7599, %v7708
  %v7760 = vadd.f32 %v7600, %v7710
  %v7761 = vadd.f32 %v7601, %v7712
  %v7762 = vadd.f32 %v7602, %v7714
  %v7763 = vadd.f32 %v7603, %v7716
  %v7764 = vadd.f32 %v7604, %v7718
  %v7765 = vadd.f32 %v7605, %v7720
  %v7766 = vadd.f32 %v7606, %v7722
  %v7767 = vadd.f32 %v7607, %v7724
  %v7768 = vadd.f32 %v7608, %v7726
  %v7769 = vadd.f32 %v7609, %v7728
  %v7770 = vadd.f32 %v7610, %v7730
  %v7771 = vadd.f32 %v7611, %v7732
  %v7772 = vadd.f32 %v7612, %v7734
  %v7773 = vadd.f32 %v7613, %v7736
  %v7774 = vadd.f32 %v7614, %v7738
  %v7775 = vadd.f32 %v7615, %v7740
  %v7776 = vadd.f32 %v7616, %v7742
  %v7777 = vadd.f32 %v7617, %v7744
  %v7778 = vadd.f32 %v7618, %v7746
  %v7779 = vpack.c.bf16 %v7748, %v7747
  %v7780 = vpack.c.bf16 %v7750, %v7749
  %v7781 = vpack.c.bf16 %v7752, %v7751
  %v7782 = vpack.c.bf16 %v7754, %v7753
  %v7783 = vpack.c.bf16 %v7756, %v7755
  %v7784 = vpack.c.bf16 %v7758, %v7757
  %v7785 = vpack.c.bf16 %v7760, %v7759
  %v7786 = vpack.c.bf16 %v7762, %v7761
  %v7787 = vpack.c.bf16 %v7764, %v7763
  %v7788 = vpack.c.bf16 %v7766, %v7765
  %v7789 = vpack.c.bf16 %v7768, %v7767
  %v7790 = vpack.c.bf16 %v7770, %v7769
  %v7791 = vpack.c.bf16 %v7772, %v7771
  %v7792 = vpack.c.bf16 %v7774, %v7773
  %v7793 = vpack.c.bf16 %v7776, %v7775
  %v7794 = vpack.c.bf16 %v7778, %v7777
  %v7795 = vld [vmem:[%s3] sm:$0xf]
  %v7796 = vld [vmem:[%s3 + $0x4] sm:$0xf]
  %v7797 = vld [vmem:[%s3 + $0x8] sm:$0xf]
  %v7798 = vld [vmem:[%s3 + $0xc] sm:$0xf]
  %v7799 = vld [vmem:[%s3 + $0x10] sm:$0xf]
  %v7800 = vld [vmem:[%s3 + $0x14] sm:$0xf]
  %v7801 = vld [vmem:[%s3 + $0x18] sm:$0xf]
  %v7802 = vld [vmem:[%s3 + $0x1c] sm:$0xf]
  %v7803 = vld [vmem:[%s3 + $0x20] sm:$0xf]
  %v7804 = vld [vmem:[%s3 + $0x24] sm:$0xf]
  %v7805 = vld [vmem:[%s3 + $0x28] sm:$0xf]
  %v7806 = vld [vmem:[%s3 + $0x2c] sm:$0xf]
  %v7807 = vld [vmem:[%s3 + $0x30] sm:$0xf]
  %v7808 = vld [vmem:[%s3 + $0x34] sm:$0xf]
  %v7809 = vld [vmem:[%s3 + $0x38] sm:$0xf]
  %v7810 = vld [vmem:[%s3 + $0x3c] sm:$0xf]
  %v7827 = vunpack.c.l.b16 %v7795
  %v7828 = vunpack.c.l.b16 %v7796
  %v7829 = vunpack.c.l.b16 %v7797
  %v7830 = vunpack.c.l.b16 %v7798
  %v7831 = vunpack.c.l.b16 %v7799
  %v7832 = vunpack.c.l.b16 %v7800
  %v7833 = vunpack.c.l.b16 %v7801
  %v7834 = vunpack.c.l.b16 %v7802
  %v7835 = vunpack.c.l.b16 %v7803
  %v7836 = vunpack.c.l.b16 %v7804
  %v7837 = vunpack.c.l.b16 %v7805
  %v7838 = vunpack.c.l.b16 %v7806
  %v7839 = vunpack.c.l.b16 %v7807
  %v7840 = vunpack.c.l.b16 %v7808
  %v7841 = vunpack.c.l.b16 %v7809
  %v7842 = vunpack.c.l.b16 %v7810
  %v7843 = vpack.c.b16 %v7828, %v7827
  %v7844 = vpack.c.b16 %v7830, %v7829
  %v7845 = vpack.c.b16 %v7832, %v7831
  %v7846 = vpack.c.b16 %v7834, %v7833
  %v7847 = vpack.c.b16 %v7836, %v7835
  %v7848 = vpack.c.b16 %v7838, %v7837
  %v7849 = vpack.c.b16 %v7840, %v7839
  %v7850 = vpack.c.b16 %v7842, %v7841
  %7859 = vmatprep.subr.bf16.mxu0 0
  %7860 = vmatpush1.bf16.msra.mxu0 %v7843
  %7861 = vmatprep.subr.bf16.mxu0 0
  %7862 = vmatpush1.bf16.msra.mxu0 %v7844
  %7863 = vmatprep.subr.bf16.mxu0 0
  %7864 = vmatpush1.bf16.msra.mxu0 %v7845
  %7865 = vmatprep.subr.bf16.mxu0 0
  %7866 = vmatpush1.bf16.msra.mxu0 %v7846
  %7867 = vmatprep.subr.bf16.mxu0 0
  %7868 = vmatpush1.bf16.msra.mxu0 %v7847
  %7869 = vmatprep.subr.bf16.mxu0 0
  %7870 = vmatpush1.bf16.msra.mxu0 %v7848
  %7871 = vmatprep.subr.bf16.mxu0 0
  %7872 = vmatpush1.bf16.msra.mxu0 %v7849
  %7873 = vmatprep.subr.bf16.mxu0 0
  %7874 = vmatpush1.bf16.msra.mxu0 %v7850
  %7875 = vmatprep.subr.bf16.mxu0 0
  %7876 = vmatpush1.bf16.msra.mxu0 0
  %7877 = vmatprep.subr.bf16.mxu0 0
  %7878 = vmatpush1.bf16.msra.mxu0 0
  %7879 = vmatprep.subr.bf16.mxu0 0
  %7880 = vmatpush1.bf16.msra.mxu0 0
  %7881 = vmatprep.subr.bf16.mxu0 0
  %7882 = vmatpush1.bf16.msra.mxu0 0
  %7883 = vmatprep.subr.bf16.mxu0 0
  %7884 = vmatpush1.bf16.msra.mxu0 0
  %7885 = vmatprep.subr.bf16.mxu0 0
  %7886 = vmatpush1.bf16.msra.mxu0 0
  %7887 = vmatprep.subr.bf16.mxu0 0
  %7888 = vmatpush1.bf16.msra.mxu0 0
  %7889 = vmatprep.subr.bf16.mxu0 0
  %7890 = vmatpush1.bf16.msra.mxu0 0
  %7891 = vmatprep.mubr.bf16.mxu0 0
  %7892 = vmatmul.mubr.bf16.gmra.mrb[0].mxu0 %v7779
  %v7893 = vpop.f32.mrb[0].mxu0
  %v7894 = vadd.f32 0.0, %v7893
  %v7895 = vpop.f32.mrb[0].mxu0
  %v7896 = vpop.f32.mrb[0].mxu0
  %v7897 = vadd.f32 0.0, %v7896
  %v7898 = vpop.f32.mrb[0].mxu0
  %7899 = vmatprep.mubr.bf16.mxu0 0
  %7900 = vmatmul.mubr.bf16.gmra.mrb[0].mxu0 %v7780
  %v7901 = vpop.f32.mrb[0].mxu0
  %v7902 = vadd.f32 0.0, %v7901
  %v7903 = vpop.f32.mrb[0].mxu0
  %v7904 = vpop.f32.mrb[0].mxu0
  %v7905 = vadd.f32 0.0, %v7904
  %v7906 = vpop.f32.mrb[0].mxu0
  %7907 = vmatprep.mubr.bf16.mxu0 0
  %7908 = vmatmul.mubr.bf16.gmra.mrb[0].mxu0 %v7781
  %v7909 = vpop.f32.mrb[0].mxu0
  %v7910 = vadd.f32 0.0, %v7909
  %v7911 = vpop.f32.mrb[0].mxu0
  %v7912 = vpop.f32.mrb[0].mxu0
  %v7913 = vadd.f32 0.0, %v7912
  %v7914 = vpop.f32.mrb[0].mxu0
  %7915 = vmatprep.mubr.bf16.mxu0 0
  %7916 = vmatmul.mubr.bf16.gmra.mrb[0].mxu0 %v7782
  %v7917 = vpop.f32.mrb[0].mxu0
  %v7918 = vadd.f32 0.0, %v7917
  %v7919 = vpop.f32.mrb[0].mxu0
  %v7920 = vpop.f32.mrb[0].mxu0
  %v7921 = vadd.f32 0.0, %v7920
  %v7922 = vpop.f32.mrb[0].mxu0
  %7923 = vmatprep.mubr.bf16.mxu0 0
  %7924 = vmatmul.mubr.bf16.gmra.mrb[0].mxu0 %v7783
  %v7925 = vpop.f32.mrb[0].mxu0
  %v7926 = vadd.f32 0.0, %v7925
  %v7927 = vpop.f32.mrb[0].mxu0
  %v7928 = vpop.f32.mrb[0].mxu0
  %v7929 = vadd.f32 0.0, %v7928
  %v7930 = vpop.f32.mrb[0].mxu0
  %7931 = vmatprep.mubr.bf16.mxu0 0
  %7932 = vmatmul.mubr.bf16.gmra.mrb[0].mxu0 %v7784
  %v7933 = vpop.f32.mrb[0].mxu0
  %v7934 = vadd.f32 0.0, %v7933
  %v7935 = vpop.f32.mrb[0].mxu0
  %v7936 = vpop.f32.mrb[0].mxu0
  %v7937 = vadd.f32 0.0, %v7936
  %v7938 = vpop.f32.mrb[0].mxu0
  %7939 = vmatprep.mubr.bf16.mxu0 0
  %7940 = vmatmul.mubr.bf16.gmra.mrb[0].mxu0 %v7785
  %v7941 = vpop.f32.mrb[0].mxu0
  %v7942 = vadd.f32 0.0, %v7941
  %v7943 = vpop.f32.mrb[0].mxu0
  %v7944 = vpop.f32.mrb[0].mxu0
  %v7945 = vadd.f32 0.0, %v7944
  %v7946 = vpop.f32.mrb[0].mxu0
  %7947 = vmatprep.mubr.bf16.mxu0 0
  %7948 = vmatmul.mubr.bf16.gmra.mrb[0].mxu0 %v7786
  %v7949 = vpop.f32.mrb[0].mxu0
  %v7950 = vadd.f32 0.0, %v7949
  %v7951 = vpop.f32.mrb[0].mxu0
  %v7952 = vpop.f32.mrb[0].mxu0
  %v7953 = vadd.f32 0.0, %v7952
  %v7954 = vpop.f32.mrb[0].mxu0
  %7955 = vmatprep.mubr.bf16.mxu0 0
  %7956 = vmatmul.mubr.bf16.gmra.mrb[0].mxu0 %v7787
  %v7957 = vpop.f32.mrb[0].mxu0
  %v7958 = vadd.f32 0.0, %v7957
  %v7959 = vpop.f32.mrb[0].mxu0
  %v7960 = vpop.f32.mrb[0].mxu0
  %v7961 = vadd.f32 0.0, %v7960
  %v7962 = vpop.f32.mrb[0].mxu0
  %7963 = vmatprep.mubr.bf16.mxu0 0
  %7964 = vmatmul.mubr.bf16.gmra.mrb[0].mxu0 %v7788
  %v7965 = vpop.f32.mrb[0].mxu0
  %v7966 = vadd.f32 0.0, %v7965
  %v7967 = vpop.f32.mrb[0].mxu0
  %v7968 = vpop.f32.mrb[0].mxu0
  %v7969 = vadd.f32 0.0, %v7968
  %v7970 = vpop.f32.mrb[0].mxu0
  %7971 = vmatprep.mubr.bf16.mxu0 0
  %7972 = vmatmul.mubr.bf16.gmra.mrb[0].mxu0 %v7789
  %v7973 = vpop.f32.mrb[0].mxu0
  %v7974 = vadd.f32 0.0, %v7973
  %v7975 = vpop.f32.mrb[0].mxu0
  %v7976 = vpop.f32.mrb[0].mxu0
  %v7977 = vadd.f32 0.0, %v7976
  %v7978 = vpop.f32.mrb[0].mxu0
  %7979 = vmatprep.mubr.bf16.mxu0 0
  %7980 = vmatmul.mubr.bf16.gmra.mrb[0].mxu0 %v7790
  %v7981 = vpop.f32.mrb[0].mxu0
  %v7982 = vadd.f32 0.0, %v7981
  %v7983 = vpop.f32.mrb[0].mxu0
  %v7984 = vpop.f32.mrb[0].mxu0
  %v7985 = vadd.f32 0.0, %v7984
  %v7986 = vpop.f32.mrb[0].mxu0
  %7987 = vmatprep.mubr.bf16.mxu0 0
  %7988 = vmatmul.mubr.bf16.gmra.mrb[0].mxu0 %v7791
  %v7989 = vpop.f32.mrb[0].mxu0
  %v7990 = vadd.f32 0.0, %v7989
  %v7991 = vpop.f32.mrb[0].mxu0
  %v7992 = vpop.f32.mrb[0].mxu0
  %v7993 = vadd.f32 0.0, %v7992
  %v7994 = vpop.f32.mrb[0].mxu0
  %7995 = vmatprep.mubr.bf16.mxu0 0
  %7996 = vmatmul.mubr.bf16.gmra.mrb[0].mxu0 %v7792
  %v7997 = vpop.f32.mrb[0].mxu0
  %v7998 = vadd.f32 0.0, %v7997
  %v7999 = vpop.f32.mrb[0].mxu0
  %v8000 = vpop.f32.mrb[0].mxu0
  %v8001 = vadd.f32 0.0, %v8000
  %v8002 = vpop.f32.mrb[0].mxu0
  %8003 = vmatprep.mubr.bf16.mxu0 0
  %8004 = vmatmul.mubr.bf16.gmra.mrb[0].mxu0 %v7793
  %v8005 = vpop.f32.mrb[0].mxu0
  %v8006 = vadd.f32 0.0, %v8005
  %v8007 = vpop.f32.mrb[0].mxu0
  %v8008 = vpop.f32.mrb[0].mxu0
  %v8009 = vadd.f32 0.0, %v8008
  %v8010 = vpop.f32.mrb[0].mxu0
  %8011 = vmatprep.mubr.bf16.mxu0 0
  %8012 = vmatmul.mubr.bf16.gmra.mrb[0].mxu0 %v7794
  %v8013 = vpop.f32.mrb[0].mxu0
  %v8014 = vadd.f32 0.0, %v8013
  %v8015 = vpop.f32.mrb[0].mxu0
  %v8016 = vpop.f32.mrb[0].mxu0
  %v8017 = vadd.f32 0.0, %v8016
  %v8018 = vpop.f32.mrb[0].mxu0
  %8019 = vdwg.mxu0
  %v8020 = vld [vmem:[%s5] sm:$0xff]
  %v8021 = vld [vmem:[%s5 + $0x8] sm:$0xff]
  %v8022 = vld [vmem:[%s5 + $0x10] sm:$0xff]
  %v8023 = vld [vmem:[%s5 + $0x18] sm:$0xff]
  %v8024 = vld [vmem:[%s5 + $0x20] sm:$0xff]
  %v8025 = vld [vmem:[%s5 + $0x28] sm:$0xff]
  %v8026 = vld [vmem:[%s5 + $0x30] sm:$0xff]
  %v8027 = vld [vmem:[%s5 + $0x38] sm:$0xff]
  %v8028 = vld [vmem:[%s5 + $0x40] sm:$0xff]
  %v8029 = vld [vmem:[%s5 + $0x48] sm:$0xff]
  %v8030 = vld [vmem:[%s5 + $0x50] sm:$0xff]
  %v8031 = vld [vmem:[%s5 + $0x58] sm:$0xff]
  %v8032 = vld [vmem:[%s5 + $0x60] sm:$0xff]
  %v8033 = vld [vmem:[%s5 + $0x68] sm:$0xff]
  %v8034 = vld [vmem:[%s5 + $0x70] sm:$0xff]
  %v8035 = vld [vmem:[%s5 + $0x78] sm:$0xff]
  %v8036 = vld [vmem:[%s5 + $0x80] sm:$0xff]
  %v8037 = vld [vmem:[%s5 + $0x88] sm:$0xff]
  %v8038 = vld [vmem:[%s5 + $0x90] sm:$0xff]
  %v8039 = vld [vmem:[%s5 + $0x98] sm:$0xff]
  %v8040 = vld [vmem:[%s5 + $0xa0] sm:$0xff]
  %v8041 = vld [vmem:[%s5 + $0xa8] sm:$0xff]
  %v8042 = vld [vmem:[%s5 + $0xb0] sm:$0xff]
  %v8043 = vld [vmem:[%s5 + $0xb8] sm:$0xff]
  %v8044 = vld [vmem:[%s5 + $0xc0] sm:$0xff]
  %v8045 = vld [vmem:[%s5 + $0xc8] sm:$0xff]
  %v8046 = vld [vmem:[%s5 + $0xd0] sm:$0xff]
  %v8047 = vld [vmem:[%s5 + $0xd8] sm:$0xff]
  %v8048 = vld [vmem:[%s5 + $0xe0] sm:$0xff]
  %v8049 = vld [vmem:[%s5 + $0xe8] sm:$0xff]
  %v8050 = vld [vmem:[%s5 + $0xf0] sm:$0xff]
  %v8051 = vld [vmem:[%s5 + $0xf8] sm:$0xff]
  %v8052 = vpack.c.bf16 %v7897, %v7894
  %v8053 = vpack.c.bf16 %v7905, %v7902
  %v8054 = vpack.c.bf16 %v7913, %v7910
  %v8055 = vpack.c.bf16 %v7921, %v7918
  %v8056 = vpack.c.bf16 %v7929, %v7926
  %v8057 = vpack.c.bf16 %v7937, %v7934
  %v8058 = vpack.c.bf16 %v7945, %v7942
  %v8059 = vpack.c.bf16 %v7953, %v7950
  %v8060 = vpack.c.bf16 %v7961, %v7958
  %v8061 = vpack.c.bf16 %v7969, %v7966
  %v8062 = vpack.c.bf16 %v7977, %v7974
  %v8063 = vpack.c.bf16 %v7985, %v7982
  %v8064 = vpack.c.bf16 %v7993, %v7990
  %v8065 = vpack.c.bf16 %v8001, %v7998
  %v8066 = vpack.c.bf16 %v8009, %v8006
  %v8067 = vpack.c.bf16 %v8017, %v8014
  %v8068 = vld [vmem:[%s4] sm:$0x1]
  %v8070 = vlaneseq
  %v8071 = vshrl.u32 %v8070, 7
  %v8072 = vsub.s32 0, %v8071
  %v8073 = vrot.slane %v8068, %v8072
  %v8107 = vunpack.c.l.b16 %v8020
  %v8108 = vunpack.c.h.b16 %v8020
  %v8109 = vunpack.c.l.b16 %v8021
  %v8110 = vunpack.c.h.b16 %v8021
  %v8111 = vunpack.c.l.b16 %v8022
  %v8112 = vunpack.c.h.b16 %v8022
  %v8113 = vunpack.c.l.b16 %v8023
  %v8114 = vunpack.c.h.b16 %v8023
  %v8115 = vunpack.c.l.b16 %v8024
  %v8116 = vunpack.c.h.b16 %v8024
  %v8117 = vunpack.c.l.b16 %v8025
  %v8118 = vunpack.c.h.b16 %v8025
  %v8119 = vunpack.c.l.b16 %v8026
  %v8120 = vunpack.c.h.b16 %v8026
  %v8121 = vunpack.c.l.b16 %v8027
  %v8122 = vunpack.c.h.b16 %v8027
  %v8123 = vunpack.c.l.b16 %v8028
  %v8124 = vunpack.c.h.b16 %v8028
  %v8125 = vunpack.c.l.b16 %v8029
  %v8126 = vunpack.c.h.b16 %v8029
  %v8127 = vunpack.c.l.b16 %v8030
  %v8128 = vunpack.c.h.b16 %v8030
  %v8129 = vunpack.c.l.b16 %v8031
  %v8130 = vunpack.c.h.b16 %v8031
  %v8131 = vunpack.c.l.b16 %v8032
  %v8132 = vunpack.c.h.b16 %v8032
  %v8133 = vunpack.c.l.b16 %v8033
  %v8134 = vunpack.c.h.b16 %v8033
  %v8135 = vunpack.c.l.b16 %v8034
  %v8136 = vunpack.c.h.b16 %v8034
  %v8137 = vunpack.c.l.b16 %v8035
  %v8138 = vunpack.c.h.b16 %v8035
  %v8139 = vunpack.c.l.b16 %v8036
  %v8140 = vunpack.c.h.b16 %v8036
  %v8141 = vunpack.c.l.b16 %v8037
  %v8142 = vunpack.c.h.b16 %v8037
  %v8143 = vunpack.c.l.b16 %v8038
  %v8144 = vunpack.c.h.b16 %v8038
  %v8145 = vunpack.c.l.b16 %v8039
  %v8146 = vunpack.c.h.b16 %v8039
  %v8147 = vunpack.c.l.b16 %v8040
  %v8148 = vunpack.c.h.b16 %v8040
  %v8149 = vunpack.c.l.b16 %v8041
  %v8150 = vunpack.c.h.b16 %v8041
  %v8151 = vunpack.c.l.b16 %v8042
  %v8152 = vunpack.c.h.b16 %v8042
  %v8153 = vunpack.c.l.b16 %v8043
  %v8154 = vunpack.c.h.b16 %v8043
  %v8155 = vunpack.c.l.b16 %v8044
  %v8156 = vunpack.c.h.b16 %v8044
  %v8157 = vunpack.c.l.b16 %v8045
  %v8158 = vunpack.c.h.b16 %v8045
  %v8159 = vunpack.c.l.b16 %v8046
  %v8160 = vunpack.c.h.b16 %v8046
  %v8161 = vunpack.c.l.b16 %v8047
  %v8162 = vunpack.c.h.b16 %v8047
  %v8163 = vunpack.c.l.b16 %v8048
  %v8164 = vunpack.c.h.b16 %v8048
  %v8165 = vunpack.c.l.b16 %v8049
  %v8166 = vunpack.c.h.b16 %v8049
  %v8167 = vunpack.c.l.b16 %v8050
  %v8168 = vunpack.c.h.b16 %v8050
  %v8169 = vunpack.c.l.b16 %v8051
  %v8170 = vunpack.c.h.b16 %v8051
  %v8171 = vpack.c.b16 %v8109, %v8107
  %v8172 = vpack.c.b16 %v8110, %v8108
  %v8173 = vpack.c.b16 %v8113, %v8111
  %v8174 = vpack.c.b16 %v8114, %v8112
  %v8175 = vpack.c.b16 %v8117, %v8115
  %v8176 = vpack.c.b16 %v8118, %v8116
  %v8177 = vpack.c.b16 %v8121, %v8119
  %v8178 = vpack.c.b16 %v8122, %v8120
  %v8179 = vpack.c.b16 %v8125, %v8123
  %v8180 = vpack.c.b16 %v8126, %v8124
  %v8181 = vpack.c.b16 %v8129, %v8127
  %v8182 = vpack.c.b16 %v8130, %v8128
  %v8183 = vpack.c.b16 %v8133, %v8131
  %v8184 = vpack.c.b16 %v8134, %v8132
  %v8185 = vpack.c.b16 %v8137, %v8135
  %v8186 = vpack.c.b16 %v8138, %v8136
  %v8187 = vpack.c.b16 %v8141, %v8139
  %v8188 = vpack.c.b16 %v8142, %v8140
  %v8189 = vpack.c.b16 %v8145, %v8143
  %v8190 = vpack.c.b16 %v8146, %v8144
  %v8191 = vpack.c.b16 %v8149, %v8147
  %v8192 = vpack.c.b16 %v8150, %v8148
  %v8193 = vpack.c.b16 %v8153, %v8151
  %v8194 = vpack.c.b16 %v8154, %v8152
  %v8195 = vpack.c.b16 %v8157, %v8155
  %v8196 = vpack.c.b16 %v8158, %v8156
  %v8197 = vpack.c.b16 %v8161, %v8159
  %v8198 = vpack.c.b16 %v8162, %v8160
  %v8199 = vpack.c.b16 %v8165, %v8163
  %v8200 = vpack.c.b16 %v8166, %v8164
  %v8201 = vpack.c.b16 %v8169, %v8167
  %v8202 = vpack.c.b16 %v8170, %v8168
  %8235 = vmatprep.subr.bf16.mxu0 0
  %8236 = vmatpush1.bf16.msra.mxu0 %v8052
  %8237 = vmatprep.subr.bf16.mxu0 0
  %8238 = vmatpush1.bf16.msra.mxu0 %v8053
  %8239 = vmatprep.subr.bf16.mxu0 0
  %8240 = vmatpush1.bf16.msra.mxu0 %v8054
  %8241 = vmatprep.subr.bf16.mxu0 0
  %8242 = vmatpush1.bf16.msra.mxu0 %v8055
  %8243 = vmatprep.subr.bf16.mxu0 0
  %8244 = vmatpush1.bf16.msra.mxu0 %v8056
  %8245 = vmatprep.subr.bf16.mxu0 0
  %8246 = vmatpush1.bf16.msra.mxu0 %v8057
  %8247 = vmatprep.subr.bf16.mxu0 0
  %8248 = vmatpush1.bf16.msra.mxu0 %v8058
  %8249 = vmatprep.subr.bf16.mxu0 0
  %8250 = vmatpush1.bf16.msra.mxu0 %v8059
  %8251 = vmatprep.subr.bf16.mxu0 0
  %8252 = vmatpush1.bf16.msra.mxu0 %v8060
  %8253 = vmatprep.subr.bf16.mxu0 0
  %8254 = vmatpush1.bf16.msra.mxu0 %v8061
  %8255 = vmatprep.subr.bf16.mxu0 0
  %8256 = vmatpush1.bf16.msra.mxu0 %v8062
  %8257 = vmatprep.subr.bf16.mxu0 0
  %8258 = vmatpush1.bf16.msra.mxu0 %v8063
  %8259 = vmatprep.subr.bf16.mxu0 0
  %8260 = vmatpush1.bf16.msra.mxu0 %v8064
  %8261 = vmatprep.subr.bf16.mxu0 0
  %8262 = vmatpush1.bf16.msra.mxu0 %v8065
  %8263 = vmatprep.subr.bf16.mxu0 0
  %8264 = vmatpush1.bf16.msra.mxu0 %v8066
  %8265 = vmatprep.subr.bf16.mxu0 0
  %8266 = vmatpush1.bf16.msra.mxu0 %v8067
  %8267 = vmatprep.mubr.bf16.mxu0 %v8172
  %8268 = vmatmul.mubr.bf16.gmra.mrb[0].mxu0 %v8171
  %v8269 = vpop.f32.mrb[0].mxu0
  %v8270 = vadd.f32 %v8073, %v8269
  %v8271 = vpop.f32.mrb[0].mxu0
  %v8272 = vpop.f32.mrb[0].mxu0
  %v8273 = vadd.f32 %v8073, %v8272
  %v8274 = vpop.f32.mrb[0].mxu0
  %8275 = vmatprep.mubr.bf16.mxu0 %v8174
  %8276 = vmatmul.mubr.bf16.gmra.mrb[0].mxu0 %v8173
  %v8277 = vpop.f32.mrb[0].mxu0
  %v8278 = vadd.f32 %v8073, %v8277
  %v8279 = vpop.f32.mrb[0].mxu0
  %v8280 = vpop.f32.mrb[0].mxu0
  %v8281 = vadd.f32 %v8073, %v8280
  %v8282 = vpop.f32.mrb[0].mxu0
  %8283 = vmatprep.mubr.bf16.mxu0 %v8176
  %8284 = vmatmul.mubr.bf16.gmra.mrb[0].mxu0 %v8175
  %v8285 = vpop.f32.mrb[0].mxu0
  %v8286 = vadd.f32 %v8073, %v8285
  %v8287 = vpop.f32.mrb[0].mxu0
  %v8288 = vpop.f32.mrb[0].mxu0
  %v8289 = vadd.f32 %v8073, %v8288
  %v8290 = vpop.f32.mrb[0].mxu0
  %8291 = vmatprep.mubr.bf16.mxu0 %v8178
  %8292 = vmatmul.mubr.bf16.gmra.mrb[0].mxu0 %v8177
  %v8293 = vpop.f32.mrb[0].mxu0
  %v8294 = vadd.f32 %v8073, %v8293
  %v8295 = vpop.f32.mrb[0].mxu0
  %v8296 = vpop.f32.mrb[0].mxu0
  %v8297 = vadd.f32 %v8073, %v8296
  %v8298 = vpop.f32.mrb[0].mxu0
  %8299 = vmatprep.mubr.bf16.mxu0 %v8180
  %8300 = vmatmul.mubr.bf16.gmra.mrb[0].mxu0 %v8179
  %v8301 = vpop.f32.mrb[0].mxu0
  %v8302 = vadd.f32 %v8073, %v8301
  %v8303 = vpop.f32.mrb[0].mxu0
  %v8304 = vpop.f32.mrb[0].mxu0
  %v8305 = vadd.f32 %v8073, %v8304
  %v8306 = vpop.f32.mrb[0].mxu0
  %8307 = vmatprep.mubr.bf16.mxu0 %v8182
  %8308 = vmatmul.mubr.bf16.gmra.mrb[0].mxu0 %v8181
  %v8309 = vpop.f32.mrb[0].mxu0
  %v8310 = vadd.f32 %v8073, %v8309
  %v8311 = vpop.f32.mrb[0].mxu0
  %v8312 = vpop.f32.mrb[0].mxu0
  %v8313 = vadd.f32 %v8073, %v8312
  %v8314 = vpop.f32.mrb[0].mxu0
  %8315 = vmatprep.mubr.bf16.mxu0 %v8184
  %8316 = vmatmul.mubr.bf16.gmra.mrb[0].mxu0 %v8183
  %v8317 = vpop.f32.mrb[0].mxu0
  %v8318 = vadd.f32 %v8073, %v8317
  %v8319 = vpop.f32.mrb[0].mxu0
  %v8320 = vpop.f32.mrb[0].mxu0
  %v8321 = vadd.f32 %v8073, %v8320
  %v8322 = vpop.f32.mrb[0].mxu0
  %8323 = vmatprep.mubr.bf16.mxu0 %v8186
  %8324 = vmatmul.mubr.bf16.gmra.mrb[0].mxu0 %v8185
  %v8325 = vpop.f32.mrb[0].mxu0
  %v8326 = vadd.f32 %v8073, %v8325
  %v8327 = vpop.f32.mrb[0].mxu0
  %v8328 = vpop.f32.mrb[0].mxu0
  %v8329 = vadd.f32 %v8073, %v8328
  %v8330 = vpop.f32.mrb[0].mxu0
  %8331 = vmatprep.mubr.bf16.mxu0 %v8188
  %8332 = vmatmul.mubr.bf16.gmra.mrb[0].mxu0 %v8187
  %v8333 = vpop.f32.mrb[0].mxu0
  %v8334 = vadd.f32 %v8073, %v8333
  %v8335 = vpop.f32.mrb[0].mxu0
  %v8336 = vpop.f32.mrb[0].mxu0
  %v8337 = vadd.f32 %v8073, %v8336
  %v8338 = vpop.f32.mrb[0].mxu0
  %8339 = vmatprep.mubr.bf16.mxu0 %v8190
  %8340 = vmatmul.mubr.bf16.gmra.mrb[0].mxu0 %v8189
  %v8341 = vpop.f32.mrb[0].mxu0
  %v8342 = vadd.f32 %v8073, %v8341
  %v8343 = vpop.f32.mrb[0].mxu0
  %v8344 = vpop.f32.mrb[0].mxu0
  %v8345 = vadd.f32 %v8073, %v8344
  %v8346 = vpop.f32.mrb[0].mxu0
  %8347 = vmatprep.mubr.bf16.mxu0 %v8192
  %8348 = vmatmul.mubr.bf16.gmra.mrb[0].mxu0 %v8191
  %v8349 = vpop.f32.mrb[0].mxu0
  %v8350 = vadd.f32 %v8073, %v8349
  %v8351 = vpop.f32.mrb[0].mxu0
  %v8352 = vpop.f32.mrb[0].mxu0
  %v8353 = vadd.f32 %v8073, %v8352
  %v8354 = vpop.f32.mrb[0].mxu0
  %8355 = vmatprep.mubr.bf16.mxu0 %v8194
  %8356 = vmatmul.mubr.bf16.gmra.mrb[0].mxu0 %v8193
  %v8357 = vpop.f32.mrb[0].mxu0
  %v8358 = vadd.f32 %v8073, %v8357
  %v8359 = vpop.f32.mrb[0].mxu0
  %v8360 = vpop.f32.mrb[0].mxu0
  %v8361 = vadd.f32 %v8073, %v8360
  %v8362 = vpop.f32.mrb[0].mxu0
  %8363 = vmatprep.mubr.bf16.mxu0 %v8196
  %8364 = vmatmul.mubr.bf16.gmra.mrb[0].mxu0 %v8195
  %v8365 = vpop.f32.mrb[0].mxu0
  %v8366 = vadd.f32 %v8073, %v8365
  %v8367 = vpop.f32.mrb[0].mxu0
  %v8368 = vpop.f32.mrb[0].mxu0
  %v8369 = vadd.f32 %v8073, %v8368
  %v8370 = vpop.f32.mrb[0].mxu0
  %8371 = vmatprep.mubr.bf16.mxu0 %v8198
  %8372 = vmatmul.mubr.bf16.gmra.mrb[0].mxu0 %v8197
  %v8373 = vpop.f32.mrb[0].mxu0
  %v8374 = vadd.f32 %v8073, %v8373
  %v8375 = vpop.f32.mrb[0].mxu0
  %v8376 = vpop.f32.mrb[0].mxu0
  %v8377 = vadd.f32 %v8073, %v8376
  %v8378 = vpop.f32.mrb[0].mxu0
  %8379 = vmatprep.mubr.bf16.mxu0 %v8200
  %8380 = vmatmul.mubr.bf16.gmra.mrb[0].mxu0 %v8199
  %v8381 = vpop.f32.mrb[0].mxu0
  %v8382 = vadd.f32 %v8073, %v8381
  %v8383 = vpop.f32.mrb[0].mxu0
  %v8384 = vpop.f32.mrb[0].mxu0
  %v8385 = vadd.f32 %v8073, %v8384
  %v8386 = vpop.f32.mrb[0].mxu0
  %8387 = vmatprep.mubr.bf16.mxu0 %v8202
  %8388 = vmatmul.mubr.bf16.gmra.mrb[0].mxu0 %v8201
  %v8389 = vpop.f32.mrb[0].mxu0
  %v8390 = vadd.f32 %v8073, %v8389
  %v8391 = vpop.f32.mrb[0].mxu0
  %v8392 = vpop.f32.mrb[0].mxu0
  %v8393 = vadd.f32 %v8073, %v8392
  %v8394 = vpop.f32.mrb[0].mxu0
  %8395 = vdwg.mxu0
  %v8396 = vadd.f32 %v8270, %v5839
  %v8397 = vadd.f32 %v8273, %v5843
  %v8398 = vadd.f32 %v8278, %v5849
  %v8399 = vadd.f32 %v8281, %v5853
  %v8400 = vadd.f32 %v8286, %v5859
  %v8401 = vadd.f32 %v8289, %v5863
  %v8402 = vadd.f32 %v8294, %v5869
  %v8403 = vadd.f32 %v8297, %v5873
  %v8404 = vadd.f32 %v8302, %v5879
  %v8405 = vadd.f32 %v8305, %v5883
  %v8406 = vadd.f32 %v8310, %v5889
  %v8407 = vadd.f32 %v8313, %v5893
  %v8408 = vadd.f32 %v8318, %v5899
  %v8409 = vadd.f32 %v8321, %v5903
  %v8410 = vadd.f32 %v8326, %v5909
  %v8411 = vadd.f32 %v8329, %v5913
  %v8412 = vadd.f32 %v8334, %v5919
  %v8413 = vadd.f32 %v8337, %v5923
  %v8414 = vadd.f32 %v8342, %v5929
  %v8415 = vadd.f32 %v8345, %v5933
  %v8416 = vadd.f32 %v8350, %v5939
  %v8417 = vadd.f32 %v8353, %v5943
  %v8418 = vadd.f32 %v8358, %v5949
  %v8419 = vadd.f32 %v8361, %v5953
  %v8420 = vadd.f32 %v8366, %v5959
  %v8421 = vadd.f32 %v8369, %v5963
  %v8422 = vadd.f32 %v8374, %v5969
  %v8423 = vadd.f32 %v8377, %v5973
  %v8424 = vadd.f32 %v8382, %v5979
  %v8425 = vadd.f32 %v8385, %v5983
  %v8426 = vadd.f32 %v8390, %v5989
  %v8427 = vadd.f32 %v8393, %v5993
  %v8428 = vmax.f32 %v8396, 0.0
  %v8429 = vmax.f32 %v8397, 0.0
  %v8430 = vmax.f32 %v8398, 0.0
  %v8431 = vmax.f32 %v8399, 0.0
  %v8432 = vmax.f32 %v8400, 0.0
  %v8433 = vmax.f32 %v8401, 0.0
  %v8434 = vmax.f32 %v8402, 0.0
  %v8435 = vmax.f32 %v8403, 0.0
  %v8436 = vmax.f32 %v8404, 0.0
  %v8437 = vmax.f32 %v8405, 0.0
  %v8438 = vmax.f32 %v8406, 0.0
  %v8439 = vmax.f32 %v8407, 0.0
  %v8440 = vmax.f32 %v8408, 0.0
  %v8441 = vmax.f32 %v8409, 0.0
  %v8442 = vmax.f32 %v8410, 0.0
  %v8443 = vmax.f32 %v8411, 0.0
  %v8444 = vmax.f32 %v8412, 0.0
  %v8445 = vmax.f32 %v8413, 0.0
  %v8446 = vmax.f32 %v8414, 0.0
  %v8447 = vmax.f32 %v8415, 0.0
  %v8448 = vmax.f32 %v8416, 0.0
  %v8449 = vmax.f32 %v8417, 0.0
  %v8450 = vmax.f32 %v8418, 0.0
  %v8451 = vmax.f32 %v8419, 0.0
  %v8452 = vmax.f32 %v8420, 0.0
  %v8453 = vmax.f32 %v8421, 0.0
  %v8454 = vmax.f32 %v8422, 0.0
  %v8455 = vmax.f32 %v8423, 0.0
  %v8456 = vmax.f32 %v8424, 0.0
  %v8457 = vmax.f32 %v8425, 0.0
  %v8458 = vmax.f32 %v8426, 0.0
  %v8459 = vmax.f32 %v8427, 0.0
  %s8460 = scalar_lea.vmem %s6, 256
  %8461 = vst.msk [vmem:[%s8460] sm:$0xff] %vm4248, %v8428
  %8462 = vst.msk [vmem:[%s8460 + $0x8] sm:$0xff] %vm4248, %v8429
  %8463 = vst.msk [vmem:[%s8460 + $0x10] sm:$0xff] %vm4248, %v8430
  %8464 = vst.msk [vmem:[%s8460 + $0x18] sm:$0xff] %vm4248, %v8431
  %8465 = vst.msk [vmem:[%s8460 + $0x20] sm:$0xff] %vm4248, %v8432
  %8466 = vst.msk [vmem:[%s8460 + $0x28] sm:$0xff] %vm4248, %v8433
  %8467 = vst.msk [vmem:[%s8460 + $0x30] sm:$0xff] %vm4248, %v8434
  %8468 = vst.msk [vmem:[%s8460 + $0x38] sm:$0xff] %vm4248, %v8435
  %8469 = vst.msk [vmem:[%s8460 + $0x40] sm:$0xff] %vm4248, %v8436
  %8470 = vst.msk [vmem:[%s8460 + $0x48] sm:$0xff] %vm4248, %v8437
  %8471 = vst.msk [vmem:[%s8460 + $0x50] sm:$0xff] %vm4248, %v8438
  %8472 = vst.msk [vmem:[%s8460 + $0x58] sm:$0xff] %vm4248, %v8439
  %8473 = vst.msk [vmem:[%s8460 + $0x60] sm:$0xff] %vm4248, %v8440
  %8474 = vst.msk [vmem:[%s8460 + $0x68] sm:$0xff] %vm4248, %v8441
  %8475 = vst.msk [vmem:[%s8460 + $0x70] sm:$0xff] %vm4248, %v8442
  %8476 = vst.msk [vmem:[%s8460 + $0x78] sm:$0xff] %vm4248, %v8443
  %8477 = vst.msk [vmem:[%s8460 + $0x80] sm:$0xff] %vm4248, %v8444
  %8478 = vst.msk [vmem:[%s8460 + $0x88] sm:$0xff] %vm4248, %v8445
  %8479 = vst.msk [vmem:[%s8460 + $0x90] sm:$0xff] %vm4248, %v8446
  %8480 = vst.msk [vmem:[%s8460 + $0x98] sm:$0xff] %vm4248, %v8447
  %8481 = vst.msk [vmem:[%s8460 + $0xa0] sm:$0xff] %vm4248, %v8448
  %8482 = vst.msk [vmem:[%s8460 + $0xa8] sm:$0xff] %vm4248, %v8449
  %8483 = vst.msk [vmem:[%s8460 + $0xb0] sm:$0xff] %vm4248, %v8450
  %8484 = vst.msk [vmem:[%s8460 + $0xb8] sm:$0xff] %vm4248, %v8451
  %8485 = vst.msk [vmem:[%s8460 + $0xc0] sm:$0xff] %vm4248, %v8452
  %8486 = vst.msk [vmem:[%s8460 + $0xc8] sm:$0xff] %vm4248, %v8453
  %8487 = vst.msk [vmem:[%s8460 + $0xd0] sm:$0xff] %vm4248, %v8454
  %8488 = vst.msk [vmem:[%s8460 + $0xd8] sm:$0xff] %vm4248, %v8455
  %8489 = vst.msk [vmem:[%s8460 + $0xe0] sm:$0xff] %vm4248, %v8456
  %8490 = vst.msk [vmem:[%s8460 + $0xe8] sm:$0xff] %vm4248, %v8457
  %8491 = vst.msk [vmem:[%s8460 + $0xf0] sm:$0xff] %vm4248, %v8458
  %8492 = vst.msk [vmem:[%s8460 + $0xf8] sm:$0xff] %vm4248, %v8459
  // Predicated region
  $region26: #{basic_block_pallas.1} parent=0 // pred_check
    _
  $region27: #{basic_block_pallas.1} parent=0 // pred_check_branch
    %8494 = sbr.rel (0) target = $region29
  $region28: #{basic_block_pallas.1} parent=0 // pred_region
    _
  $region29: #{basic_block_pallas.1} parent=0 // pred_fallthru
    _
  // Predicated region
  $region30: #{basic_block_pallas.1} parent=0 // pred_check
    _
  $region31: #{basic_block_pallas.1} parent=0 // pred_check_branch
    %8496 = sbr.rel (0) target = $region33
  $region32: #{basic_block_pallas.1} parent=0 // pred_region
    _
  $region33: #{basic_block_pallas.1} parent=0 // pred_fallthru
    _

</llo_original>
